<compile_context>
chip_gen: v7x
topology: tpu7x:2x2x1
jax: 0.10.0
libtpu: 0.0.40
codegen_flags: <defaults>
</compile_context>

<pallas_src>
import math
from functools import partial

import numpy as np
import jax
import jax.numpy as jnp
from jax.experimental import pallas as pl
from jax.experimental.pallas import tpu as pltpu

_VMEM_LIMIT = 48 * 1024 * 1024


def _sigmoid(v):
    # exp on the EUP, approximate reciprocal on the EUP vrcp slot -> VPU stays free.
    return pl.reciprocal(1.0 + jnp.exp(-v), approx=True)


# ---------------------------------------------------------------------------
# Pallas kernels
# ---------------------------------------------------------------------------
def _mm_bias_silu_kernel(*refs):
    """o = SiLU( sum_i W_i @ X_i + bias ).  refs = (w0, x0[, w1, x1, ...], bias, out)."""
    b_ref, o_ref = refs[-2], refs[-1]
    acc = None
    for i in range(0, len(refs) - 2, 2):
        w_ref, x_ref = refs[i], refs[i + 1]
        d = jnp.dot(w_ref[...], x_ref[...].astype(jnp.bfloat16),
                    preferred_element_type=jnp.float32)
        acc = d if acc is None else acc + d
    y = acc + b_ref[...]
    y = y * _sigmoid(y)
    o_ref[...] = y.astype(o_ref.dtype)


def _conv3x3_bias_silu_kernel(w_ref, x_ref, b_ref, m_ref, o_ref, *, offs, p0, m):
    """3x3 conv (stride 1, pad 1) on a zero-ring padded, flattened image row.

    x_ref: (Cin, Lp) with Lp=(H+2)*(W+2).  Each of the 9 taps is a lane-shifted slice of
    the same VMEM block, accumulated through the MXU.  The output keeps the padded layout
    (zero ring re-applied via the mask) so it can feed the next 3x3 conv directly.
    """
    cout, lp = o_ref.shape
    acc = jnp.zeros((cout, m), jnp.float32)
    for t, off in enumerate(offs):
        s = p0 + off
        acc = acc + jnp.dot(w_ref[t], x_ref[:, s:s + m],
                            preferred_element_type=jnp.float32)
    y = acc + b_ref[...]
    y = y * _sigmoid(y)
    y = y * m_ref[...]                                  # zero pad-ring / garbage columns
    o_ref[:, :] = jnp.zeros((cout, lp), o_ref.dtype)
    o_ref[:, p0:p0 + m] = y.astype(o_ref.dtype)


def _gate_kernel(*refs, d1, d2, fuse_avg):
    """Fused AttentionGate: ZPool -> 7x7 conv(+BN) -> sigmoid -> x*scale (-> /3 average)."""
    if fuse_avg:
        w_ref, z_ref, o1_ref, o2_ref, out_ref, pad_ref = refs
    else:
        w_ref, z_ref, out_ref, pad_ref = refs
    z = z_ref[...].astype(jnp.float32)                  # (Cz, D1, D2)

    # ZPool over the channel axis, written into a zero 3-ring padded VMEM scratch.
    pad_ref[...] = jnp.zeros(pad_ref.shape, pad_ref.dtype)
    pad_ref[0, 3:3 + d1, 3:3 + d2] = jnp.max(z, axis=0)
    pad_ref[1, 3:3 + d1, 3:3 + d2] = jnp.mean(z, axis=0)

    # 7x7 conv (2 -> 1 channel) as 98 scalar-FMA taps; weights + BN bias live in SMEM.
    a = jnp.zeros((d1, d2), jnp.float32)
    for ci in range(2):
        for dy in range(7):
            for dx in range(7):
                wv = w_ref[ci * 49 + dy * 7 + dx]
                a = a + wv * pad_ref[ci, dy:dy + d1, dx:dx + d2]
    a = a + w_ref[98]                                   # folded BN bias

    out = z * _sigmoid(a)
    if fuse_avg:
        out = (out + o1_ref[...].astype(jnp.float32)
               + o2_ref[...].astype(jnp.float32)) * (1.0 / 3.0)
    out_ref[...] = out.astype(out_ref.dtype)


# ---------------------------------------------------------------------------
# pallas_call wrappers
# ---------------------------------------------------------------------------
def _round_up(n, m):
    return ((n + m - 1) // m) * m


def _pick_lane_tile(n, k_rows, out_rows):
    """Largest 128-multiple lane tile dividing n, VMEM-budget aware, capped at 2048."""
    if n % 128 != 0:
        return n
    per_lane = (2 * k_rows + 4 * out_rows) * 2          # bf16 in + f32 out, double-buffered
    budget = 8 * 1024 * 1024
    t = min(n, 2048, max(128, (budget // max(per_lane, 1)) // 128 * 128))
    t = max(128, (t // 128) * 128)
    while t > 128 and n % t:
        t -= 128
    return t


def matmul_bias_silu(pairs, bias, out_dtype):
    """SiLU(sum_i W_i @ X_i + bias), per batch image, lane axis tiled and 'parallel'.

    pairs: list of (W (Cout, K_i) bf16 with BN scale folded, X (B, K_i, N)).
    Used for the C2f 1x1 convs; the two-pair form fuses the chunk/concat away.
    """
    B, _, n = pairs[0][1].shape
    cout = pairs[0][0].shape[0]
    n_pad = _round_up(n, 128) if n >= 128 else n
    if n_pad != n:
        pairs = [(w, jnp.pad(x, ((0, 0), (0, 0), (0, n_pad - n)))) for w, x in pairs]
    tn = _pick_lane_tile(n_pad, sum(w.shape[1] for w, _ in pairs), cout)

    in_specs, args = [], []
    for w, x in pairs:
        k = w.shape[1]
        in_specs.append(pl.BlockSpec((cout, k), lambda b, j: (0, 0)))
        in_specs.append(pl.BlockSpec((None, k, tn), lambda b, j: (b, 0, j)))
        args += [w, x]
    in_specs.append(pl.BlockSpec((cout, 1), lambda b, j: (0, 0)))
    args.append(bias)

    out = pl.pallas_call(
        _mm_bias_silu_kernel,
        out_shape=jax.ShapeDtypeStruct((B, cout, n_pad), out_dtype),
        grid=(B, n_pad // tn),
        in_specs=in_specs,
        out_specs=pl.BlockSpec((None, cout, tn), lambda b, j: (b, 0, j)),
        compiler_params=pltpu.CompilerParams(
            dimension_semantics=("parallel", "parallel"),
            vmem_limit_bytes=_VMEM_LIMIT),
    )(*args)
    return out if n_pad == n else out[:, :, :n]


def _conv3_mask(h, w):
    """Mask over interior-anchored output columns of the flattened padded layout."""
    wp = w + 2
    p0 = wp + 1
    m = (h + 2) * wp - 2 * p0
    p = np.arange(m) + p0
    py, px = p // wp, p % wp
    valid = (py >= 1) & (py <= h) & (px >= 1) & (px <= w)
    return jnp.asarray(valid.astype(np.float32)).reshape(1, m)


def conv3x3_bias_silu(x_flat, w9, bias, h, w):
    """x_flat: (B, Cin, (H+2)*(W+2)) zero-ring padded, flattened per image (bf16)."""
    B, cin, lp = x_flat.shape
    cout = w9.shape[1]
    wp = w + 2
    p0 = wp + 1                                  # flat index of the first interior pixel
    m = lp - 2 * p0                              # interior-anchored output columns
    offs = tuple((dy - 1) * wp + (dx - 1) for dy in range(3) for dx in range(3))
    mask = _conv3_mask(h, w)
    kern = partial(_conv3x3_bias_silu_kernel, offs=offs, p0=p0, m=m)
    return pl.pallas_call(
        kern,
        out_shape=jax.ShapeDtypeStruct((B, cout, lp), jnp.bfloat16),
        grid=(B,),
        in_specs=[pl.BlockSpec((9, cout, cin), lambda b: (0, 0, 0)),
                  pl.BlockSpec((None, cin, lp), lambda b: (b, 0, 0)),
                  pl.BlockSpec((cout, 1), lambda b: (0, 0)),
                  pl.BlockSpec((1, m), lambda b: (0, 0))],
        out_specs=pl.BlockSpec((None, cout, lp), lambda b: (b, 0, 0)),
        compiler_params=pltpu.CompilerParams(
            dimension_semantics=("parallel",),
            vmem_limit_bytes=_VMEM_LIMIT),
    )(w9, x_flat, bias, mask)


def attention_gate(z, gate_w, avg_with=None):
    """z: (B, Cz, D1, D2).  gate_w: (99,) = 98 scale-folded 7x7 weights + BN bias (SMEM)."""
    B, cz, d1, d2 = z.shape
    fuse = avg_with is not None
    kern = partial(_gate_kernel, d1=d1, d2=d2, fuse_avg=fuse)
    blk = pl.BlockSpec((None, cz, d1, d2), lambda b: (b, 0, 0, 0))
    in_specs = [pl.BlockSpec(memory_space=pltpu.MemorySpace.SMEM), blk]
    args = [gate_w, z]
    if fuse:
        in_specs += [blk, blk]
        args += list(avg_with)
    return pl.pallas_call(
        kern,
        out_shape=jax.ShapeDtypeStruct((B, cz, d1, d2), jnp.bfloat16),
        grid=(B,),
        in_specs=in_specs,
        out_specs=blk,
        scratch_shapes=[pltpu.VMEM((2, d1 + 6, d2 + 6), jnp.float32)],
        compiler_params=pltpu.CompilerParams(
            dimension_semantics=("parallel",),
            vmem_limit_bytes=_VMEM_LIMIT),
    )(*args)


# ---------------------------------------------------------------------------
# Host-side weight packing (BN scale folded, bf16 cast) + module forward
# ---------------------------------------------------------------------------
def _pack_1x1(w, scale):
    return (w[:, :, 0, 0] * scale).astype(jnp.bfloat16)


def _pack_3x3(w, scale):
    wf = w * scale.reshape(-1, 1, 1, 1)
    return jnp.transpose(wf, (2, 3, 0, 1)).reshape(9, w.shape[0], w.shape[1]).astype(jnp.bfloat16)


def _pack_gate(w7, scale, bias):
    wflat = (w7[0] * scale[0, 0]).reshape(-1)           # (98,), order [ci, dy, dx]
    return jnp.concatenate([wflat, bias.reshape(-1)]).astype(jnp.float32)


def triplet_attention(t, p):
    """t: (B, c, H, W)."""
    o1 = attention_gate(jnp.transpose(t, (0, 2, 1, 3)), _pack_gate(*p["cw"]))
    o1 = jnp.transpose(o1, (0, 2, 1, 3))
    o2 = attention_gate(jnp.transpose(t, (0, 3, 2, 1)), _pack_gate(*p["hc"]))
    o2 = jnp.transpose(o2, (0, 3, 2, 1))
    # hw branch: gate with the (o1 + o2 + gated)/3 average fused into the kernel.
    return attention_gate(t, _pack_gate(*p["hw"]), avg_with=(o1, o2))


def bottleneck_tripletat(y2, p):
    """C2f_TripletAt uses shortcut=False -> no residual add.  y2: (B, c, H, W)."""
    B, c, h, w = y2.shape
    lp = (h + 2) * (w + 2)
    xpad = jnp.pad(y2, ((0, 0), (0, 0), (1, 1), (1, 1))).reshape(B, c, lp)
    w1, s1, b1 = p["cv1"]
    w2, s2, b2 = p["cv2"]
    t = conv3x3_bias_silu(xpad, _pack_3x3(w1, s1), b1, h, w)
    t = conv3x3_bias_silu(t, _pack_3x3(w2, s2), b2, h, w)      # consumes padded layout
    t = t.reshape(B, c, h + 2, w + 2)[:, :, 1:-1, 1:-1]
    return triplet_attention(t, p["att"])


def c2f_tripletat(x, params):
    """Forward of C2f_TripletAt(c1, c2, n=1, shortcut=False, e=0.5).  x: (B, C1, H, W)."""
    B, c1, h, w = x.shape
    hw = h * w
    w1, s1, b1 = params["cv1"]
    y = matmul_bias_silu([(_pack_1x1(w1, s1), x.reshape(B, c1, hw))], b1,
                         out_dtype=jnp.bfloat16)                       # (B, 2c, HW)
    c = y.shape[1] // 2
    y2 = y[:, c:, :].reshape(B, c, h, w)                               # chunk(2)[1]
    y3 = bottleneck_tripletat(y2, params["m0"])                        # (B, c, H, W)
    w2, s2, b2 = params["cv2"]
    w2m = _pack_1x1(w2, s2)                                            # (C2, 3c)
    out = matmul_bias_silu([(w2m[:, :2 * c], y),
                            (w2m[:, 2 * c:], y3.reshape(B, c, hw))],
                           b2, out_dtype=jnp.float32)                  # concat fused away
    return out.reshape(B, -1, h, w)


# ---------------------------------------------------------------------------
# Pure-JAX f32 reference (for correctness check)
# ---------------------------------------------------------------------------
def _conv2d_ref(x, w, pad):
    return jax.lax.conv_general_dilated(
        x, w, window_strides=(1, 1),
        padding=((pad, pad), (pad, pad)),
        dimension_numbers=("NCHW", "OIHW", "NCHW"),
        precision=jax.lax.Precision.HIGHEST)


def _conv_bn_act_ref(x, w, scale, bias, act=True):
    y = _conv2d_ref(x, w, (w.shape[-1] - 1) // 2)
    y = y * scale.reshape(1, -1, 1, 1) + bias.reshape(1, -1, 1, 1)
    return y * jax.nn.sigmoid(y) if act else y


def _gate_ref(z, w7, scale, bias):
    zc = jnp.concatenate([jnp.max(z, axis=1, keepdims=True),
                          jnp.mean(z, axis=1, keepdims=True)], axis=1)
    a = _conv_bn_act_ref(zc, w7, scale, bias, act=False)
    return z * jax.nn.sigmoid(a)


def _triplet_ref(x, p):
    o1 = jnp.transpose(_gate_ref(jnp.transpose(x, (0, 2, 1, 3)), *p["cw"]), (0, 2, 1, 3))
    o2 = jnp.transpose(_gate_ref(jnp.transpose(x, (0, 3, 2, 1)), *p["hc"]), (0, 3, 2, 1))
    o3 = _gate_ref(x, *p["hw"])
    return (o1 + o2 + o3) / 3.0


def _c2f_ref(x, p):
    y = _conv_bn_act_ref(x, *p["cv1"], act=True)
    c = y.shape[1] // 2
    y1, y2 = y[:, :c], y[:, c:]
    t = _conv_bn_act_ref(y2, *p["m0"]["cv1"], act=True)
    t = _conv_bn_act_ref(t, *p["m0"]["cv2"], act=True)
    y3 = _triplet_ref(t, p["m0"]["att"])
    return _conv_bn_act_ref(jnp.concatenate([y1, y2, y3], axis=1), *p["cv2"], act=True)


# ---------------------------------------------------------------------------
# Parameters (Conv2d bias=False, eval-mode BN folded to per-channel scale/bias)
# ---------------------------------------------------------------------------
def _conv_params(key, cout, cin, k, eps):
    kw, kg, kb, km, kv = jax.random.split(key, 5)
    w = jax.random.normal(kw, (cout, cin, k, k), jnp.float32) / math.sqrt(cin * k * k)
    gamma = 1.0 + 0.2 * jax.random.normal(kg, (cout,), jnp.float32)
    beta = 0.1 * jax.random.normal(kb, (cout,), jnp.float32)
    mean = 0.1 * jax.random.normal(km, (cout,), jnp.float32)
    var = 0.5 + jax.random.uniform(kv, (cout,), jnp.float32)
    inv = gamma / jnp.sqrt(var + eps)
    scale = inv.reshape(cout, 1)
    bias = (beta - mean * inv).reshape(cout, 1)
    return w, scale, bias


if __name__ == "__main__":
    key = jax.random.PRNGKey(0)
    B, C1, C2, H, W = 2, 32, 32, 16, 16            # small demo shapes
    N_BLOCKS = 1                                   # n=1 Bottleneck_TripletAt
    c = int(C2 * 0.5)                              # CSP hidden width

    kx, k0, k1, k2, k3, k4, k5, k6 = jax.random.split(key, 8)
    x = jax.random.normal(kx, (B, C1, H, W), dtype=jnp.float32)

    EPS_CONV = 1e-3                                # ultralytics Conv BN eps
    EPS_GATE = 1e-5                                # BasicConv BN eps (AttentionGate)

    params = {
        "cv1": _conv_params(k0, 2 * c, C1, 1, EPS_CONV),
        "cv2": _conv_params(k1, C2, (2 + N_BLOCKS) * c, 1, EPS_CONV),
        "m0": {
            "cv1": _conv_params(k2, c, c, 3, EPS_CONV),
            "cv2": _conv_params(k3, c, c, 3, EPS_CONV),
            "att": {
                "cw": _conv_params(k4, 1, 2, 7, EPS_GATE),
                "hc": _conv_params(k5, 1, 2, 7, EPS_GATE),
                "hw": _conv_params(k6, 1, 2, 7, EPS_GATE),
            },
        },
    }

    y = jax.jit(c2f_tripletat)(x, params)
    y = jax.block_until_ready(y)
    assert y.shape == (B, C2, H, W), y.shape

    y_ref = _c2f_ref(x, params)
    max_err = float(jnp.max(jnp.abs(y - y_ref)))
    # bf16 MXU operands + approximate-reciprocal sigmoid vs. the exact f32 reference.
    assert jnp.allclose(y, y_ref, atol=4e-2, rtol=4e-2), f"max abs err {max_err}"

    print("KERNEL_OK")
</pallas_src>

<mosaic_0001>
module attributes {stable_mosaic.version = 11 : i64} {
  func.func @_mm_bias_silu_kernel(%arg0: i32, %arg1: i32, %arg2: memref<32x32xbf16, #tpu.memory_space<vmem>>, %arg3: memref<1x32x256xf32, #tpu.memory_space<vmem>>, %arg4: memref<32x1xf32, #tpu.memory_space<vmem>>, %arg5: memref<1x32x256xbf16, #tpu.memory_space<vmem>>) attributes {dimension_semantics = [#tpu.dimension_semantics<parallel>, #tpu.dimension_semantics<parallel>], iteration_bounds = array<i64: 2, 1>, scalar_prefetch = 0 : i64, scratch_operands = 0 : i64, tpu.core_type = #tpu.core_type<tc>, window_params = [{pipeline_mode = #tpu.pipeline_mode<synchronous>, transform_indices = @transform_0, window_bounds = array<i64: 32, 32>}, {transform_indices = @transform_1, window_bounds = array<i64: 1, 32, 256>}, {pipeline_mode = #tpu.pipeline_mode<synchronous>, transform_indices = @transform_2, window_bounds = array<i64: 32, 1>}, {transform_indices = @transform_3, window_bounds = array<i64: 1, 32, 256>}]} {
    %c0 = arith.constant 0 : index
    %c0_0 = arith.constant 0 : index
    %0 = vector.load %arg2[%c0, %c0_0] : memref<32x32xbf16, #tpu.memory_space<vmem>>, vector<32x32xbf16>
    %c0_1 = arith.constant 0 : index
    %c0_2 = arith.constant 0 : index
    %c0_3 = arith.constant 0 : index
    %1 = vector.load %arg3[%c0_1, %c0_2, %c0_3] : memref<1x32x256xf32, #tpu.memory_space<vmem>>, vector<1x32x256xf32>
    %2 = vector.shape_cast %1 : vector<1x32x256xf32> to vector<32x256xf32>
    %3 = arith.truncf %2 : vector<32x256xf32> to vector<32x256xbf16>
    %cst = arith.constant dense<0.000000e+00> : vector<32x256xf32>
    %4 = tpu.matmul %0, %3, %cst {dimension_numbers = #tpu.dot_dimension_numbers<[1], [0], [0], [1], [0, 0, 1, 1], [], []>} : vector<32x32xbf16>, vector<32x256xbf16>, vector<32x256xf32> -> vector<32x256xf32>
    %c0_4 = arith.constant 0 : index
    %c0_5 = arith.constant 0 : index
    %5 = vector.load %arg4[%c0_4, %c0_5] : memref<32x1xf32, #tpu.memory_space<vmem>>, vector<32x1xf32>
    %6 = vector.broadcast %5 : vector<32x1xf32> to vector<32x256xf32>
    %7 = arith.addf %4, %6 : vector<32x256xf32>
    %cst_6 = arith.constant 0.000000e+00 : f32
    %8 = vector.broadcast %cst_6 : f32 to vector<32x256xf32>
    %9 = arith.subf %8, %7 : vector<32x256xf32>
    %10 = math.exp %9 : vector<32x256xf32>
    %cst_7 = arith.constant 1.000000e+00 : f32
    %11 = vector.broadcast %cst_7 : f32 to vector<32x256xf32>
    %12 = arith.addf %11, %10 : vector<32x256xf32>
    %13 = tpu.reciprocal %12 {approx = true} : vector<32x256xf32> -> vector<32x256xf32>
    %14 = arith.mulf %7, %13 : vector<32x256xf32>
    %15 = arith.truncf %14 : vector<32x256xf32> to vector<32x256xbf16>
    %c0_8 = arith.constant 0 : index
    %c0_9 = arith.constant 0 : index
    %c0_10 = arith.constant 0 : index
    %16 = vector.load %arg5[%c0_8, %c0_9, %c0_10] : memref<1x32x256xbf16, #tpu.memory_space<vmem>>, vector<1x32x256xbf16>
    %17 = vector.shape_cast %16 : vector<1x32x256xbf16> to vector<32x256xbf16>
    %18 = vector.shape_cast %15 : vector<32x256xbf16> to vector<1x32x256xbf16>
    tpu.vector_store %arg5[%c0_8, %c0_9, %c0_10], %18 {strides = array<i32>} : memref<1x32x256xbf16, #tpu.memory_space<vmem>>, vector<1x32x256xbf16>,
    return
  }
  func.func @transform_0(%arg0: i32, %arg1: i32) -> (i32, i32) {
    %c0_i32 = arith.constant 0 : i32
    %c0_i32_0 = arith.constant 0 : i32
    %c0_i32_1 = arith.constant 0 : i32
    return %c0_i32, %c0_i32_0 : i32, i32
  }
  func.func @transform_1(%arg0: i32, %arg1: i32) -> (i32, i32, i32) {
    %c0_i32 = arith.constant 0 : i32
    %c0_i32_0 = arith.constant 0 : i32
    return %arg0, %c0_i32, %arg1 : i32, i32, i32
  }
  func.func @transform_2(%arg0: i32, %arg1: i32) -> (i32, i32) {
    %c0_i32 = arith.constant 0 : i32
    %c0_i32_0 = arith.constant 0 : i32
    %c0_i32_1 = arith.constant 0 : i32
    return %c0_i32, %c0_i32_0 : i32, i32
  }
  func.func @transform_3(%arg0: i32, %arg1: i32) -> (i32, i32, i32) {
    %c0_i32 = arith.constant 0 : i32
    %c0_i32_0 = arith.constant 0 : i32
    return %arg0, %c0_i32, %arg1 : i32, i32, i32
  }
}

module attributes {stable_mosaic.version = 11 : i64} {
  func.func @_conv3x3_bias_silu_kernel(%arg0: i32, %arg1: memref<9x16x16xbf16, #tpu.memory_space<vmem>>, %arg2: memref<1x16x324xbf16, #tpu.memory_space<vmem>>, %arg3: memref<16x1xf32, #tpu.memory_space<vmem>>, %arg4: memref<1x286xf32, #tpu.memory_space<vmem>>, %arg5: memref<1x16x324xbf16, #tpu.memory_space<vmem>>) attributes {dimension_semantics = [#tpu.dimension_semantics<parallel>], iteration_bounds = array<i64: 2>, scalar_prefetch = 0 : i64, scratch_operands = 0 : i64, tpu.core_type = #tpu.core_type<tc>, window_params = [{pipeline_mode = #tpu.pipeline_mode<synchronous>, transform_indices = @transform_0, window_bounds = array<i64: 9, 16, 16>}, {transform_indices = @transform_1, window_bounds = array<i64: 1, 16, 324>}, {pipeline_mode = #tpu.pipeline_mode<synchronous>, transform_indices = @transform_2, window_bounds = array<i64: 16, 1>}, {pipeline_mode = #tpu.pipeline_mode<synchronous>, transform_indices = @transform_3, window_bounds = array<i64: 1, 286>}, {transform_indices = @transform_4, window_bounds = array<i64: 1, 16, 324>}]} {
    %cst = arith.constant 0.000000e+00 : f32
    %0 = vector.broadcast %cst : f32 to vector<16x286xf32>
    %c0 = arith.constant 0 : index
    %c0_0 = arith.constant 0 : index
    %c0_1 = arith.constant 0 : index
    %1 = vector.load %arg1[%c0, %c0_0, %c0_1] : memref<9x16x16xbf16, #tpu.memory_space<vmem>>, vector<1x16x16xbf16>
    %2 = vector.shape_cast %1 : vector<1x16x16xbf16> to vector<16x16xbf16>
    %c0_2 = arith.constant 0 : index
    %c0_3 = arith.constant 0 : index
    %c0_4 = arith.constant 0 : index
    %3 = vector.load %arg2[%c0_2, %c0_3, %c0_4] : memref<1x16x324xbf16, #tpu.memory_space<vmem>>, vector<1x16x286xbf16>
    %4 = vector.shape_cast %3 : vector<1x16x286xbf16> to vector<16x286xbf16>
    %cst_5 = arith.constant dense<0.000000e+00> : vector<16x286xf32>
    %5 = tpu.matmul %2, %4, %cst_5 {dimension_numbers = #tpu.dot_dimension_numbers<[1], [0], [0], [1], [0, 0, 1, 1], [], []>} : vector<16x16xbf16>, vector<16x286xbf16>, vector<16x286xf32> -> vector<16x286xf32>
    %6 = arith.addf %0, %5 : vector<16x286xf32>
    %c1 = arith.constant 1 : index
    %c0_6 = arith.constant 0 : index
    %c0_7 = arith.constant 0 : index
    %7 = vector.load %arg1[%c1, %c0_6, %c0_7] : memref<9x16x16xbf16, #tpu.memory_space<vmem>>, vector<1x16x16xbf16>
    %8 = vector.shape_cast %7 : vector<1x16x16xbf16> to vector<16x16xbf16>
    %c0_8 = arith.constant 0 : index
    %c0_9 = arith.constant 0 : index
    %c1_10 = arith.constant 1 : index
    %9 = vector.load %arg2[%c0_8, %c0_9, %c1_10] : memref<1x16x324xbf16, #tpu.memory_space<vmem>>, vector<1x16x286xbf16>
    %10 = vector.shape_cast %9 : vector<1x16x286xbf16> to vector<16x286xbf16>
    %cst_11 = arith.constant dense<0.000000e+00> : vector<16x286xf32>
    %11 = tpu.matmul %8, %10, %cst_11 {dimension_numbers = #tpu.dot_dimension_numbers<[1], [0], [0], [1], [0, 0, 1, 1], [], []>} : vector<16x16xbf16>, vector<16x286xbf16>, vector<16x286xf32> -> vector<16x286xf32>
    %12 = arith.addf %6, %11 : vector<16x286xf32>
    %c2 = arith.constant 2 : index
    %c0_12 = arith.constant 0 : index
    %c0_13 = arith.constant 0 : index
    %13 = vector.load %arg1[%c2, %c0_12, %c0_13] : memref<9x16x16xbf16, #tpu.memory_space<vmem>>, vector<1x16x16xbf16>
    %14 = vector.shape_cast %13 : vector<1x16x16xbf16> to vector<16x16xbf16>
    %c0_14 = arith.constant 0 : index
    %c0_15 = arith.constant 0 : index
    %c2_16 = arith.constant 2 : index
    %15 = vector.load %arg2[%c0_14, %c0_15, %c2_16] : memref<1x16x324xbf16, #tpu.memory_space<vmem>>, vector<1x16x286xbf16>
    %16 = vector.shape_cast %15 : vector<1x16x286xbf16> to vector<16x286xbf16>
    %cst_17 = arith.constant dense<0.000000e+00> : vector<16x286xf32>
    %17 = tpu.matmul %14, %16, %cst_17 {dimension_numbers = #tpu.dot_dimension_numbers<[1], [0], [0], [1], [0, 0, 1, 1], [], []>} : vector<16x16xbf16>, vector<16x286xbf16>, vector<16x286xf32> -> vector<16x286xf32>
    %18 = arith.addf %12, %17 : vector<16x286xf32>
    %c3 = arith.constant 3 : index
    %c0_18 = arith.constant 0 : index
    %c0_19 = arith.constant 0 : index
    %19 = vector.load %arg1[%c3, %c0_18, %c0_19] : memref<9x16x16xbf16, #tpu.memory_space<vmem>>, vector<1x16x16xbf16>
    %20 = vector.shape_cast %19 : vector<1x16x16xbf16> to vector<16x16xbf16>
    %c0_20 = arith.constant 0 : index
    %c0_21 = arith.constant 0 : index
    %c18 = arith.constant 18 : index
    %21 = vector.load %arg2[%c0_20, %c0_21, %c18] : memref<1x16x324xbf16, #tpu.memory_space<vmem>>, vector<1x16x286xbf16>
    %22 = vector.shape_cast %21 : vector<1x16x286xbf16> to vector<16x286xbf16>
    %cst_22 = arith.constant dense<0.000000e+00> : vector<16x286xf32>
    %23 = tpu.matmul %20, %22, %cst_22 {dimension_numbers = #tpu.dot_dimension_numbers<[1], [0], [0], [1], [0, 0, 1, 1], [], []>} : vector<16x16xbf16>, vector<16x286xbf16>, vector<16x286xf32> -> vector<16x286xf32>
    %24 = arith.addf %18, %23 : vector<16x286xf32>
    %c4 = arith.constant 4 : index
    %c0_23 = arith.constant 0 : index
    %c0_24 = arith.constant 0 : index
    %25 = vector.load %arg1[%c4, %c0_23, %c0_24] : memref<9x16x16xbf16, #tpu.memory_space<vmem>>, vector<1x16x16xbf16>
    %26 = vector.shape_cast %25 : vector<1x16x16xbf16> to vector<16x16xbf16>
    %c0_25 = arith.constant 0 : index
    %c0_26 = arith.constant 0 : index
    %c19 = arith.constant 19 : index
    %27 = vector.load %arg2[%c0_25, %c0_26, %c19] : memref<1x16x324xbf16, #tpu.memory_space<vmem>>, vector<1x16x286xbf16>
    %28 = vector.shape_cast %27 : vector<1x16x286xbf16> to vector<16x286xbf16>
    %cst_27 = arith.constant dense<0.000000e+00> : vector<16x286xf32>
    %29 = tpu.matmul %26, %28, %cst_27 {dimension_numbers = #tpu.dot_dimension_numbers<[1], [0], [0], [1], [0, 0, 1, 1], [], []>} : vector<16x16xbf16>, vector<16x286xbf16>, vector<16x286xf32> -> vector<16x286xf32>
    %30 = arith.addf %24, %29 : vector<16x286xf32>
    %c5 = arith.constant 5 : index
    %c0_28 = arith.constant 0 : index
    %c0_29 = arith.constant 0 : index
    %31 = vector.load %arg1[%c5, %c0_28, %c0_29] : memref<9x16x16xbf16, #tpu.memory_space<vmem>>, vector<1x16x16xbf16>
    %32 = vector.shape_cast %31 : vector<1x16x16xbf16> to vector<16x16xbf16>
    %c0_30 = arith.constant 0 : index
    %c0_31 = arith.constant 0 : index
    %c20 = arith.constant 20 : index
    %33 = vector.load %arg2[%c0_30, %c0_31, %c20] : memref<1x16x324xbf16, #tpu.memory_space<vmem>>, vector<1x16x286xbf16>
    %34 = vector.shape_cast %33 : vector<1x16x286xbf16> to vector<16x286xbf16>
    %cst_32 = arith.constant dense<0.000000e+00> : vector<16x286xf32>
    %35 = tpu.matmul %32, %34, %cst_32 {dimension_numbers = #tpu.dot_dimension_numbers<[1], [0], [0], [1], [0, 0, 1, 1], [], []>} : vector<16x16xbf16>, vector<16x286xbf16>, vector<16x286xf32> -> vector<16x286xf32>
    %36 = arith.addf %30, %35 : vector<16x286xf32>
    %c6 = arith.constant 6 : index
    %c0_33 = arith.constant 0 : index
    %c0_34 = arith.constant 0 : index
    %37 = vector.load %arg1[%c6, %c0_33, %c0_34] : memref<9x16x16xbf16, #tpu.memory_space<vmem>>, vector<1x16x16xbf16>
    %38 = vector.shape_cast %37 : vector<1x16x16xbf16> to vector<16x16xbf16>
    %c0_35 = arith.constant 0 : index
    %c0_36 = arith.constant 0 : index
    %c36 = arith.constant 36 : index
    %39 = vector.load %arg2[%c0_35, %c0_36, %c36] : memref<1x16x324xbf16, #tpu.memory_space<vmem>>, vector<1x16x286xbf16>
    %40 = vector.shape_cast %39 : vector<1x16x286xbf16> to vector<16x286xbf16>
    %cst_37 = arith.constant dense<0.000000e+00> : vector<16x286xf32>
    %41 = tpu.matmul %38, %40, %cst_37 {dimension_numbers = #tpu.dot_dimension_numbers<[1], [0], [0], [1], [0, 0, 1, 1], [], []>} : vector<16x16xbf16>, vector<16x286xbf16>, vector<16x286xf32> -> vector<16x286xf32>
    %42 = arith.addf %36, %41 : vector<16x286xf32>
    %c7 = arith.constant 7 : index
    %c0_38 = arith.constant 0 : index
    %c0_39 = arith.constant 0 : index
    %43 = vector.load %arg1[%c7, %c0_38, %c0_39] : memref<9x16x16xbf16, #tpu.memory_space<vmem>>, vector<1x16x16xbf16>
    %44 = vector.shape_cast %43 : vector<1x16x16xbf16> to vector<16x16xbf16>
    %c0_40 = arith.constant 0 : index
    %c0_41 = arith.constant 0 : index
    %c37 = arith.constant 37 : index
    %45 = vector.load %arg2[%c0_40, %c0_41, %c37] : memref<1x16x324xbf16, #tpu.memory_space<vmem>>, vector<1x16x286xbf16>
    %46 = vector.shape_cast %45 : vector<1x16x286xbf16> to vector<16x286xbf16>
    %cst_42 = arith.constant dense<0.000000e+00> : vector<16x286xf32>
    %47 = tpu.matmul %44, %46, %cst_42 {dimension_numbers = #tpu.dot_dimension_numbers<[1], [0], [0], [1], [0, 0, 1, 1], [], []>} : vector<16x16xbf16>, vector<16x286xbf16>, vector<16x286xf32> -> vector<16x286xf32>
    %48 = arith.addf %42, %47 : vector<16x286xf32>
    %c8 = arith.constant 8 : index
    %c0_43 = arith.constant 0 : index
    %c0_44 = arith.constant 0 : index
    %49 = vector.load %arg1[%c8, %c0_43, %c0_44] : memref<9x16x16xbf16, #tpu.memory_space<vmem>>, vector<1x16x16xbf16>
    %50 = vector.shape_cast %49 : vector<1x16x16xbf16> to vector<16x16xbf16>
    %c0_45 = arith.constant 0 : index
    %c0_46 = arith.constant 0 : index
    %c38 = arith.constant 38 : index
    %51 = vector.load %arg2[%c0_45, %c0_46, %c38] : memref<1x16x324xbf16, #tpu.memory_space<vmem>>, vector<1x16x286xbf16>
    %52 = vector.shape_cast %51 : vector<1x16x286xbf16> to vector<16x286xbf16>
    %cst_47 = arith.constant dense<0.000000e+00> : vector<16x286xf32>
    %53 = tpu.matmul %50, %52, %cst_47 {dimension_numbers = #tpu.dot_dimension_numbers<[1], [0], [0], [1], [0, 0, 1, 1], [], []>} : vector<16x16xbf16>, vector<16x286xbf16>, vector<16x286xf32> -> vector<16x286xf32>
    %54 = arith.addf %48, %53 : vector<16x286xf32>
    %c0_48 = arith.constant 0 : index
    %c0_49 = arith.constant 0 : index
    %55 = vector.load %arg3[%c0_48, %c0_49] : memref<16x1xf32, #tpu.memory_space<vmem>>, vector<16x1xf32>
    %56 = vector.broadcast %55 : vector<16x1xf32> to vector<16x286xf32>
    %57 = arith.addf %54, %56 : vector<16x286xf32>
    %cst_50 = arith.constant 0.000000e+00 : f32
    %58 = vector.broadcast %cst_50 : f32 to vector<16x286xf32>
    %59 = arith.subf %58, %57 : vector<16x286xf32>
    %60 = math.exp %59 : vector<16x286xf32>
    %cst_51 = arith.constant 1.000000e+00 : f32
    %61 = vector.broadcast %cst_51 : f32 to vector<16x286xf32>
    %62 = arith.addf %61, %60 : vector<16x286xf32>
    %63 = tpu.reciprocal %62 {approx = true} : vector<16x286xf32> -> vector<16x286xf32>
    %64 = arith.mulf %57, %63 : vector<16x286xf32>
    %c0_52 = arith.constant 0 : index
    %c0_53 = arith.constant 0 : index
    %65 = vector.load %arg4[%c0_52, %c0_53] : memref<1x286xf32, #tpu.memory_space<vmem>>, vector<1x286xf32>
    %66 = vector.broadcast %65 : vector<1x286xf32> to vector<16x286xf32>
    %67 = arith.mulf %64, %66 : vector<16x286xf32>
    %cst_54 = arith.constant 0.000000e+00 : bf16
    %68 = vector.broadcast %cst_54 : bf16 to vector<16x324xbf16>
    %c0_55 = arith.constant 0 : index
    %c0_56 = arith.constant 0 : index
    %c0_57 = arith.constant 0 : index
    %69 = vector.load %arg5[%c0_55, %c0_56, %c0_57] : memref<1x16x324xbf16, #tpu.memory_space<vmem>>, vector<1x16x324xbf16>
    %70 = vector.shape_cast %69 : vector<1x16x324xbf16> to vector<16x324xbf16>
    %71 = vector.shape_cast %68 : vector<16x324xbf16> to vector<1x16x324xbf16>
    tpu.vector_store %arg5[%c0_55, %c0_56, %c0_57], %71 {strides = array<i32>} : memref<1x16x324xbf16, #tpu.memory_space<vmem>>, vector<1x16x324xbf16>,
    %72 = arith.truncf %67 : vector<16x286xf32> to vector<16x286xbf16>
    %c0_58 = arith.constant 0 : index
    %c0_59 = arith.constant 0 : index
    %c19_60 = arith.constant 19 : index
    %73 = vector.load %arg5[%c0_58, %c0_59, %c19_60] : memref<1x16x324xbf16, #tpu.memory_space<vmem>>, vector<1x16x286xbf16>
    %74 = vector.shape_cast %73 : vector<1x16x286xbf16> to vector<16x286xbf16>
    %75 = vector.shape_cast %72 : vector<16x286xbf16> to vector<1x16x286xbf16>
    tpu.vector_store %arg5[%c0_58, %c0_59, %c19_60], %75 {strides = array<i32>} : memref<1x16x324xbf16, #tpu.memory_space<vmem>>, vector<1x16x286xbf16>,
    return
  }
  func.func @transform_0(%arg0: i32) -> (i32, i32, i32) {
    %c0_i32 = arith.constant 0 : i32
    %c0_i32_0 = arith.constant 0 : i32
    %c0_i32_1 = arith.constant 0 : i32
    %c0_i32_2 = arith.constant 0 : i32
    return %c0_i32, %c0_i32_0, %c0_i32_1 : i32, i32, i32
  }
  func.func @transform_1(%arg0: i32) -> (i32, i32, i32) {
    %c0_i32 = arith.constant 0 : i32
    %c0_i32_0 = arith.constant 0 : i32
    %c0_i32_1 = arith.constant 0 : i32
    return %arg0, %c0_i32, %c0_i32_0 : i32, i32, i32
  }
  func.func @transform_2(%arg0: i32) -> (i32, i32) {
    %c0_i32 = arith.constant 0 : i32
    %c0_i32_0 = arith.constant 0 : i32
    %c0_i32_1 = arith.constant 0 : i32
    return %c0_i32, %c0_i32_0 : i32, i32
  }
  func.func @transform_3(%arg0: i32) -> (i32, i32) {
    %c0_i32 = arith.constant 0 : i32
    %c0_i32_0 = arith.constant 0 : i32
    %c0_i32_1 = arith.constant 0 : i32
    return %c0_i32, %c0_i32_0 : i32, i32
  }
  func.func @transform_4(%arg0: i32) -> (i32, i32, i32) {
    %c0_i32 = arith.constant 0 : i32
    %c0_i32_0 = arith.constant 0 : i32
    %c0_i32_1 = arith.constant 0 : i32
    return %arg0, %c0_i32, %c0_i32_0 : i32, i32, i32
  }
}

module attributes {stable_mosaic.version = 11 : i64} {
  func.func @_gate_kernel(%arg0: i32, %arg1: memref<99xf32, #tpu.memory_space<smem>>, %arg2: memref<1x16x16x16xbf16, #tpu.memory_space<vmem>>, %arg3: memref<1x16x16x16xbf16, #tpu.memory_space<vmem>>, %arg4: memref<2x22x22xf32, #tpu.memory_space<vmem>>) attributes {dimension_semantics = [#tpu.dimension_semantics<parallel>], iteration_bounds = array<i64: 2>, scalar_prefetch = 0 : i64, scratch_operands = 1 : i64, tpu.core_type = #tpu.core_type<tc>, window_params = [{transform_indices = @transform_0, window_bounds = array<i64: 99>}, {transform_indices = @transform_1, window_bounds = array<i64: 1, 16, 16, 16>}, {transform_indices = @transform_2, window_bounds = array<i64: 1, 16, 16, 16>}]} {
    %c0 = arith.constant 0 : index
    %c0_0 = arith.constant 0 : index
    %c0_1 = arith.constant 0 : index
    %c0_2 = arith.constant 0 : index
    %0 = vector.load %arg2[%c0, %c0_0, %c0_1, %c0_2] : memref<1x16x16x16xbf16, #tpu.memory_space<vmem>>, vector<1x16x16x16xbf16>
    %1 = vector.shape_cast %0 : vector<1x16x16x16xbf16> to vector<16x16x16xbf16>
    %2 = arith.extf %1 : vector<16x16x16xbf16> to vector<16x16x16xf32>
    %cst = arith.constant 0.000000e+00 : f32
    %3 = vector.broadcast %cst : f32 to vector<2x22x22xf32>
    %c0_3 = arith.constant 0 : index
    %c0_4 = arith.constant 0 : index
    %c0_5 = arith.constant 0 : index
    %4 = vector.load %arg4[%c0_3, %c0_4, %c0_5] : memref<2x22x22xf32, #tpu.memory_space<vmem>>, vector<2x22x22xf32>
    tpu.vector_store %arg4[%c0_3, %c0_4, %c0_5], %3 {strides = array<i32>} : memref<2x22x22xf32, #tpu.memory_space<vmem>>, vector<2x22x22xf32>,
    %cst_6 = arith.constant dense<0xFF800000> : vector<16x16xf32>
    %5 = vector.multi_reduction <maximumf>, %2, %cst_6 [0] : vector<16x16x16xf32> to vector<16x16xf32>
    %c0_7 = arith.constant 0 : index
    %c3 = arith.constant 3 : index
    %c3_8 = arith.constant 3 : index
    %6 = vector.load %arg4[%c0_7, %c3, %c3_8] : memref<2x22x22xf32, #tpu.memory_space<vmem>>, vector<1x16x16xf32>
    %7 = vector.shape_cast %6 : vector<1x16x16xf32> to vector<16x16xf32>
    %8 = vector.shape_cast %5 : vector<16x16xf32> to vector<1x16x16xf32>
    tpu.vector_store %arg4[%c0_7, %c3, %c3_8], %8 {strides = array<i32>} : memref<2x22x22xf32, #tpu.memory_space<vmem>>, vector<1x16x16xf32>,
    %cst_9 = arith.constant dense<0.000000e+00> : vector<16x16xf32>
    %9 = vector.multi_reduction <add>, %2, %cst_9 [0] : vector<16x16x16xf32> to vector<16x16xf32>
    %cst_10 = arith.constant 1.600000e+01 : f32
    %10 = vector.broadcast %cst_10 : f32 to vector<16x16xf32>
    %11 = arith.divf %9, %10 : vector<16x16xf32>
    %c1 = arith.constant 1 : index
    %c3_11 = arith.constant 3 : index
    %c3_12 = arith.constant 3 : index
    %12 = vector.load %arg4[%c1, %c3_11, %c3_12] : memref<2x22x22xf32, #tpu.memory_space<vmem>>, vector<1x16x16xf32>
    %13 = vector.shape_cast %12 : vector<1x16x16xf32> to vector<16x16xf32>
    %14 = vector.shape_cast %11 : vector<16x16xf32> to vector<1x16x16xf32>
    tpu.vector_store %arg4[%c1, %c3_11, %c3_12], %14 {strides = array<i32>} : memref<2x22x22xf32, #tpu.memory_space<vmem>>, vector<1x16x16xf32>,
    %cst_13 = arith.constant 0.000000e+00 : f32
    %15 = vector.broadcast %cst_13 : f32 to vector<16x16xf32>
    %c0_14 = arith.constant 0 : index
    %16 = memref.load %arg1[%c0_14] : memref<99xf32, #tpu.memory_space<smem>>
    %c0_15 = arith.constant 0 : index
    %c0_16 = arith.constant 0 : index
    %c0_17 = arith.constant 0 : index
    %17 = vector.load %arg4[%c0_15, %c0_16, %c0_17] : memref<2x22x22xf32, #tpu.memory_space<vmem>>, vector<1x16x16xf32>
    %18 = vector.shape_cast %17 : vector<1x16x16xf32> to vector<16x16xf32>
    %19 = vector.broadcast %16 : f32 to vector<16x16xf32>
    %20 = arith.mulf %19, %18 : vector<16x16xf32>
    %21 = arith.addf %15, %20 : vector<16x16xf32>
    %c1_18 = arith.constant 1 : index
    %22 = memref.load %arg1[%c1_18] : memref<99xf32, #tpu.memory_space<smem>>
    %c0_19 = arith.constant 0 : index
    %c0_20 = arith.constant 0 : index
    %c1_21 = arith.constant 1 : index
    %23 = vector.load %arg4[%c0_19, %c0_20, %c1_21] : memref<2x22x22xf32, #tpu.memory_space<vmem>>, vector<1x16x16xf32>
    %24 = vector.shape_cast %23 : vector<1x16x16xf32> to vector<16x16xf32>
    %25 = vector.broadcast %22 : f32 to vector<16x16xf32>
    %26 = arith.mulf %25, %24 : vector<16x16xf32>
    %27 = arith.addf %21, %26 : vector<16x16xf32>
    %c2 = arith.constant 2 : index
    %28 = memref.load %arg1[%c2] : memref<99xf32, #tpu.memory_space<smem>>
    %c0_22 = arith.constant 0 : index
    %c0_23 = arith.constant 0 : index
    %c2_24 = arith.constant 2 : index
    %29 = vector.load %arg4[%c0_22, %c0_23, %c2_24] : memref<2x22x22xf32, #tpu.memory_space<vmem>>, vector<1x16x16xf32>
    %30 = vector.shape_cast %29 : vector<1x16x16xf32> to vector<16x16xf32>
    %31 = vector.broadcast %28 : f32 to vector<16x16xf32>
    %32 = arith.mulf %31, %30 : vector<16x16xf32>
    %33 = arith.addf %27, %32 : vector<16x16xf32>
    %c3_25 = arith.constant 3 : index
    %34 = memref.load %arg1[%c3_25] : memref<99xf32, #tpu.memory_space<smem>>
    %c0_26 = arith.constant 0 : index
    %c0_27 = arith.constant 0 : index
    %c3_28 = arith.constant 3 : index
    %35 = vector.load %arg4[%c0_26, %c0_27, %c3_28] : memref<2x22x22xf32, #tpu.memory_space<vmem>>, vector<1x16x16xf32>
    %36 = vector.shape_cast %35 : vector<1x16x16xf32> to vector<16x16xf32>
    %37 = vector.broadcast %34 : f32 to vector<16x16xf32>
    %38 = arith.mulf %37, %36 : vector<16x16xf32>
    %39 = arith.addf %33, %38 : vector<16x16xf32>
    %c4 = arith.constant 4 : index
    %40 = memref.load %arg1[%c4] : memref<99xf32, #tpu.memory_space<smem>>
    %c0_29 = arith.constant 0 : index
    %c0_30 = arith.constant 0 : index
    %c4_31 = arith.constant 4 : index
    %41 = vector.load %arg4[%c0_29, %c0_30, %c4_31] : memref<2x22x22xf32, #tpu.memory_space<vmem>>, vector<1x16x16xf32>
    %42 = vector.shape_cast %41 : vector<1x16x16xf32> to vector<16x16xf32>
    %43 = vector.broadcast %40 : f32 to vector<16x16xf32>
    %44 = arith.mulf %43, %42 : vector<16x16xf32>
    %45 = arith.addf %39, %44 : vector<16x16xf32>
    %c5 = arith.constant 5 : index
    %46 = memref.load %arg1[%c5] : memref<99xf32, #tpu.memory_space<smem>>
    %c0_32 = arith.constant 0 : index
    %c0_33 = arith.constant 0 : index
    %c5_34 = arith.constant 5 : index
    %47 = vector.load %arg4[%c0_32, %c0_33, %c5_34] : memref<2x22x22xf32, #tpu.memory_space<vmem>>, vector<1x16x16xf32>
    %48 = vector.shape_cast %47 : vector<1x16x16xf32> to vector<16x16xf32>
    %49 = vector.broadcast %46 : f32 to vector<16x16xf32>
    %50 = arith.mulf %49, %48 : vector<16x16xf32>
    %51 = arith.addf %45, %50 : vector<16x16xf32>
    %c6 = arith.constant 6 : index
    %52 = memref.load %arg1[%c6] : memref<99xf32, #tpu.memory_space<smem>>
    %c0_35 = arith.constant 0 : index
    %c0_36 = arith.constant 0 : index
    %c6_37 = arith.constant 6 : index
    %53 = vector.load %arg4[%c0_35, %c0_36, %c6_37] : memref<2x22x22xf32, #tpu.memory_space<vmem>>, vector<1x16x16xf32>
    %54 = vector.shape_cast %53 : vector<1x16x16xf32> to vector<16x16xf32>
    %55 = vector.broadcast %52 : f32 to vector<16x16xf32>
    %56 = arith.mulf %55, %54 : vector<16x16xf32>
    %57 = arith.addf %51, %56 : vector<16x16xf32>
    %c7 = arith.constant 7 : index
    %58 = memref.load %arg1[%c7] : memref<99xf32, #tpu.memory_space<smem>>
    %c0_38 = arith.constant 0 : index
    %c1_39 = arith.constant 1 : index
    %c0_40 = arith.constant 0 : index
    %59 = vector.load %arg4[%c0_38, %c1_39, %c0_40] : memref<2x22x22xf32, #tpu.memory_space<vmem>>, vector<1x16x16xf32>
    %60 = vector.shape_cast %59 : vector<1x16x16xf32> to vector<16x16xf32>
    %61 = vector.broadcast %58 : f32 to vector<16x16xf32>
    %62 = arith.mulf %61, %60 : vector<16x16xf32>
    %63 = arith.addf %57, %62 : vector<16x16xf32>
    %c8 = arith.constant 8 : index
    %64 = memref.load %arg1[%c8] : memref<99xf32, #tpu.memory_space<smem>>
    %c0_41 = arith.constant 0 : index
    %c1_42 = arith.constant 1 : index
    %c1_43 = arith.constant 1 : index
    %65 = vector.load %arg4[%c0_41, %c1_42, %c1_43] : memref<2x22x22xf32, #tpu.memory_space<vmem>>, vector<1x16x16xf32>
    %66 = vector.shape_cast %65 : vector<1x16x16xf32> to vector<16x16xf32>
    %67 = vector.broadcast %64 : f32 to vector<16x16xf32>
    %68 = arith.mulf %67, %66 : vector<16x16xf32>
    %69 = arith.addf %63, %68 : vector<16x16xf32>
    %c9 = arith.constant 9 : index
    %70 = memref.load %arg1[%c9] : memref<99xf32, #tpu.memory_space<smem>>
    %c0_44 = arith.constant 0 : index
    %c1_45 = arith.constant 1 : index
    %c2_46 = arith.constant 2 : index
    %71 = vector.load %arg4[%c0_44, %c1_45, %c2_46] : memref<2x22x22xf32, #tpu.memory_space<vmem>>, vector<1x16x16xf32>
    %72 = vector.shape_cast %71 : vector<1x16x16xf32> to vector<16x16xf32>
    %73 = vector.broadcast %70 : f32 to vector<16x16xf32>
    %74 = arith.mulf %73, %72 : vector<16x16xf32>
    %75 = arith.addf %69, %74 : vector<16x16xf32>
    %c10 = arith.constant 10 : index
    %76 = memref.load %arg1[%c10] : memref<99xf32, #tpu.memory_space<smem>>
    %c0_47 = arith.constant 0 : index
    %c1_48 = arith.constant 1 : index
    %c3_49 = arith.constant 3 : index
    %77 = vector.load %arg4[%c0_47, %c1_48, %c3_49] : memref<2x22x22xf32, #tpu.memory_space<vmem>>, vector<1x16x16xf32>
    %78 = vector.shape_cast %77 : vector<1x16x16xf32> to vector<16x16xf32>
    %79 = vector.broadcast %76 : f32 to vector<16x16xf32>
    %80 = arith.mulf %79, %78 : vector<16x16xf32>
    %81 = arith.addf %75, %80 : vector<16x16xf32>
    %c11 = arith.constant 11 : index
    %82 = memref.load %arg1[%c11] : memref<99xf32, #tpu.memory_space<smem>>
    %c0_50 = arith.constant 0 : index
    %c1_51 = arith.constant 1 : index
    %c4_52 = arith.constant 4 : index
    %83 = vector.load %arg4[%c0_50, %c1_51, %c4_52] : memref<2x22x22xf32, #tpu.memory_space<vmem>>, vector<1x16x16xf32>
    %84 = vector.shape_cast %83 : vector<1x16x16xf32> to vector<16x16xf32>
    %85 = vector.broadcast %82 : f32 to vector<16x16xf32>
    %86 = arith.mulf %85, %84 : vector<16x16xf32>
    %87 = arith.addf %81, %86 : vector<16x16xf32>
    %c12 = arith.constant 12 : index
    %88 = memref.load %arg1[%c12] : memref<99xf32, #tpu.memory_space<smem>>
    %c0_53 = arith.constant 0 : index
    %c1_54 = arith.constant 1 : index
    %c5_55 = arith.constant 5 : index
    %89 = vector.load %arg4[%c0_53, %c1_54, %c5_55] : memref<2x22x22xf32, #tpu.memory_space<vmem>>, vector<1x16x16xf32>
    %90 = vector.shape_cast %89 : vector<1x16x16xf32> to vector<16x16xf32>
    %91 = vector.broadcast %88 : f32 to vector<16x16xf32>
    %92 = arith.mulf %91, %90 : vector<16x16xf32>
    %93 = arith.addf %87, %92 : vector<16x16xf32>
    %c13 = arith.constant 13 : index
    %94 = memref.load %arg1[%c13] : memref<99xf32, #tpu.memory_space<smem>>
    %c0_56 = arith.constant 0 : index
    %c1_57 = arith.constant 1 : index
    %c6_58 = arith.constant 6 : index
    %95 = vector.load %arg4[%c0_56, %c1_57, %c6_58] : memref<2x22x22xf32, #tpu.memory_space<vmem>>, vector<1x16x16xf32>
    %96 = vector.shape_cast %95 : vector<1x16x16xf32> to vector<16x16xf32>
    %97 = vector.broadcast %94 : f32 to vector<16x16xf32>
    %98 = arith.mulf %97, %96 : vector<16x16xf32>
    %99 = arith.addf %93, %98 : vector<16x16xf32>
    %c14 = arith.constant 14 : index
    %100 = memref.load %arg1[%c14] : memref<99xf32, #tpu.memory_space<smem>>
    %c0_59 = arith.constant 0 : index
    %c2_60 = arith.constant 2 : index
    %c0_61 = arith.constant 0 : index
    %101 = vector.load %arg4[%c0_59, %c2_60, %c0_61] : memref<2x22x22xf32, #tpu.memory_space<vmem>>, vector<1x16x16xf32>
    %102 = vector.shape_cast %101 : vector<1x16x16xf32> to vector<16x16xf32>
    %103 = vector.broadcast %100 : f32 to vector<16x16xf32>
    %104 = arith.mulf %103, %102 : vector<16x16xf32>
    %105 = arith.addf %99, %104 : vector<16x16xf32>
    %c15 = arith.constant 15 : index
    %106 = memref.load %arg1[%c15] : memref<99xf32, #tpu.memory_space<smem>>
    %c0_62 = arith.constant 0 : index
    %c2_63 = arith.constant 2 : index
    %c1_64 = arith.constant 1 : index
    %107 = vector.load %arg4[%c0_62, %c2_63, %c1_64] : memref<2x22x22xf32, #tpu.memory_space<vmem>>, vector<1x16x16xf32>
    %108 = vector.shape_cast %107 : vector<1x16x16xf32> to vector<16x16xf32>
    %109 = vector.broadcast %106 : f32 to vector<16x16xf32>
    %110 = arith.mulf %109, %108 : vector<16x16xf32>
    %111 = arith.addf %105, %110 : vector<16x16xf32>
    %c16 = arith.constant 16 : index
    %112 = memref.load %arg1[%c16] : memref<99xf32, #tpu.memory_space<smem>>
    %c0_65 = arith.constant 0 : index
    %c2_66 = arith.constant 2 : index
    %c2_67 = arith.constant 2 : index
    %113 = vector.load %arg4[%c0_65, %c2_66, %c2_67] : memref<2x22x22xf32, #tpu.memory_space<vmem>>, vector<1x16x16xf32>
    %114 = vector.shape_cast %113 : vector<1x16x16xf32> to vector<16x16xf32>
    %115 = vector.broadcast %112 : f32 to vector<16x16xf32>
    %116 = arith.mulf %115, %114 : vector<16x16xf32>
    %117 = arith.addf %111, %116 : vector<16x16xf32>
    %c17 = arith.constant 17 : index
    %118 = memref.load %arg1[%c17] : memref<99xf32, #tpu.memory_space<smem>>
    %c0_68 = arith.constant 0 : index
    %c2_69 = arith.constant 2 : index
    %c3_70 = arith.constant 3 : index
    %119 = vector.load %arg4[%c0_68, %c2_69, %c3_70] : memref<2x22x22xf32, #tpu.memory_space<vmem>>, vector<1x16x16xf32>
    %120 = vector.shape_cast %119 : vector<1x16x16xf32> to vector<16x16xf32>
    %121 = vector.broadcast %118 : f32 to vector<16x16xf32>
    %122 = arith.mulf %121, %120 : vector<16x16xf32>
    %123 = arith.addf %117, %122 : vector<16x16xf32>
    %c18 = arith.constant 18 : index
    %124 = memref.load %arg1[%c18] : memref<99xf32, #tpu.memory_space<smem>>
    %c0_71 = arith.constant 0 : index
    %c2_72 = arith.constant 2 : index
    %c4_73 = arith.constant 4 : index
    %125 = vector.load %arg4[%c0_71, %c2_72, %c4_73] : memref<2x22x22xf32, #tpu.memory_space<vmem>>, vector<1x16x16xf32>
    %126 = vector.shape_cast %125 : vector<1x16x16xf32> to vector<16x16xf32>
    %127 = vector.broadcast %124 : f32 to vector<16x16xf32>
    %128 = arith.mulf %127, %126 : vector<16x16xf32>
    %129 = arith.addf %123, %128 : vector<16x16xf32>
    %c19 = arith.constant 19 : index
    %130 = memref.load %arg1[%c19] : memref<99xf32, #tpu.memory_space<smem>>
    %c0_74 = arith.constant 0 : index
    %c2_75 = arith.constant 2 : index
    %c5_76 = arith.constant 5 : index
    %131 = vector.load %arg4[%c0_74, %c2_75, %c5_76] : memref<2x22x22xf32, #tpu.memory_space<vmem>>, vector<1x16x16xf32>
    %132 = vector.shape_cast %131 : vector<1x16x16xf32> to vector<16x16xf32>
    %133 = vector.broadcast %130 : f32 to vector<16x16xf32>
    %134 = arith.mulf %133, %132 : vector<16x16xf32>
    %135 = arith.addf %129, %134 : vector<16x16xf32>
    %c20 = arith.constant 20 : index
    %136 = memref.load %arg1[%c20] : memref<99xf32, #tpu.memory_space<smem>>
    %c0_77 = arith.constant 0 : index
    %c2_78 = arith.constant 2 : index
    %c6_79 = arith.constant 6 : index
    %137 = vector.load %arg4[%c0_77, %c2_78, %c6_79] : memref<2x22x22xf32, #tpu.memory_space<vmem>>, vector<1x16x16xf32>
    %138 = vector.shape_cast %137 : vector<1x16x16xf32> to vector<16x16xf32>
    %139 = vector.broadcast %136 : f32 to vector<16x16xf32>
    %140 = arith.mulf %139, %138 : vector<16x16xf32>
    %141 = arith.addf %135, %140 : vector<16x16xf32>
    %c21 = arith.constant 21 : index
    %142 = memref.load %arg1[%c21] : memref<99xf32, #tpu.memory_space<smem>>
    %c0_80 = arith.constant 0 : index
    %c3_81 = arith.constant 3 : index
    %c0_82 = arith.constant 0 : index
    %143 = vector.load %arg4[%c0_80, %c3_81, %c0_82] : memref<2x22x22xf32, #tpu.memory_space<vmem>>, vector<1x16x16xf32>
    %144 = vector.shape_cast %143 : vector<1x16x16xf32> to vector<16x16xf32>
    %145 = vector.broadcast %142 : f32 to vector<16x16xf32>
    %146 = arith.mulf %145, %144 : vector<16x16xf32>
    %147 = arith.addf %141, %146 : vector<16x16xf32>
    %c22 = arith.constant 22 : index
    %148 = memref.load %arg1[%c22] : memref<99xf32, #tpu.memory_space<smem>>
    %c0_83 = arith.constant 0 : index
    %c3_84 = arith.constant 3 : index
    %c1_85 = arith.constant 1 : index
    %149 = vector.load %arg4[%c0_83, %c3_84, %c1_85] : memref<2x22x22xf32, #tpu.memory_space<vmem>>, vector<1x16x16xf32>
    %150 = vector.shape_cast %149 : vector<1x16x16xf32> to vector<16x16xf32>
    %151 = vector.broadcast %148 : f32 to vector<16x16xf32>
    %152 = arith.mulf %151, %150 : vector<16x16xf32>
    %153 = arith.addf %147, %152 : vector<16x16xf32>
    %c23 = arith.constant 23 : index
    %154 = memref.load %arg1[%c23] : memref<99xf32, #tpu.memory_space<smem>>
    %c0_86 = arith.constant 0 : index
    %c3_87 = arith.constant 3 : index
    %c2_88 = arith.constant 2 : index
    %155 = vector.load %arg4[%c0_86, %c3_87, %c2_88] : memref<2x22x22xf32, #tpu.memory_space<vmem>>, vector<1x16x16xf32>
    %156 = vector.shape_cast %155 : vector<1x16x16xf32> to vector<16x16xf32>
    %157 = vector.broadcast %154 : f32 to vector<16x16xf32>
    %158 = arith.mulf %157, %156 : vector<16x16xf32>
    %159 = arith.addf %153, %158 : vector<16x16xf32>
    %c24 = arith.constant 24 : index
    %160 = memref.load %arg1[%c24] : memref<99xf32, #tpu.memory_space<smem>>
    %c0_89 = arith.constant 0 : index
    %c3_90 = arith.constant 3 : index
    %c3_91 = arith.constant 3 : index
    %161 = vector.load %arg4[%c0_89, %c3_90, %c3_91] : memref<2x22x22xf32, #tpu.memory_space<vmem>>, vector<1x16x16xf32>
    %162 = vector.shape_cast %161 : vector<1x16x16xf32> to vector<16x16xf32>
    %163 = vector.broadcast %160 : f32 to vector<16x16xf32>
    %164 = arith.mulf %163, %162 : vector<16x16xf32>
    %165 = arith.addf %159, %164 : vector<16x16xf32>
    %c25 = arith.constant 25 : index
    %166 = memref.load %arg1[%c25] : memref<99xf32, #tpu.memory_space<smem>>
    %c0_92 = arith.constant 0 : index
    %c3_93 = arith.constant 3 : index
    %c4_94 = arith.constant 4 : index
    %167 = vector.load %arg4[%c0_92, %c3_93, %c4_94] : memref<2x22x22xf32, #tpu.memory_space<vmem>>, vector<1x16x16xf32>
    %168 = vector.shape_cast %167 : vector<1x16x16xf32> to vector<16x16xf32>
    %169 = vector.broadcast %166 : f32 to vector<16x16xf32>
    %170 = arith.mulf %169, %168 : vector<16x16xf32>
    %171 = arith.addf %165, %170 : vector<16x16xf32>
    %c26 = arith.constant 26 : index
    %172 = memref.load %arg1[%c26] : memref<99xf32, #tpu.memory_space<smem>>
    %c0_95 = arith.constant 0 : index
    %c3_96 = arith.constant 3 : index
    %c5_97 = arith.constant 5 : index
    %173 = vector.load %arg4[%c0_95, %c3_96, %c5_97] : memref<2x22x22xf32, #tpu.memory_space<vmem>>, vector<1x16x16xf32>
    %174 = vector.shape_cast %173 : vector<1x16x16xf32> to vector<16x16xf32>
    %175 = vector.broadcast %172 : f32 to vector<16x16xf32>
    %176 = arith.mulf %175, %174 : vector<16x16xf32>
    %177 = arith.addf %171, %176 : vector<16x16xf32>
    %c27 = arith.constant 27 : index
    %178 = memref.load %arg1[%c27] : memref<99xf32, #tpu.memory_space<smem>>
    %c0_98 = arith.constant 0 : index
    %c3_99 = arith.constant 3 : index
    %c6_100 = arith.constant 6 : index
    %179 = vector.load %arg4[%c0_98, %c3_99, %c6_100] : memref<2x22x22xf32, #tpu.memory_space<vmem>>, vector<1x16x16xf32>
    %180 = vector.shape_cast %179 : vector<1x16x16xf32> to vector<16x16xf32>
    %181 = vector.broadcast %178 : f32 to vector<16x16xf32>
    %182 = arith.mulf %181, %180 : vector<16x16xf32>
    %183 = arith.addf %177, %182 : vector<16x16xf32>
    %c28 = arith.constant 28 : index
    %184 = memref.load %arg1[%c28] : memref<99xf32, #tpu.memory_space<smem>>
    %c0_101 = arith.constant 0 : index
    %c4_102 = arith.constant 4 : index
    %c0_103 = arith.constant 0 : index
    %185 = vector.load %arg4[%c0_101, %c4_102, %c0_103] : memref<2x22x22xf32, #tpu.memory_space<vmem>>, vector<1x16x16xf32>
    %186 = vector.shape_cast %185 : vector<1x16x16xf32> to vector<16x16xf32>
    %187 = vector.broadcast %184 : f32 to vector<16x16xf32>
    %188 = arith.mulf %187, %186 : vector<16x16xf32>
    %189 = arith.addf %183, %188 : vector<16x16xf32>
    %c29 = arith.constant 29 : index
    %190 = memref.load %arg1[%c29] : memref<99xf32, #tpu.memory_space<smem>>
    %c0_104 = arith.constant 0 : index
    %c4_105 = arith.constant 4 : index
    %c1_106 = arith.constant 1 : index
    %191 = vector.load %arg4[%c0_104, %c4_105, %c1_106] : memref<2x22x22xf32, #tpu.memory_space<vmem>>, vector<1x16x16xf32>
    %192 = vector.shape_cast %191 : vector<1x16x16xf32> to vector<16x16xf32>
    %193 = vector.broadcast %190 : f32 to vector<16x16xf32>
    %194 = arith.mulf %193, %192 : vector<16x16xf32>
    %195 = arith.addf %189, %194 : vector<16x16xf32>
    %c30 = arith.constant 30 : index
    %196 = memref.load %arg1[%c30] : memref<99xf32, #tpu.memory_space<smem>>
    %c0_107 = arith.constant 0 : index
    %c4_108 = arith.constant 4 : index
    %c2_109 = arith.constant 2 : index
    %197 = vector.load %arg4[%c0_107, %c4_108, %c2_109] : memref<2x22x22xf32, #tpu.memory_space<vmem>>, vector<1x16x16xf32>
    %198 = vector.shape_cast %197 : vector<1x16x16xf32> to vector<16x16xf32>
    %199 = vector.broadcast %196 : f32 to vector<16x16xf32>
    %200 = arith.mulf %199, %198 : vector<16x16xf32>
    %201 = arith.addf %195, %200 : vector<16x16xf32>
    %c31 = arith.constant 31 : index
    %202 = memref.load %arg1[%c31] : memref<99xf32, #tpu.memory_space<smem>>
    %c0_110 = arith.constant 0 : index
    %c4_111 = arith.constant 4 : index
    %c3_112 = arith.constant 3 : index
    %203 = vector.load %arg4[%c0_110, %c4_111, %c3_112] : memref<2x22x22xf32, #tpu.memory_space<vmem>>, vector<1x16x16xf32>
    %204 = vector.shape_cast %203 : vector<1x16x16xf32> to vector<16x16xf32>
    %205 = vector.broadcast %202 : f32 to vector<16x16xf32>
    %206 = arith.mulf %205, %204 : vector<16x16xf32>
    %207 = arith.addf %201, %206 : vector<16x16xf32>
    %c32 = arith.constant 32 : index
    %208 = memref.load %arg1[%c32] : memref<99xf32, #tpu.memory_space<smem>>
    %c0_113 = arith.constant 0 : index
    %c4_114 = arith.constant 4 : index
    %c4_115 = arith.constant 4 : index
    %209 = vector.load %arg4[%c0_113, %c4_114, %c4_115] : memref<2x22x22xf32, #tpu.memory_space<vmem>>, vector<1x16x16xf32>
    %210 = vector.shape_cast %209 : vector<1x16x16xf32> to vector<16x16xf32>
    %211 = vector.broadcast %208 : f32 to vector<16x16xf32>
    %212 = arith.mulf %211, %210 : vector<16x16xf32>
    %213 = arith.addf %207, %212 : vector<16x16xf32>
    %c33 = arith.constant 33 : index
    %214 = memref.load %arg1[%c33] : memref<99xf32, #tpu.memory_space<smem>>
    %c0_116 = arith.constant 0 : index
    %c4_117 = arith.constant 4 : index
    %c5_118 = arith.constant 5 : index
    %215 = vector.load %arg4[%c0_116, %c4_117, %c5_118] : memref<2x22x22xf32, #tpu.memory_space<vmem>>, vector<1x16x16xf32>
    %216 = vector.shape_cast %215 : vector<1x16x16xf32> to vector<16x16xf32>
    %217 = vector.broadcast %214 : f32 to vector<16x16xf32>
    %218 = arith.mulf %217, %216 : vector<16x16xf32>
    %219 = arith.addf %213, %218 : vector<16x16xf32>
    %c34 = arith.constant 34 : index
    %220 = memref.load %arg1[%c34] : memref<99xf32, #tpu.memory_space<smem>>
    %c0_119 = arith.constant 0 : index
    %c4_120 = arith.constant 4 : index
    %c6_121 = arith.constant 6 : index
    %221 = vector.load %arg4[%c0_119, %c4_120, %c6_121] : memref<2x22x22xf32, #tpu.memory_space<vmem>>, vector<1x16x16xf32>
    %222 = vector.shape_cast %221 : vector<1x16x16xf32> to vector<16x16xf32>
    %223 = vector.broadcast %220 : f32 to vector<16x16xf32>
    %224 = arith.mulf %223, %222 : vector<16x16xf32>
    %225 = arith.addf %219, %224 : vector<16x16xf32>
    %c35 = arith.constant 35 : index
    %226 = memref.load %arg1[%c35] : memref<99xf32, #tpu.memory_space<smem>>
    %c0_122 = arith.constant 0 : index
    %c5_123 = arith.constant 5 : index
    %c0_124 = arith.constant 0 : index
    %227 = vector.load %arg4[%c0_122, %c5_123, %c0_124] : memref<2x22x22xf32, #tpu.memory_space<vmem>>, vector<1x16x16xf32>
    %228 = vector.shape_cast %227 : vector<1x16x16xf32> to vector<16x16xf32>
    %229 = vector.broadcast %226 : f32 to vector<16x16xf32>
    %230 = arith.mulf %229, %228 : vector<16x16xf32>
    %231 = arith.addf %225, %230 : vector<16x16xf32>
    %c36 = arith.constant 36 : index
    %232 = memref.load %arg1[%c36] : memref<99xf32, #tpu.memory_space<smem>>
    %c0_125 = arith.constant 0 : index
    %c5_126 = arith.constant 5 : index
    %c1_127 = arith.constant 1 : index
    %233 = vector.load %arg4[%c0_125, %c5_126, %c1_127] : memref<2x22x22xf32, #tpu.memory_space<vmem>>, vector<1x16x16xf32>
    %234 = vector.shape_cast %233 : vector<1x16x16xf32> to vector<16x16xf32>
    %235 = vector.broadcast %232 : f32 to vector<16x16xf32>
    %236 = arith.mulf %235, %234 : vector<16x16xf32>
    %237 = arith.addf %231, %236 : vector<16x16xf32>
    %c37 = arith.constant 37 : index
    %238 = memref.load %arg1[%c37] : memref<99xf32, #tpu.memory_space<smem>>
    %c0_128 = arith.constant 0 : index
    %c5_129 = arith.constant 5 : index
    %c2_130 = arith.constant 2 : index
    %239 = vector.load %arg4[%c0_128, %c5_129, %c2_130] : memref<2x22x22xf32, #tpu.memory_space<vmem>>, vector<1x16x16xf32>
    %240 = vector.shape_cast %239 : vector<1x16x16xf32> to vector<16x16xf32>
    %241 = vector.broadcast %238 : f32 to vector<16x16xf32>
    %242 = arith.mulf %241, %240 : vector<16x16xf32>
    %243 = arith.addf %237, %242 : vector<16x16xf32>
    %c38 = arith.constant 38 : index
    %244 = memref.load %arg1[%c38] : memref<99xf32, #tpu.memory_space<smem>>
    %c0_131 = arith.constant 0 : index
    %c5_132 = arith.constant 5 : index
    %c3_133 = arith.constant 3 : index
    %245 = vector.load %arg4[%c0_131, %c5_132, %c3_133] : memref<2x22x22xf32, #tpu.memory_space<vmem>>, vector<1x16x16xf32>
    %246 = vector.shape_cast %245 : vector<1x16x16xf32> to vector<16x16xf32>
    %247 = vector.broadcast %244 : f32 to vector<16x16xf32>
    %248 = arith.mulf %247, %246 : vector<16x16xf32>
    %249 = arith.addf %243, %248 : vector<16x16xf32>
    %c39 = arith.constant 39 : index
    %250 = memref.load %arg1[%c39] : memref<99xf32, #tpu.memory_space<smem>>
    %c0_134 = arith.constant 0 : index
    %c5_135 = arith.constant 5 : index
    %c4_136 = arith.constant 4 : index
    %251 = vector.load %arg4[%c0_134, %c5_135, %c4_136] : memref<2x22x22xf32, #tpu.memory_space<vmem>>, vector<1x16x16xf32>
    %252 = vector.shape_cast %251 : vector<1x16x16xf32> to vector<16x16xf32>
    %253 = vector.broadcast %250 : f32 to vector<16x16xf32>
    %254 = arith.mulf %253, %252 : vector<16x16xf32>
    %255 = arith.addf %249, %254 : vector<16x16xf32>
    %c40 = arith.constant 40 : index
    %256 = memref.load %arg1[%c40] : memref<99xf32, #tpu.memory_space<smem>>
    %c0_137 = arith.constant 0 : index
    %c5_138 = arith.constant 5 : index
    %c5_139 = arith.constant 5 : index
    %257 = vector.load %arg4[%c0_137, %c5_138, %c5_139] : memref<2x22x22xf32, #tpu.memory_space<vmem>>, vector<1x16x16xf32>
    %258 = vector.shape_cast %257 : vector<1x16x16xf32> to vector<16x16xf32>
    %259 = vector.broadcast %256 : f32 to vector<16x16xf32>
    %260 = arith.mulf %259, %258 : vector<16x16xf32>
    %261 = arith.addf %255, %260 : vector<16x16xf32>
    %c41 = arith.constant 41 : index
    %262 = memref.load %arg1[%c41] : memref<99xf32, #tpu.memory_space<smem>>
    %c0_140 = arith.constant 0 : index
    %c5_141 = arith.constant 5 : index
    %c6_142 = arith.constant 6 : index
    %263 = vector.load %arg4[%c0_140, %c5_141, %c6_142] : memref<2x22x22xf32, #tpu.memory_space<vmem>>, vector<1x16x16xf32>
    %264 = vector.shape_cast %263 : vector<1x16x16xf32> to vector<16x16xf32>
    %265 = vector.broadcast %262 : f32 to vector<16x16xf32>
    %266 = arith.mulf %265, %264 : vector<16x16xf32>
    %267 = arith.addf %261, %266 : vector<16x16xf32>
    %c42 = arith.constant 42 : index
    %268 = memref.load %arg1[%c42] : memref<99xf32, #tpu.memory_space<smem>>
    %c0_143 = arith.constant 0 : index
    %c6_144 = arith.constant 6 : index
    %c0_145 = arith.constant 0 : index
    %269 = vector.load %arg4[%c0_143, %c6_144, %c0_145] : memref<2x22x22xf32, #tpu.memory_space<vmem>>, vector<1x16x16xf32>
    %270 = vector.shape_cast %269 : vector<1x16x16xf32> to vector<16x16xf32>
    %271 = vector.broadcast %268 : f32 to vector<16x16xf32>
    %272 = arith.mulf %271, %270 : vector<16x16xf32>
    %273 = arith.addf %267, %272 : vector<16x16xf32>
    %c43 = arith.constant 43 : index
    %274 = memref.load %arg1[%c43] : memref<99xf32, #tpu.memory_space<smem>>
    %c0_146 = arith.constant 0 : index
    %c6_147 = arith.constant 6 : index
    %c1_148 = arith.constant 1 : index
    %275 = vector.load %arg4[%c0_146, %c6_147, %c1_148] : memref<2x22x22xf32, #tpu.memory_space<vmem>>, vector<1x16x16xf32>
    %276 = vector.shape_cast %275 : vector<1x16x16xf32> to vector<16x16xf32>
    %277 = vector.broadcast %274 : f32 to vector<16x16xf32>
    %278 = arith.mulf %277, %276 : vector<16x16xf32>
    %279 = arith.addf %273, %278 : vector<16x16xf32>
    %c44 = arith.constant 44 : index
    %280 = memref.load %arg1[%c44] : memref<99xf32, #tpu.memory_space<smem>>
    %c0_149 = arith.constant 0 : index
    %c6_150 = arith.constant 6 : index
    %c2_151 = arith.constant 2 : index
    %281 = vector.load %arg4[%c0_149, %c6_150, %c2_151] : memref<2x22x22xf32, #tpu.memory_space<vmem>>, vector<1x16x16xf32>
    %282 = vector.shape_cast %281 : vector<1x16x16xf32> to vector<16x16xf32>
    %283 = vector.broadcast %280 : f32 to vector<16x16xf32>
    %284 = arith.mulf %283, %282 : vector<16x16xf32>
    %285 = arith.addf %279, %284 : vector<16x16xf32>
    %c45 = arith.constant 45 : index
    %286 = memref.load %arg1[%c45] : memref<99xf32, #tpu.memory_space<smem>>
    %c0_152 = arith.constant 0 : index
    %c6_153 = arith.constant 6 : index
    %c3_154 = arith.constant 3 : index
    %287 = vector.load %arg4[%c0_152, %c6_153, %c3_154] : memref<2x22x22xf32, #tpu.memory_space<vmem>>, vector<1x16x16xf32>
    %288 = vector.shape_cast %287 : vector<1x16x16xf32> to vector<16x16xf32>
    %289 = vector.broadcast %286 : f32 to vector<16x16xf32>
    %290 = arith.mulf %289, %288 : vector<16x16xf32>
    %291 = arith.addf %285, %290 : vector<16x16xf32>
    %c46 = arith.constant 46 : index
    %292 = memref.load %arg1[%c46] : memref<99xf32, #tpu.memory_space<smem>>
    %c0_155 = arith.constant 0 : index
    %c6_156 = arith.constant 6 : index
    %c4_157 = arith.constant 4 : index
    %293 = vector.load %arg4[%c0_155, %c6_156, %c4_157] : memref<2x22x22xf32, #tpu.memory_space<vmem>>, vector<1x16x16xf32>
    %294 = vector.shape_cast %293 : vector<1x16x16xf32> to vector<16x16xf32>
    %295 = vector.broadcast %292 : f32 to vector<16x16xf32>
    %296 = arith.mulf %295, %294 : vector<16x16xf32>
    %297 = arith.addf %291, %296 : vector<16x16xf32>
    %c47 = arith.constant 47 : index
    %298 = memref.load %arg1[%c47] : memref<99xf32, #tpu.memory_space<smem>>
    %c0_158 = arith.constant 0 : index
    %c6_159 = arith.constant 6 : index
    %c5_160 = arith.constant 5 : index
    %299 = vector.load %arg4[%c0_158, %c6_159, %c5_160] : memref<2x22x22xf32, #tpu.memory_space<vmem>>, vector<1x16x16xf32>
    %300 = vector.shape_cast %299 : vector<1x16x16xf32> to vector<16x16xf32>
    %301 = vector.broadcast %298 : f32 to vector<16x16xf32>
    %302 = arith.mulf %301, %300 : vector<16x16xf32>
    %303 = arith.addf %297, %302 : vector<16x16xf32>
    %c48 = arith.constant 48 : index
    %304 = memref.load %arg1[%c48] : memref<99xf32, #tpu.memory_space<smem>>
    %c0_161 = arith.constant 0 : index
    %c6_162 = arith.constant 6 : index
    %c6_163 = arith.constant 6 : index
    %305 = vector.load %arg4[%c0_161, %c6_162, %c6_163] : memref<2x22x22xf32, #tpu.memory_space<vmem>>, vector<1x16x16xf32>
    %306 = vector.shape_cast %305 : vector<1x16x16xf32> to vector<16x16xf32>
    %307 = vector.broadcast %304 : f32 to vector<16x16xf32>
    %308 = arith.mulf %307, %306 : vector<16x16xf32>
    %309 = arith.addf %303, %308 : vector<16x16xf32>
    %c49 = arith.constant 49 : index
    %310 = memref.load %arg1[%c49] : memref<99xf32, #tpu.memory_space<smem>>
    %c1_164 = arith.constant 1 : index
    %c0_165 = arith.constant 0 : index
    %c0_166 = arith.constant 0 : index
    %311 = vector.load %arg4[%c1_164, %c0_165, %c0_166] : memref<2x22x22xf32, #tpu.memory_space<vmem>>, vector<1x16x16xf32>
    %312 = vector.shape_cast %311 : vector<1x16x16xf32> to vector<16x16xf32>
    %313 = vector.broadcast %310 : f32 to vector<16x16xf32>
    %314 = arith.mulf %313, %312 : vector<16x16xf32>
    %315 = arith.addf %309, %314 : vector<16x16xf32>
    %c50 = arith.constant 50 : index
    %316 = memref.load %arg1[%c50] : memref<99xf32, #tpu.memory_space<smem>>
    %c1_167 = arith.constant 1 : index
    %c0_168 = arith.constant 0 : index
    %c1_169 = arith.constant 1 : index
    %317 = vector.load %arg4[%c1_167, %c0_168, %c1_169] : memref<2x22x22xf32, #tpu.memory_space<vmem>>, vector<1x16x16xf32>
    %318 = vector.shape_cast %317 : vector<1x16x16xf32> to vector<16x16xf32>
    %319 = vector.broadcast %316 : f32 to vector<16x16xf32>
    %320 = arith.mulf %319, %318 : vector<16x16xf32>
    %321 = arith.addf %315, %320 : vector<16x16xf32>
    %c51 = arith.constant 51 : index
    %322 = memref.load %arg1[%c51] : memref<99xf32, #tpu.memory_space<smem>>
    %c1_170 = arith.constant 1 : index
    %c0_171 = arith.constant 0 : index
    %c2_172 = arith.constant 2 : index
    %323 = vector.load %arg4[%c1_170, %c0_171, %c2_172] : memref<2x22x22xf32, #tpu.memory_space<vmem>>, vector<1x16x16xf32>
    %324 = vector.shape_cast %323 : vector<1x16x16xf32> to vector<16x16xf32>
    %325 = vector.broadcast %322 : f32 to vector<16x16xf32>
    %326 = arith.mulf %325, %324 : vector<16x16xf32>
    %327 = arith.addf %321, %326 : vector<16x16xf32>
    %c52 = arith.constant 52 : index
    %328 = memref.load %arg1[%c52] : memref<99xf32, #tpu.memory_space<smem>>
    %c1_173 = arith.constant 1 : index
    %c0_174 = arith.constant 0 : index
    %c3_175 = arith.constant 3 : index
    %329 = vector.load %arg4[%c1_173, %c0_174, %c3_175] : memref<2x22x22xf32, #tpu.memory_space<vmem>>, vector<1x16x16xf32>
    %330 = vector.shape_cast %329 : vector<1x16x16xf32> to vector<16x16xf32>
    %331 = vector.broadcast %328 : f32 to vector<16x16xf32>
    %332 = arith.mulf %331, %330 : vector<16x16xf32>
    %333 = arith.addf %327, %332 : vector<16x16xf32>
    %c53 = arith.constant 53 : index
    %334 = memref.load %arg1[%c53] : memref<99xf32, #tpu.memory_space<smem>>
    %c1_176 = arith.constant 1 : index
    %c0_177 = arith.constant 0 : index
    %c4_178 = arith.constant 4 : index
    %335 = vector.load %arg4[%c1_176, %c0_177, %c4_178] : memref<2x22x22xf32, #tpu.memory_space<vmem>>, vector<1x16x16xf32>
    %336 = vector.shape_cast %335 : vector<1x16x16xf32> to vector<16x16xf32>
    %337 = vector.broadcast %334 : f32 to vector<16x16xf32>
    %338 = arith.mulf %337, %336 : vector<16x16xf32>
    %339 = arith.addf %333, %338 : vector<16x16xf32>
    %c54 = arith.constant 54 : index
    %340 = memref.load %arg1[%c54] : memref<99xf32, #tpu.memory_space<smem>>
    %c1_179 = arith.constant 1 : index
    %c0_180 = arith.constant 0 : index
    %c5_181 = arith.constant 5 : index
    %341 = vector.load %arg4[%c1_179, %c0_180, %c5_181] : memref<2x22x22xf32, #tpu.memory_space<vmem>>, vector<1x16x16xf32>
    %342 = vector.shape_cast %341 : vector<1x16x16xf32> to vector<16x16xf32>
    %343 = vector.broadcast %340 : f32 to vector<16x16xf32>
    %344 = arith.mulf %343, %342 : vector<16x16xf32>
    %345 = arith.addf %339, %344 : vector<16x16xf32>
    %c55 = arith.constant 55 : index
    %346 = memref.load %arg1[%c55] : memref<99xf32, #tpu.memory_space<smem>>
    %c1_182 = arith.constant 1 : index
    %c0_183 = arith.constant 0 : index
    %c6_184 = arith.constant 6 : index
    %347 = vector.load %arg4[%c1_182, %c0_183, %c6_184] : memref<2x22x22xf32, #tpu.memory_space<vmem>>, vector<1x16x16xf32>
    %348 = vector.shape_cast %347 : vector<1x16x16xf32> to vector<16x16xf32>
    %349 = vector.broadcast %346 : f32 to vector<16x16xf32>
    %350 = arith.mulf %349, %348 : vector<16x16xf32>
    %351 = arith.addf %345, %350 : vector<16x16xf32>
    %c56 = arith.constant 56 : index
    %352 = memref.load %arg1[%c56] : memref<99xf32, #tpu.memory_space<smem>>
    %c1_185 = arith.constant 1 : index
    %c1_186 = arith.constant 1 : index
    %c0_187 = arith.constant 0 : index
    %353 = vector.load %arg4[%c1_185, %c1_186, %c0_187] : memref<2x22x22xf32, #tpu.memory_space<vmem>>, vector<1x16x16xf32>
    %354 = vector.shape_cast %353 : vector<1x16x16xf32> to vector<16x16xf32>
    %355 = vector.broadcast %352 : f32 to vector<16x16xf32>
    %356 = arith.mulf %355, %354 : vector<16x16xf32>
    %357 = arith.addf %351, %356 : vector<16x16xf32>
    %c57 = arith.constant 57 : index
    %358 = memref.load %arg1[%c57] : memref<99xf32, #tpu.memory_space<smem>>
    %c1_188 = arith.constant 1 : index
    %c1_189 = arith.constant 1 : index
    %c1_190 = arith.constant 1 : index
    %359 = vector.load %arg4[%c1_188, %c1_189, %c1_190] : memref<2x22x22xf32, #tpu.memory_space<vmem>>, vector<1x16x16xf32>
    %360 = vector.shape_cast %359 : vector<1x16x16xf32> to vector<16x16xf32>
    %361 = vector.broadcast %358 : f32 to vector<16x16xf32>
    %362 = arith.mulf %361, %360 : vector<16x16xf32>
    %363 = arith.addf %357, %362 : vector<16x16xf32>
    %c58 = arith.constant 58 : index
    %364 = memref.load %arg1[%c58] : memref<99xf32, #tpu.memory_space<smem>>
    %c1_191 = arith.constant 1 : index
    %c1_192 = arith.constant 1 : index
    %c2_193 = arith.constant 2 : index
    %365 = vector.load %arg4[%c1_191, %c1_192, %c2_193] : memref<2x22x22xf32, #tpu.memory_space<vmem>>, vector<1x16x16xf32>
    %366 = vector.shape_cast %365 : vector<1x16x16xf32> to vector<16x16xf32>
    %367 = vector.broadcast %364 : f32 to vector<16x16xf32>
    %368 = arith.mulf %367, %366 : vector<16x16xf32>
    %369 = arith.addf %363, %368 : vector<16x16xf32>
    %c59 = arith.constant 59 : index
    %370 = memref.load %arg1[%c59] : memref<99xf32, #tpu.memory_space<smem>>
    %c1_194 = arith.constant 1 : index
    %c1_195 = arith.constant 1 : index
    %c3_196 = arith.constant 3 : index
    %371 = vector.load %arg4[%c1_194, %c1_195, %c3_196] : memref<2x22x22xf32, #tpu.memory_space<vmem>>, vector<1x16x16xf32>
    %372 = vector.shape_cast %371 : vector<1x16x16xf32> to vector<16x16xf32>
    %373 = vector.broadcast %370 : f32 to vector<16x16xf32>
    %374 = arith.mulf %373, %372 : vector<16x16xf32>
    %375 = arith.addf %369, %374 : vector<16x16xf32>
    %c60 = arith.constant 60 : index
    %376 = memref.load %arg1[%c60] : memref<99xf32, #tpu.memory_space<smem>>
    %c1_197 = arith.constant 1 : index
    %c1_198 = arith.constant 1 : index
    %c4_199 = arith.constant 4 : index
    %377 = vector.load %arg4[%c1_197, %c1_198, %c4_199] : memref<2x22x22xf32, #tpu.memory_space<vmem>>, vector<1x16x16xf32>
    %378 = vector.shape_cast %377 : vector<1x16x16xf32> to vector<16x16xf32>
    %379 = vector.broadcast %376 : f32 to vector<16x16xf32>
    %380 = arith.mulf %379, %378 : vector<16x16xf32>
    %381 = arith.addf %375, %380 : vector<16x16xf32>
    %c61 = arith.constant 61 : index
    %382 = memref.load %arg1[%c61] : memref<99xf32, #tpu.memory_space<smem>>
    %c1_200 = arith.constant 1 : index
    %c1_201 = arith.constant 1 : index
    %c5_202 = arith.constant 5 : index
    %383 = vector.load %arg4[%c1_200, %c1_201, %c5_202] : memref<2x22x22xf32, #tpu.memory_space<vmem>>, vector<1x16x16xf32>
    %384 = vector.shape_cast %383 : vector<1x16x16xf32> to vector<16x16xf32>
    %385 = vector.broadcast %382 : f32 to vector<16x16xf32>
    %386 = arith.mulf %385, %384 : vector<16x16xf32>
    %387 = arith.addf %381, %386 : vector<16x16xf32>
    %c62 = arith.constant 62 : index
    %388 = memref.load %arg1[%c62] : memref<99xf32, #tpu.memory_space<smem>>
    %c1_203 = arith.constant 1 : index
    %c1_204 = arith.constant 1 : index
    %c6_205 = arith.constant 6 : index
    %389 = vector.load %arg4[%c1_203, %c1_204, %c6_205] : memref<2x22x22xf32, #tpu.memory_space<vmem>>, vector<1x16x16xf32>
    %390 = vector.shape_cast %389 : vector<1x16x16xf32> to vector<16x16xf32>
    %391 = vector.broadcast %388 : f32 to vector<16x16xf32>
    %392 = arith.mulf %391, %390 : vector<16x16xf32>
    %393 = arith.addf %387, %392 : vector<16x16xf32>
    %c63 = arith.constant 63 : index
    %394 = memref.load %arg1[%c63] : memref<99xf32, #tpu.memory_space<smem>>
    %c1_206 = arith.constant 1 : index
    %c2_207 = arith.constant 2 : index
    %c0_208 = arith.constant 0 : index
    %395 = vector.load %arg4[%c1_206, %c2_207, %c0_208] : memref<2x22x22xf32, #tpu.memory_space<vmem>>, vector<1x16x16xf32>
    %396 = vector.shape_cast %395 : vector<1x16x16xf32> to vector<16x16xf32>
    %397 = vector.broadcast %394 : f32 to vector<16x16xf32>
    %398 = arith.mulf %397, %396 : vector<16x16xf32>
    %399 = arith.addf %393, %398 : vector<16x16xf32>
    %c64 = arith.constant 64 : index
    %400 = memref.load %arg1[%c64] : memref<99xf32, #tpu.memory_space<smem>>
    %c1_209 = arith.constant 1 : index
    %c2_210 = arith.constant 2 : index
    %c1_211 = arith.constant 1 : index
    %401 = vector.load %arg4[%c1_209, %c2_210, %c1_211] : memref<2x22x22xf32, #tpu.memory_space<vmem>>, vector<1x16x16xf32>
    %402 = vector.shape_cast %401 : vector<1x16x16xf32> to vector<16x16xf32>
    %403 = vector.broadcast %400 : f32 to vector<16x16xf32>
    %404 = arith.mulf %403, %402 : vector<16x16xf32>
    %405 = arith.addf %399, %404 : vector<16x16xf32>
    %c65 = arith.constant 65 : index
    %406 = memref.load %arg1[%c65] : memref<99xf32, #tpu.memory_space<smem>>
    %c1_212 = arith.constant 1 : index
    %c2_213 = arith.constant 2 : index
    %c2_214 = arith.constant 2 : index
    %407 = vector.load %arg4[%c1_212, %c2_213, %c2_214] : memref<2x22x22xf32, #tpu.memory_space<vmem>>, vector<1x16x16xf32>
    %408 = vector.shape_cast %407 : vector<1x16x16xf32> to vector<16x16xf32>
    %409 = vector.broadcast %406 : f32 to vector<16x16xf32>
    %410 = arith.mulf %409, %408 : vector<16x16xf32>
    %411 = arith.addf %405, %410 : vector<16x16xf32>
    %c66 = arith.constant 66 : index
    %412 = memref.load %arg1[%c66] : memref<99xf32, #tpu.memory_space<smem>>
    %c1_215 = arith.constant 1 : index
    %c2_216 = arith.constant 2 : index
    %c3_217 = arith.constant 3 : index
    %413 = vector.load %arg4[%c1_215, %c2_216, %c3_217] : memref<2x22x22xf32, #tpu.memory_space<vmem>>, vector<1x16x16xf32>
    %414 = vector.shape_cast %413 : vector<1x16x16xf32> to vector<16x16xf32>
    %415 = vector.broadcast %412 : f32 to vector<16x16xf32>
    %416 = arith.mulf %415, %414 : vector<16x16xf32>
    %417 = arith.addf %411, %416 : vector<16x16xf32>
    %c67 = arith.constant 67 : index
    %418 = memref.load %arg1[%c67] : memref<99xf32, #tpu.memory_space<smem>>
    %c1_218 = arith.constant 1 : index
    %c2_219 = arith.constant 2 : index
    %c4_220 = arith.constant 4 : index
    %419 = vector.load %arg4[%c1_218, %c2_219, %c4_220] : memref<2x22x22xf32, #tpu.memory_space<vmem>>, vector<1x16x16xf32>
    %420 = vector.shape_cast %419 : vector<1x16x16xf32> to vector<16x16xf32>
    %421 = vector.broadcast %418 : f32 to vector<16x16xf32>
    %422 = arith.mulf %421, %420 : vector<16x16xf32>
    %423 = arith.addf %417, %422 : vector<16x16xf32>
    %c68 = arith.constant 68 : index
    %424 = memref.load %arg1[%c68] : memref<99xf32, #tpu.memory_space<smem>>
    %c1_221 = arith.constant 1 : index
    %c2_222 = arith.constant 2 : index
    %c5_223 = arith.constant 5 : index
    %425 = vector.load %arg4[%c1_221, %c2_222, %c5_223] : memref<2x22x22xf32, #tpu.memory_space<vmem>>, vector<1x16x16xf32>
    %426 = vector.shape_cast %425 : vector<1x16x16xf32> to vector<16x16xf32>
    %427 = vector.broadcast %424 : f32 to vector<16x16xf32>
    %428 = arith.mulf %427, %426 : vector<16x16xf32>
    %429 = arith.addf %423, %428 : vector<16x16xf32>
    %c69 = arith.constant 69 : index
    %430 = memref.load %arg1[%c69] : memref<99xf32, #tpu.memory_space<smem>>
    %c1_224 = arith.constant 1 : index
    %c2_225 = arith.constant 2 : index
    %c6_226 = arith.constant 6 : index
    %431 = vector.load %arg4[%c1_224, %c2_225, %c6_226] : memref<2x22x22xf32, #tpu.memory_space<vmem>>, vector<1x16x16xf32>
    %432 = vector.shape_cast %431 : vector<1x16x16xf32> to vector<16x16xf32>
    %433 = vector.broadcast %430 : f32 to vector<16x16xf32>
    %434 = arith.mulf %433, %432 : vector<16x16xf32>
    %435 = arith.addf %429, %434 : vector<16x16xf32>
    %c70 = arith.constant 70 : index
    %436 = memref.load %arg1[%c70] : memref<99xf32, #tpu.memory_space<smem>>
    %c1_227 = arith.constant 1 : index
    %c3_228 = arith.constant 3 : index
    %c0_229 = arith.constant 0 : index
    %437 = vector.load %arg4[%c1_227, %c3_228, %c0_229] : memref<2x22x22xf32, #tpu.memory_space<vmem>>, vector<1x16x16xf32>
    %438 = vector.shape_cast %437 : vector<1x16x16xf32> to vector<16x16xf32>
    %439 = vector.broadcast %436 : f32 to vector<16x16xf32>
    %440 = arith.mulf %439, %438 : vector<16x16xf32>
    %441 = arith.addf %435, %440 : vector<16x16xf32>
    %c71 = arith.constant 71 : index
    %442 = memref.load %arg1[%c71] : memref<99xf32, #tpu.memory_space<smem>>
    %c1_230 = arith.constant 1 : index
    %c3_231 = arith.constant 3 : index
    %c1_232 = arith.constant 1 : index
    %443 = vector.load %arg4[%c1_230, %c3_231, %c1_232] : memref<2x22x22xf32, #tpu.memory_space<vmem>>, vector<1x16x16xf32>
    %444 = vector.shape_cast %443 : vector<1x16x16xf32> to vector<16x16xf32>
    %445 = vector.broadcast %442 : f32 to vector<16x16xf32>
    %446 = arith.mulf %445, %444 : vector<16x16xf32>
    %447 = arith.addf %441, %446 : vector<16x16xf32>
    %c72 = arith.constant 72 : index
    %448 = memref.load %arg1[%c72] : memref<99xf32, #tpu.memory_space<smem>>
    %c1_233 = arith.constant 1 : index
    %c3_234 = arith.constant 3 : index
    %c2_235 = arith.constant 2 : index
    %449 = vector.load %arg4[%c1_233, %c3_234, %c2_235] : memref<2x22x22xf32, #tpu.memory_space<vmem>>, vector<1x16x16xf32>
    %450 = vector.shape_cast %449 : vector<1x16x16xf32> to vector<16x16xf32>
    %451 = vector.broadcast %448 : f32 to vector<16x16xf32>
    %452 = arith.mulf %451, %450 : vector<16x16xf32>
    %453 = arith.addf %447, %452 : vector<16x16xf32>
    %c73 = arith.constant 73 : index
    %454 = memref.load %arg1[%c73] : memref<99xf32, #tpu.memory_space<smem>>
    %c1_236 = arith.constant 1 : index
    %c3_237 = arith.constant 3 : index
    %c3_238 = arith.constant 3 : index
    %455 = vector.load %arg4[%c1_236, %c3_237, %c3_238] : memref<2x22x22xf32, #tpu.memory_space<vmem>>, vector<1x16x16xf32>
    %456 = vector.shape_cast %455 : vector<1x16x16xf32> to vector<16x16xf32>
    %457 = vector.broadcast %454 : f32 to vector<16x16xf32>
    %458 = arith.mulf %457, %456 : vector<16x16xf32>
    %459 = arith.addf %453, %458 : vector<16x16xf32>
    %c74 = arith.constant 74 : index
    %460 = memref.load %arg1[%c74] : memref<99xf32, #tpu.memory_space<smem>>
    %c1_239 = arith.constant 1 : index
    %c3_240 = arith.constant 3 : index
    %c4_241 = arith.constant 4 : index
    %461 = vector.load %arg4[%c1_239, %c3_240, %c4_241] : memref<2x22x22xf32, #tpu.memory_space<vmem>>, vector<1x16x16xf32>
    %462 = vector.shape_cast %461 : vector<1x16x16xf32> to vector<16x16xf32>
    %463 = vector.broadcast %460 : f32 to vector<16x16xf32>
    %464 = arith.mulf %463, %462 : vector<16x16xf32>
    %465 = arith.addf %459, %464 : vector<16x16xf32>
    %c75 = arith.constant 75 : index
    %466 = memref.load %arg1[%c75] : memref<99xf32, #tpu.memory_space<smem>>
    %c1_242 = arith.constant 1 : index
    %c3_243 = arith.constant 3 : index
    %c5_244 = arith.constant 5 : index
    %467 = vector.load %arg4[%c1_242, %c3_243, %c5_244] : memref<2x22x22xf32, #tpu.memory_space<vmem>>, vector<1x16x16xf32>
    %468 = vector.shape_cast %467 : vector<1x16x16xf32> to vector<16x16xf32>
    %469 = vector.broadcast %466 : f32 to vector<16x16xf32>
    %470 = arith.mulf %469, %468 : vector<16x16xf32>
    %471 = arith.addf %465, %470 : vector<16x16xf32>
    %c76 = arith.constant 76 : index
    %472 = memref.load %arg1[%c76] : memref<99xf32, #tpu.memory_space<smem>>
    %c1_245 = arith.constant 1 : index
    %c3_246 = arith.constant 3 : index
    %c6_247 = arith.constant 6 : index
    %473 = vector.load %arg4[%c1_245, %c3_246, %c6_247] : memref<2x22x22xf32, #tpu.memory_space<vmem>>, vector<1x16x16xf32>
    %474 = vector.shape_cast %473 : vector<1x16x16xf32> to vector<16x16xf32>
    %475 = vector.broadcast %472 : f32 to vector<16x16xf32>
    %476 = arith.mulf %475, %474 : vector<16x16xf32>
    %477 = arith.addf %471, %476 : vector<16x16xf32>
    %c77 = arith.constant 77 : index
    %478 = memref.load %arg1[%c77] : memref<99xf32, #tpu.memory_space<smem>>
    %c1_248 = arith.constant 1 : index
    %c4_249 = arith.constant 4 : index
    %c0_250 = arith.constant 0 : index
    %479 = vector.load %arg4[%c1_248, %c4_249, %c0_250] : memref<2x22x22xf32, #tpu.memory_space<vmem>>, vector<1x16x16xf32>
    %480 = vector.shape_cast %479 : vector<1x16x16xf32> to vector<16x16xf32>
    %481 = vector.broadcast %478 : f32 to vector<16x16xf32>
    %482 = arith.mulf %481, %480 : vector<16x16xf32>
    %483 = arith.addf %477, %482 : vector<16x16xf32>
    %c78 = arith.constant 78 : index
    %484 = memref.load %arg1[%c78] : memref<99xf32, #tpu.memory_space<smem>>
    %c1_251 = arith.constant 1 : index
    %c4_252 = arith.constant 4 : index
    %c1_253 = arith.constant 1 : index
    %485 = vector.load %arg4[%c1_251, %c4_252, %c1_253] : memref<2x22x22xf32, #tpu.memory_space<vmem>>, vector<1x16x16xf32>
    %486 = vector.shape_cast %485 : vector<1x16x16xf32> to vector<16x16xf32>
    %487 = vector.broadcast %484 : f32 to vector<16x16xf32>
    %488 = arith.mulf %487, %486 : vector<16x16xf32>
    %489 = arith.addf %483, %488 : vector<16x16xf32>
    %c79 = arith.constant 79 : index
    %490 = memref.load %arg1[%c79] : memref<99xf32, #tpu.memory_space<smem>>
    %c1_254 = arith.constant 1 : index
    %c4_255 = arith.constant 4 : index
    %c2_256 = arith.constant 2 : index
    %491 = vector.load %arg4[%c1_254, %c4_255, %c2_256] : memref<2x22x22xf32, #tpu.memory_space<vmem>>, vector<1x16x16xf32>
    %492 = vector.shape_cast %491 : vector<1x16x16xf32> to vector<16x16xf32>
    %493 = vector.broadcast %490 : f32 to vector<16x16xf32>
    %494 = arith.mulf %493, %492 : vector<16x16xf32>
    %495 = arith.addf %489, %494 : vector<16x16xf32>
    %c80 = arith.constant 80 : index
    %496 = memref.load %arg1[%c80] : memref<99xf32, #tpu.memory_space<smem>>
    %c1_257 = arith.constant 1 : index
    %c4_258 = arith.constant 4 : index
    %c3_259 = arith.constant 3 : index
    %497 = vector.load %arg4[%c1_257, %c4_258, %c3_259] : memref<2x22x22xf32, #tpu.memory_space<vmem>>, vector<1x16x16xf32>
    %498 = vector.shape_cast %497 : vector<1x16x16xf32> to vector<16x16xf32>
    %499 = vector.broadcast %496 : f32 to vector<16x16xf32>
    %500 = arith.mulf %499, %498 : vector<16x16xf32>
    %501 = arith.addf %495, %500 : vector<16x16xf32>
    %c81 = arith.constant 81 : index
    %502 = memref.load %arg1[%c81] : memref<99xf32, #tpu.memory_space<smem>>
    %c1_260 = arith.constant 1 : index
    %c4_261 = arith.constant 4 : index
    %c4_262 = arith.constant 4 : index
    %503 = vector.load %arg4[%c1_260, %c4_261, %c4_262] : memref<2x22x22xf32, #tpu.memory_space<vmem>>, vector<1x16x16xf32>
    %504 = vector.shape_cast %503 : vector<1x16x16xf32> to vector<16x16xf32>
    %505 = vector.broadcast %502 : f32 to vector<16x16xf32>
    %506 = arith.mulf %505, %504 : vector<16x16xf32>
    %507 = arith.addf %501, %506 : vector<16x16xf32>
    %c82 = arith.constant 82 : index
    %508 = memref.load %arg1[%c82] : memref<99xf32, #tpu.memory_space<smem>>
    %c1_263 = arith.constant 1 : index
    %c4_264 = arith.constant 4 : index
    %c5_265 = arith.constant 5 : index
    %509 = vector.load %arg4[%c1_263, %c4_264, %c5_265] : memref<2x22x22xf32, #tpu.memory_space<vmem>>, vector<1x16x16xf32>
    %510 = vector.shape_cast %509 : vector<1x16x16xf32> to vector<16x16xf32>
    %511 = vector.broadcast %508 : f32 to vector<16x16xf32>
    %512 = arith.mulf %511, %510 : vector<16x16xf32>
    %513 = arith.addf %507, %512 : vector<16x16xf32>
    %c83 = arith.constant 83 : index
    %514 = memref.load %arg1[%c83] : memref<99xf32, #tpu.memory_space<smem>>
    %c1_266 = arith.constant 1 : index
    %c4_267 = arith.constant 4 : index
    %c6_268 = arith.constant 6 : index
    %515 = vector.load %arg4[%c1_266, %c4_267, %c6_268] : memref<2x22x22xf32, #tpu.memory_space<vmem>>, vector<1x16x16xf32>
    %516 = vector.shape_cast %515 : vector<1x16x16xf32> to vector<16x16xf32>
    %517 = vector.broadcast %514 : f32 to vector<16x16xf32>
    %518 = arith.mulf %517, %516 : vector<16x16xf32>
    %519 = arith.addf %513, %518 : vector<16x16xf32>
    %c84 = arith.constant 84 : index
    %520 = memref.load %arg1[%c84] : memref<99xf32, #tpu.memory_space<smem>>
    %c1_269 = arith.constant 1 : index
    %c5_270 = arith.constant 5 : index
    %c0_271 = arith.constant 0 : index
    %521 = vector.load %arg4[%c1_269, %c5_270, %c0_271] : memref<2x22x22xf32, #tpu.memory_space<vmem>>, vector<1x16x16xf32>
    %522 = vector.shape_cast %521 : vector<1x16x16xf32> to vector<16x16xf32>
    %523 = vector.broadcast %520 : f32 to vector<16x16xf32>
    %524 = arith.mulf %523, %522 : vector<16x16xf32>
    %525 = arith.addf %519, %524 : vector<16x16xf32>
    %c85 = arith.constant 85 : index
    %526 = memref.load %arg1[%c85] : memref<99xf32, #tpu.memory_space<smem>>
    %c1_272 = arith.constant 1 : index
    %c5_273 = arith.constant 5 : index
    %c1_274 = arith.constant 1 : index
    %527 = vector.load %arg4[%c1_272, %c5_273, %c1_274] : memref<2x22x22xf32, #tpu.memory_space<vmem>>, vector<1x16x16xf32>
    %528 = vector.shape_cast %527 : vector<1x16x16xf32> to vector<16x16xf32>
    %529 = vector.broadcast %526 : f32 to vector<16x16xf32>
    %530 = arith.mulf %529, %528 : vector<16x16xf32>
    %531 = arith.addf %525, %530 : vector<16x16xf32>
    %c86 = arith.constant 86 : index
    %532 = memref.load %arg1[%c86] : memref<99xf32, #tpu.memory_space<smem>>
    %c1_275 = arith.constant 1 : index
    %c5_276 = arith.constant 5 : index
    %c2_277 = arith.constant 2 : index
    %533 = vector.load %arg4[%c1_275, %c5_276, %c2_277] : memref<2x22x22xf32, #tpu.memory_space<vmem>>, vector<1x16x16xf32>
    %534 = vector.shape_cast %533 : vector<1x16x16xf32> to vector<16x16xf32>
    %535 = vector.broadcast %532 : f32 to vector<16x16xf32>
    %536 = arith.mulf %535, %534 : vector<16x16xf32>
    %537 = arith.addf %531, %536 : vector<16x16xf32>
    %c87 = arith.constant 87 : index
    %538 = memref.load %arg1[%c87] : memref<99xf32, #tpu.memory_space<smem>>
    %c1_278 = arith.constant 1 : index
    %c5_279 = arith.constant 5 : index
    %c3_280 = arith.constant 3 : index
    %539 = vector.load %arg4[%c1_278, %c5_279, %c3_280] : memref<2x22x22xf32, #tpu.memory_space<vmem>>, vector<1x16x16xf32>
    %540 = vector.shape_cast %539 : vector<1x16x16xf32> to vector<16x16xf32>
    %541 = vector.broadcast %538 : f32 to vector<16x16xf32>
    %542 = arith.mulf %541, %540 : vector<16x16xf32>
    %543 = arith.addf %537, %542 : vector<16x16xf32>
    %c88 = arith.constant 88 : index
    %544 = memref.load %arg1[%c88] : memref<99xf32, #tpu.memory_space<smem>>
    %c1_281 = arith.constant 1 : index
    %c5_282 = arith.constant 5 : index
    %c4_283 = arith.constant 4 : index
    %545 = vector.load %arg4[%c1_281, %c5_282, %c4_283] : memref<2x22x22xf32, #tpu.memory_space<vmem>>, vector<1x16x16xf32>
    %546 = vector.shape_cast %545 : vector<1x16x16xf32> to vector<16x16xf32>
    %547 = vector.broadcast %544 : f32 to vector<16x16xf32>
    %548 = arith.mulf %547, %546 : vector<16x16xf32>
    %549 = arith.addf %543, %548 : vector<16x16xf32>
    %c89 = arith.constant 89 : index
    %550 = memref.load %arg1[%c89] : memref<99xf32, #tpu.memory_space<smem>>
    %c1_284 = arith.constant 1 : index
    %c5_285 = arith.constant 5 : index
    %c5_286 = arith.constant 5 : index
    %551 = vector.load %arg4[%c1_284, %c5_285, %c5_286] : memref<2x22x22xf32, #tpu.memory_space<vmem>>, vector<1x16x16xf32>
    %552 = vector.shape_cast %551 : vector<1x16x16xf32> to vector<16x16xf32>
    %553 = vector.broadcast %550 : f32 to vector<16x16xf32>
    %554 = arith.mulf %553, %552 : vector<16x16xf32>
    %555 = arith.addf %549, %554 : vector<16x16xf32>
    %c90 = arith.constant 90 : index
    %556 = memref.load %arg1[%c90] : memref<99xf32, #tpu.memory_space<smem>>
    %c1_287 = arith.constant 1 : index
    %c5_288 = arith.constant 5 : index
    %c6_289 = arith.constant 6 : index
    %557 = vector.load %arg4[%c1_287, %c5_288, %c6_289] : memref<2x22x22xf32, #tpu.memory_space<vmem>>, vector<1x16x16xf32>
    %558 = vector.shape_cast %557 : vector<1x16x16xf32> to vector<16x16xf32>
    %559 = vector.broadcast %556 : f32 to vector<16x16xf32>
    %560 = arith.mulf %559, %558 : vector<16x16xf32>
    %561 = arith.addf %555, %560 : vector<16x16xf32>
    %c91 = arith.constant 91 : index
    %562 = memref.load %arg1[%c91] : memref<99xf32, #tpu.memory_space<smem>>
    %c1_290 = arith.constant 1 : index
    %c6_291 = arith.constant 6 : index
    %c0_292 = arith.constant 0 : index
    %563 = vector.load %arg4[%c1_290, %c6_291, %c0_292] : memref<2x22x22xf32, #tpu.memory_space<vmem>>, vector<1x16x16xf32>
    %564 = vector.shape_cast %563 : vector<1x16x16xf32> to vector<16x16xf32>
    %565 = vector.broadcast %562 : f32 to vector<16x16xf32>
    %566 = arith.mulf %565, %564 : vector<16x16xf32>
    %567 = arith.addf %561, %566 : vector<16x16xf32>
    %c92 = arith.constant 92 : index
    %568 = memref.load %arg1[%c92] : memref<99xf32, #tpu.memory_space<smem>>
    %c1_293 = arith.constant 1 : index
    %c6_294 = arith.constant 6 : index
    %c1_295 = arith.constant 1 : index
    %569 = vector.load %arg4[%c1_293, %c6_294, %c1_295] : memref<2x22x22xf32, #tpu.memory_space<vmem>>, vector<1x16x16xf32>
    %570 = vector.shape_cast %569 : vector<1x16x16xf32> to vector<16x16xf32>
    %571 = vector.broadcast %568 : f32 to vector<16x16xf32>
    %572 = arith.mulf %571, %570 : vector<16x16xf32>
    %573 = arith.addf %567, %572 : vector<16x16xf32>
    %c93 = arith.constant 93 : index
    %574 = memref.load %arg1[%c93] : memref<99xf32, #tpu.memory_space<smem>>
    %c1_296 = arith.constant 1 : index
    %c6_297 = arith.constant 6 : index
    %c2_298 = arith.constant 2 : index
    %575 = vector.load %arg4[%c1_296, %c6_297, %c2_298] : memref<2x22x22xf32, #tpu.memory_space<vmem>>, vector<1x16x16xf32>
    %576 = vector.shape_cast %575 : vector<1x16x16xf32> to vector<16x16xf32>
    %577 = vector.broadcast %574 : f32 to vector<16x16xf32>
    %578 = arith.mulf %577, %576 : vector<16x16xf32>
    %579 = arith.addf %573, %578 : vector<16x16xf32>
    %c94 = arith.constant 94 : index
    %580 = memref.load %arg1[%c94] : memref<99xf32, #tpu.memory_space<smem>>
    %c1_299 = arith.constant 1 : index
    %c6_300 = arith.constant 6 : index
    %c3_301 = arith.constant 3 : index
    %581 = vector.load %arg4[%c1_299, %c6_300, %c3_301] : memref<2x22x22xf32, #tpu.memory_space<vmem>>, vector<1x16x16xf32>
    %582 = vector.shape_cast %581 : vector<1x16x16xf32> to vector<16x16xf32>
    %583 = vector.broadcast %580 : f32 to vector<16x16xf32>
    %584 = arith.mulf %583, %582 : vector<16x16xf32>
    %585 = arith.addf %579, %584 : vector<16x16xf32>
    %c95 = arith.constant 95 : index
    %586 = memref.load %arg1[%c95] : memref<99xf32, #tpu.memory_space<smem>>
    %c1_302 = arith.constant 1 : index
    %c6_303 = arith.constant 6 : index
    %c4_304 = arith.constant 4 : index
    %587 = vector.load %arg4[%c1_302, %c6_303, %c4_304] : memref<2x22x22xf32, #tpu.memory_space<vmem>>, vector<1x16x16xf32>
    %588 = vector.shape_cast %587 : vector<1x16x16xf32> to vector<16x16xf32>
    %589 = vector.broadcast %586 : f32 to vector<16x16xf32>
    %590 = arith.mulf %589, %588 : vector<16x16xf32>
    %591 = arith.addf %585, %590 : vector<16x16xf32>
    %c96 = arith.constant 96 : index
    %592 = memref.load %arg1[%c96] : memref<99xf32, #tpu.memory_space<smem>>
    %c1_305 = arith.constant 1 : index
    %c6_306 = arith.constant 6 : index
    %c5_307 = arith.constant 5 : index
    %593 = vector.load %arg4[%c1_305, %c6_306, %c5_307] : memref<2x22x22xf32, #tpu.memory_space<vmem>>, vector<1x16x16xf32>
    %594 = vector.shape_cast %593 : vector<1x16x16xf32> to vector<16x16xf32>
    %595 = vector.broadcast %592 : f32 to vector<16x16xf32>
    %596 = arith.mulf %595, %594 : vector<16x16xf32>
    %597 = arith.addf %591, %596 : vector<16x16xf32>
    %c97 = arith.constant 97 : index
    %598 = memref.load %arg1[%c97] : memref<99xf32, #tpu.memory_space<smem>>
    %c1_308 = arith.constant 1 : index
    %c6_309 = arith.constant 6 : index
    %c6_310 = arith.constant 6 : index
    %599 = vector.load %arg4[%c1_308, %c6_309, %c6_310] : memref<2x22x22xf32, #tpu.memory_space<vmem>>, vector<1x16x16xf32>
    %600 = vector.shape_cast %599 : vector<1x16x16xf32> to vector<16x16xf32>
    %601 = vector.broadcast %598 : f32 to vector<16x16xf32>
    %602 = arith.mulf %601, %600 : vector<16x16xf32>
    %603 = arith.addf %597, %602 : vector<16x16xf32>
    %c98 = arith.constant 98 : index
    %604 = memref.load %arg1[%c98] : memref<99xf32, #tpu.memory_space<smem>>
    %605 = vector.broadcast %604 : f32 to vector<16x16xf32>
    %606 = arith.addf %603, %605 : vector<16x16xf32>
    %cst_311 = arith.constant 0.000000e+00 : f32
    %607 = vector.broadcast %cst_311 : f32 to vector<16x16xf32>
    %608 = arith.subf %607, %606 : vector<16x16xf32>
    %609 = math.exp %608 : vector<16x16xf32>
    %cst_312 = arith.constant 1.000000e+00 : f32
    %610 = vector.broadcast %cst_312 : f32 to vector<16x16xf32>
    %611 = arith.addf %610, %609 : vector<16x16xf32>
    %612 = tpu.reciprocal %611 {approx = true} : vector<16x16xf32> -> vector<16x16xf32>
    %613 = vector.shape_cast %612 : vector<16x16xf32> to vector<1x16x16xf32>
    %614 = vector.broadcast %613 : vector<1x16x16xf32> to vector<16x16x16xf32>
    %615 = arith.mulf %2, %614 : vector<16x16x16xf32>
    %616 = arith.truncf %615 : vector<16x16x16xf32> to vector<16x16x16xbf16>
    %c0_313 = arith.constant 0 : index
    %c0_314 = arith.constant 0 : index
    %c0_315 = arith.constant 0 : index
    %c0_316 = arith.constant 0 : index
    %617 = vector.load %arg3[%c0_313, %c0_314, %c0_315, %c0_316] : memref<1x16x16x16xbf16, #tpu.memory_space<vmem>>, vector<1x16x16x16xbf16>
    %618 = vector.shape_cast %617 : vector<1x16x16x16xbf16> to vector<16x16x16xbf16>
    %619 = vector.shape_cast %616 : vector<16x16x16xbf16> to vector<1x16x16x16xbf16>
    tpu.vector_store %arg3[%c0_313, %c0_314, %c0_315, %c0_316], %619 {strides = array<i32>} : memref<1x16x16x16xbf16, #tpu.memory_space<vmem>>, vector<1x16x16x16xbf16>,
    return
  }
  func.func @transform_0(%arg0: i32) -> i32 {
    %c0_i32 = arith.constant 0 : i32
    %c0_i32_0 = arith.constant 0 : i32
    return %c0_i32 : i32
  }
  func.func @transform_1(%arg0: i32) -> (i32, i32, i32, i32) {
    %c0_i32 = arith.constant 0 : i32
    %c0_i32_0 = arith.constant 0 : i32
    %c0_i32_1 = arith.constant 0 : i32
    %c0_i32_2 = arith.constant 0 : i32
    return %arg0, %c0_i32, %c0_i32_0, %c0_i32_1 : i32, i32, i32, i32
  }
  func.func @transform_2(%arg0: i32) -> (i32, i32, i32, i32) {
    %c0_i32 = arith.constant 0 : i32
    %c0_i32_0 = arith.constant 0 : i32
    %c0_i32_1 = arith.constant 0 : i32
    %c0_i32_2 = arith.constant 0 : i32
    return %arg0, %c0_i32, %c0_i32_0, %c0_i32_1 : i32, i32, i32, i32
  }
}

module attributes {stable_mosaic.version = 11 : i64} {
  func.func @_gate_kernel(%arg0: i32, %arg1: memref<99xf32, #tpu.memory_space<smem>>, %arg2: memref<1x16x16x16xbf16, #tpu.memory_space<vmem>>, %arg3: memref<1x16x16x16xbf16, #tpu.memory_space<vmem>>, %arg4: memref<1x16x16x16xbf16, #tpu.memory_space<vmem>>, %arg5: memref<1x16x16x16xbf16, #tpu.memory_space<vmem>>, %arg6: memref<2x22x22xf32, #tpu.memory_space<vmem>>) attributes {dimension_semantics = [#tpu.dimension_semantics<parallel>], iteration_bounds = array<i64: 2>, scalar_prefetch = 0 : i64, scratch_operands = 1 : i64, tpu.core_type = #tpu.core_type<tc>, window_params = [{transform_indices = @transform_0, window_bounds = array<i64: 99>}, {transform_indices = @transform_1, window_bounds = array<i64: 1, 16, 16, 16>}, {transform_indices = @transform_2, window_bounds = array<i64: 1, 16, 16, 16>}, {transform_indices = @transform_3, window_bounds = array<i64: 1, 16, 16, 16>}, {transform_indices = @transform_4, window_bounds = array<i64: 1, 16, 16, 16>}]} {
    %c0 = arith.constant 0 : index
    %c0_0 = arith.constant 0 : index
    %c0_1 = arith.constant 0 : index
    %c0_2 = arith.constant 0 : index
    %0 = vector.load %arg2[%c0, %c0_0, %c0_1, %c0_2] : memref<1x16x16x16xbf16, #tpu.memory_space<vmem>>, vector<1x16x16x16xbf16>
    %1 = vector.shape_cast %0 : vector<1x16x16x16xbf16> to vector<16x16x16xbf16>
    %2 = arith.extf %1 : vector<16x16x16xbf16> to vector<16x16x16xf32>
    %cst = arith.constant 0.000000e+00 : f32
    %3 = vector.broadcast %cst : f32 to vector<2x22x22xf32>
    %c0_3 = arith.constant 0 : index
    %c0_4 = arith.constant 0 : index
    %c0_5 = arith.constant 0 : index
    %4 = vector.load %arg6[%c0_3, %c0_4, %c0_5] : memref<2x22x22xf32, #tpu.memory_space<vmem>>, vector<2x22x22xf32>
    tpu.vector_store %arg6[%c0_3, %c0_4, %c0_5], %3 {strides = array<i32>} : memref<2x22x22xf32, #tpu.memory_space<vmem>>, vector<2x22x22xf32>,
    %cst_6 = arith.constant dense<0xFF800000> : vector<16x16xf32>
    %5 = vector.multi_reduction <maximumf>, %2, %cst_6 [0] : vector<16x16x16xf32> to vector<16x16xf32>
    %c0_7 = arith.constant 0 : index
    %c3 = arith.constant 3 : index
    %c3_8 = arith.constant 3 : index
    %6 = vector.load %arg6[%c0_7, %c3, %c3_8] : memref<2x22x22xf32, #tpu.memory_space<vmem>>, vector<1x16x16xf32>
    %7 = vector.shape_cast %6 : vector<1x16x16xf32> to vector<16x16xf32>
    %8 = vector.shape_cast %5 : vector<16x16xf32> to vector<1x16x16xf32>
    tpu.vector_store %arg6[%c0_7, %c3, %c3_8], %8 {strides = array<i32>} : memref<2x22x22xf32, #tpu.memory_space<vmem>>, vector<1x16x16xf32>,
    %cst_9 = arith.constant dense<0.000000e+00> : vector<16x16xf32>
    %9 = vector.multi_reduction <add>, %2, %cst_9 [0] : vector<16x16x16xf32> to vector<16x16xf32>
    %cst_10 = arith.constant 1.600000e+01 : f32
    %10 = vector.broadcast %cst_10 : f32 to vector<16x16xf32>
    %11 = arith.divf %9, %10 : vector<16x16xf32>
    %c1 = arith.constant 1 : index
    %c3_11 = arith.constant 3 : index
    %c3_12 = arith.constant 3 : index
    %12 = vector.load %arg6[%c1, %c3_11, %c3_12] : memref<2x22x22xf32, #tpu.memory_space<vmem>>, vector<1x16x16xf32>
    %13 = vector.shape_cast %12 : vector<1x16x16xf32> to vector<16x16xf32>
    %14 = vector.shape_cast %11 : vector<16x16xf32> to vector<1x16x16xf32>
    tpu.vector_store %arg6[%c1, %c3_11, %c3_12], %14 {strides = array<i32>} : memref<2x22x22xf32, #tpu.memory_space<vmem>>, vector<1x16x16xf32>,
    %cst_13 = arith.constant 0.000000e+00 : f32
    %15 = vector.broadcast %cst_13 : f32 to vector<16x16xf32>
    %c0_14 = arith.constant 0 : index
    %16 = memref.load %arg1[%c0_14] : memref<99xf32, #tpu.memory_space<smem>>
    %c0_15 = arith.constant 0 : index
    %c0_16 = arith.constant 0 : index
    %c0_17 = arith.constant 0 : index
    %17 = vector.load %arg6[%c0_15, %c0_16, %c0_17] : memref<2x22x22xf32, #tpu.memory_space<vmem>>, vector<1x16x16xf32>
    %18 = vector.shape_cast %17 : vector<1x16x16xf32> to vector<16x16xf32>
    %19 = vector.broadcast %16 : f32 to vector<16x16xf32>
    %20 = arith.mulf %19, %18 : vector<16x16xf32>
    %21 = arith.addf %15, %20 : vector<16x16xf32>
    %c1_18 = arith.constant 1 : index
    %22 = memref.load %arg1[%c1_18] : memref<99xf32, #tpu.memory_space<smem>>
    %c0_19 = arith.constant 0 : index
    %c0_20 = arith.constant 0 : index
    %c1_21 = arith.constant 1 : index
    %23 = vector.load %arg6[%c0_19, %c0_20, %c1_21] : memref<2x22x22xf32, #tpu.memory_space<vmem>>, vector<1x16x16xf32>
    %24 = vector.shape_cast %23 : vector<1x16x16xf32> to vector<16x16xf32>
    %25 = vector.broadcast %22 : f32 to vector<16x16xf32>
    %26 = arith.mulf %25, %24 : vector<16x16xf32>
    %27 = arith.addf %21, %26 : vector<16x16xf32>
    %c2 = arith.constant 2 : index
    %28 = memref.load %arg1[%c2] : memref<99xf32, #tpu.memory_space<smem>>
    %c0_22 = arith.constant 0 : index
    %c0_23 = arith.constant 0 : index
    %c2_24 = arith.constant 2 : index
    %29 = vector.load %arg6[%c0_22, %c0_23, %c2_24] : memref<2x22x22xf32, #tpu.memory_space<vmem>>, vector<1x16x16xf32>
    %30 = vector.shape_cast %29 : vector<1x16x16xf32> to vector<16x16xf32>
    %31 = vector.broadcast %28 : f32 to vector<16x16xf32>
    %32 = arith.mulf %31, %30 : vector<16x16xf32>
    %33 = arith.addf %27, %32 : vector<16x16xf32>
    %c3_25 = arith.constant 3 : index
    %34 = memref.load %arg1[%c3_25] : memref<99xf32, #tpu.memory_space<smem>>
    %c0_26 = arith.constant 0 : index
    %c0_27 = arith.constant 0 : index
    %c3_28 = arith.constant 3 : index
    %35 = vector.load %arg6[%c0_26, %c0_27, %c3_28] : memref<2x22x22xf32, #tpu.memory_space<vmem>>, vector<1x16x16xf32>
    %36 = vector.shape_cast %35 : vector<1x16x16xf32> to vector<16x16xf32>
    %37 = vector.broadcast %34 : f32 to vector<16x16xf32>
    %38 = arith.mulf %37, %36 : vector<16x16xf32>
    %39 = arith.addf %33, %38 : vector<16x16xf32>
    %c4 = arith.constant 4 : index
    %40 = memref.load %arg1[%c4] : memref<99xf32, #tpu.memory_space<smem>>
    %c0_29 = arith.constant 0 : index
    %c0_30 = arith.constant 0 : index
    %c4_31 = arith.constant 4 : index
    %41 = vector.load %arg6[%c0_29, %c0_30, %c4_31] : memref<2x22x22xf32, #tpu.memory_space<vmem>>, vector<1x16x16xf32>
    %42 = vector.shape_cast %41 : vector<1x16x16xf32> to vector<16x16xf32>
    %43 = vector.broadcast %40 : f32 to vector<16x16xf32>
    %44 = arith.mulf %43, %42 : vector<16x16xf32>
    %45 = arith.addf %39, %44 : vector<16x16xf32>
    %c5 = arith.constant 5 : index
    %46 = memref.load %arg1[%c5] : memref<99xf32, #tpu.memory_space<smem>>
    %c0_32 = arith.constant 0 : index
    %c0_33 = arith.constant 0 : index
    %c5_34 = arith.constant 5 : index
    %47 = vector.load %arg6[%c0_32, %c0_33, %c5_34] : memref<2x22x22xf32, #tpu.memory_space<vmem>>, vector<1x16x16xf32>
    %48 = vector.shape_cast %47 : vector<1x16x16xf32> to vector<16x16xf32>
    %49 = vector.broadcast %46 : f32 to vector<16x16xf32>
    %50 = arith.mulf %49, %48 : vector<16x16xf32>
    %51 = arith.addf %45, %50 : vector<16x16xf32>
    %c6 = arith.constant 6 : index
    %52 = memref.load %arg1[%c6] : memref<99xf32, #tpu.memory_space<smem>>
    %c0_35 = arith.constant 0 : index
    %c0_36 = arith.constant 0 : index
    %c6_37 = arith.constant 6 : index
    %53 = vector.load %arg6[%c0_35, %c0_36, %c6_37] : memref<2x22x22xf32, #tpu.memory_space<vmem>>, vector<1x16x16xf32>
    %54 = vector.shape_cast %53 : vector<1x16x16xf32> to vector<16x16xf32>
    %55 = vector.broadcast %52 : f32 to vector<16x16xf32>
    %56 = arith.mulf %55, %54 : vector<16x16xf32>
    %57 = arith.addf %51, %56 : vector<16x16xf32>
    %c7 = arith.constant 7 : index
    %58 = memref.load %arg1[%c7] : memref<99xf32, #tpu.memory_space<smem>>
    %c0_38 = arith.constant 0 : index
    %c1_39 = arith.constant 1 : index
    %c0_40 = arith.constant 0 : index
    %59 = vector.load %arg6[%c0_38, %c1_39, %c0_40] : memref<2x22x22xf32, #tpu.memory_space<vmem>>, vector<1x16x16xf32>
    %60 = vector.shape_cast %59 : vector<1x16x16xf32> to vector<16x16xf32>
    %61 = vector.broadcast %58 : f32 to vector<16x16xf32>
    %62 = arith.mulf %61, %60 : vector<16x16xf32>
    %63 = arith.addf %57, %62 : vector<16x16xf32>
    %c8 = arith.constant 8 : index
    %64 = memref.load %arg1[%c8] : memref<99xf32, #tpu.memory_space<smem>>
    %c0_41 = arith.constant 0 : index
    %c1_42 = arith.constant 1 : index
    %c1_43 = arith.constant 1 : index
    %65 = vector.load %arg6[%c0_41, %c1_42, %c1_43] : memref<2x22x22xf32, #tpu.memory_space<vmem>>, vector<1x16x16xf32>
    %66 = vector.shape_cast %65 : vector<1x16x16xf32> to vector<16x16xf32>
    %67 = vector.broadcast %64 : f32 to vector<16x16xf32>
    %68 = arith.mulf %67, %66 : vector<16x16xf32>
    %69 = arith.addf %63, %68 : vector<16x16xf32>
    %c9 = arith.constant 9 : index
    %70 = memref.load %arg1[%c9] : memref<99xf32, #tpu.memory_space<smem>>
    %c0_44 = arith.constant 0 : index
    %c1_45 = arith.constant 1 : index
    %c2_46 = arith.constant 2 : index
    %71 = vector.load %arg6[%c0_44, %c1_45, %c2_46] : memref<2x22x22xf32, #tpu.memory_space<vmem>>, vector<1x16x16xf32>
    %72 = vector.shape_cast %71 : vector<1x16x16xf32> to vector<16x16xf32>
    %73 = vector.broadcast %70 : f32 to vector<16x16xf32>
    %74 = arith.mulf %73, %72 : vector<16x16xf32>
    %75 = arith.addf %69, %74 : vector<16x16xf32>
    %c10 = arith.constant 10 : index
    %76 = memref.load %arg1[%c10] : memref<99xf32, #tpu.memory_space<smem>>
    %c0_47 = arith.constant 0 : index
    %c1_48 = arith.constant 1 : index
    %c3_49 = arith.constant 3 : index
    %77 = vector.load %arg6[%c0_47, %c1_48, %c3_49] : memref<2x22x22xf32, #tpu.memory_space<vmem>>, vector<1x16x16xf32>
    %78 = vector.shape_cast %77 : vector<1x16x16xf32> to vector<16x16xf32>
    %79 = vector.broadcast %76 : f32 to vector<16x16xf32>
    %80 = arith.mulf %79, %78 : vector<16x16xf32>
    %81 = arith.addf %75, %80 : vector<16x16xf32>
    %c11 = arith.constant 11 : index
    %82 = memref.load %arg1[%c11] : memref<99xf32, #tpu.memory_space<smem>>
    %c0_50 = arith.constant 0 : index
    %c1_51 = arith.constant 1 : index
    %c4_52 = arith.constant 4 : index
    %83 = vector.load %arg6[%c0_50, %c1_51, %c4_52] : memref<2x22x22xf32, #tpu.memory_space<vmem>>, vector<1x16x16xf32>
    %84 = vector.shape_cast %83 : vector<1x16x16xf32> to vector<16x16xf32>
    %85 = vector.broadcast %82 : f32 to vector<16x16xf32>
    %86 = arith.mulf %85, %84 : vector<16x16xf32>
    %87 = arith.addf %81, %86 : vector<16x16xf32>
    %c12 = arith.constant 12 : index
    %88 = memref.load %arg1[%c12] : memref<99xf32, #tpu.memory_space<smem>>
    %c0_53 = arith.constant 0 : index
    %c1_54 = arith.constant 1 : index
    %c5_55 = arith.constant 5 : index
    %89 = vector.load %arg6[%c0_53, %c1_54, %c5_55] : memref<2x22x22xf32, #tpu.memory_space<vmem>>, vector<1x16x16xf32>
    %90 = vector.shape_cast %89 : vector<1x16x16xf32> to vector<16x16xf32>
    %91 = vector.broadcast %88 : f32 to vector<16x16xf32>
    %92 = arith.mulf %91, %90 : vector<16x16xf32>
    %93 = arith.addf %87, %92 : vector<16x16xf32>
    %c13 = arith.constant 13 : index
    %94 = memref.load %arg1[%c13] : memref<99xf32, #tpu.memory_space<smem>>
    %c0_56 = arith.constant 0 : index
    %c1_57 = arith.constant 1 : index
    %c6_58 = arith.constant 6 : index
    %95 = vector.load %arg6[%c0_56, %c1_57, %c6_58] : memref<2x22x22xf32, #tpu.memory_space<vmem>>, vector<1x16x16xf32>
    %96 = vector.shape_cast %95 : vector<1x16x16xf32> to vector<16x16xf32>
    %97 = vector.broadcast %94 : f32 to vector<16x16xf32>
    %98 = arith.mulf %97, %96 : vector<16x16xf32>
    %99 = arith.addf %93, %98 : vector<16x16xf32>
    %c14 = arith.constant 14 : index
    %100 = memref.load %arg1[%c14] : memref<99xf32, #tpu.memory_space<smem>>
    %c0_59 = arith.constant 0 : index
    %c2_60 = arith.constant 2 : index
    %c0_61 = arith.constant 0 : index
    %101 = vector.load %arg6[%c0_59, %c2_60, %c0_61] : memref<2x22x22xf32, #tpu.memory_space<vmem>>, vector<1x16x16xf32>
    %102 = vector.shape_cast %101 : vector<1x16x16xf32> to vector<16x16xf32>
    %103 = vector.broadcast %100 : f32 to vector<16x16xf32>
    %104 = arith.mulf %103, %102 : vector<16x16xf32>
    %105 = arith.addf %99, %104 : vector<16x16xf32>
    %c15 = arith.constant 15 : index
    %106 = memref.load %arg1[%c15] : memref<99xf32, #tpu.memory_space<smem>>
    %c0_62 = arith.constant 0 : index
    %c2_63 = arith.constant 2 : index
    %c1_64 = arith.constant 1 : index
    %107 = vector.load %arg6[%c0_62, %c2_63, %c1_64] : memref<2x22x22xf32, #tpu.memory_space<vmem>>, vector<1x16x16xf32>
    %108 = vector.shape_cast %107 : vector<1x16x16xf32> to vector<16x16xf32>
    %109 = vector.broadcast %106 : f32 to vector<16x16xf32>
    %110 = arith.mulf %109, %108 : vector<16x16xf32>
    %111 = arith.addf %105, %110 : vector<16x16xf32>
    %c16 = arith.constant 16 : index
    %112 = memref.load %arg1[%c16] : memref<99xf32, #tpu.memory_space<smem>>
    %c0_65 = arith.constant 0 : index
    %c2_66 = arith.constant 2 : index
    %c2_67 = arith.constant 2 : index
    %113 = vector.load %arg6[%c0_65, %c2_66, %c2_67] : memref<2x22x22xf32, #tpu.memory_space<vmem>>, vector<1x16x16xf32>
    %114 = vector.shape_cast %113 : vector<1x16x16xf32> to vector<16x16xf32>
    %115 = vector.broadcast %112 : f32 to vector<16x16xf32>
    %116 = arith.mulf %115, %114 : vector<16x16xf32>
    %117 = arith.addf %111, %116 : vector<16x16xf32>
    %c17 = arith.constant 17 : index
    %118 = memref.load %arg1[%c17] : memref<99xf32, #tpu.memory_space<smem>>
    %c0_68 = arith.constant 0 : index
    %c2_69 = arith.constant 2 : index
    %c3_70 = arith.constant 3 : index
    %119 = vector.load %arg6[%c0_68, %c2_69, %c3_70] : memref<2x22x22xf32, #tpu.memory_space<vmem>>, vector<1x16x16xf32>
    %120 = vector.shape_cast %119 : vector<1x16x16xf32> to vector<16x16xf32>
    %121 = vector.broadcast %118 : f32 to vector<16x16xf32>
    %122 = arith.mulf %121, %120 : vector<16x16xf32>
    %123 = arith.addf %117, %122 : vector<16x16xf32>
    %c18 = arith.constant 18 : index
    %124 = memref.load %arg1[%c18] : memref<99xf32, #tpu.memory_space<smem>>
    %c0_71 = arith.constant 0 : index
    %c2_72 = arith.constant 2 : index
    %c4_73 = arith.constant 4 : index
    %125 = vector.load %arg6[%c0_71, %c2_72, %c4_73] : memref<2x22x22xf32, #tpu.memory_space<vmem>>, vector<1x16x16xf32>
    %126 = vector.shape_cast %125 : vector<1x16x16xf32> to vector<16x16xf32>
    %127 = vector.broadcast %124 : f32 to vector<16x16xf32>
    %128 = arith.mulf %127, %126 : vector<16x16xf32>
    %129 = arith.addf %123, %128 : vector<16x16xf32>
    %c19 = arith.constant 19 : index
    %130 = memref.load %arg1[%c19] : memref<99xf32, #tpu.memory_space<smem>>
    %c0_74 = arith.constant 0 : index
    %c2_75 = arith.constant 2 : index
    %c5_76 = arith.constant 5 : index
    %131 = vector.load %arg6[%c0_74, %c2_75, %c5_76] : memref<2x22x22xf32, #tpu.memory_space<vmem>>, vector<1x16x16xf32>
    %132 = vector.shape_cast %131 : vector<1x16x16xf32> to vector<16x16xf32>
    %133 = vector.broadcast %130 : f32 to vector<16x16xf32>
    %134 = arith.mulf %133, %132 : vector<16x16xf32>
    %135 = arith.addf %129, %134 : vector<16x16xf32>
    %c20 = arith.constant 20 : index
    %136 = memref.load %arg1[%c20] : memref<99xf32, #tpu.memory_space<smem>>
    %c0_77 = arith.constant 0 : index
    %c2_78 = arith.constant 2 : index
    %c6_79 = arith.constant 6 : index
    %137 = vector.load %arg6[%c0_77, %c2_78, %c6_79] : memref<2x22x22xf32, #tpu.memory_space<vmem>>, vector<1x16x16xf32>
    %138 = vector.shape_cast %137 : vector<1x16x16xf32> to vector<16x16xf32>
    %139 = vector.broadcast %136 : f32 to vector<16x16xf32>
    %140 = arith.mulf %139, %138 : vector<16x16xf32>
    %141 = arith.addf %135, %140 : vector<16x16xf32>
    %c21 = arith.constant 21 : index
    %142 = memref.load %arg1[%c21] : memref<99xf32, #tpu.memory_space<smem>>
    %c0_80 = arith.constant 0 : index
    %c3_81 = arith.constant 3 : index
    %c0_82 = arith.constant 0 : index
    %143 = vector.load %arg6[%c0_80, %c3_81, %c0_82] : memref<2x22x22xf32, #tpu.memory_space<vmem>>, vector<1x16x16xf32>
    %144 = vector.shape_cast %143 : vector<1x16x16xf32> to vector<16x16xf32>
    %145 = vector.broadcast %142 : f32 to vector<16x16xf32>
    %146 = arith.mulf %145, %144 : vector<16x16xf32>
    %147 = arith.addf %141, %146 : vector<16x16xf32>
    %c22 = arith.constant 22 : index
    %148 = memref.load %arg1[%c22] : memref<99xf32, #tpu.memory_space<smem>>
    %c0_83 = arith.constant 0 : index
    %c3_84 = arith.constant 3 : index
    %c1_85 = arith.constant 1 : index
    %149 = vector.load %arg6[%c0_83, %c3_84, %c1_85] : memref<2x22x22xf32, #tpu.memory_space<vmem>>, vector<1x16x16xf32>
    %150 = vector.shape_cast %149 : vector<1x16x16xf32> to vector<16x16xf32>
    %151 = vector.broadcast %148 : f32 to vector<16x16xf32>
    %152 = arith.mulf %151, %150 : vector<16x16xf32>
    %153 = arith.addf %147, %152 : vector<16x16xf32>
    %c23 = arith.constant 23 : index
    %154 = memref.load %arg1[%c23] : memref<99xf32, #tpu.memory_space<smem>>
    %c0_86 = arith.constant 0 : index
    %c3_87 = arith.constant 3 : index
    %c2_88 = arith.constant 2 : index
    %155 = vector.load %arg6[%c0_86, %c3_87, %c2_88] : memref<2x22x22xf32, #tpu.memory_space<vmem>>, vector<1x16x16xf32>
    %156 = vector.shape_cast %155 : vector<1x16x16xf32> to vector<16x16xf32>
    %157 = vector.broadcast %154 : f32 to vector<16x16xf32>
    %158 = arith.mulf %157, %156 : vector<16x16xf32>
    %159 = arith.addf %153, %158 : vector<16x16xf32>
    %c24 = arith.constant 24 : index
    %160 = memref.load %arg1[%c24] : memref<99xf32, #tpu.memory_space<smem>>
    %c0_89 = arith.constant 0 : index
    %c3_90 = arith.constant 3 : index
    %c3_91 = arith.constant 3 : index
    %161 = vector.load %arg6[%c0_89, %c3_90, %c3_91] : memref<2x22x22xf32, #tpu.memory_space<vmem>>, vector<1x16x16xf32>
    %162 = vector.shape_cast %161 : vector<1x16x16xf32> to vector<16x16xf32>
    %163 = vector.broadcast %160 : f32 to vector<16x16xf32>
    %164 = arith.mulf %163, %162 : vector<16x16xf32>
    %165 = arith.addf %159, %164 : vector<16x16xf32>
    %c25 = arith.constant 25 : index
    %166 = memref.load %arg1[%c25] : memref<99xf32, #tpu.memory_space<smem>>
    %c0_92 = arith.constant 0 : index
    %c3_93 = arith.constant 3 : index
    %c4_94 = arith.constant 4 : index
    %167 = vector.load %arg6[%c0_92, %c3_93, %c4_94] : memref<2x22x22xf32, #tpu.memory_space<vmem>>, vector<1x16x16xf32>
    %168 = vector.shape_cast %167 : vector<1x16x16xf32> to vector<16x16xf32>
    %169 = vector.broadcast %166 : f32 to vector<16x16xf32>
    %170 = arith.mulf %169, %168 : vector<16x16xf32>
    %171 = arith.addf %165, %170 : vector<16x16xf32>
    %c26 = arith.constant 26 : index
    %172 = memref.load %arg1[%c26] : memref<99xf32, #tpu.memory_space<smem>>
    %c0_95 = arith.constant 0 : index
    %c3_96 = arith.constant 3 : index
    %c5_97 = arith.constant 5 : index
    %173 = vector.load %arg6[%c0_95, %c3_96, %c5_97] : memref<2x22x22xf32, #tpu.memory_space<vmem>>, vector<1x16x16xf32>
    %174 = vector.shape_cast %173 : vector<1x16x16xf32> to vector<16x16xf32>
    %175 = vector.broadcast %172 : f32 to vector<16x16xf32>
    %176 = arith.mulf %175, %174 : vector<16x16xf32>
    %177 = arith.addf %171, %176 : vector<16x16xf32>
    %c27 = arith.constant 27 : index
    %178 = memref.load %arg1[%c27] : memref<99xf32, #tpu.memory_space<smem>>
    %c0_98 = arith.constant 0 : index
    %c3_99 = arith.constant 3 : index
    %c6_100 = arith.constant 6 : index
    %179 = vector.load %arg6[%c0_98, %c3_99, %c6_100] : memref<2x22x22xf32, #tpu.memory_space<vmem>>, vector<1x16x16xf32>
    %180 = vector.shape_cast %179 : vector<1x16x16xf32> to vector<16x16xf32>
    %181 = vector.broadcast %178 : f32 to vector<16x16xf32>
    %182 = arith.mulf %181, %180 : vector<16x16xf32>
    %183 = arith.addf %177, %182 : vector<16x16xf32>
    %c28 = arith.constant 28 : index
    %184 = memref.load %arg1[%c28] : memref<99xf32, #tpu.memory_space<smem>>
    %c0_101 = arith.constant 0 : index
    %c4_102 = arith.constant 4 : index
    %c0_103 = arith.constant 0 : index
    %185 = vector.load %arg6[%c0_101, %c4_102, %c0_103] : memref<2x22x22xf32, #tpu.memory_space<vmem>>, vector<1x16x16xf32>
    %186 = vector.shape_cast %185 : vector<1x16x16xf32> to vector<16x16xf32>
    %187 = vector.broadcast %184 : f32 to vector<16x16xf32>
    %188 = arith.mulf %187, %186 : vector<16x16xf32>
    %189 = arith.addf %183, %188 : vector<16x16xf32>
    %c29 = arith.constant 29 : index
    %190 = memref.load %arg1[%c29] : memref<99xf32, #tpu.memory_space<smem>>
    %c0_104 = arith.constant 0 : index
    %c4_105 = arith.constant 4 : index
    %c1_106 = arith.constant 1 : index
    %191 = vector.load %arg6[%c0_104, %c4_105, %c1_106] : memref<2x22x22xf32, #tpu.memory_space<vmem>>, vector<1x16x16xf32>
    %192 = vector.shape_cast %191 : vector<1x16x16xf32> to vector<16x16xf32>
    %193 = vector.broadcast %190 : f32 to vector<16x16xf32>
    %194 = arith.mulf %193, %192 : vector<16x16xf32>
    %195 = arith.addf %189, %194 : vector<16x16xf32>
    %c30 = arith.constant 30 : index
    %196 = memref.load %arg1[%c30] : memref<99xf32, #tpu.memory_space<smem>>
    %c0_107 = arith.constant 0 : index
    %c4_108 = arith.constant 4 : index
    %c2_109 = arith.constant 2 : index
    %197 = vector.load %arg6[%c0_107, %c4_108, %c2_109] : memref<2x22x22xf32, #tpu.memory_space<vmem>>, vector<1x16x16xf32>
    %198 = vector.shape_cast %197 : vector<1x16x16xf32> to vector<16x16xf32>
    %199 = vector.broadcast %196 : f32 to vector<16x16xf32>
    %200 = arith.mulf %199, %198 : vector<16x16xf32>
    %201 = arith.addf %195, %200 : vector<16x16xf32>
    %c31 = arith.constant 31 : index
    %202 = memref.load %arg1[%c31] : memref<99xf32, #tpu.memory_space<smem>>
    %c0_110 = arith.constant 0 : index
    %c4_111 = arith.constant 4 : index
    %c3_112 = arith.constant 3 : index
    %203 = vector.load %arg6[%c0_110, %c4_111, %c3_112] : memref<2x22x22xf32, #tpu.memory_space<vmem>>, vector<1x16x16xf32>
    %204 = vector.shape_cast %203 : vector<1x16x16xf32> to vector<16x16xf32>
    %205 = vector.broadcast %202 : f32 to vector<16x16xf32>
    %206 = arith.mulf %205, %204 : vector<16x16xf32>
    %207 = arith.addf %201, %206 : vector<16x16xf32>
    %c32 = arith.constant 32 : index
    %208 = memref.load %arg1[%c32] : memref<99xf32, #tpu.memory_space<smem>>
    %c0_113 = arith.constant 0 : index
    %c4_114 = arith.constant 4 : index
    %c4_115 = arith.constant 4 : index
    %209 = vector.load %arg6[%c0_113, %c4_114, %c4_115] : memref<2x22x22xf32, #tpu.memory_space<vmem>>, vector<1x16x16xf32>
    %210 = vector.shape_cast %209 : vector<1x16x16xf32> to vector<16x16xf32>
    %211 = vector.broadcast %208 : f32 to vector<16x16xf32>
    %212 = arith.mulf %211, %210 : vector<16x16xf32>
    %213 = arith.addf %207, %212 : vector<16x16xf32>
    %c33 = arith.constant 33 : index
    %214 = memref.load %arg1[%c33] : memref<99xf32, #tpu.memory_space<smem>>
    %c0_116 = arith.constant 0 : index
    %c4_117 = arith.constant 4 : index
    %c5_118 = arith.constant 5 : index
    %215 = vector.load %arg6[%c0_116, %c4_117, %c5_118] : memref<2x22x22xf32, #tpu.memory_space<vmem>>, vector<1x16x16xf32>
    %216 = vector.shape_cast %215 : vector<1x16x16xf32> to vector<16x16xf32>
    %217 = vector.broadcast %214 : f32 to vector<16x16xf32>
    %218 = arith.mulf %217, %216 : vector<16x16xf32>
    %219 = arith.addf %213, %218 : vector<16x16xf32>
    %c34 = arith.constant 34 : index
    %220 = memref.load %arg1[%c34] : memref<99xf32, #tpu.memory_space<smem>>
    %c0_119 = arith.constant 0 : index
    %c4_120 = arith.constant 4 : index
    %c6_121 = arith.constant 6 : index
    %221 = vector.load %arg6[%c0_119, %c4_120, %c6_121] : memref<2x22x22xf32, #tpu.memory_space<vmem>>, vector<1x16x16xf32>
    %222 = vector.shape_cast %221 : vector<1x16x16xf32> to vector<16x16xf32>
    %223 = vector.broadcast %220 : f32 to vector<16x16xf32>
    %224 = arith.mulf %223, %222 : vector<16x16xf32>
    %225 = arith.addf %219, %224 : vector<16x16xf32>
    %c35 = arith.constant 35 : index
    %226 = memref.load %arg1[%c35] : memref<99xf32, #tpu.memory_space<smem>>
    %c0_122 = arith.constant 0 : index
    %c5_123 = arith.constant 5 : index
    %c0_124 = arith.constant 0 : index
    %227 = vector.load %arg6[%c0_122, %c5_123, %c0_124] : memref<2x22x22xf32, #tpu.memory_space<vmem>>, vector<1x16x16xf32>
    %228 = vector.shape_cast %227 : vector<1x16x16xf32> to vector<16x16xf32>
    %229 = vector.broadcast %226 : f32 to vector<16x16xf32>
    %230 = arith.mulf %229, %228 : vector<16x16xf32>
    %231 = arith.addf %225, %230 : vector<16x16xf32>
    %c36 = arith.constant 36 : index
    %232 = memref.load %arg1[%c36] : memref<99xf32, #tpu.memory_space<smem>>
    %c0_125 = arith.constant 0 : index
    %c5_126 = arith.constant 5 : index
    %c1_127 = arith.constant 1 : index
    %233 = vector.load %arg6[%c0_125, %c5_126, %c1_127] : memref<2x22x22xf32, #tpu.memory_space<vmem>>, vector<1x16x16xf32>
    %234 = vector.shape_cast %233 : vector<1x16x16xf32> to vector<16x16xf32>
    %235 = vector.broadcast %232 : f32 to vector<16x16xf32>
    %236 = arith.mulf %235, %234 : vector<16x16xf32>
    %237 = arith.addf %231, %236 : vector<16x16xf32>
    %c37 = arith.constant 37 : index
    %238 = memref.load %arg1[%c37] : memref<99xf32, #tpu.memory_space<smem>>
    %c0_128 = arith.constant 0 : index
    %c5_129 = arith.constant 5 : index
    %c2_130 = arith.constant 2 : index
    %239 = vector.load %arg6[%c0_128, %c5_129, %c2_130] : memref<2x22x22xf32, #tpu.memory_space<vmem>>, vector<1x16x16xf32>
    %240 = vector.shape_cast %239 : vector<1x16x16xf32> to vector<16x16xf32>
    %241 = vector.broadcast %238 : f32 to vector<16x16xf32>
    %242 = arith.mulf %241, %240 : vector<16x16xf32>
    %243 = arith.addf %237, %242 : vector<16x16xf32>
    %c38 = arith.constant 38 : index
    %244 = memref.load %arg1[%c38] : memref<99xf32, #tpu.memory_space<smem>>
    %c0_131 = arith.constant 0 : index
    %c5_132 = arith.constant 5 : index
    %c3_133 = arith.constant 3 : index
    %245 = vector.load %arg6[%c0_131, %c5_132, %c3_133] : memref<2x22x22xf32, #tpu.memory_space<vmem>>, vector<1x16x16xf32>
    %246 = vector.shape_cast %245 : vector<1x16x16xf32> to vector<16x16xf32>
    %247 = vector.broadcast %244 : f32 to vector<16x16xf32>
    %248 = arith.mulf %247, %246 : vector<16x16xf32>
    %249 = arith.addf %243, %248 : vector<16x16xf32>
    %c39 = arith.constant 39 : index
    %250 = memref.load %arg1[%c39] : memref<99xf32, #tpu.memory_space<smem>>
    %c0_134 = arith.constant 0 : index
    %c5_135 = arith.constant 5 : index
    %c4_136 = arith.constant 4 : index
    %251 = vector.load %arg6[%c0_134, %c5_135, %c4_136] : memref<2x22x22xf32, #tpu.memory_space<vmem>>, vector<1x16x16xf32>
    %252 = vector.shape_cast %251 : vector<1x16x16xf32> to vector<16x16xf32>
    %253 = vector.broadcast %250 : f32 to vector<16x16xf32>
    %254 = arith.mulf %253, %252 : vector<16x16xf32>
    %255 = arith.addf %249, %254 : vector<16x16xf32>
    %c40 = arith.constant 40 : index
    %256 = memref.load %arg1[%c40] : memref<99xf32, #tpu.memory_space<smem>>
    %c0_137 = arith.constant 0 : index
    %c5_138 = arith.constant 5 : index
    %c5_139 = arith.constant 5 : index
    %257 = vector.load %arg6[%c0_137, %c5_138, %c5_139] : memref<2x22x22xf32, #tpu.memory_space<vmem>>, vector<1x16x16xf32>
    %258 = vector.shape_cast %257 : vector<1x16x16xf32> to vector<16x16xf32>
    %259 = vector.broadcast %256 : f32 to vector<16x16xf32>
    %260 = arith.mulf %259, %258 : vector<16x16xf32>
    %261 = arith.addf %255, %260 : vector<16x16xf32>
    %c41 = arith.constant 41 : index
    %262 = memref.load %arg1[%c41] : memref<99xf32, #tpu.memory_space<smem>>
    %c0_140 = arith.constant 0 : index
    %c5_141 = arith.constant 5 : index
    %c6_142 = arith.constant 6 : index
    %263 = vector.load %arg6[%c0_140, %c5_141, %c6_142] : memref<2x22x22xf32, #tpu.memory_space<vmem>>, vector<1x16x16xf32>
    %264 = vector.shape_cast %263 : vector<1x16x16xf32> to vector<16x16xf32>
    %265 = vector.broadcast %262 : f32 to vector<16x16xf32>
    %266 = arith.mulf %265, %264 : vector<16x16xf32>
    %267 = arith.addf %261, %266 : vector<16x16xf32>
    %c42 = arith.constant 42 : index
    %268 = memref.load %arg1[%c42] : memref<99xf32, #tpu.memory_space<smem>>
    %c0_143 = arith.constant 0 : index
    %c6_144 = arith.constant 6 : index
    %c0_145 = arith.constant 0 : index
    %269 = vector.load %arg6[%c0_143, %c6_144, %c0_145] : memref<2x22x22xf32, #tpu.memory_space<vmem>>, vector<1x16x16xf32>
    %270 = vector.shape_cast %269 : vector<1x16x16xf32> to vector<16x16xf32>
    %271 = vector.broadcast %268 : f32 to vector<16x16xf32>
    %272 = arith.mulf %271, %270 : vector<16x16xf32>
    %273 = arith.addf %267, %272 : vector<16x16xf32>
    %c43 = arith.constant 43 : index
    %274 = memref.load %arg1[%c43] : memref<99xf32, #tpu.memory_space<smem>>
    %c0_146 = arith.constant 0 : index
    %c6_147 = arith.constant 6 : index
    %c1_148 = arith.constant 1 : index
    %275 = vector.load %arg6[%c0_146, %c6_147, %c1_148] : memref<2x22x22xf32, #tpu.memory_space<vmem>>, vector<1x16x16xf32>
    %276 = vector.shape_cast %275 : vector<1x16x16xf32> to vector<16x16xf32>
    %277 = vector.broadcast %274 : f32 to vector<16x16xf32>
    %278 = arith.mulf %277, %276 : vector<16x16xf32>
    %279 = arith.addf %273, %278 : vector<16x16xf32>
    %c44 = arith.constant 44 : index
    %280 = memref.load %arg1[%c44] : memref<99xf32, #tpu.memory_space<smem>>
    %c0_149 = arith.constant 0 : index
    %c6_150 = arith.constant 6 : index
    %c2_151 = arith.constant 2 : index
    %281 = vector.load %arg6[%c0_149, %c6_150, %c2_151] : memref<2x22x22xf32, #tpu.memory_space<vmem>>, vector<1x16x16xf32>
    %282 = vector.shape_cast %281 : vector<1x16x16xf32> to vector<16x16xf32>
    %283 = vector.broadcast %280 : f32 to vector<16x16xf32>
    %284 = arith.mulf %283, %282 : vector<16x16xf32>
    %285 = arith.addf %279, %284 : vector<16x16xf32>
    %c45 = arith.constant 45 : index
    %286 = memref.load %arg1[%c45] : memref<99xf32, #tpu.memory_space<smem>>
    %c0_152 = arith.constant 0 : index
    %c6_153 = arith.constant 6 : index
    %c3_154 = arith.constant 3 : index
    %287 = vector.load %arg6[%c0_152, %c6_153, %c3_154] : memref<2x22x22xf32, #tpu.memory_space<vmem>>, vector<1x16x16xf32>
    %288 = vector.shape_cast %287 : vector<1x16x16xf32> to vector<16x16xf32>
    %289 = vector.broadcast %286 : f32 to vector<16x16xf32>
    %290 = arith.mulf %289, %288 : vector<16x16xf32>
    %291 = arith.addf %285, %290 : vector<16x16xf32>
    %c46 = arith.constant 46 : index
    %292 = memref.load %arg1[%c46] : memref<99xf32, #tpu.memory_space<smem>>
    %c0_155 = arith.constant 0 : index
    %c6_156 = arith.constant 6 : index
    %c4_157 = arith.constant 4 : index
    %293 = vector.load %arg6[%c0_155, %c6_156, %c4_157] : memref<2x22x22xf32, #tpu.memory_space<vmem>>, vector<1x16x16xf32>
    %294 = vector.shape_cast %293 : vector<1x16x16xf32> to vector<16x16xf32>
    %295 = vector.broadcast %292 : f32 to vector<16x16xf32>
    %296 = arith.mulf %295, %294 : vector<16x16xf32>
    %297 = arith.addf %291, %296 : vector<16x16xf32>
    %c47 = arith.constant 47 : index
    %298 = memref.load %arg1[%c47] : memref<99xf32, #tpu.memory_space<smem>>
    %c0_158 = arith.constant 0 : index
    %c6_159 = arith.constant 6 : index
    %c5_160 = arith.constant 5 : index
    %299 = vector.load %arg6[%c0_158, %c6_159, %c5_160] : memref<2x22x22xf32, #tpu.memory_space<vmem>>, vector<1x16x16xf32>
    %300 = vector.shape_cast %299 : vector<1x16x16xf32> to vector<16x16xf32>
    %301 = vector.broadcast %298 : f32 to vector<16x16xf32>
    %302 = arith.mulf %301, %300 : vector<16x16xf32>
    %303 = arith.addf %297, %302 : vector<16x16xf32>
    %c48 = arith.constant 48 : index
    %304 = memref.load %arg1[%c48] : memref<99xf32, #tpu.memory_space<smem>>
    %c0_161 = arith.constant 0 : index
    %c6_162 = arith.constant 6 : index
    %c6_163 = arith.constant 6 : index
    %305 = vector.load %arg6[%c0_161, %c6_162, %c6_163] : memref<2x22x22xf32, #tpu.memory_space<vmem>>, vector<1x16x16xf32>
    %306 = vector.shape_cast %305 : vector<1x16x16xf32> to vector<16x16xf32>
    %307 = vector.broadcast %304 : f32 to vector<16x16xf32>
    %308 = arith.mulf %307, %306 : vector<16x16xf32>
    %309 = arith.addf %303, %308 : vector<16x16xf32>
    %c49 = arith.constant 49 : index
    %310 = memref.load %arg1[%c49] : memref<99xf32, #tpu.memory_space<smem>>
    %c1_164 = arith.constant 1 : index
    %c0_165 = arith.constant 0 : index
    %c0_166 = arith.constant 0 : index
    %311 = vector.load %arg6[%c1_164, %c0_165, %c0_166] : memref<2x22x22xf32, #tpu.memory_space<vmem>>, vector<1x16x16xf32>
    %312 = vector.shape_cast %311 : vector<1x16x16xf32> to vector<16x16xf32>
    %313 = vector.broadcast %310 : f32 to vector<16x16xf32>
    %314 = arith.mulf %313, %312 : vector<16x16xf32>
    %315 = arith.addf %309, %314 : vector<16x16xf32>
    %c50 = arith.constant 50 : index
    %316 = memref.load %arg1[%c50] : memref<99xf32, #tpu.memory_space<smem>>
    %c1_167 = arith.constant 1 : index
    %c0_168 = arith.constant 0 : index
    %c1_169 = arith.constant 1 : index
    %317 = vector.load %arg6[%c1_167, %c0_168, %c1_169] : memref<2x22x22xf32, #tpu.memory_space<vmem>>, vector<1x16x16xf32>
    %318 = vector.shape_cast %317 : vector<1x16x16xf32> to vector<16x16xf32>
    %319 = vector.broadcast %316 : f32 to vector<16x16xf32>
    %320 = arith.mulf %319, %318 : vector<16x16xf32>
    %321 = arith.addf %315, %320 : vector<16x16xf32>
    %c51 = arith.constant 51 : index
    %322 = memref.load %arg1[%c51] : memref<99xf32, #tpu.memory_space<smem>>
    %c1_170 = arith.constant 1 : index
    %c0_171 = arith.constant 0 : index
    %c2_172 = arith.constant 2 : index
    %323 = vector.load %arg6[%c1_170, %c0_171, %c2_172] : memref<2x22x22xf32, #tpu.memory_space<vmem>>, vector<1x16x16xf32>
    %324 = vector.shape_cast %323 : vector<1x16x16xf32> to vector<16x16xf32>
    %325 = vector.broadcast %322 : f32 to vector<16x16xf32>
    %326 = arith.mulf %325, %324 : vector<16x16xf32>
    %327 = arith.addf %321, %326 : vector<16x16xf32>
    %c52 = arith.constant 52 : index
    %328 = memref.load %arg1[%c52] : memref<99xf32, #tpu.memory_space<smem>>
    %c1_173 = arith.constant 1 : index
    %c0_174 = arith.constant 0 : index
    %c3_175 = arith.constant 3 : index
    %329 = vector.load %arg6[%c1_173, %c0_174, %c3_175] : memref<2x22x22xf32, #tpu.memory_space<vmem>>, vector<1x16x16xf32>
    %330 = vector.shape_cast %329 : vector<1x16x16xf32> to vector<16x16xf32>
    %331 = vector.broadcast %328 : f32 to vector<16x16xf32>
    %332 = arith.mulf %331, %330 : vector<16x16xf32>
    %333 = arith.addf %327, %332 : vector<16x16xf32>
    %c53 = arith.constant 53 : index
    %334 = memref.load %arg1[%c53] : memref<99xf32, #tpu.memory_space<smem>>
    %c1_176 = arith.constant 1 : index
    %c0_177 = arith.constant 0 : index
    %c4_178 = arith.constant 4 : index
    %335 = vector.load %arg6[%c1_176, %c0_177, %c4_178] : memref<2x22x22xf32, #tpu.memory_space<vmem>>, vector<1x16x16xf32>
    %336 = vector.shape_cast %335 : vector<1x16x16xf32> to vector<16x16xf32>
    %337 = vector.broadcast %334 : f32 to vector<16x16xf32>
    %338 = arith.mulf %337, %336 : vector<16x16xf32>
    %339 = arith.addf %333, %338 : vector<16x16xf32>
    %c54 = arith.constant 54 : index
    %340 = memref.load %arg1[%c54] : memref<99xf32, #tpu.memory_space<smem>>
    %c1_179 = arith.constant 1 : index
    %c0_180 = arith.constant 0 : index
    %c5_181 = arith.constant 5 : index
    %341 = vector.load %arg6[%c1_179, %c0_180, %c5_181] : memref<2x22x22xf32, #tpu.memory_space<vmem>>, vector<1x16x16xf32>
    %342 = vector.shape_cast %341 : vector<1x16x16xf32> to vector<16x16xf32>
    %343 = vector.broadcast %340 : f32 to vector<16x16xf32>
    %344 = arith.mulf %343, %342 : vector<16x16xf32>
    %345 = arith.addf %339, %344 : vector<16x16xf32>
    %c55 = arith.constant 55 : index
    %346 = memref.load %arg1[%c55] : memref<99xf32, #tpu.memory_space<smem>>
    %c1_182 = arith.constant 1 : index
    %c0_183 = arith.constant 0 : index
    %c6_184 = arith.constant 6 : index
    %347 = vector.load %arg6[%c1_182, %c0_183, %c6_184] : memref<2x22x22xf32, #tpu.memory_space<vmem>>, vector<1x16x16xf32>
    %348 = vector.shape_cast %347 : vector<1x16x16xf32> to vector<16x16xf32>
    %349 = vector.broadcast %346 : f32 to vector<16x16xf32>
    %350 = arith.mulf %349, %348 : vector<16x16xf32>
    %351 = arith.addf %345, %350 : vector<16x16xf32>
    %c56 = arith.constant 56 : index
    %352 = memref.load %arg1[%c56] : memref<99xf32, #tpu.memory_space<smem>>
    %c1_185 = arith.constant 1 : index
    %c1_186 = arith.constant 1 : index
    %c0_187 = arith.constant 0 : index
    %353 = vector.load %arg6[%c1_185, %c1_186, %c0_187] : memref<2x22x22xf32, #tpu.memory_space<vmem>>, vector<1x16x16xf32>
    %354 = vector.shape_cast %353 : vector<1x16x16xf32> to vector<16x16xf32>
    %355 = vector.broadcast %352 : f32 to vector<16x16xf32>
    %356 = arith.mulf %355, %354 : vector<16x16xf32>
    %357 = arith.addf %351, %356 : vector<16x16xf32>
    %c57 = arith.constant 57 : index
    %358 = memref.load %arg1[%c57] : memref<99xf32, #tpu.memory_space<smem>>
    %c1_188 = arith.constant 1 : index
    %c1_189 = arith.constant 1 : index
    %c1_190 = arith.constant 1 : index
    %359 = vector.load %arg6[%c1_188, %c1_189, %c1_190] : memref<2x22x22xf32, #tpu.memory_space<vmem>>, vector<1x16x16xf32>
    %360 = vector.shape_cast %359 : vector<1x16x16xf32> to vector<16x16xf32>
    %361 = vector.broadcast %358 : f32 to vector<16x16xf32>
    %362 = arith.mulf %361, %360 : vector<16x16xf32>
    %363 = arith.addf %357, %362 : vector<16x16xf32>
    %c58 = arith.constant 58 : index
    %364 = memref.load %arg1[%c58] : memref<99xf32, #tpu.memory_space<smem>>
    %c1_191 = arith.constant 1 : index
    %c1_192 = arith.constant 1 : index
    %c2_193 = arith.constant 2 : index
    %365 = vector.load %arg6[%c1_191, %c1_192, %c2_193] : memref<2x22x22xf32, #tpu.memory_space<vmem>>, vector<1x16x16xf32>
    %366 = vector.shape_cast %365 : vector<1x16x16xf32> to vector<16x16xf32>
    %367 = vector.broadcast %364 : f32 to vector<16x16xf32>
    %368 = arith.mulf %367, %366 : vector<16x16xf32>
    %369 = arith.addf %363, %368 : vector<16x16xf32>
    %c59 = arith.constant 59 : index
    %370 = memref.load %arg1[%c59] : memref<99xf32, #tpu.memory_space<smem>>
    %c1_194 = arith.constant 1 : index
    %c1_195 = arith.constant 1 : index
    %c3_196 = arith.constant 3 : index
    %371 = vector.load %arg6[%c1_194, %c1_195, %c3_196] : memref<2x22x22xf32, #tpu.memory_space<vmem>>, vector<1x16x16xf32>
    %372 = vector.shape_cast %371 : vector<1x16x16xf32> to vector<16x16xf32>
    %373 = vector.broadcast %370 : f32 to vector<16x16xf32>
    %374 = arith.mulf %373, %372 : vector<16x16xf32>
    %375 = arith.addf %369, %374 : vector<16x16xf32>
    %c60 = arith.constant 60 : index
    %376 = memref.load %arg1[%c60] : memref<99xf32, #tpu.memory_space<smem>>
    %c1_197 = arith.constant 1 : index
    %c1_198 = arith.constant 1 : index
    %c4_199 = arith.constant 4 : index
    %377 = vector.load %arg6[%c1_197, %c1_198, %c4_199] : memref<2x22x22xf32, #tpu.memory_space<vmem>>, vector<1x16x16xf32>
    %378 = vector.shape_cast %377 : vector<1x16x16xf32> to vector<16x16xf32>
    %379 = vector.broadcast %376 : f32 to vector<16x16xf32>
    %380 = arith.mulf %379, %378 : vector<16x16xf32>
    %381 = arith.addf %375, %380 : vector<16x16xf32>
    %c61 = arith.constant 61 : index
    %382 = memref.load %arg1[%c61] : memref<99xf32, #tpu.memory_space<smem>>
    %c1_200 = arith.constant 1 : index
    %c1_201 = arith.constant 1 : index
    %c5_202 = arith.constant 5 : index
    %383 = vector.load %arg6[%c1_200, %c1_201, %c5_202] : memref<2x22x22xf32, #tpu.memory_space<vmem>>, vector<1x16x16xf32>
    %384 = vector.shape_cast %383 : vector<1x16x16xf32> to vector<16x16xf32>
    %385 = vector.broadcast %382 : f32 to vector<16x16xf32>
    %386 = arith.mulf %385, %384 : vector<16x16xf32>
    %387 = arith.addf %381, %386 : vector<16x16xf32>
    %c62 = arith.constant 62 : index
    %388 = memref.load %arg1[%c62] : memref<99xf32, #tpu.memory_space<smem>>
    %c1_203 = arith.constant 1 : index
    %c1_204 = arith.constant 1 : index
    %c6_205 = arith.constant 6 : index
    %389 = vector.load %arg6[%c1_203, %c1_204, %c6_205] : memref<2x22x22xf32, #tpu.memory_space<vmem>>, vector<1x16x16xf32>
    %390 = vector.shape_cast %389 : vector<1x16x16xf32> to vector<16x16xf32>
    %391 = vector.broadcast %388 : f32 to vector<16x16xf32>
    %392 = arith.mulf %391, %390 : vector<16x16xf32>
    %393 = arith.addf %387, %392 : vector<16x16xf32>
    %c63 = arith.constant 63 : index
    %394 = memref.load %arg1[%c63] : memref<99xf32, #tpu.memory_space<smem>>
    %c1_206 = arith.constant 1 : index
    %c2_207 = arith.constant 2 : index
    %c0_208 = arith.constant 0 : index
    %395 = vector.load %arg6[%c1_206, %c2_207, %c0_208] : memref<2x22x22xf32, #tpu.memory_space<vmem>>, vector<1x16x16xf32>
    %396 = vector.shape_cast %395 : vector<1x16x16xf32> to vector<16x16xf32>
    %397 = vector.broadcast %394 : f32 to vector<16x16xf32>
    %398 = arith.mulf %397, %396 : vector<16x16xf32>
    %399 = arith.addf %393, %398 : vector<16x16xf32>
    %c64 = arith.constant 64 : index
    %400 = memref.load %arg1[%c64] : memref<99xf32, #tpu.memory_space<smem>>
    %c1_209 = arith.constant 1 : index
    %c2_210 = arith.constant 2 : index
    %c1_211 = arith.constant 1 : index
    %401 = vector.load %arg6[%c1_209, %c2_210, %c1_211] : memref<2x22x22xf32, #tpu.memory_space<vmem>>, vector<1x16x16xf32>
    %402 = vector.shape_cast %401 : vector<1x16x16xf32> to vector<16x16xf32>
    %403 = vector.broadcast %400 : f32 to vector<16x16xf32>
    %404 = arith.mulf %403, %402 : vector<16x16xf32>
    %405 = arith.addf %399, %404 : vector<16x16xf32>
    %c65 = arith.constant 65 : index
    %406 = memref.load %arg1[%c65] : memref<99xf32, #tpu.memory_space<smem>>
    %c1_212 = arith.constant 1 : index
    %c2_213 = arith.constant 2 : index
    %c2_214 = arith.constant 2 : index
    %407 = vector.load %arg6[%c1_212, %c2_213, %c2_214] : memref<2x22x22xf32, #tpu.memory_space<vmem>>, vector<1x16x16xf32>
    %408 = vector.shape_cast %407 : vector<1x16x16xf32> to vector<16x16xf32>
    %409 = vector.broadcast %406 : f32 to vector<16x16xf32>
    %410 = arith.mulf %409, %408 : vector<16x16xf32>
    %411 = arith.addf %405, %410 : vector<16x16xf32>
    %c66 = arith.constant 66 : index
    %412 = memref.load %arg1[%c66] : memref<99xf32, #tpu.memory_space<smem>>
    %c1_215 = arith.constant 1 : index
    %c2_216 = arith.constant 2 : index
    %c3_217 = arith.constant 3 : index
    %413 = vector.load %arg6[%c1_215, %c2_216, %c3_217] : memref<2x22x22xf32, #tpu.memory_space<vmem>>, vector<1x16x16xf32>
    %414 = vector.shape_cast %413 : vector<1x16x16xf32> to vector<16x16xf32>
    %415 = vector.broadcast %412 : f32 to vector<16x16xf32>
    %416 = arith.mulf %415, %414 : vector<16x16xf32>
    %417 = arith.addf %411, %416 : vector<16x16xf32>
    %c67 = arith.constant 67 : index
    %418 = memref.load %arg1[%c67] : memref<99xf32, #tpu.memory_space<smem>>
    %c1_218 = arith.constant 1 : index
    %c2_219 = arith.constant 2 : index
    %c4_220 = arith.constant 4 : index
    %419 = vector.load %arg6[%c1_218, %c2_219, %c4_220] : memref<2x22x22xf32, #tpu.memory_space<vmem>>, vector<1x16x16xf32>
    %420 = vector.shape_cast %419 : vector<1x16x16xf32> to vector<16x16xf32>
    %421 = vector.broadcast %418 : f32 to vector<16x16xf32>
    %422 = arith.mulf %421, %420 : vector<16x16xf32>
    %423 = arith.addf %417, %422 : vector<16x16xf32>
    %c68 = arith.constant 68 : index
    %424 = memref.load %arg1[%c68] : memref<99xf32, #tpu.memory_space<smem>>
    %c1_221 = arith.constant 1 : index
    %c2_222 = arith.constant 2 : index
    %c5_223 = arith.constant 5 : index
    %425 = vector.load %arg6[%c1_221, %c2_222, %c5_223] : memref<2x22x22xf32, #tpu.memory_space<vmem>>, vector<1x16x16xf32>
    %426 = vector.shape_cast %425 : vector<1x16x16xf32> to vector<16x16xf32>
    %427 = vector.broadcast %424 : f32 to vector<16x16xf32>
    %428 = arith.mulf %427, %426 : vector<16x16xf32>
    %429 = arith.addf %423, %428 : vector<16x16xf32>
    %c69 = arith.constant 69 : index
    %430 = memref.load %arg1[%c69] : memref<99xf32, #tpu.memory_space<smem>>
    %c1_224 = arith.constant 1 : index
    %c2_225 = arith.constant 2 : index
    %c6_226 = arith.constant 6 : index
    %431 = vector.load %arg6[%c1_224, %c2_225, %c6_226] : memref<2x22x22xf32, #tpu.memory_space<vmem>>, vector<1x16x16xf32>
    %432 = vector.shape_cast %431 : vector<1x16x16xf32> to vector<16x16xf32>
    %433 = vector.broadcast %430 : f32 to vector<16x16xf32>
    %434 = arith.mulf %433, %432 : vector<16x16xf32>
    %435 = arith.addf %429, %434 : vector<16x16xf32>
    %c70 = arith.constant 70 : index
    %436 = memref.load %arg1[%c70] : memref<99xf32, #tpu.memory_space<smem>>
    %c1_227 = arith.constant 1 : index
    %c3_228 = arith.constant 3 : index
    %c0_229 = arith.constant 0 : index
    %437 = vector.load %arg6[%c1_227, %c3_228, %c0_229] : memref<2x22x22xf32, #tpu.memory_space<vmem>>, vector<1x16x16xf32>
    %438 = vector.shape_cast %437 : vector<1x16x16xf32> to vector<16x16xf32>
    %439 = vector.broadcast %436 : f32 to vector<16x16xf32>
    %440 = arith.mulf %439, %438 : vector<16x16xf32>
    %441 = arith.addf %435, %440 : vector<16x16xf32>
    %c71 = arith.constant 71 : index
    %442 = memref.load %arg1[%c71] : memref<99xf32, #tpu.memory_space<smem>>
    %c1_230 = arith.constant 1 : index
    %c3_231 = arith.constant 3 : index
    %c1_232 = arith.constant 1 : index
    %443 = vector.load %arg6[%c1_230, %c3_231, %c1_232] : memref<2x22x22xf32, #tpu.memory_space<vmem>>, vector<1x16x16xf32>
    %444 = vector.shape_cast %443 : vector<1x16x16xf32> to vector<16x16xf32>
    %445 = vector.broadcast %442 : f32 to vector<16x16xf32>
    %446 = arith.mulf %445, %444 : vector<16x16xf32>
    %447 = arith.addf %441, %446 : vector<16x16xf32>
    %c72 = arith.constant 72 : index
    %448 = memref.load %arg1[%c72] : memref<99xf32, #tpu.memory_space<smem>>
    %c1_233 = arith.constant 1 : index
    %c3_234 = arith.constant 3 : index
    %c2_235 = arith.constant 2 : index
    %449 = vector.load %arg6[%c1_233, %c3_234, %c2_235] : memref<2x22x22xf32, #tpu.memory_space<vmem>>, vector<1x16x16xf32>
    %450 = vector.shape_cast %449 : vector<1x16x16xf32> to vector<16x16xf32>
    %451 = vector.broadcast %448 : f32 to vector<16x16xf32>
    %452 = arith.mulf %451, %450 : vector<16x16xf32>
    %453 = arith.addf %447, %452 : vector<16x16xf32>
    %c73 = arith.constant 73 : index
    %454 = memref.load %arg1[%c73] : memref<99xf32, #tpu.memory_space<smem>>
    %c1_236 = arith.constant 1 : index
    %c3_237 = arith.constant 3 : index
    %c3_238 = arith.constant 3 : index
    %455 = vector.load %arg6[%c1_236, %c3_237, %c3_238] : memref<2x22x22xf32, #tpu.memory_space<vmem>>, vector<1x16x16xf32>
    %456 = vector.shape_cast %455 : vector<1x16x16xf32> to vector<16x16xf32>
    %457 = vector.broadcast %454 : f32 to vector<16x16xf32>
    %458 = arith.mulf %457, %456 : vector<16x16xf32>
    %459 = arith.addf %453, %458 : vector<16x16xf32>
    %c74 = arith.constant 74 : index
    %460 = memref.load %arg1[%c74] : memref<99xf32, #tpu.memory_space<smem>>
    %c1_239 = arith.constant 1 : index
    %c3_240 = arith.constant 3 : index
    %c4_241 = arith.constant 4 : index
    %461 = vector.load %arg6[%c1_239, %c3_240, %c4_241] : memref<2x22x22xf32, #tpu.memory_space<vmem>>, vector<1x16x16xf32>
    %462 = vector.shape_cast %461 : vector<1x16x16xf32> to vector<16x16xf32>
    %463 = vector.broadcast %460 : f32 to vector<16x16xf32>
    %464 = arith.mulf %463, %462 : vector<16x16xf32>
    %465 = arith.addf %459, %464 : vector<16x16xf32>
    %c75 = arith.constant 75 : index
    %466 = memref.load %arg1[%c75] : memref<99xf32, #tpu.memory_space<smem>>
    %c1_242 = arith.constant 1 : index
    %c3_243 = arith.constant 3 : index
    %c5_244 = arith.constant 5 : index
    %467 = vector.load %arg6[%c1_242, %c3_243, %c5_244] : memref<2x22x22xf32, #tpu.memory_space<vmem>>, vector<1x16x16xf32>
    %468 = vector.shape_cast %467 : vector<1x16x16xf32> to vector<16x16xf32>
    %469 = vector.broadcast %466 : f32 to vector<16x16xf32>
    %470 = arith.mulf %469, %468 : vector<16x16xf32>
    %471 = arith.addf %465, %470 : vector<16x16xf32>
    %c76 = arith.constant 76 : index
    %472 = memref.load %arg1[%c76] : memref<99xf32, #tpu.memory_space<smem>>
    %c1_245 = arith.constant 1 : index
    %c3_246 = arith.constant 3 : index
    %c6_247 = arith.constant 6 : index
    %473 = vector.load %arg6[%c1_245, %c3_246, %c6_247] : memref<2x22x22xf32, #tpu.memory_space<vmem>>, vector<1x16x16xf32>
    %474 = vector.shape_cast %473 : vector<1x16x16xf32> to vector<16x16xf32>
    %475 = vector.broadcast %472 : f32 to vector<16x16xf32>
    %476 = arith.mulf %475, %474 : vector<16x16xf32>
    %477 = arith.addf %471, %476 : vector<16x16xf32>
    %c77 = arith.constant 77 : index
    %478 = memref.load %arg1[%c77] : memref<99xf32, #tpu.memory_space<smem>>
    %c1_248 = arith.constant 1 : index
    %c4_249 = arith.constant 4 : index
    %c0_250 = arith.constant 0 : index
    %479 = vector.load %arg6[%c1_248, %c4_249, %c0_250] : memref<2x22x22xf32, #tpu.memory_space<vmem>>, vector<1x16x16xf32>
    %480 = vector.shape_cast %479 : vector<1x16x16xf32> to vector<16x16xf32>
    %481 = vector.broadcast %478 : f32 to vector<16x16xf32>
    %482 = arith.mulf %481, %480 : vector<16x16xf32>
    %483 = arith.addf %477, %482 : vector<16x16xf32>
    %c78 = arith.constant 78 : index
    %484 = memref.load %arg1[%c78] : memref<99xf32, #tpu.memory_space<smem>>
    %c1_251 = arith.constant 1 : index
    %c4_252 = arith.constant 4 : index
    %c1_253 = arith.constant 1 : index
    %485 = vector.load %arg6[%c1_251, %c4_252, %c1_253] : memref<2x22x22xf32, #tpu.memory_space<vmem>>, vector<1x16x16xf32>
    %486 = vector.shape_cast %485 : vector<1x16x16xf32> to vector<16x16xf32>
    %487 = vector.broadcast %484 : f32 to vector<16x16xf32>
    %488 = arith.mulf %487, %486 : vector<16x16xf32>
    %489 = arith.addf %483, %488 : vector<16x16xf32>
    %c79 = arith.constant 79 : index
    %490 = memref.load %arg1[%c79] : memref<99xf32, #tpu.memory_space<smem>>
    %c1_254 = arith.constant 1 : index
    %c4_255 = arith.constant 4 : index
    %c2_256 = arith.constant 2 : index
    %491 = vector.load %arg6[%c1_254, %c4_255, %c2_256] : memref<2x22x22xf32, #tpu.memory_space<vmem>>, vector<1x16x16xf32>
    %492 = vector.shape_cast %491 : vector<1x16x16xf32> to vector<16x16xf32>
    %493 = vector.broadcast %490 : f32 to vector<16x16xf32>
    %494 = arith.mulf %493, %492 : vector<16x16xf32>
    %495 = arith.addf %489, %494 : vector<16x16xf32>
    %c80 = arith.constant 80 : index
    %496 = memref.load %arg1[%c80] : memref<99xf32, #tpu.memory_space<smem>>
    %c1_257 = arith.constant 1 : index
    %c4_258 = arith.constant 4 : index
    %c3_259 = arith.constant 3 : index
    %497 = vector.load %arg6[%c1_257, %c4_258, %c3_259] : memref<2x22x22xf32, #tpu.memory_space<vmem>>, vector<1x16x16xf32>
    %498 = vector.shape_cast %497 : vector<1x16x16xf32> to vector<16x16xf32>
    %499 = vector.broadcast %496 : f32 to vector<16x16xf32>
    %500 = arith.mulf %499, %498 : vector<16x16xf32>
    %501 = arith.addf %495, %500 : vector<16x16xf32>
    %c81 = arith.constant 81 : index
    %502 = memref.load %arg1[%c81] : memref<99xf32, #tpu.memory_space<smem>>
    %c1_260 = arith.constant 1 : index
    %c4_261 = arith.constant 4 : index
    %c4_262 = arith.constant 4 : index
    %503 = vector.load %arg6[%c1_260, %c4_261, %c4_262] : memref<2x22x22xf32, #tpu.memory_space<vmem>>, vector<1x16x16xf32>
    %504 = vector.shape_cast %503 : vector<1x16x16xf32> to vector<16x16xf32>
    %505 = vector.broadcast %502 : f32 to vector<16x16xf32>
    %506 = arith.mulf %505, %504 : vector<16x16xf32>
    %507 = arith.addf %501, %506 : vector<16x16xf32>
    %c82 = arith.constant 82 : index
    %508 = memref.load %arg1[%c82] : memref<99xf32, #tpu.memory_space<smem>>
    %c1_263 = arith.constant 1 : index
    %c4_264 = arith.constant 4 : index
    %c5_265 = arith.constant 5 : index
    %509 = vector.load %arg6[%c1_263, %c4_264, %c5_265] : memref<2x22x22xf32, #tpu.memory_space<vmem>>, vector<1x16x16xf32>
    %510 = vector.shape_cast %509 : vector<1x16x16xf32> to vector<16x16xf32>
    %511 = vector.broadcast %508 : f32 to vector<16x16xf32>
    %512 = arith.mulf %511, %510 : vector<16x16xf32>
    %513 = arith.addf %507, %512 : vector<16x16xf32>
    %c83 = arith.constant 83 : index
    %514 = memref.load %arg1[%c83] : memref<99xf32, #tpu.memory_space<smem>>
    %c1_266 = arith.constant 1 : index
    %c4_267 = arith.constant 4 : index
    %c6_268 = arith.constant 6 : index
    %515 = vector.load %arg6[%c1_266, %c4_267, %c6_268] : memref<2x22x22xf32, #tpu.memory_space<vmem>>, vector<1x16x16xf32>
    %516 = vector.shape_cast %515 : vector<1x16x16xf32> to vector<16x16xf32>
    %517 = vector.broadcast %514 : f32 to vector<16x16xf32>
    %518 = arith.mulf %517, %516 : vector<16x16xf32>
    %519 = arith.addf %513, %518 : vector<16x16xf32>
    %c84 = arith.constant 84 : index
    %520 = memref.load %arg1[%c84] : memref<99xf32, #tpu.memory_space<smem>>
    %c1_269 = arith.constant 1 : index
    %c5_270 = arith.constant 5 : index
    %c0_271 = arith.constant 0 : index
    %521 = vector.load %arg6[%c1_269, %c5_270, %c0_271] : memref<2x22x22xf32, #tpu.memory_space<vmem>>, vector<1x16x16xf32>
    %522 = vector.shape_cast %521 : vector<1x16x16xf32> to vector<16x16xf32>
    %523 = vector.broadcast %520 : f32 to vector<16x16xf32>
    %524 = arith.mulf %523, %522 : vector<16x16xf32>
    %525 = arith.addf %519, %524 : vector<16x16xf32>
    %c85 = arith.constant 85 : index
    %526 = memref.load %arg1[%c85] : memref<99xf32, #tpu.memory_space<smem>>
    %c1_272 = arith.constant 1 : index
    %c5_273 = arith.constant 5 : index
    %c1_274 = arith.constant 1 : index
    %527 = vector.load %arg6[%c1_272, %c5_273, %c1_274] : memref<2x22x22xf32, #tpu.memory_space<vmem>>, vector<1x16x16xf32>
    %528 = vector.shape_cast %527 : vector<1x16x16xf32> to vector<16x16xf32>
    %529 = vector.broadcast %526 : f32 to vector<16x16xf32>
    %530 = arith.mulf %529, %528 : vector<16x16xf32>
    %531 = arith.addf %525, %530 : vector<16x16xf32>
    %c86 = arith.constant 86 : index
    %532 = memref.load %arg1[%c86] : memref<99xf32, #tpu.memory_space<smem>>
    %c1_275 = arith.constant 1 : index
    %c5_276 = arith.constant 5 : index
    %c2_277 = arith.constant 2 : index
    %533 = vector.load %arg6[%c1_275, %c5_276, %c2_277] : memref<2x22x22xf32, #tpu.memory_space<vmem>>, vector<1x16x16xf32>
    %534 = vector.shape_cast %533 : vector<1x16x16xf32> to vector<16x16xf32>
    %535 = vector.broadcast %532 : f32 to vector<16x16xf32>
    %536 = arith.mulf %535, %534 : vector<16x16xf32>
    %537 = arith.addf %531, %536 : vector<16x16xf32>
    %c87 = arith.constant 87 : index
    %538 = memref.load %arg1[%c87] : memref<99xf32, #tpu.memory_space<smem>>
    %c1_278 = arith.constant 1 : index
    %c5_279 = arith.constant 5 : index
    %c3_280 = arith.constant 3 : index
    %539 = vector.load %arg6[%c1_278, %c5_279, %c3_280] : memref<2x22x22xf32, #tpu.memory_space<vmem>>, vector<1x16x16xf32>
    %540 = vector.shape_cast %539 : vector<1x16x16xf32> to vector<16x16xf32>
    %541 = vector.broadcast %538 : f32 to vector<16x16xf32>
    %542 = arith.mulf %541, %540 : vector<16x16xf32>
    %543 = arith.addf %537, %542 : vector<16x16xf32>
    %c88 = arith.constant 88 : index
    %544 = memref.load %arg1[%c88] : memref<99xf32, #tpu.memory_space<smem>>
    %c1_281 = arith.constant 1 : index
    %c5_282 = arith.constant 5 : index
    %c4_283 = arith.constant 4 : index
    %545 = vector.load %arg6[%c1_281, %c5_282, %c4_283] : memref<2x22x22xf32, #tpu.memory_space<vmem>>, vector<1x16x16xf32>
    %546 = vector.shape_cast %545 : vector<1x16x16xf32> to vector<16x16xf32>
    %547 = vector.broadcast %544 : f32 to vector<16x16xf32>
    %548 = arith.mulf %547, %546 : vector<16x16xf32>
    %549 = arith.addf %543, %548 : vector<16x16xf32>
    %c89 = arith.constant 89 : index
    %550 = memref.load %arg1[%c89] : memref<99xf32, #tpu.memory_space<smem>>
    %c1_284 = arith.constant 1 : index
    %c5_285 = arith.constant 5 : index
    %c5_286 = arith.constant 5 : index
    %551 = vector.load %arg6[%c1_284, %c5_285, %c5_286] : memref<2x22x22xf32, #tpu.memory_space<vmem>>, vector<1x16x16xf32>
    %552 = vector.shape_cast %551 : vector<1x16x16xf32> to vector<16x16xf32>
    %553 = vector.broadcast %550 : f32 to vector<16x16xf32>
    %554 = arith.mulf %553, %552 : vector<16x16xf32>
    %555 = arith.addf %549, %554 : vector<16x16xf32>
    %c90 = arith.constant 90 : index
    %556 = memref.load %arg1[%c90] : memref<99xf32, #tpu.memory_space<smem>>
    %c1_287 = arith.constant 1 : index
    %c5_288 = arith.constant 5 : index
    %c6_289 = arith.constant 6 : index
    %557 = vector.load %arg6[%c1_287, %c5_288, %c6_289] : memref<2x22x22xf32, #tpu.memory_space<vmem>>, vector<1x16x16xf32>
    %558 = vector.shape_cast %557 : vector<1x16x16xf32> to vector<16x16xf32>
    %559 = vector.broadcast %556 : f32 to vector<16x16xf32>
    %560 = arith.mulf %559, %558 : vector<16x16xf32>
    %561 = arith.addf %555, %560 : vector<16x16xf32>
    %c91 = arith.constant 91 : index
    %562 = memref.load %arg1[%c91] : memref<99xf32, #tpu.memory_space<smem>>
    %c1_290 = arith.constant 1 : index
    %c6_291 = arith.constant 6 : index
    %c0_292 = arith.constant 0 : index
    %563 = vector.load %arg6[%c1_290, %c6_291, %c0_292] : memref<2x22x22xf32, #tpu.memory_space<vmem>>, vector<1x16x16xf32>
    %564 = vector.shape_cast %563 : vector<1x16x16xf32> to vector<16x16xf32>
    %565 = vector.broadcast %562 : f32 to vector<16x16xf32>
    %566 = arith.mulf %565, %564 : vector<16x16xf32>
    %567 = arith.addf %561, %566 : vector<16x16xf32>
    %c92 = arith.constant 92 : index
    %568 = memref.load %arg1[%c92] : memref<99xf32, #tpu.memory_space<smem>>
    %c1_293 = arith.constant 1 : index
    %c6_294 = arith.constant 6 : index
    %c1_295 = arith.constant 1 : index
    %569 = vector.load %arg6[%c1_293, %c6_294, %c1_295] : memref<2x22x22xf32, #tpu.memory_space<vmem>>, vector<1x16x16xf32>
    %570 = vector.shape_cast %569 : vector<1x16x16xf32> to vector<16x16xf32>
    %571 = vector.broadcast %568 : f32 to vector<16x16xf32>
    %572 = arith.mulf %571, %570 : vector<16x16xf32>
    %573 = arith.addf %567, %572 : vector<16x16xf32>
    %c93 = arith.constant 93 : index
    %574 = memref.load %arg1[%c93] : memref<99xf32, #tpu.memory_space<smem>>
    %c1_296 = arith.constant 1 : index
    %c6_297 = arith.constant 6 : index
    %c2_298 = arith.constant 2 : index
    %575 = vector.load %arg6[%c1_296, %c6_297, %c2_298] : memref<2x22x22xf32, #tpu.memory_space<vmem>>, vector<1x16x16xf32>
    %576 = vector.shape_cast %575 : vector<1x16x16xf32> to vector<16x16xf32>
    %577 = vector.broadcast %574 : f32 to vector<16x16xf32>
    %578 = arith.mulf %577, %576 : vector<16x16xf32>
    %579 = arith.addf %573, %578 : vector<16x16xf32>
    %c94 = arith.constant 94 : index
    %580 = memref.load %arg1[%c94] : memref<99xf32, #tpu.memory_space<smem>>
    %c1_299 = arith.constant 1 : index
    %c6_300 = arith.constant 6 : index
    %c3_301 = arith.constant 3 : index
    %581 = vector.load %arg6[%c1_299, %c6_300, %c3_301] : memref<2x22x22xf32, #tpu.memory_space<vmem>>, vector<1x16x16xf32>
    %582 = vector.shape_cast %581 : vector<1x16x16xf32> to vector<16x16xf32>
    %583 = vector.broadcast %580 : f32 to vector<16x16xf32>
    %584 = arith.mulf %583, %582 : vector<16x16xf32>
    %585 = arith.addf %579, %584 : vector<16x16xf32>
    %c95 = arith.constant 95 : index
    %586 = memref.load %arg1[%c95] : memref<99xf32, #tpu.memory_space<smem>>
    %c1_302 = arith.constant 1 : index
    %c6_303 = arith.constant 6 : index
    %c4_304 = arith.constant 4 : index
    %587 = vector.load %arg6[%c1_302, %c6_303, %c4_304] : memref<2x22x22xf32, #tpu.memory_space<vmem>>, vector<1x16x16xf32>
    %588 = vector.shape_cast %587 : vector<1x16x16xf32> to vector<16x16xf32>
    %589 = vector.broadcast %586 : f32 to vector<16x16xf32>
    %590 = arith.mulf %589, %588 : vector<16x16xf32>
    %591 = arith.addf %585, %590 : vector<16x16xf32>
    %c96 = arith.constant 96 : index
    %592 = memref.load %arg1[%c96] : memref<99xf32, #tpu.memory_space<smem>>
    %c1_305 = arith.constant 1 : index
    %c6_306 = arith.constant 6 : index
    %c5_307 = arith.constant 5 : index
    %593 = vector.load %arg6[%c1_305, %c6_306, %c5_307] : memref<2x22x22xf32, #tpu.memory_space<vmem>>, vector<1x16x16xf32>
    %594 = vector.shape_cast %593 : vector<1x16x16xf32> to vector<16x16xf32>
    %595 = vector.broadcast %592 : f32 to vector<16x16xf32>
    %596 = arith.mulf %595, %594 : vector<16x16xf32>
    %597 = arith.addf %591, %596 : vector<16x16xf32>
    %c97 = arith.constant 97 : index
    %598 = memref.load %arg1[%c97] : memref<99xf32, #tpu.memory_space<smem>>
    %c1_308 = arith.constant 1 : index
    %c6_309 = arith.constant 6 : index
    %c6_310 = arith.constant 6 : index
    %599 = vector.load %arg6[%c1_308, %c6_309, %c6_310] : memref<2x22x22xf32, #tpu.memory_space<vmem>>, vector<1x16x16xf32>
    %600 = vector.shape_cast %599 : vector<1x16x16xf32> to vector<16x16xf32>
    %601 = vector.broadcast %598 : f32 to vector<16x16xf32>
    %602 = arith.mulf %601, %600 : vector<16x16xf32>
    %603 = arith.addf %597, %602 : vector<16x16xf32>
    %c98 = arith.constant 98 : index
    %604 = memref.load %arg1[%c98] : memref<99xf32, #tpu.memory_space<smem>>
    %605 = vector.broadcast %604 : f32 to vector<16x16xf32>
    %606 = arith.addf %603, %605 : vector<16x16xf32>
    %cst_311 = arith.constant 0.000000e+00 : f32
    %607 = vector.broadcast %cst_311 : f32 to vector<16x16xf32>
    %608 = arith.subf %607, %606 : vector<16x16xf32>
    %609 = math.exp %608 : vector<16x16xf32>
    %cst_312 = arith.constant 1.000000e+00 : f32
    %610 = vector.broadcast %cst_312 : f32 to vector<16x16xf32>
    %611 = arith.addf %610, %609 : vector<16x16xf32>
    %612 = tpu.reciprocal %611 {approx = true} : vector<16x16xf32> -> vector<16x16xf32>
    %613 = vector.shape_cast %612 : vector<16x16xf32> to vector<1x16x16xf32>
    %614 = vector.broadcast %613 : vector<1x16x16xf32> to vector<16x16x16xf32>
    %615 = arith.mulf %2, %614 : vector<16x16x16xf32>
    %c0_313 = arith.constant 0 : index
    %c0_314 = arith.constant 0 : index
    %c0_315 = arith.constant 0 : index
    %c0_316 = arith.constant 0 : index
    %616 = vector.load %arg3[%c0_313, %c0_314, %c0_315, %c0_316] : memref<1x16x16x16xbf16, #tpu.memory_space<vmem>>, vector<1x16x16x16xbf16>
    %617 = vector.shape_cast %616 : vector<1x16x16x16xbf16> to vector<16x16x16xbf16>
    %618 = arith.extf %617 : vector<16x16x16xbf16> to vector<16x16x16xf32>
    %619 = arith.addf %615, %618 : vector<16x16x16xf32>
    %c0_317 = arith.constant 0 : index
    %c0_318 = arith.constant 0 : index
    %c0_319 = arith.constant 0 : index
    %c0_320 = arith.constant 0 : index
    %620 = vector.load %arg4[%c0_317, %c0_318, %c0_319, %c0_320] : memref<1x16x16x16xbf16, #tpu.memory_space<vmem>>, vector<1x16x16x16xbf16>
    %621 = vector.shape_cast %620 : vector<1x16x16x16xbf16> to vector<16x16x16xbf16>
    %622 = arith.extf %621 : vector<16x16x16xbf16> to vector<16x16x16xf32>
    %623 = arith.addf %619, %622 : vector<16x16x16xf32>
    %cst_321 = arith.constant 0.333333343 : f32
    %624 = vector.broadcast %cst_321 : f32 to vector<16x16x16xf32>
    %625 = arith.mulf %623, %624 : vector<16x16x16xf32>
    %626 = arith.truncf %625 : vector<16x16x16xf32> to vector<16x16x16xbf16>
    %c0_322 = arith.constant 0 : index
    %c0_323 = arith.constant 0 : index
    %c0_324 = arith.constant 0 : index
    %c0_325 = arith.constant 0 : index
    %627 = vector.load %arg5[%c0_322, %c0_323, %c0_324, %c0_325] : memref<1x16x16x16xbf16, #tpu.memory_space<vmem>>, vector<1x16x16x16xbf16>
    %628 = vector.shape_cast %627 : vector<1x16x16x16xbf16> to vector<16x16x16xbf16>
    %629 = vector.shape_cast %626 : vector<16x16x16xbf16> to vector<1x16x16x16xbf16>
    tpu.vector_store %arg5[%c0_322, %c0_323, %c0_324, %c0_325], %629 {strides = array<i32>} : memref<1x16x16x16xbf16, #tpu.memory_space<vmem>>, vector<1x16x16x16xbf16>,
    return
  }
  func.func @transform_0(%arg0: i32) -> i32 {
    %c0_i32 = arith.constant 0 : i32
    %c0_i32_0 = arith.constant 0 : i32
    return %c0_i32 : i32
  }
  func.func @transform_1(%arg0: i32) -> (i32, i32, i32, i32) {
    %c0_i32 = arith.constant 0 : i32
    %c0_i32_0 = arith.constant 0 : i32
    %c0_i32_1 = arith.constant 0 : i32
    %c0_i32_2 = arith.constant 0 : i32
    return %arg0, %c0_i32, %c0_i32_0, %c0_i32_1 : i32, i32, i32, i32
  }
  func.func @transform_2(%arg0: i32) -> (i32, i32, i32, i32) {
    %c0_i32 = arith.constant 0 : i32
    %c0_i32_0 = arith.constant 0 : i32
    %c0_i32_1 = arith.constant 0 : i32
    %c0_i32_2 = arith.constant 0 : i32
    return %arg0, %c0_i32, %c0_i32_0, %c0_i32_1 : i32, i32, i32, i32
  }
  func.func @transform_3(%arg0: i32) -> (i32, i32, i32, i32) {
    %c0_i32 = arith.constant 0 : i32
    %c0_i32_0 = arith.constant 0 : i32
    %c0_i32_1 = arith.constant 0 : i32
    %c0_i32_2 = arith.constant 0 : i32
    return %arg0, %c0_i32, %c0_i32_0, %c0_i32_1 : i32, i32, i32, i32
  }
  func.func @transform_4(%arg0: i32) -> (i32, i32, i32, i32) {
    %c0_i32 = arith.constant 0 : i32
    %c0_i32_0 = arith.constant 0 : i32
    %c0_i32_1 = arith.constant 0 : i32
    %c0_i32_2 = arith.constant 0 : i32
    return %arg0, %c0_i32, %c0_i32_0, %c0_i32_1 : i32, i32, i32, i32
  }
}

module attributes {stable_mosaic.version = 11 : i64} {
  func.func @_mm_bias_silu_kernel(%arg0: i32, %arg1: i32, %arg2: memref<32x32xbf16, #tpu.memory_space<vmem>>, %arg3: memref<1x32x256xbf16, #tpu.memory_space<vmem>>, %arg4: memref<32x16xbf16, #tpu.memory_space<vmem>>, %arg5: memref<1x16x256xbf16, #tpu.memory_space<vmem>>, %arg6: memref<32x1xf32, #tpu.memory_space<vmem>>, %arg7: memref<1x32x256xf32, #tpu.memory_space<vmem>>) attributes {dimension_semantics = [#tpu.dimension_semantics<parallel>, #tpu.dimension_semantics<parallel>], iteration_bounds = array<i64: 2, 1>, scalar_prefetch = 0 : i64, scratch_operands = 0 : i64, tpu.core_type = #tpu.core_type<tc>, window_params = [{pipeline_mode = #tpu.pipeline_mode<synchronous>, transform_indices = @transform_0, window_bounds = array<i64: 32, 32>}, {transform_indices = @transform_1, window_bounds = array<i64: 1, 32, 256>}, {pipeline_mode = #tpu.pipeline_mode<synchronous>, transform_indices = @transform_2, window_bounds = array<i64: 32, 16>}, {transform_indices = @transform_3, window_bounds = array<i64: 1, 16, 256>}, {pipeline_mode = #tpu.pipeline_mode<synchronous>, transform_indices = @transform_4, window_bounds = array<i64: 32, 1>}, {transform_indices = @transform_5, window_bounds = array<i64: 1, 32, 256>}]} {
    %c0 = arith.constant 0 : index
    %c0_0 = arith.constant 0 : index
    %0 = vector.load %arg2[%c0, %c0_0] : memref<32x32xbf16, #tpu.memory_space<vmem>>, vector<32x32xbf16>
    %c0_1 = arith.constant 0 : index
    %c0_2 = arith.constant 0 : index
    %c0_3 = arith.constant 0 : index
    %1 = vector.load %arg3[%c0_1, %c0_2, %c0_3] : memref<1x32x256xbf16, #tpu.memory_space<vmem>>, vector<1x32x256xbf16>
    %2 = vector.shape_cast %1 : vector<1x32x256xbf16> to vector<32x256xbf16>
    %cst = arith.constant dense<0.000000e+00> : vector<32x256xf32>
    %3 = tpu.matmul %0, %2, %cst {dimension_numbers = #tpu.dot_dimension_numbers<[1], [0], [0], [1], [0, 0, 1, 1], [], []>} : vector<32x32xbf16>, vector<32x256xbf16>, vector<32x256xf32> -> vector<32x256xf32>
    %c0_4 = arith.constant 0 : index
    %c0_5 = arith.constant 0 : index
    %4 = vector.load %arg4[%c0_4, %c0_5] : memref<32x16xbf16, #tpu.memory_space<vmem>>, vector<32x16xbf16>
    %c0_6 = arith.constant 0 : index
    %c0_7 = arith.constant 0 : index
    %c0_8 = arith.constant 0 : index
    %5 = vector.load %arg5[%c0_6, %c0_7, %c0_8] : memref<1x16x256xbf16, #tpu.memory_space<vmem>>, vector<1x16x256xbf16>
    %6 = vector.shape_cast %5 : vector<1x16x256xbf16> to vector<16x256xbf16>
    %cst_9 = arith.constant dense<0.000000e+00> : vector<32x256xf32>
    %7 = tpu.matmul %4, %6, %cst_9 {dimension_numbers = #tpu.dot_dimension_numbers<[1], [0], [0], [1], [0, 0, 1, 1], [], []>} : vector<32x16xbf16>, vector<16x256xbf16>, vector<32x256xf32> -> vector<32x256xf32>
    %8 = arith.addf %3, %7 : vector<32x256xf32>
    %c0_10 = arith.constant 0 : index
    %c0_11 = arith.constant 0 : index
    %9 = vector.load %arg6[%c0_10, %c0_11] : memref<32x1xf32, #tpu.memory_space<vmem>>, vector<32x1xf32>
    %10 = vector.broadcast %9 : vector<32x1xf32> to vector<32x256xf32>
    %11 = arith.addf %8, %10 : vector<32x256xf32>
    %cst_12 = arith.constant 0.000000e+00 : f32
    %12 = vector.broadcast %cst_12 : f32 to vector<32x256xf32>
    %13 = arith.subf %12, %11 : vector<32x256xf32>
    %14 = math.exp %13 : vector<32x256xf32>
    %cst_13 = arith.constant 1.000000e+00 : f32
    %15 = vector.broadcast %cst_13 : f32 to vector<32x256xf32>
    %16 = arith.addf %15, %14 : vector<32x256xf32>
    %17 = tpu.reciprocal %16 {approx = true} : vector<32x256xf32> -> vector<32x256xf32>
    %18 = arith.mulf %11, %17 : vector<32x256xf32>
    %c0_14 = arith.constant 0 : index
    %c0_15 = arith.constant 0 : index
    %c0_16 = arith.constant 0 : index
    %19 = vector.load %arg7[%c0_14, %c0_15, %c0_16] : memref<1x32x256xf32, #tpu.memory_space<vmem>>, vector<1x32x256xf32>
    %20 = vector.shape_cast %19 : vector<1x32x256xf32> to vector<32x256xf32>
    %21 = vector.shape_cast %18 : vector<32x256xf32> to vector<1x32x256xf32>
    tpu.vector_store %arg7[%c0_14, %c0_15, %c0_16], %21 {strides = array<i32>} : memref<1x32x256xf32, #tpu.memory_space<vmem>>, vector<1x32x256xf32>,
    return
  }
  func.func @transform_0(%arg0: i32, %arg1: i32) -> (i32, i32) {
    %c0_i32 = arith.constant 0 : i32
    %c0_i32_0 = arith.constant 0 : i32
    %c0_i32_1 = arith.constant 0 : i32
    return %c0_i32, %c0_i32_0 : i32, i32
  }
  func.func @transform_1(%arg0: i32, %arg1: i32) -> (i32, i32, i32) {
    %c0_i32 = arith.constant 0 : i32
    %c0_i32_0 = arith.constant 0 : i32
    return %arg0, %c0_i32, %arg1 : i32, i32, i32
  }
  func.func @transform_2(%arg0: i32, %arg1: i32) -> (i32, i32) {
    %c0_i32 = arith.constant 0 : i32
    %c0_i32_0 = arith.constant 0 : i32
    %c0_i32_1 = arith.constant 0 : i32
    return %c0_i32, %c0_i32_0 : i32, i32
  }
  func.func @transform_3(%arg0: i32, %arg1: i32) -> (i32, i32, i32) {
    %c0_i32 = arith.constant 0 : i32
    %c0_i32_0 = arith.constant 0 : i32
    return %arg0, %c0_i32, %arg1 : i32, i32, i32
  }
  func.func @transform_4(%arg0: i32, %arg1: i32) -> (i32, i32) {
    %c0_i32 = arith.constant 0 : i32
    %c0_i32_0 = arith.constant 0 : i32
    %c0_i32_1 = arith.constant 0 : i32
    return %c0_i32, %c0_i32_0 : i32, i32
  }
  func.func @transform_5(%arg0: i32, %arg1: i32) -> (i32, i32, i32) {
    %c0_i32 = arith.constant 0 : i32
    %c0_i32_0 = arith.constant 0 : i32
    return %arg0, %c0_i32, %arg1 : i32, i32, i32
  }
}

</mosaic_0001>

<llo_original>
// kernel: c2f_tripletat.7
$region0: #{c2f_tripletat.7}
  #allocation0 [shape = 'u32[]', space=smem, size = 0x4, offset = 0x4, fixed_abs, tag = 'smem constant byte address 0x4 - core index']
  #allocation1 [shape = 'u32[144,128]{1,0:T(1,128)}', space=vmem, size = 0x12000, scoped, tag = 'internal scratch']
  %s0 = inlined_call_operand.vmem [shape: bf16[32,32], index: 0, kind: input, shape index: {}]
  %s1 = inlined_call_operand.vmem [shape: f32[2,32,256], index: 1, kind: input, shape index: {}]
  %s2 = inlined_call_operand.vmem [shape: f32[32,1], index: 2, kind: input, shape index: {}]
  %s3 = inlined_call_operand.vmem [shape: bf16[2,32,256], index: 3, kind: output, shape index: {}]
  %s4 = sld [smem:[#allocation0]]
  $region45: #{c2f_tripletat.7} parent=0
    _
  %s6 = ssub.s32 1, %s4
  %s7 = scalar_select 0, %s6, %s4
  loop: start=0, step=1, limit=4
  $region2: #{c2f_tripletat.7} parent=0 // loop_pre_header
    _
  $region3: #{c2f_tripletat.7} parent=0 // loop_header
    %s9 = sphi 0, %s13
    %p10 = scmp.ge.s32.totalorder %s9, 4
    %s16 = sphi 0, %s28
    %s17 = sphi 0, %s24
    %s18 = sphi 0, %s16
    %s19 = sphi 0, %s17
    %s20 = sphi 0, %s18
    %s21 = sphi 0, %s19
    %s29 = sphi 0, %s29
    %s31 = sphi 0, %s29
    %s32 = sphi 0, %s31
    %s46 = sphi 0, %s32
    %s54 = sphi 0, %s56
    %s57 = sphi 0, %s54
    %s58 = sphi 0, %s57
    %s74 = sphi 0, %s58
    %s78 = sphi 0, %s78
    %s80 = sphi 0, %s78
    %s81 = sphi 0, %s80
    %s95 = sphi 0, %s81
    %s103 = sphi 0, %s105
    %s106 = sphi 0, %s103
    %s107 = sphi 0, %s106
    %s123 = sphi 0, %s107
  $region4: #{c2f_tripletat.7} parent=0 // loop_header_branch
    %12 = sbr.rel (%p10) target = $region8
  $region5: #{c2f_tripletat.7} parent=0 // loop_body
    %s14 = ssub.s32 %s9, 1
    %s15 = ssub.s32 %s9, 2
    %s22 = sadd.s32 1, %s17
    %p23 = scmp.ge.s32.totalorder %s22, 1
    %s24 = scalar_select %p23, 0, %s22
    %s25 = sadd.s32 1, %s16
    %s26 = scalar_select %p23, %s25, %s16
    %p27 = scmp.ge.s32.totalorder %s26, 2
    %s28 = scalar_select %p27, 0, %s26
    %s30 = sadd.s32 %s29, 1
    %p33 = scmp.eq.s32.totalorder %s9, 1
    %p34 = scmp.ne.s32.totalorder %s29, %s31
    %p35 = scmp.eq.s32.totalorder %s9, 0
    %p36 = por %p34, %p35
    %p37 = scmp.ne.s32.totalorder %s29, %s31
    %p38 = scmp.eq.s32.totalorder %s14, 1
    %p39 = por %p37, %p38
    %p40 = scmp.ne.s32.totalorder %s31, %s32
    %p41 = scmp.eq.s32.totalorder %s14, 0
    %p42 = por %p40, %p41
    %p43 = scmp.ne.s32.totalorder %s31, %s32
    %p44 = scmp.eq.s32.totalorder %s15, 1
    %p45 = por %p43, %p44
    %p47 = scmp.ne.s32.totalorder %s32, %s46
    %p48 = scmp.eq.s32.totalorder %s15, 0
    %p49 = por %p47, %p48
    %s50 = ssub.s32 %s16, %s28
    %s51 = ssub.s32 %s17, %s24
    %s52 = sor.u32 %s50, %s51
    %p53 = scmp.eq.s32.totalorder %s52, 0
    %s55 = sadd.s32 %s54, 1
    %s56 = scalar_select %p53, %s54, %s55
    %p59 = pneg %p53
    %p60 = scmp.eq.s32.totalorder %s9, 1
    %p61 = por %p59, %p60
    %p62 = scmp.ne.s32.totalorder %s54, %s57
    %p63 = scmp.eq.s32.totalorder %s9, 0
    %p64 = por %p62, %p63
    %p65 = scmp.ne.s32.totalorder %s54, %s57
    %p66 = scmp.eq.s32.totalorder %s14, 1
    %p67 = por %p65, %p66
    %p68 = scmp.ne.s32.totalorder %s57, %s58
    %p69 = scmp.eq.s32.totalorder %s14, 0
    %p70 = por %p68, %p69
    %p71 = scmp.ne.s32.totalorder %s57, %s58
    %p72 = scmp.eq.s32.totalorder %s15, 1
    %p73 = por %p71, %p72
    %p75 = scmp.ne.s32.totalorder %s58, %s74
    %p76 = scmp.eq.s32.totalorder %s15, 0
    %p77 = por %p75, %p76
    %s79 = sadd.s32 %s78, 1
    %p82 = scmp.eq.s32.totalorder %s9, 1
    %p83 = scmp.ne.s32.totalorder %s78, %s80
    %p84 = scmp.eq.s32.totalorder %s9, 0
    %p85 = por %p83, %p84
    %p86 = scmp.ne.s32.totalorder %s78, %s80
    %p87 = scmp.eq.s32.totalorder %s14, 1
    %p88 = por %p86, %p87
    %p89 = scmp.ne.s32.totalorder %s80, %s81
    %p90 = scmp.eq.s32.totalorder %s14, 0
    %p91 = por %p89, %p90
    %p92 = scmp.ne.s32.totalorder %s80, %s81
    %p93 = scmp.eq.s32.totalorder %s15, 1
    %p94 = por %p92, %p93
    %p96 = scmp.ne.s32.totalorder %s81, %s95
    %p97 = scmp.eq.s32.totalorder %s15, 0
    %p98 = por %p96, %p97
    %s99 = ssub.s32 %s16, %s28
    %s100 = ssub.s32 %s17, %s24
    %s101 = sor.u32 %s99, %s100
    %p102 = scmp.eq.s32.totalorder %s101, 0
    %s104 = sadd.s32 %s103, 1
    %s105 = scalar_select %p102, %s103, %s104
    %p108 = pneg %p102
    %p109 = scmp.eq.s32.totalorder %s9, 1
    %p110 = por %p108, %p109
    %p111 = scmp.ne.s32.totalorder %s103, %s106
    %p112 = scmp.eq.s32.totalorder %s9, 0
    %p113 = por %p111, %p112
    %p114 = scmp.ne.s32.totalorder %s103, %s106
    %p115 = scmp.eq.s32.totalorder %s14, 1
    %p116 = por %p114, %p115
    %p117 = scmp.ne.s32.totalorder %s106, %s107
    %p118 = scmp.eq.s32.totalorder %s14, 0
    %p119 = por %p117, %p118
    %p120 = scmp.ne.s32.totalorder %s106, %s107
    %p121 = scmp.eq.s32.totalorder %s15, 1
    %p122 = por %p120, %p121
    %p124 = scmp.ne.s32.totalorder %s107, %s123
    %p125 = scmp.eq.s32.totalorder %s15, 0
    %p126 = por %p124, %p125
    %p127 = scmp.le.s32.totalorder 1, %s9
    %p128 = scmp.lt.s32.totalorder %s9, 3
    %p129 = pnand %p127, %p128
    %p130 = pneg %p129
    // Predicated region
    $region9: #{c2f_tripletat.7} parent=5 // pred_check
      _
    $region10: #{c2f_tripletat.7} parent=5 // pred_check_branch
      %132 = sbr.rel (%p129) target = $region12
    $region11: #{c2f_tripletat.7} parent=5 // pred_region
      %s133 = ssub.s32 %s9, 1
      // Predicated region
      $region13: #{c2f_tripletat.7} parent=11 // pred_check
        %p134 = pneg %p42
      $region14: #{c2f_tripletat.7} parent=11 // pred_check_branch
        %136 = sbr.rel (%p134) target = $region16
      $region15: #{c2f_tripletat.7} parent=11 // pred_region
        _
      $region16: #{c2f_tripletat.7} parent=11 // pred_fallthru
        _
      // Predicated region
      $region17: #{c2f_tripletat.7} parent=11 // pred_check
        %p137 = pneg %p91
      $region18: #{c2f_tripletat.7} parent=11 // pred_check_branch
        %139 = sbr.rel (%p137) target = $region20
      $region19: #{c2f_tripletat.7} parent=11 // pred_region
        _
      $region20: #{c2f_tripletat.7} parent=11 // pred_fallthru
        _
    $region12: #{c2f_tripletat.7} parent=5 // pred_fallthru
      _
    %p140 = scmp.lt.s32.totalorder %s9, 2
    // Predicated region
    $region21: #{c2f_tripletat.7} parent=5 // pred_check
      %p141 = pneg %p140
    $region22: #{c2f_tripletat.7} parent=5 // pred_check_branch
      %143 = sbr.rel (%p141) target = $region24
    $region23: #{c2f_tripletat.7} parent=5 // pred_region
      // Predicated region
      $region25: #{c2f_tripletat.7} parent=23 // pred_check
        %p144 = pneg %p64
      $region26: #{c2f_tripletat.7} parent=23 // pred_check_branch
        %146 = sbr.rel (%p144) target = $region28
      $region27: #{c2f_tripletat.7} parent=23 // pred_region
        %s147 = smul.u32 2, %s17
        %p148 = scmp.lt.s32.totalorder %s16, 1
        %s149 = scalar_select %p148, %s16, 1
        %p150 = scmp.lt.s32.totalorder %s147, 1
        %s151 = scalar_select %p150, %s147, 1
        %s152 = smul.addr %s149, 8
        %s153 = sadd.s32 %s151, %s152
        %s154 = smul.addr %s153, 8
        %s155 = scalar_lea.vmem %s1, %s154
        %s156 = smul.u32 2, %s17
      $region28: #{c2f_tripletat.7} parent=23 // pred_fallthru
        _
    $region24: #{c2f_tripletat.7} parent=5 // pred_fallthru
      _
    %p157 = scmp.le.s32.totalorder 1, %s9
    %p158 = scmp.lt.s32.totalorder %s9, 3
    %p159 = pnand %p157, %p158
    %p160 = pneg %p159
    // Predicated region
    $region29: #{c2f_tripletat.7} parent=5 // pred_check
      _
    $region30: #{c2f_tripletat.7} parent=5 // pred_check_branch
      %162 = sbr.rel (%p159) target = $region32
    $region31: #{c2f_tripletat.7} parent=5 // pred_region
      %s163 = ssub.s32 %s9, 1
      %p164 = pneg %p42
      %p165 = pneg %p39
      %s166 = smul.u32 2, %s19
      %p167 = scmp.lt.s32.totalorder %s18, 1
      %s168 = scalar_select %p167, %s18, 1
      %p169 = scmp.lt.s32.totalorder %s166, 1
      %s170 = scalar_select %p169, %s166, 1
      %s171 = smul.addr %s168, 8
      %s172 = sadd.s32 %s170, %s171
      %s173 = smul.addr %s172, 8
      %s174 = scalar_lea.vmem %s1, %s173
      %p175 = pneg %p70
      %p176 = pneg %p67
      %p177 = pneg %p91
      %p178 = pneg %p88
      %p179 = pneg %p119
      %p180 = pneg %p116
      %s181 = smul.u32 2, %s19
      %p182 = scmp.lt.s32.totalorder %s18, 1
      %s183 = scalar_select %p182, %s18, 1
      %p184 = scmp.lt.s32.totalorder %s181, 1
      %s185 = scalar_select %p184, %s181, 1
      %s186 = smul.addr %s183, 8
      %s187 = sadd.s32 %s185, %s186
      %s188 = smul.addr %s187, 4
      %s189 = scalar_lea.vmem %s3, %s188
      %s190 = smul.u32 2, %s19
      %p191 = scmp.lt.s32.totalorder %s18, 1
      %s192 = scalar_select %p191, %s18, 1
      %p193 = scmp.lt.s32.totalorder %s190, 1
      %s194 = scalar_select %p193, %s190, 1
      %s195 = smul.addr %s192, 8
      %s196 = sadd.s32 %s194, %s195
      %s197 = smul.addr %s196, 8
      %s198 = scalar_lea.vmem %s1, %s197
      %s199 = smul.u32 2, %s19
      %s200 = smul.u32 2, %s19
      %p201 = scmp.lt.s32.totalorder %s18, 1
      %s202 = scalar_select %p201, %s18, 1
      %p203 = scmp.lt.s32.totalorder %s200, 1
      %s204 = scalar_select %p203, %s200, 1
      %s205 = smul.addr %s202, 8
      %s206 = sadd.s32 %s204, %s205
      %s207 = smul.addr %s206, 4
      %s208 = scalar_lea.vmem %s3, %s207
      %s209 = smul.u32 2, %s19
      %v211 = vld [vmem:[%s0] sm:$0xf]
      %v212 = vld [vmem:[%s0 + $0x4] sm:$0xf]
      %v213 = vld [vmem:[%s0 + $0x8] sm:$0xf]
      %v214 = vld [vmem:[%s0 + $0xc] sm:$0xf]
      %v215 = vld [vmem:[%s198] sm:$0xff]
      %v216 = vld [vmem:[%s198 + $0x8] sm:$0xff]
      %v217 = vld [vmem:[%s198 + $0x10] sm:$0xff]
      %v218 = vld [vmem:[%s198 + $0x18] sm:$0xff]
      %v219 = vld [vmem:[%s198 + $0x20] sm:$0xff]
      %v220 = vld [vmem:[%s198 + $0x28] sm:$0xff]
      %v221 = vld [vmem:[%s198 + $0x30] sm:$0xff]
      %v222 = vld [vmem:[%s198 + $0x38] sm:$0xff]
      %v223 = vpack.c.bf16 %v217, %v215
      %v224 = vpack.c.bf16 %v218, %v216
      %v225 = vpack.c.bf16 %v221, %v219
      %v226 = vpack.c.bf16 %v222, %v220
      %v227 = vld [vmem:[%s2] sm:$0xff]
      %v228 = vld [vmem:[%s2 + $0x8] sm:$0xff]
      %v229 = vld [vmem:[%s2 + $0x10] sm:$0xff]
      %v230 = vld [vmem:[%s2 + $0x18] sm:$0xff]
      %232 = vset.pattern.permute.xlu0 0
      %233 = vperm.xlu0 %232, %v227
      %v234 = vpop.permute.xlu0 %233
      %237 = vset.pattern.permute.xlu0 0
      %238 = vperm.xlu0 %237, %v228
      %v239 = vpop.permute.xlu0 %238
      %242 = vset.pattern.permute.xlu0 0
      %243 = vperm.xlu0 %242, %v229
      %v244 = vpop.permute.xlu0 %243
      %247 = vset.pattern.permute.xlu0 0
      %248 = vperm.xlu0 %247, %v230
      %v249 = vpop.permute.xlu0 %248
      %v255 = vunpack.c.l.b16 %v211
      %v256 = vunpack.c.l.b16 %v212
      %v257 = vunpack.c.l.b16 %v213
      %v258 = vunpack.c.l.b16 %v214
      %v259 = vpack.c.b16 %v256, %v255
      %v260 = vpack.c.b16 %v258, %v257
      %vm261 = vcmask 261120
      %v263 = vsel %vm261, %v259, 0
      %v266 = vsel %vm261, %v260, 0
      %268 = vmatprep.subr.bf16.mxu0 %v224
      %269 = vmatpush1.bf16.msra.mxu0 %v223
      %270 = vmatprep.subr.bf16.mxu0 %v226
      %271 = vmatpush1.bf16.msra.mxu0 %v225
      %272 = vmatprep.subr.bf16.mxu0 0
      %273 = vmatpush1.bf16.msra.mxu0 0
      %274 = vmatprep.subr.bf16.mxu0 0
      %275 = vmatpush1.bf16.msra.mxu0 0
      %276 = vmatprep.subr.bf16.mxu0 0
      %277 = vmatpush1.bf16.msra.mxu0 0
      %278 = vmatprep.subr.bf16.mxu0 0
      %279 = vmatpush1.bf16.msra.mxu0 0
      %280 = vmatprep.subr.bf16.mxu0 0
      %281 = vmatpush1.bf16.msra.mxu0 0
      %282 = vmatprep.subr.bf16.mxu0 0
      %283 = vmatpush1.bf16.msra.mxu0 0
      %284 = vmatprep.subr.bf16.mxu0 0
      %285 = vmatpush1.bf16.msra.mxu0 0
      %286 = vmatprep.subr.bf16.mxu0 0
      %287 = vmatpush1.bf16.msra.mxu0 0
      %288 = vmatprep.subr.bf16.mxu0 0
      %289 = vmatpush1.bf16.msra.mxu0 0
      %290 = vmatprep.subr.bf16.mxu0 0
      %291 = vmatpush1.bf16.msra.mxu0 0
      %292 = vmatprep.subr.bf16.mxu0 0
      %293 = vmatpush1.bf16.msra.mxu0 0
      %294 = vmatprep.subr.bf16.mxu0 0
      %295 = vmatpush1.bf16.msra.mxu0 0
      %296 = vmatprep.subr.bf16.mxu0 0
      %297 = vmatpush1.bf16.msra.mxu0 0
      %298 = vmatprep.subr.bf16.mxu0 0
      %299 = vmatpush1.bf16.msra.mxu0 0
      %300 = vmatprep.mubr.bf16.mxu0 0
      %301 = vmatmul.mubr.bf16.gmra.mrb[0].mxu0 %v263
      %v302 = vpop.f32.mrb[0].mxu0
      %v303 = vadd.f32 %v234, %v302
      %v304 = vpop.f32.mrb[0].mxu0
      %v305 = vadd.f32 %v234, %v304
      %v306 = vpop.f32.mrb[0].mxu0
      %v307 = vadd.f32 %v239, %v306
      %v308 = vpop.f32.mrb[0].mxu0
      %v309 = vadd.f32 %v239, %v308
      %310 = vmatprep.mubr.bf16.mxu0 0
      %311 = vmatmul.mubr.bf16.gmra.mrb[0].mxu0 %v266
      %v312 = vpop.f32.mrb[0].mxu0
      %v313 = vadd.f32 %v244, %v312
      %v314 = vpop.f32.mrb[0].mxu0
      %v315 = vadd.f32 %v244, %v314
      %v316 = vpop.f32.mrb[0].mxu0
      %v317 = vadd.f32 %v249, %v316
      %v318 = vpop.f32.mrb[0].mxu0
      %v319 = vadd.f32 %v249, %v318
      %320 = vdwg.mxu0
      %v321 = vsub.f32 0.0, %v303
      %v322 = vsub.f32 0.0, %v305
      %v323 = vsub.f32 0.0, %v307
      %v324 = vsub.f32 0.0, %v309
      %v325 = vsub.f32 0.0, %v313
      %v326 = vsub.f32 0.0, %v315
      %v327 = vsub.f32 0.0, %v317
      %v328 = vsub.f32 0.0, %v319
      %v329 = vmul.f32 %v321, 1.442695
      %v330 = vpow.pop %v329
      %v331 = vmul.f32 %v322, 1.442695
      %v332 = vpow.pop %v331
      %v333 = vmul.f32 %v323, 1.442695
      %v334 = vpow.pop %v333
      %v335 = vmul.f32 %v324, 1.442695
      %v336 = vpow.pop %v335
      %v337 = vmul.f32 %v325, 1.442695
      %v338 = vpow.pop %v337
      %v339 = vmul.f32 %v326, 1.442695
      %v340 = vpow.pop %v339
      %v341 = vmul.f32 %v327, 1.442695
      %v342 = vpow.pop %v341
      %v343 = vmul.f32 %v328, 1.442695
      %v344 = vpow.pop %v343
      %v345 = vadd.f32 %v330, 1.0
      %v346 = vadd.f32 %v332, 1.0
      %v347 = vadd.f32 %v334, 1.0
      %v348 = vadd.f32 %v336, 1.0
      %v349 = vadd.f32 %v338, 1.0
      %v350 = vadd.f32 %v340, 1.0
      %v351 = vadd.f32 %v342, 1.0
      %v352 = vadd.f32 %v344, 1.0
      %v353 = vrcp.pop %v345
      %v354 = vrcp.pop %v346
      %v355 = vrcp.pop %v347
      %v356 = vrcp.pop %v348
      %v357 = vrcp.pop %v349
      %v358 = vrcp.pop %v350
      %v359 = vrcp.pop %v351
      %v360 = vrcp.pop %v352
      %v361 = vmul.f32 %v303, %v353
      %v362 = vmul.f32 %v305, %v354
      %v363 = vmul.f32 %v307, %v355
      %v364 = vmul.f32 %v309, %v356
      %v365 = vmul.f32 %v313, %v357
      %v366 = vmul.f32 %v315, %v358
      %v367 = vmul.f32 %v317, %v359
      %v368 = vmul.f32 %v319, %v360
      %v369 = vpack.c.bf16 %v363, %v361
      %v370 = vpack.c.bf16 %v364, %v362
      %v371 = vpack.c.bf16 %v367, %v365
      %v372 = vpack.c.bf16 %v368, %v366
      %v377 = vunpack.c.l.b16 %v369
      %v378 = vunpack.c.l.b16 %v370
      %v379 = vunpack.c.h.b16 %v369
      %v380 = vunpack.c.h.b16 %v370
      %v381 = vunpack.c.l.b16 %v371
      %v382 = vunpack.c.l.b16 %v372
      %v383 = vunpack.c.h.b16 %v371
      %v384 = vunpack.c.h.b16 %v372
      %v385 = vpack.c.b16 %v378, %v377
      %v386 = vpack.c.b16 %v380, %v379
      %v387 = vpack.c.b16 %v382, %v381
      %v388 = vpack.c.b16 %v384, %v383
      %393 = vst [vmem:[%s208] sm:$0xff] %v385
      %394 = vst [vmem:[%s208 + $0x8] sm:$0xff] %v386
      %395 = vst [vmem:[%s208 + $0x10] sm:$0xff] %v387
      %396 = vst [vmem:[%s208 + $0x18] sm:$0xff] %v388
      %s397 = smul.u32 2, %s19
      %p398 = scmp.lt.s32.totalorder %s18, 1
      %s399 = scalar_select %p398, %s18, 1
      %p400 = scmp.lt.s32.totalorder %s397, 1
      %s401 = scalar_select %p400, %s397, 1
      %s402 = smul.addr %s399, 8
      %s403 = sadd.s32 %s401, %s402
      %s404 = smul.addr %s403, 4
      %s405 = scalar_lea.vmem %s3, %s404
      // Predicated region
      $region33: #{c2f_tripletat.7} parent=31 // pred_check
        %p406 = pneg %p116
      $region34: #{c2f_tripletat.7} parent=31 // pred_check_branch
        %408 = sbr.rel (%p406) target = $region36
      $region35: #{c2f_tripletat.7} parent=31 // pred_region
        %s409 = smul.u32 2, %s19
      $region36: #{c2f_tripletat.7} parent=31 // pred_fallthru
        _
    $region32: #{c2f_tripletat.7} parent=5 // pred_fallthru
      _
    %p410 = scmp.le.s32.totalorder 2, %s9
    // Predicated region
    $region37: #{c2f_tripletat.7} parent=5 // pred_check
      %p411 = pneg %p410
    $region38: #{c2f_tripletat.7} parent=5 // pred_check_branch
      %413 = sbr.rel (%p411) target = $region40
    $region39: #{c2f_tripletat.7} parent=5 // pred_region
      %s414 = ssub.s32 %s9, 2
      // Predicated region
      $region41: #{c2f_tripletat.7} parent=39 // pred_check
        %p415 = pneg %p122
      $region42: #{c2f_tripletat.7} parent=39 // pred_check_branch
        %417 = sbr.rel (%p415) target = $region44
      $region43: #{c2f_tripletat.7} parent=39 // pred_region
        %s418 = smul.u32 2, %s21
        %p419 = scmp.lt.s32.totalorder %s20, 1
        %s420 = scalar_select %p419, %s20, 1
        %p421 = scmp.lt.s32.totalorder %s418, 1
        %s422 = scalar_select %p421, %s418, 1
        %s423 = smul.addr %s420, 8
        %s424 = sadd.s32 %s422, %s423
        %s425 = smul.addr %s424, 4
        %s426 = scalar_lea.vmem %s3, %s425
      $region44: #{c2f_tripletat.7} parent=39 // pred_fallthru
        _
    $region40: #{c2f_tripletat.7} parent=5 // pred_fallthru
      _
  $region6: #{c2f_tripletat.7} parent=0 // loop_footer
    %s13 = sadd.s32 1, %s9
  $region7: #{c2f_tripletat.7} parent=0 // loop_footer_branch
    %8 = sbr.rel target = $region3
  $region8: #{c2f_tripletat.7} parent=0 // loop_exit
    _

// kernel: c2f_tripletat.8
$region0: #{c2f_tripletat.8}
  #allocation0 [shape = 'u32[]', space=smem, size = 0x4, offset = 0x4, fixed_abs, tag = 'smem constant byte address 0x4 - core index']
  #allocation1 [shape = 'u32[144,128]{1,0:T(1,128)}', space=vmem, size = 0x12000, scoped, tag = 'internal scratch']
  %s0 = inlined_call_operand.vmem [shape: bf16[9,16,16], index: 0, kind: input, shape index: {}]
  %s1 = inlined_call_operand.vmem [shape: bf16[2,16,324], index: 1, kind: input, shape index: {}]
  %s2 = inlined_call_operand.vmem [shape: f32[16,1], index: 2, kind: input, shape index: {}]
  %s3 = inlined_call_operand.vmem [shape: f32[1,286], index: 3, kind: input, shape index: {}]
  %s4 = inlined_call_operand.vmem [shape: bf16[2,16,324], index: 4, kind: output, shape index: {}]
  %s5 = sld [smem:[#allocation0]]
  $region49: #{c2f_tripletat.8} parent=0
    _
  %s7 = ssub.s32 1, %s5
  %s8 = scalar_select 0, %s7, %s5
  loop: start=0, step=1, limit=4
  $region2: #{c2f_tripletat.8} parent=0 // loop_pre_header
    _
  $region3: #{c2f_tripletat.8} parent=0 // loop_header
    %s10 = sphi 0, %s14
    %p11 = scmp.ge.s32.totalorder %s10, 4
    %s18 = sphi 0, %s18
    %s20 = sphi 0, %s18
    %s21 = sphi 0, %s20
    %s35 = sphi 0, %s21
    %s41 = sphi 0, %s43
    %s44 = sphi 0, %s41
    %s45 = sphi 0, %s44
    %s61 = sphi 0, %s45
    %s65 = sphi 0, %s65
    %s67 = sphi 0, %s65
    %s68 = sphi 0, %s67
    %s82 = sphi 0, %s68
    %s86 = sphi 0, %s86
    %s88 = sphi 0, %s86
    %s89 = sphi 0, %s88
    %s103 = sphi 0, %s89
    %s109 = sphi 0, %s111
    %s112 = sphi 0, %s109
    %s113 = sphi 0, %s112
    %s129 = sphi 0, %s113
  $region4: #{c2f_tripletat.8} parent=0 // loop_header_branch
    %13 = sbr.rel (%p11) target = $region8
  $region5: #{c2f_tripletat.8} parent=0 // loop_body
    %s15 = ssub.s32 %s10, 1
    %s16 = ssub.s32 %s10, 2
    %s17 = sadd.s32 %s10, 1
    %s19 = sadd.s32 %s18, 1
    %p22 = scmp.eq.s32.totalorder %s10, 1
    %p23 = scmp.ne.s32.totalorder %s18, %s20
    %p24 = scmp.eq.s32.totalorder %s10, 0
    %p25 = por %p23, %p24
    %p26 = scmp.ne.s32.totalorder %s18, %s20
    %p27 = scmp.eq.s32.totalorder %s15, 1
    %p28 = por %p26, %p27
    %p29 = scmp.ne.s32.totalorder %s20, %s21
    %p30 = scmp.eq.s32.totalorder %s15, 0
    %p31 = por %p29, %p30
    %p32 = scmp.ne.s32.totalorder %s20, %s21
    %p33 = scmp.eq.s32.totalorder %s16, 1
    %p34 = por %p32, %p33
    %p36 = scmp.ne.s32.totalorder %s21, %s35
    %p37 = scmp.eq.s32.totalorder %s16, 0
    %p38 = por %p36, %p37
    %s39 = ssub.s32 %s10, %s17
    %p40 = scmp.eq.s32.totalorder %s39, 0
    %s42 = sadd.s32 %s41, 1
    %s43 = scalar_select %p40, %s41, %s42
    %p46 = pneg %p40
    %p47 = scmp.eq.s32.totalorder %s10, 1
    %p48 = por %p46, %p47
    %p49 = scmp.ne.s32.totalorder %s41, %s44
    %p50 = scmp.eq.s32.totalorder %s10, 0
    %p51 = por %p49, %p50
    %p52 = scmp.ne.s32.totalorder %s41, %s44
    %p53 = scmp.eq.s32.totalorder %s15, 1
    %p54 = por %p52, %p53
    %p55 = scmp.ne.s32.totalorder %s44, %s45
    %p56 = scmp.eq.s32.totalorder %s15, 0
    %p57 = por %p55, %p56
    %p58 = scmp.ne.s32.totalorder %s44, %s45
    %p59 = scmp.eq.s32.totalorder %s16, 1
    %p60 = por %p58, %p59
    %p62 = scmp.ne.s32.totalorder %s45, %s61
    %p63 = scmp.eq.s32.totalorder %s16, 0
    %p64 = por %p62, %p63
    %s66 = sadd.s32 %s65, 1
    %p69 = scmp.eq.s32.totalorder %s10, 1
    %p70 = scmp.ne.s32.totalorder %s65, %s67
    %p71 = scmp.eq.s32.totalorder %s10, 0
    %p72 = por %p70, %p71
    %p73 = scmp.ne.s32.totalorder %s65, %s67
    %p74 = scmp.eq.s32.totalorder %s15, 1
    %p75 = por %p73, %p74
    %p76 = scmp.ne.s32.totalorder %s67, %s68
    %p77 = scmp.eq.s32.totalorder %s15, 0
    %p78 = por %p76, %p77
    %p79 = scmp.ne.s32.totalorder %s67, %s68
    %p80 = scmp.eq.s32.totalorder %s16, 1
    %p81 = por %p79, %p80
    %p83 = scmp.ne.s32.totalorder %s68, %s82
    %p84 = scmp.eq.s32.totalorder %s16, 0
    %p85 = por %p83, %p84
    %s87 = sadd.s32 %s86, 1
    %p90 = scmp.eq.s32.totalorder %s10, 1
    %p91 = scmp.ne.s32.totalorder %s86, %s88
    %p92 = scmp.eq.s32.totalorder %s10, 0
    %p93 = por %p91, %p92
    %p94 = scmp.ne.s32.totalorder %s86, %s88
    %p95 = scmp.eq.s32.totalorder %s15, 1
    %p96 = por %p94, %p95
    %p97 = scmp.ne.s32.totalorder %s88, %s89
    %p98 = scmp.eq.s32.totalorder %s15, 0
    %p99 = por %p97, %p98
    %p100 = scmp.ne.s32.totalorder %s88, %s89
    %p101 = scmp.eq.s32.totalorder %s16, 1
    %p102 = por %p100, %p101
    %p104 = scmp.ne.s32.totalorder %s89, %s103
    %p105 = scmp.eq.s32.totalorder %s16, 0
    %p106 = por %p104, %p105
    %s107 = ssub.s32 %s10, %s17
    %p108 = scmp.eq.s32.totalorder %s107, 0
    %s110 = sadd.s32 %s109, 1
    %s111 = scalar_select %p108, %s109, %s110
    %p114 = pneg %p108
    %p115 = scmp.eq.s32.totalorder %s10, 1
    %p116 = por %p114, %p115
    %p117 = scmp.ne.s32.totalorder %s109, %s112
    %p118 = scmp.eq.s32.totalorder %s10, 0
    %p119 = por %p117, %p118
    %p120 = scmp.ne.s32.totalorder %s109, %s112
    %p121 = scmp.eq.s32.totalorder %s15, 1
    %p122 = por %p120, %p121
    %p123 = scmp.ne.s32.totalorder %s112, %s113
    %p124 = scmp.eq.s32.totalorder %s15, 0
    %p125 = por %p123, %p124
    %p126 = scmp.ne.s32.totalorder %s112, %s113
    %p127 = scmp.eq.s32.totalorder %s16, 1
    %p128 = por %p126, %p127
    %p130 = scmp.ne.s32.totalorder %s113, %s129
    %p131 = scmp.eq.s32.totalorder %s16, 0
    %p132 = por %p130, %p131
    %p133 = scmp.le.s32.totalorder 1, %s10
    %p134 = scmp.lt.s32.totalorder %s10, 3
    %p135 = pnand %p133, %p134
    %p136 = pneg %p135
    // Predicated region
    $region9: #{c2f_tripletat.8} parent=5 // pred_check
      _
    $region10: #{c2f_tripletat.8} parent=5 // pred_check_branch
      %138 = sbr.rel (%p135) target = $region12
    $region11: #{c2f_tripletat.8} parent=5 // pred_region
      %s139 = ssub.s32 %s10, 1
      // Predicated region
      $region13: #{c2f_tripletat.8} parent=11 // pred_check
        %p140 = pneg %p31
      $region14: #{c2f_tripletat.8} parent=11 // pred_check_branch
        %142 = sbr.rel (%p140) target = $region16
      $region15: #{c2f_tripletat.8} parent=11 // pred_region
        _
      $region16: #{c2f_tripletat.8} parent=11 // pred_fallthru
        _
      // Predicated region
      $region17: #{c2f_tripletat.8} parent=11 // pred_check
        %p143 = pneg %p78
      $region18: #{c2f_tripletat.8} parent=11 // pred_check_branch
        %145 = sbr.rel (%p143) target = $region20
      $region19: #{c2f_tripletat.8} parent=11 // pred_region
        _
      $region20: #{c2f_tripletat.8} parent=11 // pred_fallthru
        _
      // Predicated region
      $region21: #{c2f_tripletat.8} parent=11 // pred_check
        %p146 = pneg %p99
      $region22: #{c2f_tripletat.8} parent=11 // pred_check_branch
        %148 = sbr.rel (%p146) target = $region24
      $region23: #{c2f_tripletat.8} parent=11 // pred_region
        _
      $region24: #{c2f_tripletat.8} parent=11 // pred_fallthru
        _
    $region12: #{c2f_tripletat.8} parent=5 // pred_fallthru
      _
    %p149 = scmp.lt.s32.totalorder %s10, 2
    // Predicated region
    $region25: #{c2f_tripletat.8} parent=5 // pred_check
      %p150 = pneg %p149
    $region26: #{c2f_tripletat.8} parent=5 // pred_check_branch
      %152 = sbr.rel (%p150) target = $region28
    $region27: #{c2f_tripletat.8} parent=5 // pred_region
      // Predicated region
      $region29: #{c2f_tripletat.8} parent=27 // pred_check
        %p153 = pneg %p51
      $region30: #{c2f_tripletat.8} parent=27 // pred_check_branch
        %155 = sbr.rel (%p153) target = $region32
      $region31: #{c2f_tripletat.8} parent=27 // pred_region
        %p156 = scmp.lt.s32.totalorder %s10, 1
        %s157 = scalar_select %p156, %s10, 1
        %s158 = smul.addr %s157, 6
        %s159 = smul.addr %s158, 4
        %s160 = scalar_lea.vmem %s1, %s159
      $region32: #{c2f_tripletat.8} parent=27 // pred_fallthru
        _
    $region28: #{c2f_tripletat.8} parent=5 // pred_fallthru
      _
    %p161 = scmp.le.s32.totalorder 1, %s10
    %p162 = scmp.lt.s32.totalorder %s10, 3
    %p163 = pnand %p161, %p162
    %p164 = pneg %p163
    // Predicated region
    $region33: #{c2f_tripletat.8} parent=5 // pred_check
      _
    $region34: #{c2f_tripletat.8} parent=5 // pred_check_branch
      %166 = sbr.rel (%p163) target = $region36
    $region35: #{c2f_tripletat.8} parent=5 // pred_region
      %s167 = ssub.s32 %s10, 1
      %p168 = pneg %p31
      %p169 = pneg %p28
      %p170 = scmp.lt.s32.totalorder %s15, 1
      %s171 = scalar_select %p170, %s15, 1
      %s172 = smul.addr %s171, 6
      %s173 = smul.addr %s172, 4
      %s174 = scalar_lea.vmem %s1, %s173
      %p175 = pneg %p57
      %p176 = pneg %p54
      %p177 = pneg %p78
      %p178 = pneg %p75
      %p179 = pneg %p99
      %p180 = pneg %p96
      %p181 = pneg %p125
      %p182 = pneg %p122
      %p183 = scmp.lt.s32.totalorder %s15, 1
      %s184 = scalar_select %p183, %s15, 1
      %s185 = smul.addr %s184, 6
      %s186 = smul.addr %s185, 4
      %s187 = scalar_lea.vmem %s4, %s186
      %p188 = scmp.lt.s32.totalorder %s15, 1
      %s189 = scalar_select %p188, %s15, 1
      %s190 = smul.addr %s189, 6
      %s191 = smul.addr %s190, 4
      %s192 = scalar_lea.vmem %s1, %s191
      %p193 = scmp.lt.s32.totalorder %s15, 1
      %s194 = scalar_select %p193, %s15, 1
      %s195 = smul.addr %s194, 6
      %s196 = smul.addr %s195, 4
      %s197 = scalar_lea.vmem %s4, %s196
      %v199 = vld [vmem:[%s0] sm:$0xf]
      %v200 = vld [vmem:[%s0 + $0x4] sm:$0xf]
      %v201 = vld [vmem:[%s192] sm:$0xff]
      %v202 = vld [vmem:[%s192 + $0x8] sm:$0xf]
      %v203 = vld [vmem:[%s192 + $0xc] sm:$0xff]
      %v204 = vld [vmem:[%s192 + $0x14] sm:$0xf]
      %s205 = scalar_lea.vmem %s0, 8
      %v206 = vld [vmem:[%s205] sm:$0xf]
      %v207 = vld [vmem:[%s205 + $0x4] sm:$0xf]
      %v210 = vunpack.c.l.b16 %v206
      %v211 = vunpack.c.l.b16 %v207
      %v212 = vpack.c.b16 %v211, %v210
      %v217 = vunpack.c.l.b16 %v201
      %v218 = vunpack.c.h.b16 %v201
      %v219 = vunpack.c.l.b16 %v202
      %v220 = vunpack.c.l.b16 %v203
      %v221 = vunpack.c.h.b16 %v203
      %v222 = vunpack.c.l.b16 %v204
      %v223 = vpack.c.b16 %v220, %v217
      %v224 = vpack.c.b16 %v221, %v218
      %v225 = vpack.c.b16 %v222, %v219
      %226 = vrot.lane.b32.xlu0 %v223, 127
      %v227 = vpop.permute.xlu0 %226
      %228 = vrot.lane.b32.xlu0 %v224, 127
      %v229 = vpop.permute.xlu0 %228
      %230 = vrot.lane.b32.xlu0 %v225, 127
      %v231 = vpop.permute.xlu0 %230
      %vm232 = vcmask 1039360
      %v233 = vsel %vm232, %v227, %v229
      %v234 = vsel %vm232, %v229, %v231
      %vm238 = vcmask 130048
      %v240 = vsel %vm238, %v212, 0
      %242 = vmatprep.subr.bf16.mxu0 %v234
      %243 = vmatpush1.bf16.msra.mxu0 %v233
      %244 = vmatprep.subr.bf16.mxu0 0
      %245 = vmatpush1.bf16.msra.mxu0 0
      %246 = vmatprep.subr.bf16.mxu0 0
      %247 = vmatpush1.bf16.msra.mxu0 0
      %248 = vmatprep.subr.bf16.mxu0 0
      %249 = vmatpush1.bf16.msra.mxu0 0
      %250 = vmatprep.subr.bf16.mxu0 0
      %251 = vmatpush1.bf16.msra.mxu0 0
      %252 = vmatprep.subr.bf16.mxu0 0
      %253 = vmatpush1.bf16.msra.mxu0 0
      %254 = vmatprep.subr.bf16.mxu0 0
      %255 = vmatpush1.bf16.msra.mxu0 0
      %256 = vmatprep.subr.bf16.mxu0 0
      %257 = vmatpush1.bf16.msra.mxu0 0
      %258 = vmatprep.subr.bf16.mxu0 0
      %259 = vmatpush1.bf16.msra.mxu0 0
      %260 = vmatprep.subr.bf16.mxu0 0
      %261 = vmatpush1.bf16.msra.mxu0 0
      %262 = vmatprep.subr.bf16.mxu0 0
      %263 = vmatpush1.bf16.msra.mxu0 0
      %264 = vmatprep.subr.bf16.mxu0 0
      %265 = vmatpush1.bf16.msra.mxu0 0
      %266 = vmatprep.subr.bf16.mxu0 0
      %267 = vmatpush1.bf16.msra.mxu0 0
      %268 = vmatprep.subr.bf16.mxu0 0
      %269 = vmatpush1.bf16.msra.mxu0 0
      %270 = vmatprep.subr.bf16.mxu0 0
      %271 = vmatpush1.bf16.msra.mxu0 0
      %272 = vmatprep.subr.bf16.mxu0 0
      %273 = vmatpush1.bf16.msra.mxu0 0
      %274 = vmatprep.mubr.bf16.mxu0 0
      %275 = vmatmul.mubr.bf16.gmra.mrb[0].mxu0 %v240
      %v276 = vpop.f32.mrb[0].mxu0
      %v277 = vadd.f32 0.0, %v276
      %v278 = vpop.f32.mrb[0].mxu0
      %v279 = vadd.f32 0.0, %v278
      %v280 = vpop.f32.mrb[0].mxu0
      %v281 = vadd.f32 0.0, %v280
      %v282 = vpop.f32.mrb[0].mxu0
      %v283 = vadd.f32 0.0, %v282
      %284 = vdwg.mxu0
      %285 = vmatprep.subr.bf16.mxu0 0
      %286 = vmatpush1.bf16.msra.mxu0 %v231
      %287 = vmatprep.subr.bf16.mxu0 0
      %288 = vmatpush1.bf16.msra.mxu0 0
      %289 = vmatprep.subr.bf16.mxu0 0
      %290 = vmatpush1.bf16.msra.mxu0 0
      %291 = vmatprep.subr.bf16.mxu0 0
      %292 = vmatpush1.bf16.msra.mxu0 0
      %293 = vmatprep.subr.bf16.mxu0 0
      %294 = vmatpush1.bf16.msra.mxu0 0
      %295 = vmatprep.subr.bf16.mxu0 0
      %296 = vmatpush1.bf16.msra.mxu0 0
      %297 = vmatprep.subr.bf16.mxu0 0
      %298 = vmatpush1.bf16.msra.mxu0 0
      %299 = vmatprep.subr.bf16.mxu0 0
      %300 = vmatpush1.bf16.msra.mxu0 0
      %301 = vmatprep.subr.bf16.mxu0 0
      %302 = vmatpush1.bf16.msra.mxu0 0
      %303 = vmatprep.subr.bf16.mxu0 0
      %304 = vmatpush1.bf16.msra.mxu0 0
      %305 = vmatprep.subr.bf16.mxu0 0
      %306 = vmatpush1.bf16.msra.mxu0 0
      %307 = vmatprep.subr.bf16.mxu0 0
      %308 = vmatpush1.bf16.msra.mxu0 0
      %309 = vmatprep.subr.bf16.mxu0 0
      %310 = vmatpush1.bf16.msra.mxu0 0
      %311 = vmatprep.subr.bf16.mxu0 0
      %312 = vmatpush1.bf16.msra.mxu0 0
      %313 = vmatprep.subr.bf16.mxu0 0
      %314 = vmatpush1.bf16.msra.mxu0 0
      %315 = vmatprep.subr.bf16.mxu0 0
      %316 = vmatpush1.bf16.msra.mxu0 0
      %317 = vmatprep.mubr.bf16.mxu0 0
      %318 = vmatmul.mubr.bf16.gmra.mrb[0].mxu0 %v240
      %v319 = vpop.f32.mrb[0].mxu0
      %v320 = vadd.f32 0.0, %v319
      %v321 = vpop.f32.mrb[0].mxu0
      %v322 = vpop.f32.mrb[0].mxu0
      %v323 = vadd.f32 0.0, %v322
      %v324 = vpop.f32.mrb[0].mxu0
      %325 = vdwg.mxu0
      %v328 = vunpack.c.l.b16 %v199
      %v329 = vunpack.c.l.b16 %v200
      %v330 = vpack.c.b16 %v329, %v328
      %v335 = vsel %vm238, %v330, 0
      %337 = vmatprep.subr.bf16.mxu0 %v224
      %338 = vmatpush1.bf16.msra.mxu0 %v223
      %339 = vmatprep.subr.bf16.mxu0 0
      %340 = vmatpush1.bf16.msra.mxu0 0
      %341 = vmatprep.subr.bf16.mxu0 0
      %342 = vmatpush1.bf16.msra.mxu0 0
      %343 = vmatprep.subr.bf16.mxu0 0
      %344 = vmatpush1.bf16.msra.mxu0 0
      %345 = vmatprep.subr.bf16.mxu0 0
      %346 = vmatpush1.bf16.msra.mxu0 0
      %347 = vmatprep.subr.bf16.mxu0 0
      %348 = vmatpush1.bf16.msra.mxu0 0
      %349 = vmatprep.subr.bf16.mxu0 0
      %350 = vmatpush1.bf16.msra.mxu0 0
      %351 = vmatprep.subr.bf16.mxu0 0
      %352 = vmatpush1.bf16.msra.mxu0 0
      %353 = vmatprep.subr.bf16.mxu0 0
      %354 = vmatpush1.bf16.msra.mxu0 0
      %355 = vmatprep.subr.bf16.mxu0 0
      %356 = vmatpush1.bf16.msra.mxu0 0
      %357 = vmatprep.subr.bf16.mxu0 0
      %358 = vmatpush1.bf16.msra.mxu0 0
      %359 = vmatprep.subr.bf16.mxu0 0
      %360 = vmatpush1.bf16.msra.mxu0 0
      %361 = vmatprep.subr.bf16.mxu0 0
      %362 = vmatpush1.bf16.msra.mxu0 0
      %363 = vmatprep.subr.bf16.mxu0 0
      %364 = vmatpush1.bf16.msra.mxu0 0
      %365 = vmatprep.subr.bf16.mxu0 0
      %366 = vmatpush1.bf16.msra.mxu0 0
      %367 = vmatprep.subr.bf16.mxu0 0
      %368 = vmatpush1.bf16.msra.mxu0 0
      %369 = vmatprep.mubr.bf16.mxu0 0
      %370 = vmatmul.mubr.bf16.gmra.mrb[0].mxu0 %v335
      %v371 = vpop.f32.mrb[0].mxu0
      %v372 = vadd.f32 %v277, %v371
      %v373 = vpop.f32.mrb[0].mxu0
      %v374 = vadd.f32 %v279, %v373
      %v375 = vpop.f32.mrb[0].mxu0
      %v376 = vadd.f32 %v281, %v375
      %v377 = vpop.f32.mrb[0].mxu0
      %v378 = vadd.f32 %v283, %v377
      %379 = vdwg.mxu0
      %380 = vmatprep.subr.bf16.mxu0 0
      %381 = vmatpush1.bf16.msra.mxu0 %v225
      %382 = vmatprep.subr.bf16.mxu0 0
      %383 = vmatpush1.bf16.msra.mxu0 0
      %384 = vmatprep.subr.bf16.mxu0 0
      %385 = vmatpush1.bf16.msra.mxu0 0
      %386 = vmatprep.subr.bf16.mxu0 0
      %387 = vmatpush1.bf16.msra.mxu0 0
      %388 = vmatprep.subr.bf16.mxu0 0
      %389 = vmatpush1.bf16.msra.mxu0 0
      %390 = vmatprep.subr.bf16.mxu0 0
      %391 = vmatpush1.bf16.msra.mxu0 0
      %392 = vmatprep.subr.bf16.mxu0 0
      %393 = vmatpush1.bf16.msra.mxu0 0
      %394 = vmatprep.subr.bf16.mxu0 0
      %395 = vmatpush1.bf16.msra.mxu0 0
      %396 = vmatprep.subr.bf16.mxu0 0
      %397 = vmatpush1.bf16.msra.mxu0 0
      %398 = vmatprep.subr.bf16.mxu0 0
      %399 = vmatpush1.bf16.msra.mxu0 0
      %400 = vmatprep.subr.bf16.mxu0 0
      %401 = vmatpush1.bf16.msra.mxu0 0
      %402 = vmatprep.subr.bf16.mxu0 0
      %403 = vmatpush1.bf16.msra.mxu0 0
      %404 = vmatprep.subr.bf16.mxu0 0
      %405 = vmatpush1.bf16.msra.mxu0 0
      %406 = vmatprep.subr.bf16.mxu0 0
      %407 = vmatpush1.bf16.msra.mxu0 0
      %408 = vmatprep.subr.bf16.mxu0 0
      %409 = vmatpush1.bf16.msra.mxu0 0
      %410 = vmatprep.subr.bf16.mxu0 0
      %411 = vmatpush1.bf16.msra.mxu0 0
      %412 = vmatprep.mubr.bf16.mxu0 0
      %413 = vmatmul.mubr.bf16.gmra.mrb[0].mxu0 %v335
      %v414 = vpop.f32.mrb[0].mxu0
      %v415 = vadd.f32 %v320, %v414
      %v416 = vpop.f32.mrb[0].mxu0
      %v417 = vpop.f32.mrb[0].mxu0
      %v418 = vadd.f32 %v323, %v417
      %v419 = vpop.f32.mrb[0].mxu0
      %420 = vdwg.mxu0
      %s421 = scalar_lea.vmem %s0, 16
      %v422 = vld [vmem:[%s421] sm:$0xf]
      %v423 = vld [vmem:[%s421 + $0x4] sm:$0xf]
      %v426 = vunpack.c.l.b16 %v422
      %v427 = vunpack.c.l.b16 %v423
      %v428 = vpack.c.b16 %v427, %v426
      %429 = vrot.lane.b32.xlu0 %v223, 126
      %v430 = vpop.permute.xlu0 %429
      %431 = vrot.lane.b32.xlu0 %v224, 126
      %v432 = vpop.permute.xlu0 %431
      %433 = vrot.lane.b32.xlu0 %v225, 126
      %v434 = vpop.permute.xlu0 %433
      %vm435 = vcmask 1031168
      %v436 = vsel %vm435, %v430, %v432
      %v437 = vsel %vm435, %v432, %v434
      %v442 = vsel %vm238, %v428, 0
      %444 = vmatprep.subr.bf16.mxu0 %v437
      %445 = vmatpush1.bf16.msra.mxu0 %v436
      %446 = vmatprep.subr.bf16.mxu0 0
      %447 = vmatpush1.bf16.msra.mxu0 0
      %448 = vmatprep.subr.bf16.mxu0 0
      %449 = vmatpush1.bf16.msra.mxu0 0
      %450 = vmatprep.subr.bf16.mxu0 0
      %451 = vmatpush1.bf16.msra.mxu0 0
      %452 = vmatprep.subr.bf16.mxu0 0
      %453 = vmatpush1.bf16.msra.mxu0 0
      %454 = vmatprep.subr.bf16.mxu0 0
      %455 = vmatpush1.bf16.msra.mxu0 0
      %456 = vmatprep.subr.bf16.mxu0 0
      %457 = vmatpush1.bf16.msra.mxu0 0
      %458 = vmatprep.subr.bf16.mxu0 0
      %459 = vmatpush1.bf16.msra.mxu0 0
      %460 = vmatprep.subr.bf16.mxu0 0
      %461 = vmatpush1.bf16.msra.mxu0 0
      %462 = vmatprep.subr.bf16.mxu0 0
      %463 = vmatpush1.bf16.msra.mxu0 0
      %464 = vmatprep.subr.bf16.mxu0 0
      %465 = vmatpush1.bf16.msra.mxu0 0
      %466 = vmatprep.subr.bf16.mxu0 0
      %467 = vmatpush1.bf16.msra.mxu0 0
      %468 = vmatprep.subr.bf16.mxu0 0
      %469 = vmatpush1.bf16.msra.mxu0 0
      %470 = vmatprep.subr.bf16.mxu0 0
      %471 = vmatpush1.bf16.msra.mxu0 0
      %472 = vmatprep.subr.bf16.mxu0 0
      %473 = vmatpush1.bf16.msra.mxu0 0
      %474 = vmatprep.subr.bf16.mxu0 0
      %475 = vmatpush1.bf16.msra.mxu0 0
      %476 = vmatprep.mubr.bf16.mxu0 0
      %477 = vmatmul.mubr.bf16.gmra.mrb[0].mxu0 %v442
      %v478 = vpop.f32.mrb[0].mxu0
      %v479 = vadd.f32 0.0, %v478
      %v480 = vpop.f32.mrb[0].mxu0
      %v481 = vadd.f32 0.0, %v480
      %v482 = vpop.f32.mrb[0].mxu0
      %v483 = vadd.f32 0.0, %v482
      %v484 = vpop.f32.mrb[0].mxu0
      %v485 = vadd.f32 0.0, %v484
      %486 = vdwg.mxu0
      %487 = vmatprep.subr.bf16.mxu0 0
      %488 = vmatpush1.bf16.msra.mxu0 %v434
      %489 = vmatprep.subr.bf16.mxu0 0
      %490 = vmatpush1.bf16.msra.mxu0 0
      %491 = vmatprep.subr.bf16.mxu0 0
      %492 = vmatpush1.bf16.msra.mxu0 0
      %493 = vmatprep.subr.bf16.mxu0 0
      %494 = vmatpush1.bf16.msra.mxu0 0
      %495 = vmatprep.subr.bf16.mxu0 0
      %496 = vmatpush1.bf16.msra.mxu0 0
      %497 = vmatprep.subr.bf16.mxu0 0
      %498 = vmatpush1.bf16.msra.mxu0 0
      %499 = vmatprep.subr.bf16.mxu0 0
      %500 = vmatpush1.bf16.msra.mxu0 0
      %501 = vmatprep.subr.bf16.mxu0 0
      %502 = vmatpush1.bf16.msra.mxu0 0
      %503 = vmatprep.subr.bf16.mxu0 0
      %504 = vmatpush1.bf16.msra.mxu0 0
      %505 = vmatprep.subr.bf16.mxu0 0
      %506 = vmatpush1.bf16.msra.mxu0 0
      %507 = vmatprep.subr.bf16.mxu0 0
      %508 = vmatpush1.bf16.msra.mxu0 0
      %509 = vmatprep.subr.bf16.mxu0 0
      %510 = vmatpush1.bf16.msra.mxu0 0
      %511 = vmatprep.subr.bf16.mxu0 0
      %512 = vmatpush1.bf16.msra.mxu0 0
      %513 = vmatprep.subr.bf16.mxu0 0
      %514 = vmatpush1.bf16.msra.mxu0 0
      %515 = vmatprep.subr.bf16.mxu0 0
      %516 = vmatpush1.bf16.msra.mxu0 0
      %517 = vmatprep.subr.bf16.mxu0 0
      %518 = vmatpush1.bf16.msra.mxu0 0
      %519 = vmatprep.mubr.bf16.mxu0 0
      %520 = vmatmul.mubr.bf16.gmra.mrb[0].mxu0 %v442
      %v521 = vpop.f32.mrb[0].mxu0
      %v522 = vadd.f32 0.0, %v521
      %v523 = vpop.f32.mrb[0].mxu0
      %v524 = vpop.f32.mrb[0].mxu0
      %v525 = vadd.f32 0.0, %v524
      %v526 = vpop.f32.mrb[0].mxu0
      %527 = vdwg.mxu0
      %v528 = vadd.f32 %v372, %v479
      %v529 = vadd.f32 %v374, %v481
      %v530 = vadd.f32 %v415, %v522
      %v531 = vadd.f32 %v376, %v483
      %v532 = vadd.f32 %v378, %v485
      %v533 = vadd.f32 %v418, %v525
      %s534 = scalar_lea.vmem %s0, 24
      %v535 = vld [vmem:[%s534] sm:$0xf]
      %v536 = vld [vmem:[%s534 + $0x4] sm:$0xf]
      %v539 = vunpack.c.l.b16 %v535
      %v540 = vunpack.c.l.b16 %v536
      %v541 = vpack.c.b16 %v540, %v539
      %542 = vrot.lane.b32.xlu0 %v223, 110
      %v543 = vpop.permute.xlu0 %542
      %544 = vrot.lane.b32.xlu0 %v224, 110
      %v545 = vpop.permute.xlu0 %544
      %546 = vrot.lane.b32.xlu0 %v225, 110
      %v547 = vpop.permute.xlu0 %546
      %vm548 = vcmask 900096
      %v549 = vsel %vm548, %v543, %v545
      %v550 = vsel %vm548, %v545, %v547
      %v555 = vsel %vm238, %v541, 0
      %557 = vmatprep.subr.bf16.mxu0 %v550
      %558 = vmatpush1.bf16.msra.mxu0 %v549
      %559 = vmatprep.subr.bf16.mxu0 0
      %560 = vmatpush1.bf16.msra.mxu0 0
      %561 = vmatprep.subr.bf16.mxu0 0
      %562 = vmatpush1.bf16.msra.mxu0 0
      %563 = vmatprep.subr.bf16.mxu0 0
      %564 = vmatpush1.bf16.msra.mxu0 0
      %565 = vmatprep.subr.bf16.mxu0 0
      %566 = vmatpush1.bf16.msra.mxu0 0
      %567 = vmatprep.subr.bf16.mxu0 0
      %568 = vmatpush1.bf16.msra.mxu0 0
      %569 = vmatprep.subr.bf16.mxu0 0
      %570 = vmatpush1.bf16.msra.mxu0 0
      %571 = vmatprep.subr.bf16.mxu0 0
      %572 = vmatpush1.bf16.msra.mxu0 0
      %573 = vmatprep.subr.bf16.mxu0 0
      %574 = vmatpush1.bf16.msra.mxu0 0
      %575 = vmatprep.subr.bf16.mxu0 0
      %576 = vmatpush1.bf16.msra.mxu0 0
      %577 = vmatprep.subr.bf16.mxu0 0
      %578 = vmatpush1.bf16.msra.mxu0 0
      %579 = vmatprep.subr.bf16.mxu0 0
      %580 = vmatpush1.bf16.msra.mxu0 0
      %581 = vmatprep.subr.bf16.mxu0 0
      %582 = vmatpush1.bf16.msra.mxu0 0
      %583 = vmatprep.subr.bf16.mxu0 0
      %584 = vmatpush1.bf16.msra.mxu0 0
      %585 = vmatprep.subr.bf16.mxu0 0
      %586 = vmatpush1.bf16.msra.mxu0 0
      %587 = vmatprep.subr.bf16.mxu0 0
      %588 = vmatpush1.bf16.msra.mxu0 0
      %589 = vmatprep.mubr.bf16.mxu0 0
      %590 = vmatmul.mubr.bf16.gmra.mrb[0].mxu0 %v555
      %v591 = vpop.f32.mrb[0].mxu0
      %v592 = vadd.f32 0.0, %v591
      %v593 = vpop.f32.mrb[0].mxu0
      %v594 = vadd.f32 0.0, %v593
      %v595 = vpop.f32.mrb[0].mxu0
      %v596 = vadd.f32 0.0, %v595
      %v597 = vpop.f32.mrb[0].mxu0
      %v598 = vadd.f32 0.0, %v597
      %599 = vdwg.mxu0
      %600 = vmatprep.subr.bf16.mxu0 0
      %601 = vmatpush1.bf16.msra.mxu0 %v547
      %602 = vmatprep.subr.bf16.mxu0 0
      %603 = vmatpush1.bf16.msra.mxu0 0
      %604 = vmatprep.subr.bf16.mxu0 0
      %605 = vmatpush1.bf16.msra.mxu0 0
      %606 = vmatprep.subr.bf16.mxu0 0
      %607 = vmatpush1.bf16.msra.mxu0 0
      %608 = vmatprep.subr.bf16.mxu0 0
      %609 = vmatpush1.bf16.msra.mxu0 0
      %610 = vmatprep.subr.bf16.mxu0 0
      %611 = vmatpush1.bf16.msra.mxu0 0
      %612 = vmatprep.subr.bf16.mxu0 0
      %613 = vmatpush1.bf16.msra.mxu0 0
      %614 = vmatprep.subr.bf16.mxu0 0
      %615 = vmatpush1.bf16.msra.mxu0 0
      %616 = vmatprep.subr.bf16.mxu0 0
      %617 = vmatpush1.bf16.msra.mxu0 0
      %618 = vmatprep.subr.bf16.mxu0 0
      %619 = vmatpush1.bf16.msra.mxu0 0
      %620 = vmatprep.subr.bf16.mxu0 0
      %621 = vmatpush1.bf16.msra.mxu0 0
      %622 = vmatprep.subr.bf16.mxu0 0
      %623 = vmatpush1.bf16.msra.mxu0 0
      %624 = vmatprep.subr.bf16.mxu0 0
      %625 = vmatpush1.bf16.msra.mxu0 0
      %626 = vmatprep.subr.bf16.mxu0 0
      %627 = vmatpush1.bf16.msra.mxu0 0
      %628 = vmatprep.subr.bf16.mxu0 0
      %629 = vmatpush1.bf16.msra.mxu0 0
      %630 = vmatprep.subr.bf16.mxu0 0
      %631 = vmatpush1.bf16.msra.mxu0 0
      %632 = vmatprep.mubr.bf16.mxu0 0
      %633 = vmatmul.mubr.bf16.gmra.mrb[0].mxu0 %v555
      %v634 = vpop.f32.mrb[0].mxu0
      %v635 = vadd.f32 0.0, %v634
      %v636 = vpop.f32.mrb[0].mxu0
      %v637 = vpop.f32.mrb[0].mxu0
      %v638 = vadd.f32 0.0, %v637
      %v639 = vpop.f32.mrb[0].mxu0
      %640 = vdwg.mxu0
      %v641 = vadd.f32 %v528, %v592
      %v642 = vadd.f32 %v529, %v594
      %v643 = vadd.f32 %v530, %v635
      %v644 = vadd.f32 %v531, %v596
      %v645 = vadd.f32 %v532, %v598
      %v646 = vadd.f32 %v533, %v638
      %s647 = scalar_lea.vmem %s0, 32
      %v648 = vld [vmem:[%s647] sm:$0xf]
      %v649 = vld [vmem:[%s647 + $0x4] sm:$0xf]
      %v652 = vunpack.c.l.b16 %v648
      %v653 = vunpack.c.l.b16 %v649
      %v654 = vpack.c.b16 %v653, %v652
      %655 = vrot.lane.b32.xlu0 %v223, 109
      %v656 = vpop.permute.xlu0 %655
      %657 = vrot.lane.b32.xlu0 %v224, 109
      %v658 = vpop.permute.xlu0 %657
      %659 = vrot.lane.b32.xlu0 %v225, 109
      %v660 = vpop.permute.xlu0 %659
      %vm661 = vcmask 891904
      %v662 = vsel %vm661, %v656, %v658
      %v663 = vsel %vm661, %v658, %v660
      %v668 = vsel %vm238, %v654, 0
      %670 = vmatprep.subr.bf16.mxu0 %v663
      %671 = vmatpush1.bf16.msra.mxu0 %v662
      %672 = vmatprep.subr.bf16.mxu0 0
      %673 = vmatpush1.bf16.msra.mxu0 0
      %674 = vmatprep.subr.bf16.mxu0 0
      %675 = vmatpush1.bf16.msra.mxu0 0
      %676 = vmatprep.subr.bf16.mxu0 0
      %677 = vmatpush1.bf16.msra.mxu0 0
      %678 = vmatprep.subr.bf16.mxu0 0
      %679 = vmatpush1.bf16.msra.mxu0 0
      %680 = vmatprep.subr.bf16.mxu0 0
      %681 = vmatpush1.bf16.msra.mxu0 0
      %682 = vmatprep.subr.bf16.mxu0 0
      %683 = vmatpush1.bf16.msra.mxu0 0
      %684 = vmatprep.subr.bf16.mxu0 0
      %685 = vmatpush1.bf16.msra.mxu0 0
      %686 = vmatprep.subr.bf16.mxu0 0
      %687 = vmatpush1.bf16.msra.mxu0 0
      %688 = vmatprep.subr.bf16.mxu0 0
      %689 = vmatpush1.bf16.msra.mxu0 0
      %690 = vmatprep.subr.bf16.mxu0 0
      %691 = vmatpush1.bf16.msra.mxu0 0
      %692 = vmatprep.subr.bf16.mxu0 0
      %693 = vmatpush1.bf16.msra.mxu0 0
      %694 = vmatprep.subr.bf16.mxu0 0
      %695 = vmatpush1.bf16.msra.mxu0 0
      %696 = vmatprep.subr.bf16.mxu0 0
      %697 = vmatpush1.bf16.msra.mxu0 0
      %698 = vmatprep.subr.bf16.mxu0 0
      %699 = vmatpush1.bf16.msra.mxu0 0
      %700 = vmatprep.subr.bf16.mxu0 0
      %701 = vmatpush1.bf16.msra.mxu0 0
      %702 = vmatprep.mubr.bf16.mxu0 0
      %703 = vmatmul.mubr.bf16.gmra.mrb[0].mxu0 %v668
      %v704 = vpop.f32.mrb[0].mxu0
      %v705 = vadd.f32 0.0, %v704
      %v706 = vpop.f32.mrb[0].mxu0
      %v707 = vadd.f32 0.0, %v706
      %v708 = vpop.f32.mrb[0].mxu0
      %v709 = vadd.f32 0.0, %v708
      %v710 = vpop.f32.mrb[0].mxu0
      %v711 = vadd.f32 0.0, %v710
      %712 = vdwg.mxu0
      %713 = vmatprep.subr.bf16.mxu0 0
      %714 = vmatpush1.bf16.msra.mxu0 %v660
      %715 = vmatprep.subr.bf16.mxu0 0
      %716 = vmatpush1.bf16.msra.mxu0 0
      %717 = vmatprep.subr.bf16.mxu0 0
      %718 = vmatpush1.bf16.msra.mxu0 0
      %719 = vmatprep.subr.bf16.mxu0 0
      %720 = vmatpush1.bf16.msra.mxu0 0
      %721 = vmatprep.subr.bf16.mxu0 0
      %722 = vmatpush1.bf16.msra.mxu0 0
      %723 = vmatprep.subr.bf16.mxu0 0
      %724 = vmatpush1.bf16.msra.mxu0 0
      %725 = vmatprep.subr.bf16.mxu0 0
      %726 = vmatpush1.bf16.msra.mxu0 0
      %727 = vmatprep.subr.bf16.mxu0 0
      %728 = vmatpush1.bf16.msra.mxu0 0
      %729 = vmatprep.subr.bf16.mxu0 0
      %730 = vmatpush1.bf16.msra.mxu0 0
      %731 = vmatprep.subr.bf16.mxu0 0
      %732 = vmatpush1.bf16.msra.mxu0 0
      %733 = vmatprep.subr.bf16.mxu0 0
      %734 = vmatpush1.bf16.msra.mxu0 0
      %735 = vmatprep.subr.bf16.mxu0 0
      %736 = vmatpush1.bf16.msra.mxu0 0
      %737 = vmatprep.subr.bf16.mxu0 0
      %738 = vmatpush1.bf16.msra.mxu0 0
      %739 = vmatprep.subr.bf16.mxu0 0
      %740 = vmatpush1.bf16.msra.mxu0 0
      %741 = vmatprep.subr.bf16.mxu0 0
      %742 = vmatpush1.bf16.msra.mxu0 0
      %743 = vmatprep.subr.bf16.mxu0 0
      %744 = vmatpush1.bf16.msra.mxu0 0
      %745 = vmatprep.mubr.bf16.mxu0 0
      %746 = vmatmul.mubr.bf16.gmra.mrb[0].mxu0 %v668
      %v747 = vpop.f32.mrb[0].mxu0
      %v748 = vadd.f32 0.0, %v747
      %v749 = vpop.f32.mrb[0].mxu0
      %v750 = vpop.f32.mrb[0].mxu0
      %v751 = vadd.f32 0.0, %v750
      %v752 = vpop.f32.mrb[0].mxu0
      %753 = vdwg.mxu0
      %v754 = vadd.f32 %v641, %v705
      %v755 = vadd.f32 %v642, %v707
      %v756 = vadd.f32 %v643, %v748
      %v757 = vadd.f32 %v644, %v709
      %v758 = vadd.f32 %v645, %v711
      %v759 = vadd.f32 %v646, %v751
      %s760 = scalar_lea.vmem %s0, 40
      %v761 = vld [vmem:[%s760] sm:$0xf]
      %v762 = vld [vmem:[%s760 + $0x4] sm:$0xf]
      %v765 = vunpack.c.l.b16 %v761
      %v766 = vunpack.c.l.b16 %v762
      %v767 = vpack.c.b16 %v766, %v765
      %768 = vrot.lane.b32.xlu0 %v223, 108
      %v769 = vpop.permute.xlu0 %768
      %770 = vrot.lane.b32.xlu0 %v224, 108
      %v771 = vpop.permute.xlu0 %770
      %772 = vrot.lane.b32.xlu0 %v225, 108
      %v773 = vpop.permute.xlu0 %772
      %vm774 = vcmask 883712
      %v775 = vsel %vm774, %v769, %v771
      %v776 = vsel %vm774, %v771, %v773
      %v781 = vsel %vm238, %v767, 0
      %783 = vmatprep.subr.bf16.mxu0 %v776
      %784 = vmatpush1.bf16.msra.mxu0 %v775
      %785 = vmatprep.subr.bf16.mxu0 0
      %786 = vmatpush1.bf16.msra.mxu0 0
      %787 = vmatprep.subr.bf16.mxu0 0
      %788 = vmatpush1.bf16.msra.mxu0 0
      %789 = vmatprep.subr.bf16.mxu0 0
      %790 = vmatpush1.bf16.msra.mxu0 0
      %791 = vmatprep.subr.bf16.mxu0 0
      %792 = vmatpush1.bf16.msra.mxu0 0
      %793 = vmatprep.subr.bf16.mxu0 0
      %794 = vmatpush1.bf16.msra.mxu0 0
      %795 = vmatprep.subr.bf16.mxu0 0
      %796 = vmatpush1.bf16.msra.mxu0 0
      %797 = vmatprep.subr.bf16.mxu0 0
      %798 = vmatpush1.bf16.msra.mxu0 0
      %799 = vmatprep.subr.bf16.mxu0 0
      %800 = vmatpush1.bf16.msra.mxu0 0
      %801 = vmatprep.subr.bf16.mxu0 0
      %802 = vmatpush1.bf16.msra.mxu0 0
      %803 = vmatprep.subr.bf16.mxu0 0
      %804 = vmatpush1.bf16.msra.mxu0 0
      %805 = vmatprep.subr.bf16.mxu0 0
      %806 = vmatpush1.bf16.msra.mxu0 0
      %807 = vmatprep.subr.bf16.mxu0 0
      %808 = vmatpush1.bf16.msra.mxu0 0
      %809 = vmatprep.subr.bf16.mxu0 0
      %810 = vmatpush1.bf16.msra.mxu0 0
      %811 = vmatprep.subr.bf16.mxu0 0
      %812 = vmatpush1.bf16.msra.mxu0 0
      %813 = vmatprep.subr.bf16.mxu0 0
      %814 = vmatpush1.bf16.msra.mxu0 0
      %815 = vmatprep.mubr.bf16.mxu0 0
      %816 = vmatmul.mubr.bf16.gmra.mrb[0].mxu0 %v781
      %v817 = vpop.f32.mrb[0].mxu0
      %v818 = vadd.f32 0.0, %v817
      %v819 = vpop.f32.mrb[0].mxu0
      %v820 = vadd.f32 0.0, %v819
      %v821 = vpop.f32.mrb[0].mxu0
      %v822 = vadd.f32 0.0, %v821
      %v823 = vpop.f32.mrb[0].mxu0
      %v824 = vadd.f32 0.0, %v823
      %825 = vdwg.mxu0
      %826 = vmatprep.subr.bf16.mxu0 0
      %827 = vmatpush1.bf16.msra.mxu0 %v773
      %828 = vmatprep.subr.bf16.mxu0 0
      %829 = vmatpush1.bf16.msra.mxu0 0
      %830 = vmatprep.subr.bf16.mxu0 0
      %831 = vmatpush1.bf16.msra.mxu0 0
      %832 = vmatprep.subr.bf16.mxu0 0
      %833 = vmatpush1.bf16.msra.mxu0 0
      %834 = vmatprep.subr.bf16.mxu0 0
      %835 = vmatpush1.bf16.msra.mxu0 0
      %836 = vmatprep.subr.bf16.mxu0 0
      %837 = vmatpush1.bf16.msra.mxu0 0
      %838 = vmatprep.subr.bf16.mxu0 0
      %839 = vmatpush1.bf16.msra.mxu0 0
      %840 = vmatprep.subr.bf16.mxu0 0
      %841 = vmatpush1.bf16.msra.mxu0 0
      %842 = vmatprep.subr.bf16.mxu0 0
      %843 = vmatpush1.bf16.msra.mxu0 0
      %844 = vmatprep.subr.bf16.mxu0 0
      %845 = vmatpush1.bf16.msra.mxu0 0
      %846 = vmatprep.subr.bf16.mxu0 0
      %847 = vmatpush1.bf16.msra.mxu0 0
      %848 = vmatprep.subr.bf16.mxu0 0
      %849 = vmatpush1.bf16.msra.mxu0 0
      %850 = vmatprep.subr.bf16.mxu0 0
      %851 = vmatpush1.bf16.msra.mxu0 0
      %852 = vmatprep.subr.bf16.mxu0 0
      %853 = vmatpush1.bf16.msra.mxu0 0
      %854 = vmatprep.subr.bf16.mxu0 0
      %855 = vmatpush1.bf16.msra.mxu0 0
      %856 = vmatprep.subr.bf16.mxu0 0
      %857 = vmatpush1.bf16.msra.mxu0 0
      %858 = vmatprep.mubr.bf16.mxu0 0
      %859 = vmatmul.mubr.bf16.gmra.mrb[0].mxu0 %v781
      %v860 = vpop.f32.mrb[0].mxu0
      %v861 = vadd.f32 0.0, %v860
      %v862 = vpop.f32.mrb[0].mxu0
      %v863 = vpop.f32.mrb[0].mxu0
      %v864 = vadd.f32 0.0, %v863
      %v865 = vpop.f32.mrb[0].mxu0
      %866 = vdwg.mxu0
      %v867 = vadd.f32 %v754, %v818
      %v868 = vadd.f32 %v755, %v820
      %v869 = vadd.f32 %v756, %v861
      %v870 = vadd.f32 %v757, %v822
      %v871 = vadd.f32 %v758, %v824
      %v872 = vadd.f32 %v759, %v864
      %s873 = scalar_lea.vmem %s0, 48
      %v874 = vld [vmem:[%s873] sm:$0xf]
      %v875 = vld [vmem:[%s873 + $0x4] sm:$0xf]
      %v878 = vunpack.c.l.b16 %v874
      %v879 = vunpack.c.l.b16 %v875
      %v880 = vpack.c.b16 %v879, %v878
      %881 = vrot.lane.b32.xlu0 %v223, 92
      %v882 = vpop.permute.xlu0 %881
      %883 = vrot.lane.b32.xlu0 %v224, 92
      %v884 = vpop.permute.xlu0 %883
      %885 = vrot.lane.b32.xlu0 %v225, 92
      %v886 = vpop.permute.xlu0 %885
      %vm887 = vcmask 752640
      %v888 = vsel %vm887, %v882, %v884
      %v889 = vsel %vm887, %v884, %v886
      %v894 = vsel %vm238, %v880, 0
      %896 = vmatprep.subr.bf16.mxu0 %v889
      %897 = vmatpush1.bf16.msra.mxu0 %v888
      %898 = vmatprep.subr.bf16.mxu0 0
      %899 = vmatpush1.bf16.msra.mxu0 0
      %900 = vmatprep.subr.bf16.mxu0 0
      %901 = vmatpush1.bf16.msra.mxu0 0
      %902 = vmatprep.subr.bf16.mxu0 0
      %903 = vmatpush1.bf16.msra.mxu0 0
      %904 = vmatprep.subr.bf16.mxu0 0
      %905 = vmatpush1.bf16.msra.mxu0 0
      %906 = vmatprep.subr.bf16.mxu0 0
      %907 = vmatpush1.bf16.msra.mxu0 0
      %908 = vmatprep.subr.bf16.mxu0 0
      %909 = vmatpush1.bf16.msra.mxu0 0
      %910 = vmatprep.subr.bf16.mxu0 0
      %911 = vmatpush1.bf16.msra.mxu0 0
      %912 = vmatprep.subr.bf16.mxu0 0
      %913 = vmatpush1.bf16.msra.mxu0 0
      %914 = vmatprep.subr.bf16.mxu0 0
      %915 = vmatpush1.bf16.msra.mxu0 0
      %916 = vmatprep.subr.bf16.mxu0 0
      %917 = vmatpush1.bf16.msra.mxu0 0
      %918 = vmatprep.subr.bf16.mxu0 0
      %919 = vmatpush1.bf16.msra.mxu0 0
      %920 = vmatprep.subr.bf16.mxu0 0
      %921 = vmatpush1.bf16.msra.mxu0 0
      %922 = vmatprep.subr.bf16.mxu0 0
      %923 = vmatpush1.bf16.msra.mxu0 0
      %924 = vmatprep.subr.bf16.mxu0 0
      %925 = vmatpush1.bf16.msra.mxu0 0
      %926 = vmatprep.subr.bf16.mxu0 0
      %927 = vmatpush1.bf16.msra.mxu0 0
      %928 = vmatprep.mubr.bf16.mxu0 0
      %929 = vmatmul.mubr.bf16.gmra.mrb[0].mxu0 %v894
      %v930 = vpop.f32.mrb[0].mxu0
      %v931 = vadd.f32 0.0, %v930
      %v932 = vpop.f32.mrb[0].mxu0
      %v933 = vadd.f32 0.0, %v932
      %v934 = vpop.f32.mrb[0].mxu0
      %v935 = vadd.f32 0.0, %v934
      %v936 = vpop.f32.mrb[0].mxu0
      %v937 = vadd.f32 0.0, %v936
      %938 = vdwg.mxu0
      %939 = vmatprep.subr.bf16.mxu0 0
      %940 = vmatpush1.bf16.msra.mxu0 %v886
      %941 = vmatprep.subr.bf16.mxu0 0
      %942 = vmatpush1.bf16.msra.mxu0 0
      %943 = vmatprep.subr.bf16.mxu0 0
      %944 = vmatpush1.bf16.msra.mxu0 0
      %945 = vmatprep.subr.bf16.mxu0 0
      %946 = vmatpush1.bf16.msra.mxu0 0
      %947 = vmatprep.subr.bf16.mxu0 0
      %948 = vmatpush1.bf16.msra.mxu0 0
      %949 = vmatprep.subr.bf16.mxu0 0
      %950 = vmatpush1.bf16.msra.mxu0 0
      %951 = vmatprep.subr.bf16.mxu0 0
      %952 = vmatpush1.bf16.msra.mxu0 0
      %953 = vmatprep.subr.bf16.mxu0 0
      %954 = vmatpush1.bf16.msra.mxu0 0
      %955 = vmatprep.subr.bf16.mxu0 0
      %956 = vmatpush1.bf16.msra.mxu0 0
      %957 = vmatprep.subr.bf16.mxu0 0
      %958 = vmatpush1.bf16.msra.mxu0 0
      %959 = vmatprep.subr.bf16.mxu0 0
      %960 = vmatpush1.bf16.msra.mxu0 0
      %961 = vmatprep.subr.bf16.mxu0 0
      %962 = vmatpush1.bf16.msra.mxu0 0
      %963 = vmatprep.subr.bf16.mxu0 0
      %964 = vmatpush1.bf16.msra.mxu0 0
      %965 = vmatprep.subr.bf16.mxu0 0
      %966 = vmatpush1.bf16.msra.mxu0 0
      %967 = vmatprep.subr.bf16.mxu0 0
      %968 = vmatpush1.bf16.msra.mxu0 0
      %969 = vmatprep.subr.bf16.mxu0 0
      %970 = vmatpush1.bf16.msra.mxu0 0
      %971 = vmatprep.mubr.bf16.mxu0 0
      %972 = vmatmul.mubr.bf16.gmra.mrb[0].mxu0 %v894
      %v973 = vpop.f32.mrb[0].mxu0
      %v974 = vadd.f32 0.0, %v973
      %v975 = vpop.f32.mrb[0].mxu0
      %v976 = vpop.f32.mrb[0].mxu0
      %v977 = vadd.f32 0.0, %v976
      %v978 = vpop.f32.mrb[0].mxu0
      %979 = vdwg.mxu0
      %v980 = vadd.f32 %v867, %v931
      %v981 = vadd.f32 %v868, %v933
      %v982 = vadd.f32 %v869, %v974
      %v983 = vadd.f32 %v870, %v935
      %v984 = vadd.f32 %v871, %v937
      %v985 = vadd.f32 %v872, %v977
      %s986 = scalar_lea.vmem %s0, 56
      %v987 = vld [vmem:[%s986] sm:$0xf]
      %v988 = vld [vmem:[%s986 + $0x4] sm:$0xf]
      %v991 = vunpack.c.l.b16 %v987
      %v992 = vunpack.c.l.b16 %v988
      %v993 = vpack.c.b16 %v992, %v991
      %994 = vrot.lane.b32.xlu0 %v223, 91
      %v995 = vpop.permute.xlu0 %994
      %996 = vrot.lane.b32.xlu0 %v224, 91
      %v997 = vpop.permute.xlu0 %996
      %998 = vrot.lane.b32.xlu0 %v225, 91
      %v999 = vpop.permute.xlu0 %998
      %vm1000 = vcmask 744448
      %v1001 = vsel %vm1000, %v995, %v997
      %v1002 = vsel %vm1000, %v997, %v999
      %v1007 = vsel %vm238, %v993, 0
      %1009 = vmatprep.subr.bf16.mxu0 %v1002
      %1010 = vmatpush1.bf16.msra.mxu0 %v1001
      %1011 = vmatprep.subr.bf16.mxu0 0
      %1012 = vmatpush1.bf16.msra.mxu0 0
      %1013 = vmatprep.subr.bf16.mxu0 0
      %1014 = vmatpush1.bf16.msra.mxu0 0
      %1015 = vmatprep.subr.bf16.mxu0 0
      %1016 = vmatpush1.bf16.msra.mxu0 0
      %1017 = vmatprep.subr.bf16.mxu0 0
      %1018 = vmatpush1.bf16.msra.mxu0 0
      %1019 = vmatprep.subr.bf16.mxu0 0
      %1020 = vmatpush1.bf16.msra.mxu0 0
      %1021 = vmatprep.subr.bf16.mxu0 0
      %1022 = vmatpush1.bf16.msra.mxu0 0
      %1023 = vmatprep.subr.bf16.mxu0 0
      %1024 = vmatpush1.bf16.msra.mxu0 0
      %1025 = vmatprep.subr.bf16.mxu0 0
      %1026 = vmatpush1.bf16.msra.mxu0 0
      %1027 = vmatprep.subr.bf16.mxu0 0
      %1028 = vmatpush1.bf16.msra.mxu0 0
      %1029 = vmatprep.subr.bf16.mxu0 0
      %1030 = vmatpush1.bf16.msra.mxu0 0
      %1031 = vmatprep.subr.bf16.mxu0 0
      %1032 = vmatpush1.bf16.msra.mxu0 0
      %1033 = vmatprep.subr.bf16.mxu0 0
      %1034 = vmatpush1.bf16.msra.mxu0 0
      %1035 = vmatprep.subr.bf16.mxu0 0
      %1036 = vmatpush1.bf16.msra.mxu0 0
      %1037 = vmatprep.subr.bf16.mxu0 0
      %1038 = vmatpush1.bf16.msra.mxu0 0
      %1039 = vmatprep.subr.bf16.mxu0 0
      %1040 = vmatpush1.bf16.msra.mxu0 0
      %1041 = vmatprep.mubr.bf16.mxu0 0
      %1042 = vmatmul.mubr.bf16.gmra.mrb[0].mxu0 %v1007
      %v1043 = vpop.f32.mrb[0].mxu0
      %v1044 = vadd.f32 0.0, %v1043
      %v1045 = vpop.f32.mrb[0].mxu0
      %v1046 = vadd.f32 0.0, %v1045
      %v1047 = vpop.f32.mrb[0].mxu0
      %v1048 = vadd.f32 0.0, %v1047
      %v1049 = vpop.f32.mrb[0].mxu0
      %v1050 = vadd.f32 0.0, %v1049
      %1051 = vdwg.mxu0
      %1052 = vmatprep.subr.bf16.mxu0 0
      %1053 = vmatpush1.bf16.msra.mxu0 %v999
      %1054 = vmatprep.subr.bf16.mxu0 0
      %1055 = vmatpush1.bf16.msra.mxu0 0
      %1056 = vmatprep.subr.bf16.mxu0 0
      %1057 = vmatpush1.bf16.msra.mxu0 0
      %1058 = vmatprep.subr.bf16.mxu0 0
      %1059 = vmatpush1.bf16.msra.mxu0 0
      %1060 = vmatprep.subr.bf16.mxu0 0
      %1061 = vmatpush1.bf16.msra.mxu0 0
      %1062 = vmatprep.subr.bf16.mxu0 0
      %1063 = vmatpush1.bf16.msra.mxu0 0
      %1064 = vmatprep.subr.bf16.mxu0 0
      %1065 = vmatpush1.bf16.msra.mxu0 0
      %1066 = vmatprep.subr.bf16.mxu0 0
      %1067 = vmatpush1.bf16.msra.mxu0 0
      %1068 = vmatprep.subr.bf16.mxu0 0
      %1069 = vmatpush1.bf16.msra.mxu0 0
      %1070 = vmatprep.subr.bf16.mxu0 0
      %1071 = vmatpush1.bf16.msra.mxu0 0
      %1072 = vmatprep.subr.bf16.mxu0 0
      %1073 = vmatpush1.bf16.msra.mxu0 0
      %1074 = vmatprep.subr.bf16.mxu0 0
      %1075 = vmatpush1.bf16.msra.mxu0 0
      %1076 = vmatprep.subr.bf16.mxu0 0
      %1077 = vmatpush1.bf16.msra.mxu0 0
      %1078 = vmatprep.subr.bf16.mxu0 0
      %1079 = vmatpush1.bf16.msra.mxu0 0
      %1080 = vmatprep.subr.bf16.mxu0 0
      %1081 = vmatpush1.bf16.msra.mxu0 0
      %1082 = vmatprep.subr.bf16.mxu0 0
      %1083 = vmatpush1.bf16.msra.mxu0 0
      %1084 = vmatprep.mubr.bf16.mxu0 0
      %1085 = vmatmul.mubr.bf16.gmra.mrb[0].mxu0 %v1007
      %v1086 = vpop.f32.mrb[0].mxu0
      %v1087 = vadd.f32 0.0, %v1086
      %v1088 = vpop.f32.mrb[0].mxu0
      %v1089 = vpop.f32.mrb[0].mxu0
      %v1090 = vadd.f32 0.0, %v1089
      %v1091 = vpop.f32.mrb[0].mxu0
      %1092 = vdwg.mxu0
      %v1093 = vadd.f32 %v980, %v1044
      %v1094 = vadd.f32 %v981, %v1046
      %v1095 = vadd.f32 %v982, %v1087
      %v1096 = vadd.f32 %v983, %v1048
      %v1097 = vadd.f32 %v984, %v1050
      %v1098 = vadd.f32 %v985, %v1090
      %s1099 = scalar_lea.vmem %s0, 64
      %v1100 = vld [vmem:[%s1099] sm:$0xf]
      %v1101 = vld [vmem:[%s1099 + $0x4] sm:$0xf]
      %v1104 = vunpack.c.l.b16 %v1100
      %v1105 = vunpack.c.l.b16 %v1101
      %v1106 = vpack.c.b16 %v1105, %v1104
      %1107 = vrot.lane.b32.xlu0 %v223, 90
      %v1108 = vpop.permute.xlu0 %1107
      %1109 = vrot.lane.b32.xlu0 %v224, 90
      %v1110 = vpop.permute.xlu0 %1109
      %1111 = vrot.lane.b32.xlu0 %v225, 90
      %v1112 = vpop.permute.xlu0 %1111
      %vm1113 = vcmask 736256
      %v1114 = vsel %vm1113, %v1108, %v1110
      %v1115 = vsel %vm1113, %v1110, %v1112
      %v1120 = vsel %vm238, %v1106, 0
      %1122 = vmatprep.subr.bf16.mxu0 %v1115
      %1123 = vmatpush1.bf16.msra.mxu0 %v1114
      %1124 = vmatprep.subr.bf16.mxu0 0
      %1125 = vmatpush1.bf16.msra.mxu0 0
      %1126 = vmatprep.subr.bf16.mxu0 0
      %1127 = vmatpush1.bf16.msra.mxu0 0
      %1128 = vmatprep.subr.bf16.mxu0 0
      %1129 = vmatpush1.bf16.msra.mxu0 0
      %1130 = vmatprep.subr.bf16.mxu0 0
      %1131 = vmatpush1.bf16.msra.mxu0 0
      %1132 = vmatprep.subr.bf16.mxu0 0
      %1133 = vmatpush1.bf16.msra.mxu0 0
      %1134 = vmatprep.subr.bf16.mxu0 0
      %1135 = vmatpush1.bf16.msra.mxu0 0
      %1136 = vmatprep.subr.bf16.mxu0 0
      %1137 = vmatpush1.bf16.msra.mxu0 0
      %1138 = vmatprep.subr.bf16.mxu0 0
      %1139 = vmatpush1.bf16.msra.mxu0 0
      %1140 = vmatprep.subr.bf16.mxu0 0
      %1141 = vmatpush1.bf16.msra.mxu0 0
      %1142 = vmatprep.subr.bf16.mxu0 0
      %1143 = vmatpush1.bf16.msra.mxu0 0
      %1144 = vmatprep.subr.bf16.mxu0 0
      %1145 = vmatpush1.bf16.msra.mxu0 0
      %1146 = vmatprep.subr.bf16.mxu0 0
      %1147 = vmatpush1.bf16.msra.mxu0 0
      %1148 = vmatprep.subr.bf16.mxu0 0
      %1149 = vmatpush1.bf16.msra.mxu0 0
      %1150 = vmatprep.subr.bf16.mxu0 0
      %1151 = vmatpush1.bf16.msra.mxu0 0
      %1152 = vmatprep.subr.bf16.mxu0 0
      %1153 = vmatpush1.bf16.msra.mxu0 0
      %1154 = vmatprep.mubr.bf16.mxu0 0
      %1155 = vmatmul.mubr.bf16.gmra.mrb[0].mxu0 %v1120
      %v1156 = vpop.f32.mrb[0].mxu0
      %v1157 = vadd.f32 0.0, %v1156
      %v1158 = vpop.f32.mrb[0].mxu0
      %v1159 = vadd.f32 0.0, %v1158
      %v1160 = vpop.f32.mrb[0].mxu0
      %v1161 = vadd.f32 0.0, %v1160
      %v1162 = vpop.f32.mrb[0].mxu0
      %v1163 = vadd.f32 0.0, %v1162
      %1164 = vdwg.mxu0
      %1165 = vmatprep.subr.bf16.mxu0 0
      %1166 = vmatpush1.bf16.msra.mxu0 %v1112
      %1167 = vmatprep.subr.bf16.mxu0 0
      %1168 = vmatpush1.bf16.msra.mxu0 0
      %1169 = vmatprep.subr.bf16.mxu0 0
      %1170 = vmatpush1.bf16.msra.mxu0 0
      %1171 = vmatprep.subr.bf16.mxu0 0
      %1172 = vmatpush1.bf16.msra.mxu0 0
      %1173 = vmatprep.subr.bf16.mxu0 0
      %1174 = vmatpush1.bf16.msra.mxu0 0
      %1175 = vmatprep.subr.bf16.mxu0 0
      %1176 = vmatpush1.bf16.msra.mxu0 0
      %1177 = vmatprep.subr.bf16.mxu0 0
      %1178 = vmatpush1.bf16.msra.mxu0 0
      %1179 = vmatprep.subr.bf16.mxu0 0
      %1180 = vmatpush1.bf16.msra.mxu0 0
      %1181 = vmatprep.subr.bf16.mxu0 0
      %1182 = vmatpush1.bf16.msra.mxu0 0
      %1183 = vmatprep.subr.bf16.mxu0 0
      %1184 = vmatpush1.bf16.msra.mxu0 0
      %1185 = vmatprep.subr.bf16.mxu0 0
      %1186 = vmatpush1.bf16.msra.mxu0 0
      %1187 = vmatprep.subr.bf16.mxu0 0
      %1188 = vmatpush1.bf16.msra.mxu0 0
      %1189 = vmatprep.subr.bf16.mxu0 0
      %1190 = vmatpush1.bf16.msra.mxu0 0
      %1191 = vmatprep.subr.bf16.mxu0 0
      %1192 = vmatpush1.bf16.msra.mxu0 0
      %1193 = vmatprep.subr.bf16.mxu0 0
      %1194 = vmatpush1.bf16.msra.mxu0 0
      %1195 = vmatprep.subr.bf16.mxu0 0
      %1196 = vmatpush1.bf16.msra.mxu0 0
      %1197 = vmatprep.mubr.bf16.mxu0 0
      %1198 = vmatmul.mubr.bf16.gmra.mrb[0].mxu0 %v1120
      %v1199 = vpop.f32.mrb[0].mxu0
      %v1200 = vadd.f32 0.0, %v1199
      %v1201 = vpop.f32.mrb[0].mxu0
      %v1202 = vpop.f32.mrb[0].mxu0
      %v1203 = vadd.f32 0.0, %v1202
      %v1204 = vpop.f32.mrb[0].mxu0
      %1205 = vdwg.mxu0
      %v1206 = vadd.f32 %v1093, %v1157
      %v1207 = vadd.f32 %v1094, %v1159
      %v1208 = vadd.f32 %v1095, %v1200
      %v1209 = vadd.f32 %v1096, %v1161
      %v1210 = vadd.f32 %v1097, %v1163
      %v1211 = vadd.f32 %v1098, %v1203
      %v1212 = vld [vmem:[%s2] sm:$0xff]
      %v1213 = vld [vmem:[%s2 + $0x8] sm:$0xff]
      %1215 = vset.pattern.permute.xlu0 0
      %1216 = vperm.xlu0 %1215, %v1212
      %v1217 = vpop.permute.xlu0 %1216
      %1220 = vset.pattern.permute.xlu0 0
      %1221 = vperm.xlu0 %1220, %v1213
      %v1222 = vpop.permute.xlu0 %1221
      %v1224 = vadd.f32 %v1206, %v1217
      %v1225 = vadd.f32 %v1207, %v1217
      %v1226 = vadd.f32 %v1208, %v1217
      %v1227 = vadd.f32 %v1209, %v1222
      %v1228 = vadd.f32 %v1210, %v1222
      %v1229 = vadd.f32 %v1211, %v1222
      %v1230 = vsub.f32 0.0, %v1224
      %v1231 = vsub.f32 0.0, %v1225
      %v1232 = vsub.f32 0.0, %v1226
      %v1233 = vsub.f32 0.0, %v1227
      %v1234 = vsub.f32 0.0, %v1228
      %v1235 = vsub.f32 0.0, %v1229
      %v1236 = vmul.f32 %v1230, 1.442695
      %v1237 = vpow.pop %v1236
      %v1238 = vmul.f32 %v1231, 1.442695
      %v1239 = vpow.pop %v1238
      %v1240 = vmul.f32 %v1232, 1.442695
      %v1241 = vpow.pop %v1240
      %v1242 = vmul.f32 %v1233, 1.442695
      %v1243 = vpow.pop %v1242
      %v1244 = vmul.f32 %v1234, 1.442695
      %v1245 = vpow.pop %v1244
      %v1246 = vmul.f32 %v1235, 1.442695
      %v1247 = vpow.pop %v1246
      %v1248 = vadd.f32 %v1237, 1.0
      %v1249 = vadd.f32 %v1239, 1.0
      %v1250 = vadd.f32 %v1241, 1.0
      %v1251 = vadd.f32 %v1243, 1.0
      %v1252 = vadd.f32 %v1245, 1.0
      %v1253 = vadd.f32 %v1247, 1.0
      %v1254 = vrcp.pop %v1248
      %v1255 = vrcp.pop %v1249
      %v1256 = vrcp.pop %v1250
      %v1257 = vrcp.pop %v1251
      %v1258 = vrcp.pop %v1252
      %v1259 = vrcp.pop %v1253
      %v1260 = vmul.f32 %v1224, %v1254
      %v1261 = vmul.f32 %v1225, %v1255
      %v1262 = vmul.f32 %v1226, %v1256
      %v1263 = vmul.f32 %v1227, %v1257
      %v1264 = vmul.f32 %v1228, %v1258
      %v1265 = vmul.f32 %v1229, %v1259
      %v1266 = vld [vmem:[%s3] sm:$0x7]
      %v1268 = vlaneseq
      %v1269 = vshrl.u32 %v1268, 7
      %v1270 = vsub.s32 0, %v1269
      %v1271 = vrot.slane %v1266, %v1270
      %v1272 = vlaneseq
      %v1273 = vshrl.u32 %v1272, 7
      %v1274 = vsub.s32 1, %v1273
      %v1275 = vrot.slane %v1266, %v1274
      %v1276 = vlaneseq
      %v1277 = vshrl.u32 %v1276, 7
      %v1278 = vsub.s32 2, %v1277
      %v1279 = vrot.slane %v1266, %v1278
      %v1283 = vmul.f32 %v1260, %v1271
      %v1284 = vmul.f32 %v1261, %v1275
      %v1285 = vmul.f32 %v1262, %v1279
      %v1286 = vmul.f32 %v1263, %v1271
      %v1287 = vmul.f32 %v1264, %v1275
      %v1288 = vmul.f32 %v1265, %v1279
      %1289 = vst [vmem:[%s197] sm:$0xff] 0
      %vm1290 = vcmask 551936
      %1291 = vst.msk [vmem:[%s197 + $0x8] sm:$0xf] %vm1290, 0
      %1292 = vst [vmem:[%s197 + $0xc] sm:$0xff] 0
      %1293 = vst.msk [vmem:[%s197 + $0x14] sm:$0xf] %vm1290, 0
      %v1294 = vpack.c.bf16 %v1286, %v1283
      %v1295 = vpack.c.bf16 %v1287, %v1284
      %v1296 = vpack.c.bf16 %v1288, %v1285
      %v1300 = vunpack.c.l.b16 %v1294
      %v1301 = vunpack.c.l.b16 %v1295
      %v1302 = vunpack.c.l.b16 %v1296
      %v1303 = vunpack.c.h.b16 %v1294
      %v1304 = vunpack.c.h.b16 %v1295
      %v1305 = vunpack.c.h.b16 %v1296
      %v1306 = vpack.c.b16 %v1301, %v1300
      %v1307 = vpack.c.b16 %v1302, %v1302
      %v1308 = vpack.c.b16 %v1304, %v1303
      %v1309 = vpack.c.b16 %v1305, %v1305
      %1310 = vrot.lane.b32.xlu0 %v1306, 19
      %v1311 = vpop.permute.xlu0 %1310
      %1312 = vrot.lane.b32.xlu0 %v1307, 19
      %v1313 = vpop.permute.xlu0 %1312
      %1314 = vrot.lane.b32.xlu0 %v1308, 19
      %v1315 = vpop.permute.xlu0 %1314
      %1316 = vrot.lane.b32.xlu0 %v1309, 19
      %v1317 = vpop.permute.xlu0 %1316
      %v1318 = vrot.slane %v1311, 4
      %v1319 = vrot.slane %v1315, 4
      %vm1320 = vcmask 154624
      %v1321 = vsel %vm1320, %v1318, %v1311
      %v1322 = vsel %vm1320, %v1318, %v1313
      %v1323 = vsel %vm1320, %v1319, %v1315
      %v1324 = vsel %vm1320, %v1319, %v1317
      %vm1329 = vcmask 1043608
      %vm1330 = vcmask 1047556
      %vm1331 = vmor %vm1330, %vm1329
      %1332 = vst.msk [vmem:[%s197] sm:$0xff] %vm1331, %v1321
      %vm1333 = vcmask 396288
      %1334 = vst.msk [vmem:[%s197 + $0x8] sm:$0xf] %vm1333, %v1322
      %1335 = vst.msk [vmem:[%s197 + $0xc] sm:$0xff] %vm1331, %v1323
      %1336 = vst.msk [vmem:[%s197 + $0x14] sm:$0xf] %vm1333, %v1324
      %p1337 = scmp.lt.s32.totalorder %s15, 1
      %s1338 = scalar_select %p1337, %s15, 1
      %s1339 = smul.addr %s1338, 6
      %s1340 = smul.addr %s1339, 4
      %s1341 = scalar_lea.vmem %s4, %s1340
      // Predicated region
      $region37: #{c2f_tripletat.8} parent=35 // pred_check
        %p1342 = pneg %p122
      $region38: #{c2f_tripletat.8} parent=35 // pred_check_branch
        %1344 = sbr.rel (%p1342) target = $region40
      $region39: #{c2f_tripletat.8} parent=35 // pred_region
        _
      $region40: #{c2f_tripletat.8} parent=35 // pred_fallthru
        _
    $region36: #{c2f_tripletat.8} parent=5 // pred_fallthru
      _
    %p1345 = scmp.le.s32.totalorder 2, %s10
    // Predicated region
    $region41: #{c2f_tripletat.8} parent=5 // pred_check
      %p1346 = pneg %p1345
    $region42: #{c2f_tripletat.8} parent=5 // pred_check_branch
      %1348 = sbr.rel (%p1346) target = $region44
    $region43: #{c2f_tripletat.8} parent=5 // pred_region
      %s1349 = ssub.s32 %s10, 2
      // Predicated region
      $region45: #{c2f_tripletat.8} parent=43 // pred_check
        %p1350 = pneg %p128
      $region46: #{c2f_tripletat.8} parent=43 // pred_check_branch
        %1352 = sbr.rel (%p1350) target = $region48
      $region47: #{c2f_tripletat.8} parent=43 // pred_region
        %p1353 = scmp.lt.s32.totalorder %s16, 1
        %s1354 = scalar_select %p1353, %s16, 1
        %s1355 = smul.addr %s1354, 6
        %s1356 = smul.addr %s1355, 4
        %s1357 = scalar_lea.vmem %s4, %s1356
      $region48: #{c2f_tripletat.8} parent=43 // pred_fallthru
        _
    $region44: #{c2f_tripletat.8} parent=5 // pred_fallthru
      _
  $region6: #{c2f_tripletat.8} parent=0 // loop_footer
    %s14 = sadd.s32 1, %s10
  $region7: #{c2f_tripletat.8} parent=0 // loop_footer_branch
    %9 = sbr.rel target = $region3
  $region8: #{c2f_tripletat.8} parent=0 // loop_exit
    _

// kernel: c2f_tripletat.11
$region0: #{c2f_tripletat.11}
  #allocation0 [shape = 'u32[]', space=smem, size = 0x4, offset = 0x4, fixed_abs, tag = 'smem constant byte address 0x4 - core index']
  #allocation1 [shape = 'u32[144,128]{1,0:T(1,128)}', space=vmem, size = 0x12000, scoped, tag = 'internal scratch']
  #allocation2 [shape = 'f32[2,22,22]{2,1,0:T(8,128)}', space=vmem, size = 0x6000, scoped, tag = 'scratch operand']
  %s0 = inlined_call_operand.vmem [shape: f32[99], index: 0, kind: input, shape index: {}]
  %s1 = inlined_call_operand.vmem [shape: bf16[2,16,16,16], index: 1, kind: input, shape index: {}]
  %s2 = inlined_call_operand.vmem [shape: bf16[2,16,16,16], index: 2, kind: output, shape index: {}]
  %s3 = sld [smem:[#allocation0]]
  $region45: #{c2f_tripletat.11} parent=0
    _
  %s5 = ssub.s32 1, %s3
  %s6 = scalar_select 0, %s5, %s3
  $region1: #{c2f_tripletat.11} parent=0
    #allocation3 [shape = 'u8[512]{0}', space=smem, size = 0x200, scoped, tag = 'input window, operand 0, single buffered']
    #allocation4 [shape = 's32[2]{0}', space=sflag, size = 0x8, scoped, tag = 'scoped memory for c2f_tripletat.11']
    %7 = vsyncpa [#allocation4], 0
    loop: start=0, step=1, limit=4
    $region2: #{c2f_tripletat.11} parent=1 // loop_pre_header
      _
    $region3: #{c2f_tripletat.11} parent=1 // loop_header
      %s9 = sphi 0, %s13
      %p10 = scmp.ge.s32.totalorder %s9, 4
      %s17 = sphi 0, %s17
      %s19 = sphi 0, %s17
      %s20 = sphi 0, %s19
      %s34 = sphi 0, %s20
      %s40 = sphi 0, %s42
      %s43 = sphi 0, %s40
      %s44 = sphi 0, %s43
      %s60 = sphi 0, %s44
      %s66 = sphi 0, %s68
      %s69 = sphi 0, %s66
      %s70 = sphi 0, %s69
      %s86 = sphi 0, %s70
    $region4: #{c2f_tripletat.11} parent=1 // loop_header_branch
      %12 = sbr.rel (%p10) target = $region8
    $region5: #{c2f_tripletat.11} parent=1 // loop_body
      %s14 = ssub.s32 %s9, 1
      %s15 = ssub.s32 %s9, 2
      %s16 = sadd.s32 %s9, 1
      %s18 = sadd.s32 %s17, 1
      %p21 = scmp.eq.s32.totalorder %s9, 1
      %p22 = scmp.ne.s32.totalorder %s17, %s19
      %p23 = scmp.eq.s32.totalorder %s9, 0
      %p24 = por %p22, %p23
      %p25 = scmp.ne.s32.totalorder %s17, %s19
      %p26 = scmp.eq.s32.totalorder %s14, 1
      %p27 = por %p25, %p26
      %p28 = scmp.ne.s32.totalorder %s19, %s20
      %p29 = scmp.eq.s32.totalorder %s14, 0
      %p30 = por %p28, %p29
      %p31 = scmp.ne.s32.totalorder %s19, %s20
      %p32 = scmp.eq.s32.totalorder %s15, 1
      %p33 = por %p31, %p32
      %p35 = scmp.ne.s32.totalorder %s20, %s34
      %p36 = scmp.eq.s32.totalorder %s15, 0
      %p37 = por %p35, %p36
      %s38 = ssub.s32 %s9, %s16
      %p39 = scmp.eq.s32.totalorder %s38, 0
      %s41 = sadd.s32 %s40, 1
      %s42 = scalar_select %p39, %s40, %s41
      %p45 = pneg %p39
      %p46 = scmp.eq.s32.totalorder %s9, 1
      %p47 = por %p45, %p46
      %p48 = scmp.ne.s32.totalorder %s40, %s43
      %p49 = scmp.eq.s32.totalorder %s9, 0
      %p50 = por %p48, %p49
      %p51 = scmp.ne.s32.totalorder %s40, %s43
      %p52 = scmp.eq.s32.totalorder %s14, 1
      %p53 = por %p51, %p52
      %p54 = scmp.ne.s32.totalorder %s43, %s44
      %p55 = scmp.eq.s32.totalorder %s14, 0
      %p56 = por %p54, %p55
      %p57 = scmp.ne.s32.totalorder %s43, %s44
      %p58 = scmp.eq.s32.totalorder %s15, 1
      %p59 = por %p57, %p58
      %p61 = scmp.ne.s32.totalorder %s44, %s60
      %p62 = scmp.eq.s32.totalorder %s15, 0
      %p63 = por %p61, %p62
      %s64 = ssub.s32 %s9, %s16
      %p65 = scmp.eq.s32.totalorder %s64, 0
      %s67 = sadd.s32 %s66, 1
      %s68 = scalar_select %p65, %s66, %s67
      %p71 = pneg %p65
      %p72 = scmp.eq.s32.totalorder %s9, 1
      %p73 = por %p71, %p72
      %p74 = scmp.ne.s32.totalorder %s66, %s69
      %p75 = scmp.eq.s32.totalorder %s9, 0
      %p76 = por %p74, %p75
      %p77 = scmp.ne.s32.totalorder %s66, %s69
      %p78 = scmp.eq.s32.totalorder %s14, 1
      %p79 = por %p77, %p78
      %p80 = scmp.ne.s32.totalorder %s69, %s70
      %p81 = scmp.eq.s32.totalorder %s14, 0
      %p82 = por %p80, %p81
      %p83 = scmp.ne.s32.totalorder %s69, %s70
      %p84 = scmp.eq.s32.totalorder %s15, 1
      %p85 = por %p83, %p84
      %p87 = scmp.ne.s32.totalorder %s70, %s86
      %p88 = scmp.eq.s32.totalorder %s15, 0
      %p89 = por %p87, %p88
      %p90 = scmp.le.s32.totalorder 1, %s9
      %p91 = scmp.lt.s32.totalorder %s9, 3
      %p92 = pnand %p90, %p91
      %p93 = pneg %p92
      // Predicated region
      $region9: #{c2f_tripletat.11} parent=5 // pred_check
        _
      $region10: #{c2f_tripletat.11} parent=5 // pred_check_branch
        %95 = sbr.rel (%p92) target = $region12
      $region11: #{c2f_tripletat.11} parent=5 // pred_region
        %s96 = ssub.s32 %s9, 1
        // Predicated region
        $region13: #{c2f_tripletat.11} parent=11 // pred_check
          %p97 = pneg %p30
        $region14: #{c2f_tripletat.11} parent=11 // pred_check_branch
          %99 = sbr.rel (%p97) target = $region16
        $region15: #{c2f_tripletat.11} parent=11 // pred_region
          %s101 = ssub.s32 16, 16
          %102 = vsyncadd [#allocation4], %s101
          %s104 = sshll.u32 %s0, 4
          %s105 = int_to_ptr.vmem [resolvable:$true] %s104
          %107 = dma.vmem_to_smem %s105, 16, [#allocation3], [#allocation4]
        $region16: #{c2f_tripletat.11} parent=11 // pred_fallthru
          _
      $region12: #{c2f_tripletat.11} parent=5 // pred_fallthru
        _
      %p108 = scmp.lt.s32.totalorder %s9, 2
      // Predicated region
      $region17: #{c2f_tripletat.11} parent=5 // pred_check
        %p109 = pneg %p108
      $region18: #{c2f_tripletat.11} parent=5 // pred_check_branch
        %111 = sbr.rel (%p109) target = $region20
      $region19: #{c2f_tripletat.11} parent=5 // pred_region
        // Predicated region
        $region21: #{c2f_tripletat.11} parent=19 // pred_check
          %p112 = pneg %p50
        $region22: #{c2f_tripletat.11} parent=19 // pred_check_branch
          %114 = sbr.rel (%p112) target = $region24
        $region23: #{c2f_tripletat.11} parent=19 // pred_region
          %p115 = scmp.lt.s32.totalorder %s9, 1
          %s116 = scalar_select %p115, %s9, 1
          %s117 = smul.addr %s116, 32
          %s118 = smul.addr %s117, 4
          %s119 = scalar_lea.vmem %s1, %s118
        $region24: #{c2f_tripletat.11} parent=19 // pred_fallthru
          _
      $region20: #{c2f_tripletat.11} parent=5 // pred_fallthru
        _
      %p120 = scmp.le.s32.totalorder 1, %s9
      %p121 = scmp.lt.s32.totalorder %s9, 3
      %p122 = pnand %p120, %p121
      %p123 = pneg %p122
      // Predicated region
      $region25: #{c2f_tripletat.11} parent=5 // pred_check
        _
      $region26: #{c2f_tripletat.11} parent=5 // pred_check_branch
        %125 = sbr.rel (%p122) target = $region28
      $region27: #{c2f_tripletat.11} parent=5 // pred_region
        %s126 = ssub.s32 %s9, 1
        // Predicated region
        $region29: #{c2f_tripletat.11} parent=27 // pred_check
          %p127 = pneg %p30
        $region30: #{c2f_tripletat.11} parent=27 // pred_check_branch
          %129 = sbr.rel (%p127) target = $region32
        $region31: #{c2f_tripletat.11} parent=27 // pred_region
          %130 = dma.done [#allocation4], 16
        $region32: #{c2f_tripletat.11} parent=27 // pred_fallthru
          _
        %131 = sfence
        %p132 = pneg %p30
        %p133 = pneg %p27
        %p134 = scmp.lt.s32.totalorder %s14, 1
        %s135 = scalar_select %p134, %s14, 1
        %s136 = smul.addr %s135, 32
        %s137 = smul.addr %s136, 4
        %s138 = scalar_lea.vmem %s1, %s137
        %p139 = pneg %p56
        %p140 = pneg %p53
        %p141 = pneg %p82
        %p142 = pneg %p79
        %p143 = scmp.lt.s32.totalorder %s14, 1
        %s144 = scalar_select %p143, %s14, 1
        %s145 = smul.addr %s144, 32
        %s146 = smul.addr %s145, 4
        %s147 = scalar_lea.vmem %s2, %s146
        %p148 = scmp.lt.s32.totalorder %s14, 1
        %s149 = scalar_select %p148, %s14, 1
        %s150 = smul.addr %s149, 32
        %s151 = smul.addr %s150, 4
        %s152 = scalar_lea.vmem %s1, %s151
        %p153 = scmp.lt.s32.totalorder %s14, 1
        %s154 = scalar_select %p153, %s14, 1
        %s155 = smul.addr %s154, 32
        %s156 = smul.addr %s155, 4
        %s157 = scalar_lea.vmem %s2, %s156
        %v158 = vld [vmem:[%s152] sm:$0xf]
        %v159 = vld [vmem:[%s152 + $0x4] sm:$0xf]
        %v160 = vld [vmem:[%s152 + $0x8] sm:$0xf]
        %v161 = vld [vmem:[%s152 + $0xc] sm:$0xf]
        %v162 = vld [vmem:[%s152 + $0x10] sm:$0xf]
        %v163 = vld [vmem:[%s152 + $0x14] sm:$0xf]
        %v164 = vld [vmem:[%s152 + $0x18] sm:$0xf]
        %v165 = vld [vmem:[%s152 + $0x1c] sm:$0xf]
        %v166 = vld [vmem:[%s152 + $0x20] sm:$0xf]
        %v167 = vld [vmem:[%s152 + $0x24] sm:$0xf]
        %v168 = vld [vmem:[%s152 + $0x28] sm:$0xf]
        %v169 = vld [vmem:[%s152 + $0x2c] sm:$0xf]
        %v170 = vld [vmem:[%s152 + $0x30] sm:$0xf]
        %v171 = vld [vmem:[%s152 + $0x34] sm:$0xf]
        %v172 = vld [vmem:[%s152 + $0x38] sm:$0xf]
        %v173 = vld [vmem:[%s152 + $0x3c] sm:$0xf]
        %v174 = vld [vmem:[%s152 + $0x40] sm:$0xf]
        %v175 = vld [vmem:[%s152 + $0x44] sm:$0xf]
        %v176 = vld [vmem:[%s152 + $0x48] sm:$0xf]
        %v177 = vld [vmem:[%s152 + $0x4c] sm:$0xf]
        %v178 = vld [vmem:[%s152 + $0x50] sm:$0xf]
        %v179 = vld [vmem:[%s152 + $0x54] sm:$0xf]
        %v180 = vld [vmem:[%s152 + $0x58] sm:$0xf]
        %v181 = vld [vmem:[%s152 + $0x5c] sm:$0xf]
        %v182 = vld [vmem:[%s152 + $0x60] sm:$0xf]
        %v183 = vld [vmem:[%s152 + $0x64] sm:$0xf]
        %v184 = vld [vmem:[%s152 + $0x68] sm:$0xf]
        %v185 = vld [vmem:[%s152 + $0x6c] sm:$0xf]
        %v186 = vld [vmem:[%s152 + $0x70] sm:$0xf]
        %v187 = vld [vmem:[%s152 + $0x74] sm:$0xf]
        %v188 = vld [vmem:[%s152 + $0x78] sm:$0xf]
        %v189 = vld [vmem:[%s152 + $0x7c] sm:$0xf]
        %v190 = vunpack.c.l.bf16 %v158
        %v191 = vunpack.c.l.bf16 %v159
        %v192 = vunpack.c.l.bf16 %v160
        %v193 = vunpack.c.l.bf16 %v161
        %v194 = vunpack.c.l.bf16 %v162
        %v195 = vunpack.c.l.bf16 %v163
        %v196 = vunpack.c.l.bf16 %v164
        %v197 = vunpack.c.l.bf16 %v165
        %v198 = vunpack.c.l.bf16 %v166
        %v199 = vunpack.c.l.bf16 %v167
        %v200 = vunpack.c.l.bf16 %v168
        %v201 = vunpack.c.l.bf16 %v169
        %v202 = vunpack.c.l.bf16 %v170
        %v203 = vunpack.c.l.bf16 %v171
        %v204 = vunpack.c.l.bf16 %v172
        %v205 = vunpack.c.l.bf16 %v173
        %v206 = vunpack.c.l.bf16 %v174
        %v207 = vunpack.c.l.bf16 %v175
        %v208 = vunpack.c.l.bf16 %v176
        %v209 = vunpack.c.l.bf16 %v177
        %v210 = vunpack.c.l.bf16 %v178
        %v211 = vunpack.c.l.bf16 %v179
        %v212 = vunpack.c.l.bf16 %v180
        %v213 = vunpack.c.l.bf16 %v181
        %v214 = vunpack.c.l.bf16 %v182
        %v215 = vunpack.c.l.bf16 %v183
        %v216 = vunpack.c.l.bf16 %v184
        %v217 = vunpack.c.l.bf16 %v185
        %v218 = vunpack.c.l.bf16 %v186
        %v219 = vunpack.c.l.bf16 %v187
        %v220 = vunpack.c.l.bf16 %v188
        %v221 = vunpack.c.l.bf16 %v189
        %vm222 = vcmask 179200
        %223 = vst.msk [vmem:[#allocation2] sm:$0xff] %vm222, 0.0
        %224 = vst.msk [vmem:[#allocation2 + $0x8] sm:$0xff] %vm222, 0.0
        %vm225 = vcmask 177152
        %226 = vst.msk [vmem:[#allocation2 + $0x10] sm:$0x3f] %vm225, 0.0
        %227 = vst.msk [vmem:[#allocation2 + $0x18] sm:$0xff] %vm222, 0.0
        %228 = vst.msk [vmem:[#allocation2 + $0x20] sm:$0xff] %vm222, 0.0
        %229 = vst.msk [vmem:[#allocation2 + $0x28] sm:$0x3f] %vm225, 0.0
        %vm230 = vcmask 130048
        %v231 = vsel %vm230, %v190, -inf
        %v232 = vsel %vm230, %v192, -inf
        %v233 = vsel %vm230, %v194, -inf
        %v234 = vmax.f32 %v231, %v233
        %v235 = vsel %vm230, %v196, -inf
        %v236 = vmax.f32 %v232, %v235
        %v237 = vsel %vm230, %v198, -inf
        %v238 = vmax.f32 %v234, %v237
        %v239 = vsel %vm230, %v200, -inf
        %v240 = vmax.f32 %v236, %v239
        %v241 = vsel %vm230, %v202, -inf
        %v242 = vmax.f32 %v238, %v241
        %v243 = vsel %vm230, %v204, -inf
        %v244 = vmax.f32 %v240, %v243
        %v245 = vsel %vm230, %v206, -inf
        %v246 = vmax.f32 %v242, %v245
        %v247 = vsel %vm230, %v208, -inf
        %v248 = vmax.f32 %v244, %v247
        %v249 = vsel %vm230, %v210, -inf
        %v250 = vmax.f32 %v246, %v249
        %v251 = vsel %vm230, %v212, -inf
        %v252 = vmax.f32 %v248, %v251
        %v253 = vsel %vm230, %v214, -inf
        %v254 = vmax.f32 %v250, %v253
        %v255 = vsel %vm230, %v216, -inf
        %v256 = vmax.f32 %v252, %v255
        %v257 = vsel %vm230, %v218, -inf
        %v258 = vmax.f32 %v254, %v257
        %v259 = vsel %vm230, %v220, -inf
        %v260 = vmax.f32 %v256, %v259
        %v261 = vmax.f32 %v258, %v260
        %v262 = vsel %vm230, %v191, -inf
        %v263 = vsel %vm230, %v193, -inf
        %v264 = vsel %vm230, %v195, -inf
        %v265 = vmax.f32 %v262, %v264
        %v266 = vsel %vm230, %v197, -inf
        %v267 = vmax.f32 %v263, %v266
        %v268 = vsel %vm230, %v199, -inf
        %v269 = vmax.f32 %v265, %v268
        %v270 = vsel %vm230, %v201, -inf
        %v271 = vmax.f32 %v267, %v270
        %v272 = vsel %vm230, %v203, -inf
        %v273 = vmax.f32 %v269, %v272
        %v274 = vsel %vm230, %v205, -inf
        %v275 = vmax.f32 %v271, %v274
        %v276 = vsel %vm230, %v207, -inf
        %v277 = vmax.f32 %v273, %v276
        %v278 = vsel %vm230, %v209, -inf
        %v279 = vmax.f32 %v275, %v278
        %v280 = vsel %vm230, %v211, -inf
        %v281 = vmax.f32 %v277, %v280
        %v282 = vsel %vm230, %v213, -inf
        %v283 = vmax.f32 %v279, %v282
        %v284 = vsel %vm230, %v215, -inf
        %v285 = vmax.f32 %v281, %v284
        %v286 = vsel %vm230, %v217, -inf
        %v287 = vmax.f32 %v283, %v286
        %v288 = vsel %vm230, %v219, -inf
        %v289 = vmax.f32 %v285, %v288
        %v290 = vsel %vm230, %v221, -inf
        %v291 = vmax.f32 %v287, %v290
        %v292 = vmax.f32 %v289, %v291
        %295 = vrot.lane.b32.xlu0 %v261, 3
        %v296 = vpop.permute.xlu0 %295
        %297 = vrot.lane.b32.xlu0 %v292, 3
        %v298 = vpop.permute.xlu0 %297
        %vm301 = vcmask 154648
        %302 = vst.msk [vmem:[#allocation2 + $0x3] sm:$0xff] %vm301, %v296
        %303 = vst.msk [vmem:[#allocation2 + $0xb] sm:$0xff] %vm301, %v298
        %v304 = vsel %vm230, %v190, 0.0
        %v305 = vsel %vm230, %v192, 0.0
        %v306 = vadd.f32 %v304, %v305
        %v307 = vsel %vm230, %v194, 0.0
        %v308 = vadd.f32 %v306, %v307
        %v309 = vsel %vm230, %v196, 0.0
        %v310 = vadd.f32 %v308, %v309
        %v311 = vsel %vm230, %v198, 0.0
        %v312 = vadd.f32 %v310, %v311
        %v313 = vsel %vm230, %v200, 0.0
        %v314 = vadd.f32 %v312, %v313
        %v315 = vsel %vm230, %v202, 0.0
        %v316 = vadd.f32 %v314, %v315
        %v317 = vsel %vm230, %v204, 0.0
        %v318 = vadd.f32 %v316, %v317
        %v319 = vsel %vm230, %v206, 0.0
        %v320 = vadd.f32 %v318, %v319
        %v321 = vsel %vm230, %v208, 0.0
        %v322 = vadd.f32 %v320, %v321
        %v323 = vsel %vm230, %v210, 0.0
        %v324 = vadd.f32 %v322, %v323
        %v325 = vsel %vm230, %v212, 0.0
        %v326 = vadd.f32 %v324, %v325
        %v327 = vsel %vm230, %v214, 0.0
        %v328 = vadd.f32 %v326, %v327
        %v329 = vsel %vm230, %v216, 0.0
        %v330 = vadd.f32 %v328, %v329
        %v331 = vsel %vm230, %v218, 0.0
        %v332 = vadd.f32 %v330, %v331
        %v333 = vsel %vm230, %v220, 0.0
        %v334 = vadd.f32 %v332, %v333
        %v335 = vsel %vm230, %v191, 0.0
        %v336 = vsel %vm230, %v193, 0.0
        %v337 = vadd.f32 %v335, %v336
        %v338 = vsel %vm230, %v195, 0.0
        %v339 = vadd.f32 %v337, %v338
        %v340 = vsel %vm230, %v197, 0.0
        %v341 = vadd.f32 %v339, %v340
        %v342 = vsel %vm230, %v199, 0.0
        %v343 = vadd.f32 %v341, %v342
        %v344 = vsel %vm230, %v201, 0.0
        %v345 = vadd.f32 %v343, %v344
        %v346 = vsel %vm230, %v203, 0.0
        %v347 = vadd.f32 %v345, %v346
        %v348 = vsel %vm230, %v205, 0.0
        %v349 = vadd.f32 %v347, %v348
        %v350 = vsel %vm230, %v207, 0.0
        %v351 = vadd.f32 %v349, %v350
        %v352 = vsel %vm230, %v209, 0.0
        %v353 = vadd.f32 %v351, %v352
        %v354 = vsel %vm230, %v211, 0.0
        %v355 = vadd.f32 %v353, %v354
        %v356 = vsel %vm230, %v213, 0.0
        %v357 = vadd.f32 %v355, %v356
        %v358 = vsel %vm230, %v215, 0.0
        %v359 = vadd.f32 %v357, %v358
        %v360 = vsel %vm230, %v217, 0.0
        %v361 = vadd.f32 %v359, %v360
        %v362 = vsel %vm230, %v219, 0.0
        %v363 = vadd.f32 %v361, %v362
        %v364 = vsel %vm230, %v221, 0.0
        %v365 = vadd.f32 %v363, %v364
        %v366 = vrcp.pop 16.0
        %v367 = vmul.f32 %v334, %v366
        %v368 = vmul.f32 %v365, %v366
        %371 = vrot.lane.b32.xlu0 %v367, 3
        %v372 = vpop.permute.xlu0 %371
        %373 = vrot.lane.b32.xlu0 %v368, 3
        %v374 = vpop.permute.xlu0 %373
        %s377 = scalar_lea.vmem [#allocation2], 24
        %378 = vst.msk [vmem:[%s377 + $0x3] sm:$0xff] %vm301, %v372
        %379 = vst.msk [vmem:[%s377 + $0xb] sm:$0xff] %vm301, %v374
        %s380 = sld [smem:[#allocation3]]
        %v381 = vld [vmem:[#allocation2] sm:$0xff]
        %v382 = vld [vmem:[#allocation2 + $0x8] sm:$0xff]
        %v383 = vstv %s380
        %v384 = vmul.f32 %v383, %v381
        %v385 = vmul.f32 %v383, %v382
        %v386 = vadd.f32 %v384, 0.0
        %v387 = vadd.f32 %v385, 0.0
        %s388 = sld [smem:[#allocation3 + $0x1]]
        %v389 = vstv %s388
        %v390 = vmul.f32 %v389, %v381
        %v391 = vmul.f32 %v389, %v382
        %394 = vrot.lane.b32.xlu0 %v390, 127
        %v395 = vpop.permute.xlu0 %394
        %396 = vrot.lane.b32.xlu0 %v391, 127
        %v397 = vpop.permute.xlu0 %396
        %v400 = vadd.f32 %v386, %v395
        %v401 = vadd.f32 %v387, %v397
        %s402 = sld [smem:[#allocation3 + $0x2]]
        %v403 = vstv %s402
        %v404 = vmul.f32 %v403, %v381
        %v405 = vmul.f32 %v403, %v382
        %408 = vrot.lane.b32.xlu0 %v404, 126
        %v409 = vpop.permute.xlu0 %408
        %410 = vrot.lane.b32.xlu0 %v405, 126
        %v411 = vpop.permute.xlu0 %410
        %v414 = vadd.f32 %v400, %v409
        %v415 = vadd.f32 %v401, %v411
        %s416 = sld [smem:[#allocation3 + $0x3]]
        %v417 = vstv %s416
        %v418 = vmul.f32 %v417, %v381
        %v419 = vmul.f32 %v417, %v382
        %422 = vrot.lane.b32.xlu0 %v418, 125
        %v423 = vpop.permute.xlu0 %422
        %424 = vrot.lane.b32.xlu0 %v419, 125
        %v425 = vpop.permute.xlu0 %424
        %v428 = vadd.f32 %v414, %v423
        %v429 = vadd.f32 %v415, %v425
        %s430 = sld [smem:[#allocation3 + $0x4]]
        %v431 = vstv %s430
        %v432 = vmul.f32 %v431, %v381
        %v433 = vmul.f32 %v431, %v382
        %436 = vrot.lane.b32.xlu0 %v432, 124
        %v437 = vpop.permute.xlu0 %436
        %438 = vrot.lane.b32.xlu0 %v433, 124
        %v439 = vpop.permute.xlu0 %438
        %v442 = vadd.f32 %v428, %v437
        %v443 = vadd.f32 %v429, %v439
        %s444 = sld [smem:[#allocation3 + $0x5]]
        %v445 = vstv %s444
        %v446 = vmul.f32 %v445, %v381
        %v447 = vmul.f32 %v445, %v382
        %450 = vrot.lane.b32.xlu0 %v446, 123
        %v451 = vpop.permute.xlu0 %450
        %452 = vrot.lane.b32.xlu0 %v447, 123
        %v453 = vpop.permute.xlu0 %452
        %v456 = vadd.f32 %v442, %v451
        %v457 = vadd.f32 %v443, %v453
        %s458 = sld [smem:[#allocation3 + $0x6]]
        %v459 = vstv %s458
        %v460 = vmul.f32 %v459, %v381
        %v461 = vmul.f32 %v459, %v382
        %464 = vrot.lane.b32.xlu0 %v460, 122
        %v465 = vpop.permute.xlu0 %464
        %466 = vrot.lane.b32.xlu0 %v461, 122
        %v467 = vpop.permute.xlu0 %466
        %v470 = vadd.f32 %v456, %v465
        %v471 = vadd.f32 %v457, %v467
        %s472 = sld [smem:[#allocation3 + $0x7]]
        %v473 = vld [vmem:[#allocation2 + $0x1] sm:$0xff]
        %v474 = vld [vmem:[#allocation2 + $0x9] sm:$0xff]
        %v475 = vstv %s472
        %v476 = vmul.f32 %v475, %v473
        %v477 = vmul.f32 %v475, %v474
        %v478 = vadd.f32 %v470, %v476
        %v479 = vadd.f32 %v471, %v477
        %s480 = sld [smem:[#allocation3 + $0x8]]
        %v481 = vstv %s480
        %v482 = vmul.f32 %v481, %v473
        %v483 = vmul.f32 %v481, %v474
        %486 = vrot.lane.b32.xlu0 %v482, 127
        %v487 = vpop.permute.xlu0 %486
        %488 = vrot.lane.b32.xlu0 %v483, 127
        %v489 = vpop.permute.xlu0 %488
        %v492 = vadd.f32 %v478, %v487
        %v493 = vadd.f32 %v479, %v489
        %s494 = sld [smem:[#allocation3 + $0x9]]
        %v495 = vstv %s494
        %v496 = vmul.f32 %v495, %v473
        %v497 = vmul.f32 %v495, %v474
        %500 = vrot.lane.b32.xlu0 %v496, 126
        %v501 = vpop.permute.xlu0 %500
        %502 = vrot.lane.b32.xlu0 %v497, 126
        %v503 = vpop.permute.xlu0 %502
        %v506 = vadd.f32 %v492, %v501
        %v507 = vadd.f32 %v493, %v503
        %s508 = sld [smem:[#allocation3 + $0xa]]
        %v509 = vstv %s508
        %v510 = vmul.f32 %v509, %v473
        %v511 = vmul.f32 %v509, %v474
        %514 = vrot.lane.b32.xlu0 %v510, 125
        %v515 = vpop.permute.xlu0 %514
        %516 = vrot.lane.b32.xlu0 %v511, 125
        %v517 = vpop.permute.xlu0 %516
        %v520 = vadd.f32 %v506, %v515
        %v521 = vadd.f32 %v507, %v517
        %s522 = sld [smem:[#allocation3 + $0xb]]
        %v523 = vstv %s522
        %v524 = vmul.f32 %v523, %v473
        %v525 = vmul.f32 %v523, %v474
        %528 = vrot.lane.b32.xlu0 %v524, 124
        %v529 = vpop.permute.xlu0 %528
        %530 = vrot.lane.b32.xlu0 %v525, 124
        %v531 = vpop.permute.xlu0 %530
        %v534 = vadd.f32 %v520, %v529
        %v535 = vadd.f32 %v521, %v531
        %s536 = sld [smem:[#allocation3 + $0xc]]
        %v537 = vstv %s536
        %v538 = vmul.f32 %v537, %v473
        %v539 = vmul.f32 %v537, %v474
        %542 = vrot.lane.b32.xlu0 %v538, 123
        %v543 = vpop.permute.xlu0 %542
        %544 = vrot.lane.b32.xlu0 %v539, 123
        %v545 = vpop.permute.xlu0 %544
        %v548 = vadd.f32 %v534, %v543
        %v549 = vadd.f32 %v535, %v545
        %s550 = sld [smem:[#allocation3 + $0xd]]
        %v551 = vstv %s550
        %v552 = vmul.f32 %v551, %v473
        %v553 = vmul.f32 %v551, %v474
        %556 = vrot.lane.b32.xlu0 %v552, 122
        %v557 = vpop.permute.xlu0 %556
        %558 = vrot.lane.b32.xlu0 %v553, 122
        %v559 = vpop.permute.xlu0 %558
        %v562 = vadd.f32 %v548, %v557
        %v563 = vadd.f32 %v549, %v559
        %s564 = sld [smem:[#allocation3 + $0xe]]
        %v565 = vld [vmem:[#allocation2 + $0x2] sm:$0xff]
        %v566 = vld [vmem:[#allocation2 + $0xa] sm:$0xff]
        %v567 = vstv %s564
        %v568 = vmul.f32 %v567, %v565
        %v569 = vmul.f32 %v567, %v566
        %v570 = vadd.f32 %v562, %v568
        %v571 = vadd.f32 %v563, %v569
        %s572 = sld [smem:[#allocation3 + $0xf]]
        %v573 = vstv %s572
        %v574 = vmul.f32 %v573, %v565
        %v575 = vmul.f32 %v573, %v566
        %578 = vrot.lane.b32.xlu0 %v574, 127
        %v579 = vpop.permute.xlu0 %578
        %580 = vrot.lane.b32.xlu0 %v575, 127
        %v581 = vpop.permute.xlu0 %580
        %v584 = vadd.f32 %v570, %v579
        %v585 = vadd.f32 %v571, %v581
        %s586 = sld [smem:[#allocation3 + $0x10]]
        %v587 = vstv %s586
        %v588 = vmul.f32 %v587, %v565
        %v589 = vmul.f32 %v587, %v566
        %592 = vrot.lane.b32.xlu0 %v588, 126
        %v593 = vpop.permute.xlu0 %592
        %594 = vrot.lane.b32.xlu0 %v589, 126
        %v595 = vpop.permute.xlu0 %594
        %v598 = vadd.f32 %v584, %v593
        %v599 = vadd.f32 %v585, %v595
        %s600 = sld [smem:[#allocation3 + $0x11]]
        %v601 = vstv %s600
        %v602 = vmul.f32 %v601, %v565
        %v603 = vmul.f32 %v601, %v566
        %606 = vrot.lane.b32.xlu0 %v602, 125
        %v607 = vpop.permute.xlu0 %606
        %608 = vrot.lane.b32.xlu0 %v603, 125
        %v609 = vpop.permute.xlu0 %608
        %v612 = vadd.f32 %v598, %v607
        %v613 = vadd.f32 %v599, %v609
        %s614 = sld [smem:[#allocation3 + $0x12]]
        %v615 = vstv %s614
        %v616 = vmul.f32 %v615, %v565
        %v617 = vmul.f32 %v615, %v566
        %620 = vrot.lane.b32.xlu0 %v616, 124
        %v621 = vpop.permute.xlu0 %620
        %622 = vrot.lane.b32.xlu0 %v617, 124
        %v623 = vpop.permute.xlu0 %622
        %v626 = vadd.f32 %v612, %v621
        %v627 = vadd.f32 %v613, %v623
        %s628 = sld [smem:[#allocation3 + $0x13]]
        %v629 = vstv %s628
        %v630 = vmul.f32 %v629, %v565
        %v631 = vmul.f32 %v629, %v566
        %634 = vrot.lane.b32.xlu0 %v630, 123
        %v635 = vpop.permute.xlu0 %634
        %636 = vrot.lane.b32.xlu0 %v631, 123
        %v637 = vpop.permute.xlu0 %636
        %v640 = vadd.f32 %v626, %v635
        %v641 = vadd.f32 %v627, %v637
        %s642 = sld [smem:[#allocation3 + $0x14]]
        %v643 = vstv %s642
        %v644 = vmul.f32 %v643, %v565
        %v645 = vmul.f32 %v643, %v566
        %648 = vrot.lane.b32.xlu0 %v644, 122
        %v649 = vpop.permute.xlu0 %648
        %650 = vrot.lane.b32.xlu0 %v645, 122
        %v651 = vpop.permute.xlu0 %650
        %v654 = vadd.f32 %v640, %v649
        %v655 = vadd.f32 %v641, %v651
        %s656 = sld [smem:[#allocation3 + $0x15]]
        %v657 = vld [vmem:[#allocation2 + $0x3] sm:$0xff]
        %v658 = vld [vmem:[#allocation2 + $0xb] sm:$0xff]
        %v659 = vstv %s656
        %v660 = vmul.f32 %v659, %v657
        %v661 = vmul.f32 %v659, %v658
        %v662 = vadd.f32 %v654, %v660
        %v663 = vadd.f32 %v655, %v661
        %s664 = sld [smem:[#allocation3 + $0x16]]
        %v665 = vstv %s664
        %v666 = vmul.f32 %v665, %v657
        %v667 = vmul.f32 %v665, %v658
        %670 = vrot.lane.b32.xlu0 %v666, 127
        %v671 = vpop.permute.xlu0 %670
        %672 = vrot.lane.b32.xlu0 %v667, 127
        %v673 = vpop.permute.xlu0 %672
        %v676 = vadd.f32 %v662, %v671
        %v677 = vadd.f32 %v663, %v673
        %s678 = sld [smem:[#allocation3 + $0x17]]
        %v679 = vstv %s678
        %v680 = vmul.f32 %v679, %v657
        %v681 = vmul.f32 %v679, %v658
        %684 = vrot.lane.b32.xlu0 %v680, 126
        %v685 = vpop.permute.xlu0 %684
        %686 = vrot.lane.b32.xlu0 %v681, 126
        %v687 = vpop.permute.xlu0 %686
        %v690 = vadd.f32 %v676, %v685
        %v691 = vadd.f32 %v677, %v687
        %s692 = sld [smem:[#allocation3 + $0x18]]
        %v693 = vstv %s692
        %v694 = vmul.f32 %v693, %v657
        %v695 = vmul.f32 %v693, %v658
        %698 = vrot.lane.b32.xlu0 %v694, 125
        %v699 = vpop.permute.xlu0 %698
        %700 = vrot.lane.b32.xlu0 %v695, 125
        %v701 = vpop.permute.xlu0 %700
        %v704 = vadd.f32 %v690, %v699
        %v705 = vadd.f32 %v691, %v701
        %s706 = sld [smem:[#allocation3 + $0x19]]
        %v707 = vstv %s706
        %v708 = vmul.f32 %v707, %v657
        %v709 = vmul.f32 %v707, %v658
        %712 = vrot.lane.b32.xlu0 %v708, 124
        %v713 = vpop.permute.xlu0 %712
        %714 = vrot.lane.b32.xlu0 %v709, 124
        %v715 = vpop.permute.xlu0 %714
        %v718 = vadd.f32 %v704, %v713
        %v719 = vadd.f32 %v705, %v715
        %s720 = sld [smem:[#allocation3 + $0x1a]]
        %v721 = vstv %s720
        %v722 = vmul.f32 %v721, %v657
        %v723 = vmul.f32 %v721, %v658
        %726 = vrot.lane.b32.xlu0 %v722, 123
        %v727 = vpop.permute.xlu0 %726
        %728 = vrot.lane.b32.xlu0 %v723, 123
        %v729 = vpop.permute.xlu0 %728
        %v732 = vadd.f32 %v718, %v727
        %v733 = vadd.f32 %v719, %v729
        %s734 = sld [smem:[#allocation3 + $0x1b]]
        %v735 = vstv %s734
        %v736 = vmul.f32 %v735, %v657
        %v737 = vmul.f32 %v735, %v658
        %740 = vrot.lane.b32.xlu0 %v736, 122
        %v741 = vpop.permute.xlu0 %740
        %742 = vrot.lane.b32.xlu0 %v737, 122
        %v743 = vpop.permute.xlu0 %742
        %v746 = vadd.f32 %v732, %v741
        %v747 = vadd.f32 %v733, %v743
        %s748 = sld [smem:[#allocation3 + $0x1c]]
        %v749 = vld [vmem:[#allocation2 + $0x4] sm:$0xff]
        %v750 = vld [vmem:[#allocation2 + $0xc] sm:$0xff]
        %v751 = vstv %s748
        %v752 = vmul.f32 %v751, %v749
        %v753 = vmul.f32 %v751, %v750
        %v754 = vadd.f32 %v746, %v752
        %v755 = vadd.f32 %v747, %v753
        %s756 = sld [smem:[#allocation3 + $0x1d]]
        %v757 = vstv %s756
        %v758 = vmul.f32 %v757, %v749
        %v759 = vmul.f32 %v757, %v750
        %762 = vrot.lane.b32.xlu0 %v758, 127
        %v763 = vpop.permute.xlu0 %762
        %764 = vrot.lane.b32.xlu0 %v759, 127
        %v765 = vpop.permute.xlu0 %764
        %v768 = vadd.f32 %v754, %v763
        %v769 = vadd.f32 %v755, %v765
        %s770 = sld [smem:[#allocation3 + $0x1e]]
        %v771 = vstv %s770
        %v772 = vmul.f32 %v771, %v749
        %v773 = vmul.f32 %v771, %v750
        %776 = vrot.lane.b32.xlu0 %v772, 126
        %v777 = vpop.permute.xlu0 %776
        %778 = vrot.lane.b32.xlu0 %v773, 126
        %v779 = vpop.permute.xlu0 %778
        %v782 = vadd.f32 %v768, %v777
        %v783 = vadd.f32 %v769, %v779
        %s784 = sld [smem:[#allocation3 + $0x1f]]
        %v785 = vstv %s784
        %v786 = vmul.f32 %v785, %v749
        %v787 = vmul.f32 %v785, %v750
        %790 = vrot.lane.b32.xlu0 %v786, 125
        %v791 = vpop.permute.xlu0 %790
        %792 = vrot.lane.b32.xlu0 %v787, 125
        %v793 = vpop.permute.xlu0 %792
        %v796 = vadd.f32 %v782, %v791
        %v797 = vadd.f32 %v783, %v793
        %s798 = sld [smem:[#allocation3 + $0x20]]
        %v799 = vstv %s798
        %v800 = vmul.f32 %v799, %v749
        %v801 = vmul.f32 %v799, %v750
        %804 = vrot.lane.b32.xlu0 %v800, 124
        %v805 = vpop.permute.xlu0 %804
        %806 = vrot.lane.b32.xlu0 %v801, 124
        %v807 = vpop.permute.xlu0 %806
        %v810 = vadd.f32 %v796, %v805
        %v811 = vadd.f32 %v797, %v807
        %s812 = sld [smem:[#allocation3 + $0x21]]
        %v813 = vstv %s812
        %v814 = vmul.f32 %v813, %v749
        %v815 = vmul.f32 %v813, %v750
        %818 = vrot.lane.b32.xlu0 %v814, 123
        %v819 = vpop.permute.xlu0 %818
        %820 = vrot.lane.b32.xlu0 %v815, 123
        %v821 = vpop.permute.xlu0 %820
        %v824 = vadd.f32 %v810, %v819
        %v825 = vadd.f32 %v811, %v821
        %s826 = sld [smem:[#allocation3 + $0x22]]
        %v827 = vstv %s826
        %v828 = vmul.f32 %v827, %v749
        %v829 = vmul.f32 %v827, %v750
        %832 = vrot.lane.b32.xlu0 %v828, 122
        %v833 = vpop.permute.xlu0 %832
        %834 = vrot.lane.b32.xlu0 %v829, 122
        %v835 = vpop.permute.xlu0 %834
        %v838 = vadd.f32 %v824, %v833
        %v839 = vadd.f32 %v825, %v835
        %s840 = sld [smem:[#allocation3 + $0x23]]
        %v841 = vld [vmem:[#allocation2 + $0x5] sm:$0xff]
        %v842 = vld [vmem:[#allocation2 + $0xd] sm:$0xff]
        %v843 = vstv %s840
        %v844 = vmul.f32 %v843, %v841
        %v845 = vmul.f32 %v843, %v842
        %v846 = vadd.f32 %v838, %v844
        %v847 = vadd.f32 %v839, %v845
        %s848 = sld [smem:[#allocation3 + $0x24]]
        %v849 = vstv %s848
        %v850 = vmul.f32 %v849, %v841
        %v851 = vmul.f32 %v849, %v842
        %854 = vrot.lane.b32.xlu0 %v850, 127
        %v855 = vpop.permute.xlu0 %854
        %856 = vrot.lane.b32.xlu0 %v851, 127
        %v857 = vpop.permute.xlu0 %856
        %v860 = vadd.f32 %v846, %v855
        %v861 = vadd.f32 %v847, %v857
        %s862 = sld [smem:[#allocation3 + $0x25]]
        %v863 = vstv %s862
        %v864 = vmul.f32 %v863, %v841
        %v865 = vmul.f32 %v863, %v842
        %868 = vrot.lane.b32.xlu0 %v864, 126
        %v869 = vpop.permute.xlu0 %868
        %870 = vrot.lane.b32.xlu0 %v865, 126
        %v871 = vpop.permute.xlu0 %870
        %v874 = vadd.f32 %v860, %v869
        %v875 = vadd.f32 %v861, %v871
        %s876 = sld [smem:[#allocation3 + $0x26]]
        %v877 = vstv %s876
        %v878 = vmul.f32 %v877, %v841
        %v879 = vmul.f32 %v877, %v842
        %882 = vrot.lane.b32.xlu0 %v878, 125
        %v883 = vpop.permute.xlu0 %882
        %884 = vrot.lane.b32.xlu0 %v879, 125
        %v885 = vpop.permute.xlu0 %884
        %v888 = vadd.f32 %v874, %v883
        %v889 = vadd.f32 %v875, %v885
        %s890 = sld [smem:[#allocation3 + $0x27]]
        %v891 = vstv %s890
        %v892 = vmul.f32 %v891, %v841
        %v893 = vmul.f32 %v891, %v842
        %896 = vrot.lane.b32.xlu0 %v892, 124
        %v897 = vpop.permute.xlu0 %896
        %898 = vrot.lane.b32.xlu0 %v893, 124
        %v899 = vpop.permute.xlu0 %898
        %v902 = vadd.f32 %v888, %v897
        %v903 = vadd.f32 %v889, %v899
        %s904 = sld [smem:[#allocation3 + $0x28]]
        %v905 = vstv %s904
        %v906 = vmul.f32 %v905, %v841
        %v907 = vmul.f32 %v905, %v842
        %910 = vrot.lane.b32.xlu0 %v906, 123
        %v911 = vpop.permute.xlu0 %910
        %912 = vrot.lane.b32.xlu0 %v907, 123
        %v913 = vpop.permute.xlu0 %912
        %v916 = vadd.f32 %v902, %v911
        %v917 = vadd.f32 %v903, %v913
        %s918 = sld [smem:[#allocation3 + $0x29]]
        %v919 = vstv %s918
        %v920 = vmul.f32 %v919, %v841
        %v921 = vmul.f32 %v919, %v842
        %924 = vrot.lane.b32.xlu0 %v920, 122
        %v925 = vpop.permute.xlu0 %924
        %926 = vrot.lane.b32.xlu0 %v921, 122
        %v927 = vpop.permute.xlu0 %926
        %v930 = vadd.f32 %v916, %v925
        %v931 = vadd.f32 %v917, %v927
        %s932 = sld [smem:[#allocation3 + $0x2a]]
        %v933 = vld [vmem:[#allocation2 + $0x6] sm:$0xff]
        %v934 = vld [vmem:[#allocation2 + $0xe] sm:$0xff]
        %v935 = vstv %s932
        %v936 = vmul.f32 %v935, %v933
        %v937 = vmul.f32 %v935, %v934
        %v938 = vadd.f32 %v930, %v936
        %v939 = vadd.f32 %v931, %v937
        %s940 = sld [smem:[#allocation3 + $0x2b]]
        %v941 = vstv %s940
        %v942 = vmul.f32 %v941, %v933
        %v943 = vmul.f32 %v941, %v934
        %946 = vrot.lane.b32.xlu0 %v942, 127
        %v947 = vpop.permute.xlu0 %946
        %948 = vrot.lane.b32.xlu0 %v943, 127
        %v949 = vpop.permute.xlu0 %948
        %v952 = vadd.f32 %v938, %v947
        %v953 = vadd.f32 %v939, %v949
        %s954 = sld [smem:[#allocation3 + $0x2c]]
        %v955 = vstv %s954
        %v956 = vmul.f32 %v955, %v933
        %v957 = vmul.f32 %v955, %v934
        %960 = vrot.lane.b32.xlu0 %v956, 126
        %v961 = vpop.permute.xlu0 %960
        %962 = vrot.lane.b32.xlu0 %v957, 126
        %v963 = vpop.permute.xlu0 %962
        %v966 = vadd.f32 %v952, %v961
        %v967 = vadd.f32 %v953, %v963
        %s968 = sld [smem:[#allocation3 + $0x2d]]
        %v969 = vstv %s968
        %v970 = vmul.f32 %v969, %v933
        %v971 = vmul.f32 %v969, %v934
        %974 = vrot.lane.b32.xlu0 %v970, 125
        %v975 = vpop.permute.xlu0 %974
        %976 = vrot.lane.b32.xlu0 %v971, 125
        %v977 = vpop.permute.xlu0 %976
        %v980 = vadd.f32 %v966, %v975
        %v981 = vadd.f32 %v967, %v977
        %s982 = sld [smem:[#allocation3 + $0x2e]]
        %v983 = vstv %s982
        %v984 = vmul.f32 %v983, %v933
        %v985 = vmul.f32 %v983, %v934
        %988 = vrot.lane.b32.xlu0 %v984, 124
        %v989 = vpop.permute.xlu0 %988
        %990 = vrot.lane.b32.xlu0 %v985, 124
        %v991 = vpop.permute.xlu0 %990
        %v994 = vadd.f32 %v980, %v989
        %v995 = vadd.f32 %v981, %v991
        %s996 = sld [smem:[#allocation3 + $0x2f]]
        %v997 = vstv %s996
        %v998 = vmul.f32 %v997, %v933
        %v999 = vmul.f32 %v997, %v934
        %1002 = vrot.lane.b32.xlu0 %v998, 123
        %v1003 = vpop.permute.xlu0 %1002
        %1004 = vrot.lane.b32.xlu0 %v999, 123
        %v1005 = vpop.permute.xlu0 %1004
        %v1008 = vadd.f32 %v994, %v1003
        %v1009 = vadd.f32 %v995, %v1005
        %s1010 = sld [smem:[#allocation3 + $0x30]]
        %v1011 = vstv %s1010
        %v1012 = vmul.f32 %v1011, %v933
        %v1013 = vmul.f32 %v1011, %v934
        %1016 = vrot.lane.b32.xlu0 %v1012, 122
        %v1017 = vpop.permute.xlu0 %1016
        %1018 = vrot.lane.b32.xlu0 %v1013, 122
        %v1019 = vpop.permute.xlu0 %1018
        %v1022 = vadd.f32 %v1008, %v1017
        %v1023 = vadd.f32 %v1009, %v1019
        %s1024 = sld [smem:[#allocation3 + $0x31]]
        %v1025 = vld [vmem:[%s377] sm:$0xff]
        %v1026 = vld [vmem:[%s377 + $0x8] sm:$0xff]
        %v1027 = vstv %s1024
        %v1028 = vmul.f32 %v1027, %v1025
        %v1029 = vmul.f32 %v1027, %v1026
        %v1030 = vadd.f32 %v1022, %v1028
        %v1031 = vadd.f32 %v1023, %v1029
        %s1032 = sld [smem:[#allocation3 + $0x32]]
        %v1033 = vstv %s1032
        %v1034 = vmul.f32 %v1033, %v1025
        %v1035 = vmul.f32 %v1033, %v1026
        %1038 = vrot.lane.b32.xlu0 %v1034, 127
        %v1039 = vpop.permute.xlu0 %1038
        %1040 = vrot.lane.b32.xlu0 %v1035, 127
        %v1041 = vpop.permute.xlu0 %1040
        %v1044 = vadd.f32 %v1030, %v1039
        %v1045 = vadd.f32 %v1031, %v1041
        %s1046 = sld [smem:[#allocation3 + $0x33]]
        %v1047 = vstv %s1046
        %v1048 = vmul.f32 %v1047, %v1025
        %v1049 = vmul.f32 %v1047, %v1026
        %1052 = vrot.lane.b32.xlu0 %v1048, 126
        %v1053 = vpop.permute.xlu0 %1052
        %1054 = vrot.lane.b32.xlu0 %v1049, 126
        %v1055 = vpop.permute.xlu0 %1054
        %v1058 = vadd.f32 %v1044, %v1053
        %v1059 = vadd.f32 %v1045, %v1055
        %s1060 = sld [smem:[#allocation3 + $0x34]]
        %v1061 = vstv %s1060
        %v1062 = vmul.f32 %v1061, %v1025
        %v1063 = vmul.f32 %v1061, %v1026
        %1066 = vrot.lane.b32.xlu0 %v1062, 125
        %v1067 = vpop.permute.xlu0 %1066
        %1068 = vrot.lane.b32.xlu0 %v1063, 125
        %v1069 = vpop.permute.xlu0 %1068
        %v1072 = vadd.f32 %v1058, %v1067
        %v1073 = vadd.f32 %v1059, %v1069
        %s1074 = sld [smem:[#allocation3 + $0x35]]
        %v1075 = vstv %s1074
        %v1076 = vmul.f32 %v1075, %v1025
        %v1077 = vmul.f32 %v1075, %v1026
        %1080 = vrot.lane.b32.xlu0 %v1076, 124
        %v1081 = vpop.permute.xlu0 %1080
        %1082 = vrot.lane.b32.xlu0 %v1077, 124
        %v1083 = vpop.permute.xlu0 %1082
        %v1086 = vadd.f32 %v1072, %v1081
        %v1087 = vadd.f32 %v1073, %v1083
        %s1088 = sld [smem:[#allocation3 + $0x36]]
        %v1089 = vstv %s1088
        %v1090 = vmul.f32 %v1089, %v1025
        %v1091 = vmul.f32 %v1089, %v1026
        %1094 = vrot.lane.b32.xlu0 %v1090, 123
        %v1095 = vpop.permute.xlu0 %1094
        %1096 = vrot.lane.b32.xlu0 %v1091, 123
        %v1097 = vpop.permute.xlu0 %1096
        %v1100 = vadd.f32 %v1086, %v1095
        %v1101 = vadd.f32 %v1087, %v1097
        %s1102 = sld [smem:[#allocation3 + $0x37]]
        %v1103 = vstv %s1102
        %v1104 = vmul.f32 %v1103, %v1025
        %v1105 = vmul.f32 %v1103, %v1026
        %1108 = vrot.lane.b32.xlu0 %v1104, 122
        %v1109 = vpop.permute.xlu0 %1108
        %1110 = vrot.lane.b32.xlu0 %v1105, 122
        %v1111 = vpop.permute.xlu0 %1110
        %v1114 = vadd.f32 %v1100, %v1109
        %v1115 = vadd.f32 %v1101, %v1111
        %s1116 = sld [smem:[#allocation3 + $0x38]]
        %v1117 = vld [vmem:[%s377 + $0x1] sm:$0xff]
        %v1118 = vld [vmem:[%s377 + $0x9] sm:$0xff]
        %v1119 = vstv %s1116
        %v1120 = vmul.f32 %v1119, %v1117
        %v1121 = vmul.f32 %v1119, %v1118
        %v1122 = vadd.f32 %v1114, %v1120
        %v1123 = vadd.f32 %v1115, %v1121
        %s1124 = sld [smem:[#allocation3 + $0x39]]
        %v1125 = vstv %s1124
        %v1126 = vmul.f32 %v1125, %v1117
        %v1127 = vmul.f32 %v1125, %v1118
        %1130 = vrot.lane.b32.xlu0 %v1126, 127
        %v1131 = vpop.permute.xlu0 %1130
        %1132 = vrot.lane.b32.xlu0 %v1127, 127
        %v1133 = vpop.permute.xlu0 %1132
        %v1136 = vadd.f32 %v1122, %v1131
        %v1137 = vadd.f32 %v1123, %v1133
        %s1138 = sld [smem:[#allocation3 + $0x3a]]
        %v1139 = vstv %s1138
        %v1140 = vmul.f32 %v1139, %v1117
        %v1141 = vmul.f32 %v1139, %v1118
        %1144 = vrot.lane.b32.xlu0 %v1140, 126
        %v1145 = vpop.permute.xlu0 %1144
        %1146 = vrot.lane.b32.xlu0 %v1141, 126
        %v1147 = vpop.permute.xlu0 %1146
        %v1150 = vadd.f32 %v1136, %v1145
        %v1151 = vadd.f32 %v1137, %v1147
        %s1152 = sld [smem:[#allocation3 + $0x3b]]
        %v1153 = vstv %s1152
        %v1154 = vmul.f32 %v1153, %v1117
        %v1155 = vmul.f32 %v1153, %v1118
        %1158 = vrot.lane.b32.xlu0 %v1154, 125
        %v1159 = vpop.permute.xlu0 %1158
        %1160 = vrot.lane.b32.xlu0 %v1155, 125
        %v1161 = vpop.permute.xlu0 %1160
        %v1164 = vadd.f32 %v1150, %v1159
        %v1165 = vadd.f32 %v1151, %v1161
        %s1166 = sld [smem:[#allocation3 + $0x3c]]
        %v1167 = vstv %s1166
        %v1168 = vmul.f32 %v1167, %v1117
        %v1169 = vmul.f32 %v1167, %v1118
        %1172 = vrot.lane.b32.xlu0 %v1168, 124
        %v1173 = vpop.permute.xlu0 %1172
        %1174 = vrot.lane.b32.xlu0 %v1169, 124
        %v1175 = vpop.permute.xlu0 %1174
        %v1178 = vadd.f32 %v1164, %v1173
        %v1179 = vadd.f32 %v1165, %v1175
        %s1180 = sld [smem:[#allocation3 + $0x3d]]
        %v1181 = vstv %s1180
        %v1182 = vmul.f32 %v1181, %v1117
        %v1183 = vmul.f32 %v1181, %v1118
        %1186 = vrot.lane.b32.xlu0 %v1182, 123
        %v1187 = vpop.permute.xlu0 %1186
        %1188 = vrot.lane.b32.xlu0 %v1183, 123
        %v1189 = vpop.permute.xlu0 %1188
        %v1192 = vadd.f32 %v1178, %v1187
        %v1193 = vadd.f32 %v1179, %v1189
        %s1194 = sld [smem:[#allocation3 + $0x3e]]
        %v1195 = vstv %s1194
        %v1196 = vmul.f32 %v1195, %v1117
        %v1197 = vmul.f32 %v1195, %v1118
        %1200 = vrot.lane.b32.xlu0 %v1196, 122
        %v1201 = vpop.permute.xlu0 %1200
        %1202 = vrot.lane.b32.xlu0 %v1197, 122
        %v1203 = vpop.permute.xlu0 %1202
        %v1206 = vadd.f32 %v1192, %v1201
        %v1207 = vadd.f32 %v1193, %v1203
        %s1208 = sld [smem:[#allocation3 + $0x3f]]
        %v1209 = vld [vmem:[%s377 + $0x2] sm:$0xff]
        %v1210 = vld [vmem:[%s377 + $0xa] sm:$0xff]
        %v1211 = vstv %s1208
        %v1212 = vmul.f32 %v1211, %v1209
        %v1213 = vmul.f32 %v1211, %v1210
        %v1214 = vadd.f32 %v1206, %v1212
        %v1215 = vadd.f32 %v1207, %v1213
        %s1216 = sld [smem:[#allocation3 + $0x40]]
        %v1217 = vstv %s1216
        %v1218 = vmul.f32 %v1217, %v1209
        %v1219 = vmul.f32 %v1217, %v1210
        %1222 = vrot.lane.b32.xlu0 %v1218, 127
        %v1223 = vpop.permute.xlu0 %1222
        %1224 = vrot.lane.b32.xlu0 %v1219, 127
        %v1225 = vpop.permute.xlu0 %1224
        %v1228 = vadd.f32 %v1214, %v1223
        %v1229 = vadd.f32 %v1215, %v1225
        %s1230 = sld [smem:[#allocation3 + $0x41]]
        %v1231 = vstv %s1230
        %v1232 = vmul.f32 %v1231, %v1209
        %v1233 = vmul.f32 %v1231, %v1210
        %1236 = vrot.lane.b32.xlu0 %v1232, 126
        %v1237 = vpop.permute.xlu0 %1236
        %1238 = vrot.lane.b32.xlu0 %v1233, 126
        %v1239 = vpop.permute.xlu0 %1238
        %v1242 = vadd.f32 %v1228, %v1237
        %v1243 = vadd.f32 %v1229, %v1239
        %s1244 = sld [smem:[#allocation3 + $0x42]]
        %v1245 = vstv %s1244
        %v1246 = vmul.f32 %v1245, %v1209
        %v1247 = vmul.f32 %v1245, %v1210
        %1250 = vrot.lane.b32.xlu0 %v1246, 125
        %v1251 = vpop.permute.xlu0 %1250
        %1252 = vrot.lane.b32.xlu0 %v1247, 125
        %v1253 = vpop.permute.xlu0 %1252
        %v1256 = vadd.f32 %v1242, %v1251
        %v1257 = vadd.f32 %v1243, %v1253
        %s1258 = sld [smem:[#allocation3 + $0x43]]
        %v1259 = vstv %s1258
        %v1260 = vmul.f32 %v1259, %v1209
        %v1261 = vmul.f32 %v1259, %v1210
        %1264 = vrot.lane.b32.xlu0 %v1260, 124
        %v1265 = vpop.permute.xlu0 %1264
        %1266 = vrot.lane.b32.xlu0 %v1261, 124
        %v1267 = vpop.permute.xlu0 %1266
        %v1270 = vadd.f32 %v1256, %v1265
        %v1271 = vadd.f32 %v1257, %v1267
        %s1272 = sld [smem:[#allocation3 + $0x44]]
        %v1273 = vstv %s1272
        %v1274 = vmul.f32 %v1273, %v1209
        %v1275 = vmul.f32 %v1273, %v1210
        %1278 = vrot.lane.b32.xlu0 %v1274, 123
        %v1279 = vpop.permute.xlu0 %1278
        %1280 = vrot.lane.b32.xlu0 %v1275, 123
        %v1281 = vpop.permute.xlu0 %1280
        %v1284 = vadd.f32 %v1270, %v1279
        %v1285 = vadd.f32 %v1271, %v1281
        %s1286 = sld [smem:[#allocation3 + $0x45]]
        %v1287 = vstv %s1286
        %v1288 = vmul.f32 %v1287, %v1209
        %v1289 = vmul.f32 %v1287, %v1210
        %1292 = vrot.lane.b32.xlu0 %v1288, 122
        %v1293 = vpop.permute.xlu0 %1292
        %1294 = vrot.lane.b32.xlu0 %v1289, 122
        %v1295 = vpop.permute.xlu0 %1294
        %v1298 = vadd.f32 %v1284, %v1293
        %v1299 = vadd.f32 %v1285, %v1295
        %s1300 = sld [smem:[#allocation3 + $0x46]]
        %v1301 = vld [vmem:[%s377 + $0x3] sm:$0xff]
        %v1302 = vld [vmem:[%s377 + $0xb] sm:$0xff]
        %v1303 = vstv %s1300
        %v1304 = vmul.f32 %v1303, %v1301
        %v1305 = vmul.f32 %v1303, %v1302
        %v1306 = vadd.f32 %v1298, %v1304
        %v1307 = vadd.f32 %v1299, %v1305
        %s1308 = sld [smem:[#allocation3 + $0x47]]
        %v1309 = vstv %s1308
        %v1310 = vmul.f32 %v1309, %v1301
        %v1311 = vmul.f32 %v1309, %v1302
        %1314 = vrot.lane.b32.xlu0 %v1310, 127
        %v1315 = vpop.permute.xlu0 %1314
        %1316 = vrot.lane.b32.xlu0 %v1311, 127
        %v1317 = vpop.permute.xlu0 %1316
        %v1320 = vadd.f32 %v1306, %v1315
        %v1321 = vadd.f32 %v1307, %v1317
        %s1322 = sld [smem:[#allocation3 + $0x48]]
        %v1323 = vstv %s1322
        %v1324 = vmul.f32 %v1323, %v1301
        %v1325 = vmul.f32 %v1323, %v1302
        %1328 = vrot.lane.b32.xlu0 %v1324, 126
        %v1329 = vpop.permute.xlu0 %1328
        %1330 = vrot.lane.b32.xlu0 %v1325, 126
        %v1331 = vpop.permute.xlu0 %1330
        %v1334 = vadd.f32 %v1320, %v1329
        %v1335 = vadd.f32 %v1321, %v1331
        %s1336 = sld [smem:[#allocation3 + $0x49]]
        %v1337 = vstv %s1336
        %v1338 = vmul.f32 %v1337, %v1301
        %v1339 = vmul.f32 %v1337, %v1302
        %1342 = vrot.lane.b32.xlu0 %v1338, 125
        %v1343 = vpop.permute.xlu0 %1342
        %1344 = vrot.lane.b32.xlu0 %v1339, 125
        %v1345 = vpop.permute.xlu0 %1344
        %v1348 = vadd.f32 %v1334, %v1343
        %v1349 = vadd.f32 %v1335, %v1345
        %s1350 = sld [smem:[#allocation3 + $0x4a]]
        %v1351 = vstv %s1350
        %v1352 = vmul.f32 %v1351, %v1301
        %v1353 = vmul.f32 %v1351, %v1302
        %1356 = vrot.lane.b32.xlu0 %v1352, 124
        %v1357 = vpop.permute.xlu0 %1356
        %1358 = vrot.lane.b32.xlu0 %v1353, 124
        %v1359 = vpop.permute.xlu0 %1358
        %v1362 = vadd.f32 %v1348, %v1357
        %v1363 = vadd.f32 %v1349, %v1359
        %s1364 = sld [smem:[#allocation3 + $0x4b]]
        %v1365 = vstv %s1364
        %v1366 = vmul.f32 %v1365, %v1301
        %v1367 = vmul.f32 %v1365, %v1302
        %1370 = vrot.lane.b32.xlu0 %v1366, 123
        %v1371 = vpop.permute.xlu0 %1370
        %1372 = vrot.lane.b32.xlu0 %v1367, 123
        %v1373 = vpop.permute.xlu0 %1372
        %v1376 = vadd.f32 %v1362, %v1371
        %v1377 = vadd.f32 %v1363, %v1373
        %s1378 = sld [smem:[#allocation3 + $0x4c]]
        %v1379 = vstv %s1378
        %v1380 = vmul.f32 %v1379, %v1301
        %v1381 = vmul.f32 %v1379, %v1302
        %1384 = vrot.lane.b32.xlu0 %v1380, 122
        %v1385 = vpop.permute.xlu0 %1384
        %1386 = vrot.lane.b32.xlu0 %v1381, 122
        %v1387 = vpop.permute.xlu0 %1386
        %v1390 = vadd.f32 %v1376, %v1385
        %v1391 = vadd.f32 %v1377, %v1387
        %s1392 = sld [smem:[#allocation3 + $0x4d]]
        %v1393 = vld [vmem:[%s377 + $0x4] sm:$0xff]
        %v1394 = vld [vmem:[%s377 + $0xc] sm:$0xff]
        %v1395 = vstv %s1392
        %v1396 = vmul.f32 %v1395, %v1393
        %v1397 = vmul.f32 %v1395, %v1394
        %v1398 = vadd.f32 %v1390, %v1396
        %v1399 = vadd.f32 %v1391, %v1397
        %s1400 = sld [smem:[#allocation3 + $0x4e]]
        %v1401 = vstv %s1400
        %v1402 = vmul.f32 %v1401, %v1393
        %v1403 = vmul.f32 %v1401, %v1394
        %1406 = vrot.lane.b32.xlu0 %v1402, 127
        %v1407 = vpop.permute.xlu0 %1406
        %1408 = vrot.lane.b32.xlu0 %v1403, 127
        %v1409 = vpop.permute.xlu0 %1408
        %v1412 = vadd.f32 %v1398, %v1407
        %v1413 = vadd.f32 %v1399, %v1409
        %s1414 = sld [smem:[#allocation3 + $0x4f]]
        %v1415 = vstv %s1414
        %v1416 = vmul.f32 %v1415, %v1393
        %v1417 = vmul.f32 %v1415, %v1394
        %1420 = vrot.lane.b32.xlu0 %v1416, 126
        %v1421 = vpop.permute.xlu0 %1420
        %1422 = vrot.lane.b32.xlu0 %v1417, 126
        %v1423 = vpop.permute.xlu0 %1422
        %v1426 = vadd.f32 %v1412, %v1421
        %v1427 = vadd.f32 %v1413, %v1423
        %s1428 = sld [smem:[#allocation3 + $0x50]]
        %v1429 = vstv %s1428
        %v1430 = vmul.f32 %v1429, %v1393
        %v1431 = vmul.f32 %v1429, %v1394
        %1434 = vrot.lane.b32.xlu0 %v1430, 125
        %v1435 = vpop.permute.xlu0 %1434
        %1436 = vrot.lane.b32.xlu0 %v1431, 125
        %v1437 = vpop.permute.xlu0 %1436
        %v1440 = vadd.f32 %v1426, %v1435
        %v1441 = vadd.f32 %v1427, %v1437
        %s1442 = sld [smem:[#allocation3 + $0x51]]
        %v1443 = vstv %s1442
        %v1444 = vmul.f32 %v1443, %v1393
        %v1445 = vmul.f32 %v1443, %v1394
        %1448 = vrot.lane.b32.xlu0 %v1444, 124
        %v1449 = vpop.permute.xlu0 %1448
        %1450 = vrot.lane.b32.xlu0 %v1445, 124
        %v1451 = vpop.permute.xlu0 %1450
        %v1454 = vadd.f32 %v1440, %v1449
        %v1455 = vadd.f32 %v1441, %v1451
        %s1456 = sld [smem:[#allocation3 + $0x52]]
        %v1457 = vstv %s1456
        %v1458 = vmul.f32 %v1457, %v1393
        %v1459 = vmul.f32 %v1457, %v1394
        %1462 = vrot.lane.b32.xlu0 %v1458, 123
        %v1463 = vpop.permute.xlu0 %1462
        %1464 = vrot.lane.b32.xlu0 %v1459, 123
        %v1465 = vpop.permute.xlu0 %1464
        %v1468 = vadd.f32 %v1454, %v1463
        %v1469 = vadd.f32 %v1455, %v1465
        %s1470 = sld [smem:[#allocation3 + $0x53]]
        %v1471 = vstv %s1470
        %v1472 = vmul.f32 %v1471, %v1393
        %v1473 = vmul.f32 %v1471, %v1394
        %1476 = vrot.lane.b32.xlu0 %v1472, 122
        %v1477 = vpop.permute.xlu0 %1476
        %1478 = vrot.lane.b32.xlu0 %v1473, 122
        %v1479 = vpop.permute.xlu0 %1478
        %v1482 = vadd.f32 %v1468, %v1477
        %v1483 = vadd.f32 %v1469, %v1479
        %s1484 = sld [smem:[#allocation3 + $0x54]]
        %v1485 = vld [vmem:[%s377 + $0x5] sm:$0xff]
        %v1486 = vld [vmem:[%s377 + $0xd] sm:$0xff]
        %v1487 = vstv %s1484
        %v1488 = vmul.f32 %v1487, %v1485
        %v1489 = vmul.f32 %v1487, %v1486
        %v1490 = vadd.f32 %v1482, %v1488
        %v1491 = vadd.f32 %v1483, %v1489
        %s1492 = sld [smem:[#allocation3 + $0x55]]
        %v1493 = vstv %s1492
        %v1494 = vmul.f32 %v1493, %v1485
        %v1495 = vmul.f32 %v1493, %v1486
        %1498 = vrot.lane.b32.xlu0 %v1494, 127
        %v1499 = vpop.permute.xlu0 %1498
        %1500 = vrot.lane.b32.xlu0 %v1495, 127
        %v1501 = vpop.permute.xlu0 %1500
        %v1504 = vadd.f32 %v1490, %v1499
        %v1505 = vadd.f32 %v1491, %v1501
        %s1506 = sld [smem:[#allocation3 + $0x56]]
        %v1507 = vstv %s1506
        %v1508 = vmul.f32 %v1507, %v1485
        %v1509 = vmul.f32 %v1507, %v1486
        %1512 = vrot.lane.b32.xlu0 %v1508, 126
        %v1513 = vpop.permute.xlu0 %1512
        %1514 = vrot.lane.b32.xlu0 %v1509, 126
        %v1515 = vpop.permute.xlu0 %1514
        %v1518 = vadd.f32 %v1504, %v1513
        %v1519 = vadd.f32 %v1505, %v1515
        %s1520 = sld [smem:[#allocation3 + $0x57]]
        %v1521 = vstv %s1520
        %v1522 = vmul.f32 %v1521, %v1485
        %v1523 = vmul.f32 %v1521, %v1486
        %1526 = vrot.lane.b32.xlu0 %v1522, 125
        %v1527 = vpop.permute.xlu0 %1526
        %1528 = vrot.lane.b32.xlu0 %v1523, 125
        %v1529 = vpop.permute.xlu0 %1528
        %v1532 = vadd.f32 %v1518, %v1527
        %v1533 = vadd.f32 %v1519, %v1529
        %s1534 = sld [smem:[#allocation3 + $0x58]]
        %v1535 = vstv %s1534
        %v1536 = vmul.f32 %v1535, %v1485
        %v1537 = vmul.f32 %v1535, %v1486
        %1540 = vrot.lane.b32.xlu0 %v1536, 124
        %v1541 = vpop.permute.xlu0 %1540
        %1542 = vrot.lane.b32.xlu0 %v1537, 124
        %v1543 = vpop.permute.xlu0 %1542
        %v1546 = vadd.f32 %v1532, %v1541
        %v1547 = vadd.f32 %v1533, %v1543
        %s1548 = sld [smem:[#allocation3 + $0x59]]
        %v1549 = vstv %s1548
        %v1550 = vmul.f32 %v1549, %v1485
        %v1551 = vmul.f32 %v1549, %v1486
        %1554 = vrot.lane.b32.xlu0 %v1550, 123
        %v1555 = vpop.permute.xlu0 %1554
        %1556 = vrot.lane.b32.xlu0 %v1551, 123
        %v1557 = vpop.permute.xlu0 %1556
        %v1560 = vadd.f32 %v1546, %v1555
        %v1561 = vadd.f32 %v1547, %v1557
        %s1562 = sld [smem:[#allocation3 + $0x5a]]
        %v1563 = vstv %s1562
        %v1564 = vmul.f32 %v1563, %v1485
        %v1565 = vmul.f32 %v1563, %v1486
        %1568 = vrot.lane.b32.xlu0 %v1564, 122
        %v1569 = vpop.permute.xlu0 %1568
        %1570 = vrot.lane.b32.xlu0 %v1565, 122
        %v1571 = vpop.permute.xlu0 %1570
        %v1574 = vadd.f32 %v1560, %v1569
        %v1575 = vadd.f32 %v1561, %v1571
        %s1576 = sld [smem:[#allocation3 + $0x5b]]
        %v1577 = vld [vmem:[%s377 + $0x6] sm:$0xff]
        %v1578 = vld [vmem:[%s377 + $0xe] sm:$0xff]
        %v1579 = vstv %s1576
        %v1580 = vmul.f32 %v1579, %v1577
        %v1581 = vmul.f32 %v1579, %v1578
        %v1582 = vadd.f32 %v1574, %v1580
        %v1583 = vadd.f32 %v1575, %v1581
        %s1584 = sld [smem:[#allocation3 + $0x5c]]
        %v1585 = vstv %s1584
        %v1586 = vmul.f32 %v1585, %v1577
        %v1587 = vmul.f32 %v1585, %v1578
        %1590 = vrot.lane.b32.xlu0 %v1586, 127
        %v1591 = vpop.permute.xlu0 %1590
        %1592 = vrot.lane.b32.xlu0 %v1587, 127
        %v1593 = vpop.permute.xlu0 %1592
        %v1596 = vadd.f32 %v1582, %v1591
        %v1597 = vadd.f32 %v1583, %v1593
        %s1598 = sld [smem:[#allocation3 + $0x5d]]
        %v1599 = vstv %s1598
        %v1600 = vmul.f32 %v1599, %v1577
        %v1601 = vmul.f32 %v1599, %v1578
        %1604 = vrot.lane.b32.xlu0 %v1600, 126
        %v1605 = vpop.permute.xlu0 %1604
        %1606 = vrot.lane.b32.xlu0 %v1601, 126
        %v1607 = vpop.permute.xlu0 %1606
        %v1610 = vadd.f32 %v1596, %v1605
        %v1611 = vadd.f32 %v1597, %v1607
        %s1612 = sld [smem:[#allocation3 + $0x5e]]
        %v1613 = vstv %s1612
        %v1614 = vmul.f32 %v1613, %v1577
        %v1615 = vmul.f32 %v1613, %v1578
        %1618 = vrot.lane.b32.xlu0 %v1614, 125
        %v1619 = vpop.permute.xlu0 %1618
        %1620 = vrot.lane.b32.xlu0 %v1615, 125
        %v1621 = vpop.permute.xlu0 %1620
        %v1624 = vadd.f32 %v1610, %v1619
        %v1625 = vadd.f32 %v1611, %v1621
        %s1626 = sld [smem:[#allocation3 + $0x5f]]
        %v1627 = vstv %s1626
        %v1628 = vmul.f32 %v1627, %v1577
        %v1629 = vmul.f32 %v1627, %v1578
        %1632 = vrot.lane.b32.xlu0 %v1628, 124
        %v1633 = vpop.permute.xlu0 %1632
        %1634 = vrot.lane.b32.xlu0 %v1629, 124
        %v1635 = vpop.permute.xlu0 %1634
        %v1638 = vadd.f32 %v1624, %v1633
        %v1639 = vadd.f32 %v1625, %v1635
        %s1640 = sld [smem:[#allocation3 + $0x60]]
        %v1641 = vstv %s1640
        %v1642 = vmul.f32 %v1641, %v1577
        %v1643 = vmul.f32 %v1641, %v1578
        %1646 = vrot.lane.b32.xlu0 %v1642, 123
        %v1647 = vpop.permute.xlu0 %1646
        %1648 = vrot.lane.b32.xlu0 %v1643, 123
        %v1649 = vpop.permute.xlu0 %1648
        %v1652 = vadd.f32 %v1638, %v1647
        %v1653 = vadd.f32 %v1639, %v1649
        %s1654 = sld [smem:[#allocation3 + $0x61]]
        %v1655 = vstv %s1654
        %v1656 = vmul.f32 %v1655, %v1577
        %v1657 = vmul.f32 %v1655, %v1578
        %1660 = vrot.lane.b32.xlu0 %v1656, 122
        %v1661 = vpop.permute.xlu0 %1660
        %1662 = vrot.lane.b32.xlu0 %v1657, 122
        %v1663 = vpop.permute.xlu0 %1662
        %v1666 = vadd.f32 %v1652, %v1661
        %v1667 = vadd.f32 %v1653, %v1663
        %s1668 = sld [smem:[#allocation3 + $0x62]]
        %v1669 = vstv %s1668
        %v1670 = vadd.f32 %v1666, %v1669
        %v1671 = vadd.f32 %v1667, %v1669
        %v1672 = vsub.f32 0.0, %v1670
        %v1673 = vsub.f32 0.0, %v1671
        %v1674 = vmul.f32 %v1672, 1.442695
        %v1675 = vpow.pop %v1674
        %v1676 = vmul.f32 %v1673, 1.442695
        %v1677 = vpow.pop %v1676
        %v1678 = vadd.f32 %v1675, 1.0
        %v1679 = vadd.f32 %v1677, 1.0
        %v1680 = vrcp.pop %v1678
        %v1681 = vrcp.pop %v1679
        %v1682 = vmul.f32 %v190, %v1680
        %v1683 = vmul.f32 %v191, %v1681
        %v1684 = vmul.f32 %v192, %v1680
        %v1685 = vmul.f32 %v193, %v1681
        %v1686 = vmul.f32 %v194, %v1680
        %v1687 = vmul.f32 %v195, %v1681
        %v1688 = vmul.f32 %v196, %v1680
        %v1689 = vmul.f32 %v197, %v1681
        %v1690 = vmul.f32 %v198, %v1680
        %v1691 = vmul.f32 %v199, %v1681
        %v1692 = vmul.f32 %v200, %v1680
        %v1693 = vmul.f32 %v201, %v1681
        %v1694 = vmul.f32 %v202, %v1680
        %v1695 = vmul.f32 %v203, %v1681
        %v1696 = vmul.f32 %v204, %v1680
        %v1697 = vmul.f32 %v205, %v1681
        %v1698 = vmul.f32 %v206, %v1680
        %v1699 = vmul.f32 %v207, %v1681
        %v1700 = vmul.f32 %v208, %v1680
        %v1701 = vmul.f32 %v209, %v1681
        %v1702 = vmul.f32 %v210, %v1680
        %v1703 = vmul.f32 %v211, %v1681
        %v1704 = vmul.f32 %v212, %v1680
        %v1705 = vmul.f32 %v213, %v1681
        %v1706 = vmul.f32 %v214, %v1680
        %v1707 = vmul.f32 %v215, %v1681
        %v1708 = vmul.f32 %v216, %v1680
        %v1709 = vmul.f32 %v217, %v1681
        %v1710 = vmul.f32 %v218, %v1680
        %v1711 = vmul.f32 %v219, %v1681
        %v1712 = vmul.f32 %v220, %v1680
        %v1713 = vmul.f32 %v221, %v1681
        %v1714 = vpack.c.bf16 %v1683, %v1682
        %v1715 = vpack.c.bf16 %v1685, %v1684
        %v1716 = vpack.c.bf16 %v1687, %v1686
        %v1717 = vpack.c.bf16 %v1689, %v1688
        %v1718 = vpack.c.bf16 %v1691, %v1690
        %v1719 = vpack.c.bf16 %v1693, %v1692
        %v1720 = vpack.c.bf16 %v1695, %v1694
        %v1721 = vpack.c.bf16 %v1697, %v1696
        %v1722 = vpack.c.bf16 %v1699, %v1698
        %v1723 = vpack.c.bf16 %v1701, %v1700
        %v1724 = vpack.c.bf16 %v1703, %v1702
        %v1725 = vpack.c.bf16 %v1705, %v1704
        %v1726 = vpack.c.bf16 %v1707, %v1706
        %v1727 = vpack.c.bf16 %v1709, %v1708
        %v1728 = vpack.c.bf16 %v1711, %v1710
        %v1729 = vpack.c.bf16 %v1713, %v1712
        %v1746 = vunpack.c.l.b16 %v1714
        %v1747 = vunpack.c.h.b16 %v1714
        %v1748 = vunpack.c.l.b16 %v1715
        %v1749 = vunpack.c.h.b16 %v1715
        %v1750 = vunpack.c.l.b16 %v1716
        %v1751 = vunpack.c.h.b16 %v1716
        %v1752 = vunpack.c.l.b16 %v1717
        %v1753 = vunpack.c.h.b16 %v1717
        %v1754 = vunpack.c.l.b16 %v1718
        %v1755 = vunpack.c.h.b16 %v1718
        %v1756 = vunpack.c.l.b16 %v1719
        %v1757 = vunpack.c.h.b16 %v1719
        %v1758 = vunpack.c.l.b16 %v1720
        %v1759 = vunpack.c.h.b16 %v1720
        %v1760 = vunpack.c.l.b16 %v1721
        %v1761 = vunpack.c.h.b16 %v1721
        %v1762 = vunpack.c.l.b16 %v1722
        %v1763 = vunpack.c.h.b16 %v1722
        %v1764 = vunpack.c.l.b16 %v1723
        %v1765 = vunpack.c.h.b16 %v1723
        %v1766 = vunpack.c.l.b16 %v1724
        %v1767 = vunpack.c.h.b16 %v1724
        %v1768 = vunpack.c.l.b16 %v1725
        %v1769 = vunpack.c.h.b16 %v1725
        %v1770 = vunpack.c.l.b16 %v1726
        %v1771 = vunpack.c.h.b16 %v1726
        %v1772 = vunpack.c.l.b16 %v1727
        %v1773 = vunpack.c.h.b16 %v1727
        %v1774 = vunpack.c.l.b16 %v1728
        %v1775 = vunpack.c.h.b16 %v1728
        %v1776 = vunpack.c.l.b16 %v1729
        %v1777 = vunpack.c.h.b16 %v1729
        %v1778 = vpack.c.b16 %v1746, %v1746
        %v1779 = vpack.c.b16 %v1747, %v1747
        %v1780 = vpack.c.b16 %v1748, %v1748
        %v1781 = vpack.c.b16 %v1749, %v1749
        %v1782 = vpack.c.b16 %v1750, %v1750
        %v1783 = vpack.c.b16 %v1751, %v1751
        %v1784 = vpack.c.b16 %v1752, %v1752
        %v1785 = vpack.c.b16 %v1753, %v1753
        %v1786 = vpack.c.b16 %v1754, %v1754
        %v1787 = vpack.c.b16 %v1755, %v1755
        %v1788 = vpack.c.b16 %v1756, %v1756
        %v1789 = vpack.c.b16 %v1757, %v1757
        %v1790 = vpack.c.b16 %v1758, %v1758
        %v1791 = vpack.c.b16 %v1759, %v1759
        %v1792 = vpack.c.b16 %v1760, %v1760
        %v1793 = vpack.c.b16 %v1761, %v1761
        %v1794 = vpack.c.b16 %v1762, %v1762
        %v1795 = vpack.c.b16 %v1763, %v1763
        %v1796 = vpack.c.b16 %v1764, %v1764
        %v1797 = vpack.c.b16 %v1765, %v1765
        %v1798 = vpack.c.b16 %v1766, %v1766
        %v1799 = vpack.c.b16 %v1767, %v1767
        %v1800 = vpack.c.b16 %v1768, %v1768
        %v1801 = vpack.c.b16 %v1769, %v1769
        %v1802 = vpack.c.b16 %v1770, %v1770
        %v1803 = vpack.c.b16 %v1771, %v1771
        %v1804 = vpack.c.b16 %v1772, %v1772
        %v1805 = vpack.c.b16 %v1773, %v1773
        %v1806 = vpack.c.b16 %v1774, %v1774
        %v1807 = vpack.c.b16 %v1775, %v1775
        %v1808 = vpack.c.b16 %v1776, %v1776
        %v1809 = vpack.c.b16 %v1777, %v1777
        %vm1842 = vcmask 125952
        %1843 = vst.msk [vmem:[%s157] sm:$0xf] %vm1842, %v1778
        %1844 = vst.msk [vmem:[%s157 + $0x4] sm:$0xf] %vm1842, %v1779
        %1845 = vst.msk [vmem:[%s157 + $0x8] sm:$0xf] %vm1842, %v1780
        %1846 = vst.msk [vmem:[%s157 + $0xc] sm:$0xf] %vm1842, %v1781
        %1847 = vst.msk [vmem:[%s157 + $0x10] sm:$0xf] %vm1842, %v1782
        %1848 = vst.msk [vmem:[%s157 + $0x14] sm:$0xf] %vm1842, %v1783
        %1849 = vst.msk [vmem:[%s157 + $0x18] sm:$0xf] %vm1842, %v1784
        %1850 = vst.msk [vmem:[%s157 + $0x1c] sm:$0xf] %vm1842, %v1785
        %1851 = vst.msk [vmem:[%s157 + $0x20] sm:$0xf] %vm1842, %v1786
        %1852 = vst.msk [vmem:[%s157 + $0x24] sm:$0xf] %vm1842, %v1787
        %1853 = vst.msk [vmem:[%s157 + $0x28] sm:$0xf] %vm1842, %v1788
        %1854 = vst.msk [vmem:[%s157 + $0x2c] sm:$0xf] %vm1842, %v1789
        %1855 = vst.msk [vmem:[%s157 + $0x30] sm:$0xf] %vm1842, %v1790
        %1856 = vst.msk [vmem:[%s157 + $0x34] sm:$0xf] %vm1842, %v1791
        %1857 = vst.msk [vmem:[%s157 + $0x38] sm:$0xf] %vm1842, %v1792
        %1858 = vst.msk [vmem:[%s157 + $0x3c] sm:$0xf] %vm1842, %v1793
        %1859 = vst.msk [vmem:[%s157 + $0x40] sm:$0xf] %vm1842, %v1794
        %1860 = vst.msk [vmem:[%s157 + $0x44] sm:$0xf] %vm1842, %v1795
        %1861 = vst.msk [vmem:[%s157 + $0x48] sm:$0xf] %vm1842, %v1796
        %1862 = vst.msk [vmem:[%s157 + $0x4c] sm:$0xf] %vm1842, %v1797
        %1863 = vst.msk [vmem:[%s157 + $0x50] sm:$0xf] %vm1842, %v1798
        %1864 = vst.msk [vmem:[%s157 + $0x54] sm:$0xf] %vm1842, %v1799
        %1865 = vst.msk [vmem:[%s157 + $0x58] sm:$0xf] %vm1842, %v1800
        %1866 = vst.msk [vmem:[%s157 + $0x5c] sm:$0xf] %vm1842, %v1801
        %1867 = vst.msk [vmem:[%s157 + $0x60] sm:$0xf] %vm1842, %v1802
        %1868 = vst.msk [vmem:[%s157 + $0x64] sm:$0xf] %vm1842, %v1803
        %1869 = vst.msk [vmem:[%s157 + $0x68] sm:$0xf] %vm1842, %v1804
        %1870 = vst.msk [vmem:[%s157 + $0x6c] sm:$0xf] %vm1842, %v1805
        %1871 = vst.msk [vmem:[%s157 + $0x70] sm:$0xf] %vm1842, %v1806
        %1872 = vst.msk [vmem:[%s157 + $0x74] sm:$0xf] %vm1842, %v1807
        %1873 = vst.msk [vmem:[%s157 + $0x78] sm:$0xf] %vm1842, %v1808
        %1874 = vst.msk [vmem:[%s157 + $0x7c] sm:$0xf] %vm1842, %v1809
        %p1875 = scmp.lt.s32.totalorder %s14, 1
        %s1876 = scalar_select %p1875, %s14, 1
        %s1877 = smul.addr %s1876, 32
        %s1878 = smul.addr %s1877, 4
        %s1879 = scalar_lea.vmem %s2, %s1878
        // Predicated region
        $region33: #{c2f_tripletat.11} parent=27 // pred_check
          %p1880 = pneg %p79
        $region34: #{c2f_tripletat.11} parent=27 // pred_check_branch
          %1882 = sbr.rel (%p1880) target = $region36
        $region35: #{c2f_tripletat.11} parent=27 // pred_region
          _
        $region36: #{c2f_tripletat.11} parent=27 // pred_fallthru
          _
      $region28: #{c2f_tripletat.11} parent=5 // pred_fallthru
        _
      %p1883 = scmp.le.s32.totalorder 2, %s9
      // Predicated region
      $region37: #{c2f_tripletat.11} parent=5 // pred_check
        %p1884 = pneg %p1883
      $region38: #{c2f_tripletat.11} parent=5 // pred_check_branch
        %1886 = sbr.rel (%p1884) target = $region40
      $region39: #{c2f_tripletat.11} parent=5 // pred_region
        %s1887 = ssub.s32 %s9, 2
        // Predicated region
        $region41: #{c2f_tripletat.11} parent=39 // pred_check
          %p1888 = pneg %p85
        $region42: #{c2f_tripletat.11} parent=39 // pred_check_branch
          %1890 = sbr.rel (%p1888) target = $region44
        $region43: #{c2f_tripletat.11} parent=39 // pred_region
          %p1891 = scmp.lt.s32.totalorder %s15, 1
          %s1892 = scalar_select %p1891, %s15, 1
          %s1893 = smul.addr %s1892, 32
          %s1894 = smul.addr %s1893, 4
          %s1895 = scalar_lea.vmem %s2, %s1894
        $region44: #{c2f_tripletat.11} parent=39 // pred_fallthru
          _
      $region40: #{c2f_tripletat.11} parent=5 // pred_fallthru
        _
    $region6: #{c2f_tripletat.11} parent=1 // loop_footer
      %s13 = sadd.s32 1, %s9
    $region7: #{c2f_tripletat.11} parent=1 // loop_footer_branch
      %8 = sbr.rel target = $region3
    $region8: #{c2f_tripletat.11} parent=1 // loop_exit
      _
    %1896 = vsyncpa [#allocation4], 1
    %s1897 = scalar_lea.sflag [#allocation4], 1
    %1898 = vsyncpa %s1897, 1

// kernel: c2f_tripletat.13
$region0: #{c2f_tripletat.13}
  #allocation0 [shape = 'u32[]', space=smem, size = 0x4, offset = 0x4, fixed_abs, tag = 'smem constant byte address 0x4 - core index']
  #allocation1 [shape = 'u32[144,128]{1,0:T(1,128)}', space=vmem, size = 0x12000, scoped, tag = 'internal scratch']
  %s0 = inlined_call_operand.vmem [shape: bf16[32,32], index: 0, kind: input, shape index: {}]
  %s1 = inlined_call_operand.vmem [shape: bf16[2,32,256], index: 1, kind: input, shape index: {}]
  %s2 = inlined_call_operand.vmem [shape: bf16[32,16], index: 2, kind: input, shape index: {}]
  %s3 = inlined_call_operand.vmem [shape: bf16[2,16,256], index: 3, kind: input, shape index: {}]
  %s4 = inlined_call_operand.vmem [shape: f32[32,1], index: 4, kind: input, shape index: {}]
  %s5 = inlined_call_operand.vmem [shape: f32[2,32,256], index: 5, kind: output, shape index: {}]
  %s6 = sld [smem:[#allocation0]]
  $region53: #{c2f_tripletat.13} parent=0
    _
  %s8 = ssub.s32 1, %s6
  %s9 = scalar_select 0, %s8, %s6
  loop: start=0, step=1, limit=4
  $region2: #{c2f_tripletat.13} parent=0 // loop_pre_header
    _
  $region3: #{c2f_tripletat.13} parent=0 // loop_header
    %s11 = sphi 0, %s15
    %p12 = scmp.ge.s32.totalorder %s11, 4
    %s18 = sphi 0, %s30
    %s19 = sphi 0, %s26
    %s20 = sphi 0, %s18
    %s21 = sphi 0, %s19
    %s22 = sphi 0, %s20
    %s23 = sphi 0, %s21
    %s31 = sphi 0, %s31
    %s33 = sphi 0, %s31
    %s34 = sphi 0, %s33
    %s48 = sphi 0, %s34
    %s56 = sphi 0, %s58
    %s59 = sphi 0, %s56
    %s60 = sphi 0, %s59
    %s76 = sphi 0, %s60
    %s80 = sphi 0, %s80
    %s82 = sphi 0, %s80
    %s83 = sphi 0, %s82
    %s97 = sphi 0, %s83
    %s105 = sphi 0, %s107
    %s108 = sphi 0, %s105
    %s109 = sphi 0, %s108
    %s125 = sphi 0, %s109
    %s129 = sphi 0, %s129
    %s131 = sphi 0, %s129
    %s132 = sphi 0, %s131
    %s146 = sphi 0, %s132
    %s154 = sphi 0, %s156
    %s157 = sphi 0, %s154
    %s158 = sphi 0, %s157
    %s174 = sphi 0, %s158
  $region4: #{c2f_tripletat.13} parent=0 // loop_header_branch
    %14 = sbr.rel (%p12) target = $region8
  $region5: #{c2f_tripletat.13} parent=0 // loop_body
    %s16 = ssub.s32 %s11, 1
    %s17 = ssub.s32 %s11, 2
    %s24 = sadd.s32 1, %s19
    %p25 = scmp.ge.s32.totalorder %s24, 1
    %s26 = scalar_select %p25, 0, %s24
    %s27 = sadd.s32 1, %s18
    %s28 = scalar_select %p25, %s27, %s18
    %p29 = scmp.ge.s32.totalorder %s28, 2
    %s30 = scalar_select %p29, 0, %s28
    %s32 = sadd.s32 %s31, 1
    %p35 = scmp.eq.s32.totalorder %s11, 1
    %p36 = scmp.ne.s32.totalorder %s31, %s33
    %p37 = scmp.eq.s32.totalorder %s11, 0
    %p38 = por %p36, %p37
    %p39 = scmp.ne.s32.totalorder %s31, %s33
    %p40 = scmp.eq.s32.totalorder %s16, 1
    %p41 = por %p39, %p40
    %p42 = scmp.ne.s32.totalorder %s33, %s34
    %p43 = scmp.eq.s32.totalorder %s16, 0
    %p44 = por %p42, %p43
    %p45 = scmp.ne.s32.totalorder %s33, %s34
    %p46 = scmp.eq.s32.totalorder %s17, 1
    %p47 = por %p45, %p46
    %p49 = scmp.ne.s32.totalorder %s34, %s48
    %p50 = scmp.eq.s32.totalorder %s17, 0
    %p51 = por %p49, %p50
    %s52 = ssub.s32 %s18, %s30
    %s53 = ssub.s32 %s19, %s26
    %s54 = sor.u32 %s52, %s53
    %p55 = scmp.eq.s32.totalorder %s54, 0
    %s57 = sadd.s32 %s56, 1
    %s58 = scalar_select %p55, %s56, %s57
    %p61 = pneg %p55
    %p62 = scmp.eq.s32.totalorder %s11, 1
    %p63 = por %p61, %p62
    %p64 = scmp.ne.s32.totalorder %s56, %s59
    %p65 = scmp.eq.s32.totalorder %s11, 0
    %p66 = por %p64, %p65
    %p67 = scmp.ne.s32.totalorder %s56, %s59
    %p68 = scmp.eq.s32.totalorder %s16, 1
    %p69 = por %p67, %p68
    %p70 = scmp.ne.s32.totalorder %s59, %s60
    %p71 = scmp.eq.s32.totalorder %s16, 0
    %p72 = por %p70, %p71
    %p73 = scmp.ne.s32.totalorder %s59, %s60
    %p74 = scmp.eq.s32.totalorder %s17, 1
    %p75 = por %p73, %p74
    %p77 = scmp.ne.s32.totalorder %s60, %s76
    %p78 = scmp.eq.s32.totalorder %s17, 0
    %p79 = por %p77, %p78
    %s81 = sadd.s32 %s80, 1
    %p84 = scmp.eq.s32.totalorder %s11, 1
    %p85 = scmp.ne.s32.totalorder %s80, %s82
    %p86 = scmp.eq.s32.totalorder %s11, 0
    %p87 = por %p85, %p86
    %p88 = scmp.ne.s32.totalorder %s80, %s82
    %p89 = scmp.eq.s32.totalorder %s16, 1
    %p90 = por %p88, %p89
    %p91 = scmp.ne.s32.totalorder %s82, %s83
    %p92 = scmp.eq.s32.totalorder %s16, 0
    %p93 = por %p91, %p92
    %p94 = scmp.ne.s32.totalorder %s82, %s83
    %p95 = scmp.eq.s32.totalorder %s17, 1
    %p96 = por %p94, %p95
    %p98 = scmp.ne.s32.totalorder %s83, %s97
    %p99 = scmp.eq.s32.totalorder %s17, 0
    %p100 = por %p98, %p99
    %s101 = ssub.s32 %s18, %s30
    %s102 = ssub.s32 %s19, %s26
    %s103 = sor.u32 %s101, %s102
    %p104 = scmp.eq.s32.totalorder %s103, 0
    %s106 = sadd.s32 %s105, 1
    %s107 = scalar_select %p104, %s105, %s106
    %p110 = pneg %p104
    %p111 = scmp.eq.s32.totalorder %s11, 1
    %p112 = por %p110, %p111
    %p113 = scmp.ne.s32.totalorder %s105, %s108
    %p114 = scmp.eq.s32.totalorder %s11, 0
    %p115 = por %p113, %p114
    %p116 = scmp.ne.s32.totalorder %s105, %s108
    %p117 = scmp.eq.s32.totalorder %s16, 1
    %p118 = por %p116, %p117
    %p119 = scmp.ne.s32.totalorder %s108, %s109
    %p120 = scmp.eq.s32.totalorder %s16, 0
    %p121 = por %p119, %p120
    %p122 = scmp.ne.s32.totalorder %s108, %s109
    %p123 = scmp.eq.s32.totalorder %s17, 1
    %p124 = por %p122, %p123
    %p126 = scmp.ne.s32.totalorder %s109, %s125
    %p127 = scmp.eq.s32.totalorder %s17, 0
    %p128 = por %p126, %p127
    %s130 = sadd.s32 %s129, 1
    %p133 = scmp.eq.s32.totalorder %s11, 1
    %p134 = scmp.ne.s32.totalorder %s129, %s131
    %p135 = scmp.eq.s32.totalorder %s11, 0
    %p136 = por %p134, %p135
    %p137 = scmp.ne.s32.totalorder %s129, %s131
    %p138 = scmp.eq.s32.totalorder %s16, 1
    %p139 = por %p137, %p138
    %p140 = scmp.ne.s32.totalorder %s131, %s132
    %p141 = scmp.eq.s32.totalorder %s16, 0
    %p142 = por %p140, %p141
    %p143 = scmp.ne.s32.totalorder %s131, %s132
    %p144 = scmp.eq.s32.totalorder %s17, 1
    %p145 = por %p143, %p144
    %p147 = scmp.ne.s32.totalorder %s132, %s146
    %p148 = scmp.eq.s32.totalorder %s17, 0
    %p149 = por %p147, %p148
    %s150 = ssub.s32 %s18, %s30
    %s151 = ssub.s32 %s19, %s26
    %s152 = sor.u32 %s150, %s151
    %p153 = scmp.eq.s32.totalorder %s152, 0
    %s155 = sadd.s32 %s154, 1
    %s156 = scalar_select %p153, %s154, %s155
    %p159 = pneg %p153
    %p160 = scmp.eq.s32.totalorder %s11, 1
    %p161 = por %p159, %p160
    %p162 = scmp.ne.s32.totalorder %s154, %s157
    %p163 = scmp.eq.s32.totalorder %s11, 0
    %p164 = por %p162, %p163
    %p165 = scmp.ne.s32.totalorder %s154, %s157
    %p166 = scmp.eq.s32.totalorder %s16, 1
    %p167 = por %p165, %p166
    %p168 = scmp.ne.s32.totalorder %s157, %s158
    %p169 = scmp.eq.s32.totalorder %s16, 0
    %p170 = por %p168, %p169
    %p171 = scmp.ne.s32.totalorder %s157, %s158
    %p172 = scmp.eq.s32.totalorder %s17, 1
    %p173 = por %p171, %p172
    %p175 = scmp.ne.s32.totalorder %s158, %s174
    %p176 = scmp.eq.s32.totalorder %s17, 0
    %p177 = por %p175, %p176
    %p178 = scmp.le.s32.totalorder 1, %s11
    %p179 = scmp.lt.s32.totalorder %s11, 3
    %p180 = pnand %p178, %p179
    %p181 = pneg %p180
    // Predicated region
    $region9: #{c2f_tripletat.13} parent=5 // pred_check
      _
    $region10: #{c2f_tripletat.13} parent=5 // pred_check_branch
      %183 = sbr.rel (%p180) target = $region12
    $region11: #{c2f_tripletat.13} parent=5 // pred_region
      %s184 = ssub.s32 %s11, 1
      // Predicated region
      $region13: #{c2f_tripletat.13} parent=11 // pred_check
        %p185 = pneg %p44
      $region14: #{c2f_tripletat.13} parent=11 // pred_check_branch
        %187 = sbr.rel (%p185) target = $region16
      $region15: #{c2f_tripletat.13} parent=11 // pred_region
        _
      $region16: #{c2f_tripletat.13} parent=11 // pred_fallthru
        _
      // Predicated region
      $region17: #{c2f_tripletat.13} parent=11 // pred_check
        %p188 = pneg %p93
      $region18: #{c2f_tripletat.13} parent=11 // pred_check_branch
        %190 = sbr.rel (%p188) target = $region20
      $region19: #{c2f_tripletat.13} parent=11 // pred_region
        _
      $region20: #{c2f_tripletat.13} parent=11 // pred_fallthru
        _
      // Predicated region
      $region21: #{c2f_tripletat.13} parent=11 // pred_check
        %p191 = pneg %p142
      $region22: #{c2f_tripletat.13} parent=11 // pred_check_branch
        %193 = sbr.rel (%p191) target = $region24
      $region23: #{c2f_tripletat.13} parent=11 // pred_region
        _
      $region24: #{c2f_tripletat.13} parent=11 // pred_fallthru
        _
    $region12: #{c2f_tripletat.13} parent=5 // pred_fallthru
      _
    %p194 = scmp.lt.s32.totalorder %s11, 2
    // Predicated region
    $region25: #{c2f_tripletat.13} parent=5 // pred_check
      %p195 = pneg %p194
    $region26: #{c2f_tripletat.13} parent=5 // pred_check_branch
      %197 = sbr.rel (%p195) target = $region28
    $region27: #{c2f_tripletat.13} parent=5 // pred_region
      // Predicated region
      $region29: #{c2f_tripletat.13} parent=27 // pred_check
        %p198 = pneg %p66
      $region30: #{c2f_tripletat.13} parent=27 // pred_check_branch
        %200 = sbr.rel (%p198) target = $region32
      $region31: #{c2f_tripletat.13} parent=27 // pred_region
        %s201 = smul.u32 2, %s19
        %p202 = scmp.lt.s32.totalorder %s18, 1
        %s203 = scalar_select %p202, %s18, 1
        %p204 = scmp.lt.s32.totalorder %s201, 1
        %s205 = scalar_select %p204, %s201, 1
        %s206 = smul.addr %s203, 8
        %s207 = sadd.s32 %s205, %s206
        %s208 = smul.addr %s207, 4
        %s209 = scalar_lea.vmem %s1, %s208
        %s210 = smul.u32 2, %s19
      $region32: #{c2f_tripletat.13} parent=27 // pred_fallthru
        _
      // Predicated region
      $region33: #{c2f_tripletat.13} parent=27 // pred_check
        %p211 = pneg %p115
      $region34: #{c2f_tripletat.13} parent=27 // pred_check_branch
        %213 = sbr.rel (%p211) target = $region36
      $region35: #{c2f_tripletat.13} parent=27 // pred_region
        %s214 = smul.u32 2, %s19
        %p215 = scmp.lt.s32.totalorder %s18, 1
        %s216 = scalar_select %p215, %s18, 1
        %p217 = scmp.lt.s32.totalorder %s214, 1
        %s218 = scalar_select %p217, %s214, 1
        %s219 = smul.addr %s216, 4
        %s220 = sadd.s32 %s218, %s219
        %s221 = smul.addr %s220, 4
        %s222 = scalar_lea.vmem %s3, %s221
        %s223 = smul.u32 2, %s19
      $region36: #{c2f_tripletat.13} parent=27 // pred_fallthru
        _
    $region28: #{c2f_tripletat.13} parent=5 // pred_fallthru
      _
    %p224 = scmp.le.s32.totalorder 1, %s11
    %p225 = scmp.lt.s32.totalorder %s11, 3
    %p226 = pnand %p224, %p225
    %p227 = pneg %p226
    // Predicated region
    $region37: #{c2f_tripletat.13} parent=5 // pred_check
      _
    $region38: #{c2f_tripletat.13} parent=5 // pred_check_branch
      %229 = sbr.rel (%p226) target = $region40
    $region39: #{c2f_tripletat.13} parent=5 // pred_region
      %s230 = ssub.s32 %s11, 1
      %p231 = pneg %p44
      %p232 = pneg %p41
      %s233 = smul.u32 2, %s21
      %p234 = scmp.lt.s32.totalorder %s20, 1
      %s235 = scalar_select %p234, %s20, 1
      %p236 = scmp.lt.s32.totalorder %s233, 1
      %s237 = scalar_select %p236, %s233, 1
      %s238 = smul.addr %s235, 8
      %s239 = sadd.s32 %s237, %s238
      %s240 = smul.addr %s239, 4
      %s241 = scalar_lea.vmem %s1, %s240
      %p242 = pneg %p72
      %p243 = pneg %p69
      %p244 = pneg %p93
      %p245 = pneg %p90
      %s246 = smul.u32 2, %s21
      %p247 = scmp.lt.s32.totalorder %s20, 1
      %s248 = scalar_select %p247, %s20, 1
      %p249 = scmp.lt.s32.totalorder %s246, 1
      %s250 = scalar_select %p249, %s246, 1
      %s251 = smul.addr %s248, 4
      %s252 = sadd.s32 %s250, %s251
      %s253 = smul.addr %s252, 4
      %s254 = scalar_lea.vmem %s3, %s253
      %p255 = pneg %p121
      %p256 = pneg %p118
      %p257 = pneg %p142
      %p258 = pneg %p139
      %p259 = pneg %p170
      %p260 = pneg %p167
      %s261 = smul.u32 2, %s21
      %p262 = scmp.lt.s32.totalorder %s20, 1
      %s263 = scalar_select %p262, %s20, 1
      %p264 = scmp.lt.s32.totalorder %s261, 1
      %s265 = scalar_select %p264, %s261, 1
      %s266 = smul.addr %s263, 8
      %s267 = sadd.s32 %s265, %s266
      %s268 = smul.addr %s267, 8
      %s269 = scalar_lea.vmem %s5, %s268
      %s270 = smul.u32 2, %s21
      %p271 = scmp.lt.s32.totalorder %s20, 1
      %s272 = scalar_select %p271, %s20, 1
      %p273 = scmp.lt.s32.totalorder %s270, 1
      %s274 = scalar_select %p273, %s270, 1
      %s275 = smul.addr %s272, 8
      %s276 = sadd.s32 %s274, %s275
      %s277 = smul.addr %s276, 4
      %s278 = scalar_lea.vmem %s1, %s277
      %s279 = smul.u32 2, %s21
      %s280 = smul.u32 2, %s21
      %p281 = scmp.lt.s32.totalorder %s20, 1
      %s282 = scalar_select %p281, %s20, 1
      %p283 = scmp.lt.s32.totalorder %s280, 1
      %s284 = scalar_select %p283, %s280, 1
      %s285 = smul.addr %s282, 4
      %s286 = sadd.s32 %s284, %s285
      %s287 = smul.addr %s286, 4
      %s288 = scalar_lea.vmem %s3, %s287
      %s289 = smul.u32 2, %s21
      %s290 = smul.u32 2, %s21
      %p291 = scmp.lt.s32.totalorder %s20, 1
      %s292 = scalar_select %p291, %s20, 1
      %p293 = scmp.lt.s32.totalorder %s290, 1
      %s294 = scalar_select %p293, %s290, 1
      %s295 = smul.addr %s292, 8
      %s296 = sadd.s32 %s294, %s295
      %s297 = smul.addr %s296, 8
      %s298 = scalar_lea.vmem %s5, %s297
      %s299 = smul.u32 2, %s21
      %v301 = vld [vmem:[%s0] sm:$0xf]
      %v302 = vld [vmem:[%s0 + $0x4] sm:$0xf]
      %v303 = vld [vmem:[%s0 + $0x8] sm:$0xf]
      %v304 = vld [vmem:[%s0 + $0xc] sm:$0xf]
      %v305 = vld [vmem:[%s278] sm:$0xff]
      %v306 = vld [vmem:[%s278 + $0x8] sm:$0xff]
      %v307 = vld [vmem:[%s278 + $0x10] sm:$0xff]
      %v308 = vld [vmem:[%s278 + $0x18] sm:$0xff]
      %v309 = vld [vmem:[%s2] sm:$0xf]
      %v310 = vld [vmem:[%s2 + $0x4] sm:$0xf]
      %v311 = vld [vmem:[%s2 + $0x8] sm:$0xf]
      %v312 = vld [vmem:[%s2 + $0xc] sm:$0xf]
      %v313 = vld [vmem:[%s288] sm:$0xff]
      %v314 = vld [vmem:[%s288 + $0x8] sm:$0xff]
      %v319 = vunpack.c.l.b16 %v309
      %v320 = vunpack.c.l.b16 %v310
      %v321 = vunpack.c.l.b16 %v311
      %v322 = vunpack.c.l.b16 %v312
      %v323 = vpack.c.b16 %v320, %v319
      %v324 = vpack.c.b16 %v322, %v321
      %v327 = vunpack.c.l.b16 %v313
      %v328 = vunpack.c.h.b16 %v313
      %v329 = vunpack.c.l.b16 %v314
      %v330 = vunpack.c.h.b16 %v314
      %v331 = vpack.c.b16 %v329, %v327
      %v332 = vpack.c.b16 %v330, %v328
      %vm335 = vcmask 130048
      %v337 = vsel %vm335, %v323, 0
      %v340 = vsel %vm335, %v324, 0
      %342 = vmatprep.subr.bf16.mxu0 %v332
      %343 = vmatpush1.bf16.msra.mxu0 %v331
      %344 = vmatprep.subr.bf16.mxu0 0
      %345 = vmatpush1.bf16.msra.mxu0 0
      %346 = vmatprep.subr.bf16.mxu0 0
      %347 = vmatpush1.bf16.msra.mxu0 0
      %348 = vmatprep.subr.bf16.mxu0 0
      %349 = vmatpush1.bf16.msra.mxu0 0
      %350 = vmatprep.subr.bf16.mxu0 0
      %351 = vmatpush1.bf16.msra.mxu0 0
      %352 = vmatprep.subr.bf16.mxu0 0
      %353 = vmatpush1.bf16.msra.mxu0 0
      %354 = vmatprep.subr.bf16.mxu0 0
      %355 = vmatpush1.bf16.msra.mxu0 0
      %356 = vmatprep.subr.bf16.mxu0 0
      %357 = vmatpush1.bf16.msra.mxu0 0
      %358 = vmatprep.subr.bf16.mxu0 0
      %359 = vmatpush1.bf16.msra.mxu0 0
      %360 = vmatprep.subr.bf16.mxu0 0
      %361 = vmatpush1.bf16.msra.mxu0 0
      %362 = vmatprep.subr.bf16.mxu0 0
      %363 = vmatpush1.bf16.msra.mxu0 0
      %364 = vmatprep.subr.bf16.mxu0 0
      %365 = vmatpush1.bf16.msra.mxu0 0
      %366 = vmatprep.subr.bf16.mxu0 0
      %367 = vmatpush1.bf16.msra.mxu0 0
      %368 = vmatprep.subr.bf16.mxu0 0
      %369 = vmatpush1.bf16.msra.mxu0 0
      %370 = vmatprep.subr.bf16.mxu0 0
      %371 = vmatpush1.bf16.msra.mxu0 0
      %372 = vmatprep.subr.bf16.mxu0 0
      %373 = vmatpush1.bf16.msra.mxu0 0
      %374 = vmatprep.mubr.bf16.mxu0 0
      %375 = vmatmul.mubr.bf16.gmra.mrb[0].mxu0 %v337
      %v376 = vpop.f32.mrb[0].mxu0
      %v377 = vadd.f32 0.0, %v376
      %v378 = vpop.f32.mrb[0].mxu0
      %v379 = vadd.f32 0.0, %v378
      %v380 = vpop.f32.mrb[0].mxu0
      %v381 = vadd.f32 0.0, %v380
      %v382 = vpop.f32.mrb[0].mxu0
      %v383 = vadd.f32 0.0, %v382
      %384 = vmatprep.mubr.bf16.mxu0 0
      %385 = vmatmul.mubr.bf16.gmra.mrb[0].mxu0 %v340
      %v386 = vpop.f32.mrb[0].mxu0
      %v387 = vadd.f32 0.0, %v386
      %v388 = vpop.f32.mrb[0].mxu0
      %v389 = vadd.f32 0.0, %v388
      %v390 = vpop.f32.mrb[0].mxu0
      %v391 = vadd.f32 0.0, %v390
      %v392 = vpop.f32.mrb[0].mxu0
      %v393 = vadd.f32 0.0, %v392
      %394 = vdwg.mxu0
      %v399 = vunpack.c.l.b16 %v301
      %v400 = vunpack.c.l.b16 %v302
      %v401 = vunpack.c.l.b16 %v303
      %v402 = vunpack.c.l.b16 %v304
      %v403 = vpack.c.b16 %v400, %v399
      %v404 = vpack.c.b16 %v402, %v401
      %v409 = vunpack.c.l.b16 %v305
      %v410 = vunpack.c.h.b16 %v305
      %v411 = vunpack.c.l.b16 %v306
      %v412 = vunpack.c.h.b16 %v306
      %v413 = vunpack.c.l.b16 %v307
      %v414 = vunpack.c.h.b16 %v307
      %v415 = vunpack.c.l.b16 %v308
      %v416 = vunpack.c.h.b16 %v308
      %v417 = vpack.c.b16 %v411, %v409
      %v418 = vpack.c.b16 %v412, %v410
      %v419 = vpack.c.b16 %v415, %v413
      %v420 = vpack.c.b16 %v416, %v414
      %vm425 = vcmask 261120
      %v427 = vsel %vm425, %v403, 0
      %v430 = vsel %vm425, %v404, 0
      %432 = vmatprep.subr.bf16.mxu0 %v418
      %433 = vmatpush1.bf16.msra.mxu0 %v417
      %434 = vmatprep.subr.bf16.mxu0 %v420
      %435 = vmatpush1.bf16.msra.mxu0 %v419
      %436 = vmatprep.subr.bf16.mxu0 0
      %437 = vmatpush1.bf16.msra.mxu0 0
      %438 = vmatprep.subr.bf16.mxu0 0
      %439 = vmatpush1.bf16.msra.mxu0 0
      %440 = vmatprep.subr.bf16.mxu0 0
      %441 = vmatpush1.bf16.msra.mxu0 0
      %442 = vmatprep.subr.bf16.mxu0 0
      %443 = vmatpush1.bf16.msra.mxu0 0
      %444 = vmatprep.subr.bf16.mxu0 0
      %445 = vmatpush1.bf16.msra.mxu0 0
      %446 = vmatprep.subr.bf16.mxu0 0
      %447 = vmatpush1.bf16.msra.mxu0 0
      %448 = vmatprep.subr.bf16.mxu0 0
      %449 = vmatpush1.bf16.msra.mxu0 0
      %450 = vmatprep.subr.bf16.mxu0 0
      %451 = vmatpush1.bf16.msra.mxu0 0
      %452 = vmatprep.subr.bf16.mxu0 0
      %453 = vmatpush1.bf16.msra.mxu0 0
      %454 = vmatprep.subr.bf16.mxu0 0
      %455 = vmatpush1.bf16.msra.mxu0 0
      %456 = vmatprep.subr.bf16.mxu0 0
      %457 = vmatpush1.bf16.msra.mxu0 0
      %458 = vmatprep.subr.bf16.mxu0 0
      %459 = vmatpush1.bf16.msra.mxu0 0
      %460 = vmatprep.subr.bf16.mxu0 0
      %461 = vmatpush1.bf16.msra.mxu0 0
      %462 = vmatprep.subr.bf16.mxu0 0
      %463 = vmatpush1.bf16.msra.mxu0 0
      %464 = vmatprep.mubr.bf16.mxu0 0
      %465 = vmatmul.mubr.bf16.gmra.mrb[0].mxu0 %v427
      %v466 = vpop.f32.mrb[0].mxu0
      %v467 = vadd.f32 %v377, %v466
      %v468 = vpop.f32.mrb[0].mxu0
      %v469 = vadd.f32 %v379, %v468
      %v470 = vpop.f32.mrb[0].mxu0
      %v471 = vadd.f32 %v381, %v470
      %v472 = vpop.f32.mrb[0].mxu0
      %v473 = vadd.f32 %v383, %v472
      %474 = vmatprep.mubr.bf16.mxu0 0
      %475 = vmatmul.mubr.bf16.gmra.mrb[0].mxu0 %v430
      %v476 = vpop.f32.mrb[0].mxu0
      %v477 = vadd.f32 %v387, %v476
      %v478 = vpop.f32.mrb[0].mxu0
      %v479 = vadd.f32 %v389, %v478
      %v480 = vpop.f32.mrb[0].mxu0
      %v481 = vadd.f32 %v391, %v480
      %v482 = vpop.f32.mrb[0].mxu0
      %v483 = vadd.f32 %v393, %v482
      %484 = vdwg.mxu0
      %v485 = vld [vmem:[%s4] sm:$0xff]
      %v486 = vld [vmem:[%s4 + $0x8] sm:$0xff]
      %v487 = vld [vmem:[%s4 + $0x10] sm:$0xff]
      %v488 = vld [vmem:[%s4 + $0x18] sm:$0xff]
      %490 = vset.pattern.permute.xlu0 0
      %491 = vperm.xlu0 %490, %v485
      %v492 = vpop.permute.xlu0 %491
      %495 = vset.pattern.permute.xlu0 0
      %496 = vperm.xlu0 %495, %v486
      %v497 = vpop.permute.xlu0 %496
      %500 = vset.pattern.permute.xlu0 0
      %501 = vperm.xlu0 %500, %v487
      %v502 = vpop.permute.xlu0 %501
      %505 = vset.pattern.permute.xlu0 0
      %506 = vperm.xlu0 %505, %v488
      %v507 = vpop.permute.xlu0 %506
      %v509 = vadd.f32 %v467, %v492
      %v510 = vadd.f32 %v469, %v492
      %v511 = vadd.f32 %v471, %v497
      %v512 = vadd.f32 %v473, %v497
      %v513 = vadd.f32 %v477, %v502
      %v514 = vadd.f32 %v479, %v502
      %v515 = vadd.f32 %v481, %v507
      %v516 = vadd.f32 %v483, %v507
      %v517 = vsub.f32 0.0, %v509
      %v518 = vsub.f32 0.0, %v510
      %v519 = vsub.f32 0.0, %v511
      %v520 = vsub.f32 0.0, %v512
      %v521 = vsub.f32 0.0, %v513
      %v522 = vsub.f32 0.0, %v514
      %v523 = vsub.f32 0.0, %v515
      %v524 = vsub.f32 0.0, %v516
      %v525 = vmul.f32 %v517, 1.442695
      %v526 = vpow.pop %v525
      %v527 = vmul.f32 %v518, 1.442695
      %v528 = vpow.pop %v527
      %v529 = vmul.f32 %v519, 1.442695
      %v530 = vpow.pop %v529
      %v531 = vmul.f32 %v520, 1.442695
      %v532 = vpow.pop %v531
      %v533 = vmul.f32 %v521, 1.442695
      %v534 = vpow.pop %v533
      %v535 = vmul.f32 %v522, 1.442695
      %v536 = vpow.pop %v535
      %v537 = vmul.f32 %v523, 1.442695
      %v538 = vpow.pop %v537
      %v539 = vmul.f32 %v524, 1.442695
      %v540 = vpow.pop %v539
      %v541 = vadd.f32 %v526, 1.0
      %v542 = vadd.f32 %v528, 1.0
      %v543 = vadd.f32 %v530, 1.0
      %v544 = vadd.f32 %v532, 1.0
      %v545 = vadd.f32 %v534, 1.0
      %v546 = vadd.f32 %v536, 1.0
      %v547 = vadd.f32 %v538, 1.0
      %v548 = vadd.f32 %v540, 1.0
      %v549 = vrcp.pop %v541
      %v550 = vrcp.pop %v542
      %v551 = vrcp.pop %v543
      %v552 = vrcp.pop %v544
      %v553 = vrcp.pop %v545
      %v554 = vrcp.pop %v546
      %v555 = vrcp.pop %v547
      %v556 = vrcp.pop %v548
      %v557 = vmul.f32 %v509, %v549
      %v558 = vmul.f32 %v510, %v550
      %v559 = vmul.f32 %v511, %v551
      %v560 = vmul.f32 %v512, %v552
      %v561 = vmul.f32 %v513, %v553
      %v562 = vmul.f32 %v514, %v554
      %v563 = vmul.f32 %v515, %v555
      %v564 = vmul.f32 %v516, %v556
      %565 = vst [vmem:[%s298] sm:$0xff] %v557
      %566 = vst [vmem:[%s298 + $0x8] sm:$0xff] %v558
      %567 = vst [vmem:[%s298 + $0x10] sm:$0xff] %v559
      %568 = vst [vmem:[%s298 + $0x18] sm:$0xff] %v560
      %569 = vst [vmem:[%s298 + $0x20] sm:$0xff] %v561
      %570 = vst [vmem:[%s298 + $0x28] sm:$0xff] %v562
      %571 = vst [vmem:[%s298 + $0x30] sm:$0xff] %v563
      %572 = vst [vmem:[%s298 + $0x38] sm:$0xff] %v564
      %s573 = smul.u32 2, %s21
      %p574 = scmp.lt.s32.totalorder %s20, 1
      %s575 = scalar_select %p574, %s20, 1
      %p576 = scmp.lt.s32.totalorder %s573, 1
      %s577 = scalar_select %p576, %s573, 1
      %s578 = smul.addr %s575, 8
      %s579 = sadd.s32 %s577, %s578
      %s580 = smul.addr %s579, 8
      %s581 = scalar_lea.vmem %s5, %s580
      // Predicated region
      $region41: #{c2f_tripletat.13} parent=39 // pred_check
        %p582 = pneg %p167
      $region42: #{c2f_tripletat.13} parent=39 // pred_check_branch
        %584 = sbr.rel (%p582) target = $region44
      $region43: #{c2f_tripletat.13} parent=39 // pred_region
        %s585 = smul.u32 2, %s21
      $region44: #{c2f_tripletat.13} parent=39 // pred_fallthru
        _
    $region40: #{c2f_tripletat.13} parent=5 // pred_fallthru
      _
    %p586 = scmp.le.s32.totalorder 2, %s11
    // Predicated region
    $region45: #{c2f_tripletat.13} parent=5 // pred_check
      %p587 = pneg %p586
    $region46: #{c2f_tripletat.13} parent=5 // pred_check_branch
      %589 = sbr.rel (%p587) target = $region48
    $region47: #{c2f_tripletat.13} parent=5 // pred_region
      %s590 = ssub.s32 %s11, 2
      // Predicated region
      $region49: #{c2f_tripletat.13} parent=47 // pred_check
        %p591 = pneg %p173
      $region50: #{c2f_tripletat.13} parent=47 // pred_check_branch
        %593 = sbr.rel (%p591) target = $region52
      $region51: #{c2f_tripletat.13} parent=47 // pred_region
        %s594 = smul.u32 2, %s23
        %p595 = scmp.lt.s32.totalorder %s22, 1
        %s596 = scalar_select %p595, %s22, 1
        %p597 = scmp.lt.s32.totalorder %s594, 1
        %s598 = scalar_select %p597, %s594, 1
        %s599 = smul.addr %s596, 8
        %s600 = sadd.s32 %s598, %s599
        %s601 = smul.addr %s600, 8
        %s602 = scalar_lea.vmem %s5, %s601
      $region52: #{c2f_tripletat.13} parent=47 // pred_fallthru
        _
    $region48: #{c2f_tripletat.13} parent=5 // pred_fallthru
      _
  $region6: #{c2f_tripletat.13} parent=0 // loop_footer
    %s15 = sadd.s32 1, %s11
  $region7: #{c2f_tripletat.13} parent=0 // loop_footer_branch
    %10 = sbr.rel target = $region3
  $region8: #{c2f_tripletat.13} parent=0 // loop_exit
    _

// kernel: c2f_tripletat.12
$region0: #{c2f_tripletat.12}
  #allocation0 [shape = 'u32[]', space=smem, size = 0x4, offset = 0x4, fixed_abs, tag = 'smem constant byte address 0x4 - core index']
  #allocation1 [shape = 'u32[144,128]{1,0:T(1,128)}', space=vmem, size = 0x12000, scoped, tag = 'internal scratch']
  #allocation2 [shape = 'f32[2,22,22]{2,1,0:T(8,128)}', space=vmem, size = 0x6000, scoped, tag = 'scratch operand']
  %s0 = inlined_call_operand.vmem [shape: f32[99], index: 0, kind: input, shape index: {}]
  %s1 = inlined_call_operand.vmem [shape: bf16[2,16,16,16], index: 1, kind: input, shape index: {}]
  %s2 = inlined_call_operand.vmem [shape: bf16[2,16,16,16], index: 2, kind: input, shape index: {}]
  %s3 = inlined_call_operand.vmem [shape: bf16[2,16,16,16], index: 3, kind: input, shape index: {}]
  %s4 = inlined_call_operand.vmem [shape: bf16[2,16,16,16], index: 4, kind: output, shape index: {}]
  %s5 = sld [smem:[#allocation0]]
  $region53: #{c2f_tripletat.12} parent=0
    _
  %s7 = ssub.s32 1, %s5
  %s8 = scalar_select 0, %s7, %s5
  $region1: #{c2f_tripletat.12} parent=0
    #allocation3 [shape = 'u8[512]{0}', space=smem, size = 0x200, scoped, tag = 'input window, operand 0, single buffered']
    #allocation4 [shape = 's32[2]{0}', space=sflag, size = 0x8, scoped, tag = 'scoped memory for c2f_tripletat.12']
    %9 = vsyncpa [#allocation4], 0
    loop: start=0, step=1, limit=4
    $region2: #{c2f_tripletat.12} parent=1 // loop_pre_header
      _
    $region3: #{c2f_tripletat.12} parent=1 // loop_header
      %s11 = sphi 0, %s15
      %p12 = scmp.ge.s32.totalorder %s11, 4
      %s19 = sphi 0, %s19
      %s21 = sphi 0, %s19
      %s22 = sphi 0, %s21
      %s36 = sphi 0, %s22
      %s42 = sphi 0, %s44
      %s45 = sphi 0, %s42
      %s46 = sphi 0, %s45
      %s62 = sphi 0, %s46
      %s68 = sphi 0, %s70
      %s71 = sphi 0, %s68
      %s72 = sphi 0, %s71
      %s88 = sphi 0, %s72
      %s94 = sphi 0, %s96
      %s97 = sphi 0, %s94
      %s98 = sphi 0, %s97
      %s114 = sphi 0, %s98
      %s120 = sphi 0, %s122
      %s123 = sphi 0, %s120
      %s124 = sphi 0, %s123
      %s140 = sphi 0, %s124
    $region4: #{c2f_tripletat.12} parent=1 // loop_header_branch
      %14 = sbr.rel (%p12) target = $region8
    $region5: #{c2f_tripletat.12} parent=1 // loop_body
      %s16 = ssub.s32 %s11, 1
      %s17 = ssub.s32 %s11, 2
      %s18 = sadd.s32 %s11, 1
      %s20 = sadd.s32 %s19, 1
      %p23 = scmp.eq.s32.totalorder %s11, 1
      %p24 = scmp.ne.s32.totalorder %s19, %s21
      %p25 = scmp.eq.s32.totalorder %s11, 0
      %p26 = por %p24, %p25
      %p27 = scmp.ne.s32.totalorder %s19, %s21
      %p28 = scmp.eq.s32.totalorder %s16, 1
      %p29 = por %p27, %p28
      %p30 = scmp.ne.s32.totalorder %s21, %s22
      %p31 = scmp.eq.s32.totalorder %s16, 0
      %p32 = por %p30, %p31
      %p33 = scmp.ne.s32.totalorder %s21, %s22
      %p34 = scmp.eq.s32.totalorder %s17, 1
      %p35 = por %p33, %p34
      %p37 = scmp.ne.s32.totalorder %s22, %s36
      %p38 = scmp.eq.s32.totalorder %s17, 0
      %p39 = por %p37, %p38
      %s40 = ssub.s32 %s11, %s18
      %p41 = scmp.eq.s32.totalorder %s40, 0
      %s43 = sadd.s32 %s42, 1
      %s44 = scalar_select %p41, %s42, %s43
      %p47 = pneg %p41
      %p48 = scmp.eq.s32.totalorder %s11, 1
      %p49 = por %p47, %p48
      %p50 = scmp.ne.s32.totalorder %s42, %s45
      %p51 = scmp.eq.s32.totalorder %s11, 0
      %p52 = por %p50, %p51
      %p53 = scmp.ne.s32.totalorder %s42, %s45
      %p54 = scmp.eq.s32.totalorder %s16, 1
      %p55 = por %p53, %p54
      %p56 = scmp.ne.s32.totalorder %s45, %s46
      %p57 = scmp.eq.s32.totalorder %s16, 0
      %p58 = por %p56, %p57
      %p59 = scmp.ne.s32.totalorder %s45, %s46
      %p60 = scmp.eq.s32.totalorder %s17, 1
      %p61 = por %p59, %p60
      %p63 = scmp.ne.s32.totalorder %s46, %s62
      %p64 = scmp.eq.s32.totalorder %s17, 0
      %p65 = por %p63, %p64
      %s66 = ssub.s32 %s11, %s18
      %p67 = scmp.eq.s32.totalorder %s66, 0
      %s69 = sadd.s32 %s68, 1
      %s70 = scalar_select %p67, %s68, %s69
      %p73 = pneg %p67
      %p74 = scmp.eq.s32.totalorder %s11, 1
      %p75 = por %p73, %p74
      %p76 = scmp.ne.s32.totalorder %s68, %s71
      %p77 = scmp.eq.s32.totalorder %s11, 0
      %p78 = por %p76, %p77
      %p79 = scmp.ne.s32.totalorder %s68, %s71
      %p80 = scmp.eq.s32.totalorder %s16, 1
      %p81 = por %p79, %p80
      %p82 = scmp.ne.s32.totalorder %s71, %s72
      %p83 = scmp.eq.s32.totalorder %s16, 0
      %p84 = por %p82, %p83
      %p85 = scmp.ne.s32.totalorder %s71, %s72
      %p86 = scmp.eq.s32.totalorder %s17, 1
      %p87 = por %p85, %p86
      %p89 = scmp.ne.s32.totalorder %s72, %s88
      %p90 = scmp.eq.s32.totalorder %s17, 0
      %p91 = por %p89, %p90
      %s92 = ssub.s32 %s11, %s18
      %p93 = scmp.eq.s32.totalorder %s92, 0
      %s95 = sadd.s32 %s94, 1
      %s96 = scalar_select %p93, %s94, %s95
      %p99 = pneg %p93
      %p100 = scmp.eq.s32.totalorder %s11, 1
      %p101 = por %p99, %p100
      %p102 = scmp.ne.s32.totalorder %s94, %s97
      %p103 = scmp.eq.s32.totalorder %s11, 0
      %p104 = por %p102, %p103
      %p105 = scmp.ne.s32.totalorder %s94, %s97
      %p106 = scmp.eq.s32.totalorder %s16, 1
      %p107 = por %p105, %p106
      %p108 = scmp.ne.s32.totalorder %s97, %s98
      %p109 = scmp.eq.s32.totalorder %s16, 0
      %p110 = por %p108, %p109
      %p111 = scmp.ne.s32.totalorder %s97, %s98
      %p112 = scmp.eq.s32.totalorder %s17, 1
      %p113 = por %p111, %p112
      %p115 = scmp.ne.s32.totalorder %s98, %s114
      %p116 = scmp.eq.s32.totalorder %s17, 0
      %p117 = por %p115, %p116
      %s118 = ssub.s32 %s11, %s18
      %p119 = scmp.eq.s32.totalorder %s118, 0
      %s121 = sadd.s32 %s120, 1
      %s122 = scalar_select %p119, %s120, %s121
      %p125 = pneg %p119
      %p126 = scmp.eq.s32.totalorder %s11, 1
      %p127 = por %p125, %p126
      %p128 = scmp.ne.s32.totalorder %s120, %s123
      %p129 = scmp.eq.s32.totalorder %s11, 0
      %p130 = por %p128, %p129
      %p131 = scmp.ne.s32.totalorder %s120, %s123
      %p132 = scmp.eq.s32.totalorder %s16, 1
      %p133 = por %p131, %p132
      %p134 = scmp.ne.s32.totalorder %s123, %s124
      %p135 = scmp.eq.s32.totalorder %s16, 0
      %p136 = por %p134, %p135
      %p137 = scmp.ne.s32.totalorder %s123, %s124
      %p138 = scmp.eq.s32.totalorder %s17, 1
      %p139 = por %p137, %p138
      %p141 = scmp.ne.s32.totalorder %s124, %s140
      %p142 = scmp.eq.s32.totalorder %s17, 0
      %p143 = por %p141, %p142
      %p144 = scmp.le.s32.totalorder 1, %s11
      %p145 = scmp.lt.s32.totalorder %s11, 3
      %p146 = pnand %p144, %p145
      %p147 = pneg %p146
      // Predicated region
      $region9: #{c2f_tripletat.12} parent=5 // pred_check
        _
      $region10: #{c2f_tripletat.12} parent=5 // pred_check_branch
        %149 = sbr.rel (%p146) target = $region12
      $region11: #{c2f_tripletat.12} parent=5 // pred_region
        %s150 = ssub.s32 %s11, 1
        // Predicated region
        $region13: #{c2f_tripletat.12} parent=11 // pred_check
          %p151 = pneg %p32
        $region14: #{c2f_tripletat.12} parent=11 // pred_check_branch
          %153 = sbr.rel (%p151) target = $region16
        $region15: #{c2f_tripletat.12} parent=11 // pred_region
          %s155 = ssub.s32 16, 16
          %156 = vsyncadd [#allocation4], %s155
          %s158 = sshll.u32 %s0, 4
          %s159 = int_to_ptr.vmem [resolvable:$true] %s158
          %161 = dma.vmem_to_smem %s159, 16, [#allocation3], [#allocation4]
        $region16: #{c2f_tripletat.12} parent=11 // pred_fallthru
          _
      $region12: #{c2f_tripletat.12} parent=5 // pred_fallthru
        _
      %p162 = scmp.lt.s32.totalorder %s11, 2
      // Predicated region
      $region17: #{c2f_tripletat.12} parent=5 // pred_check
        %p163 = pneg %p162
      $region18: #{c2f_tripletat.12} parent=5 // pred_check_branch
        %165 = sbr.rel (%p163) target = $region20
      $region19: #{c2f_tripletat.12} parent=5 // pred_region
        // Predicated region
        $region21: #{c2f_tripletat.12} parent=19 // pred_check
          %p166 = pneg %p52
        $region22: #{c2f_tripletat.12} parent=19 // pred_check_branch
          %168 = sbr.rel (%p166) target = $region24
        $region23: #{c2f_tripletat.12} parent=19 // pred_region
          %p169 = scmp.lt.s32.totalorder %s11, 1
          %s170 = scalar_select %p169, %s11, 1
          %s171 = smul.addr %s170, 32
          %s172 = smul.addr %s171, 4
          %s173 = scalar_lea.vmem %s1, %s172
        $region24: #{c2f_tripletat.12} parent=19 // pred_fallthru
          _
        // Predicated region
        $region25: #{c2f_tripletat.12} parent=19 // pred_check
          %p174 = pneg %p78
        $region26: #{c2f_tripletat.12} parent=19 // pred_check_branch
          %176 = sbr.rel (%p174) target = $region28
        $region27: #{c2f_tripletat.12} parent=19 // pred_region
          %p177 = scmp.lt.s32.totalorder %s11, 1
          %s178 = scalar_select %p177, %s11, 1
          %s179 = smul.addr %s178, 32
          %s180 = smul.addr %s179, 4
          %s181 = scalar_lea.vmem %s2, %s180
        $region28: #{c2f_tripletat.12} parent=19 // pred_fallthru
          _
        // Predicated region
        $region29: #{c2f_tripletat.12} parent=19 // pred_check
          %p182 = pneg %p104
        $region30: #{c2f_tripletat.12} parent=19 // pred_check_branch
          %184 = sbr.rel (%p182) target = $region32
        $region31: #{c2f_tripletat.12} parent=19 // pred_region
          %p185 = scmp.lt.s32.totalorder %s11, 1
          %s186 = scalar_select %p185, %s11, 1
          %s187 = smul.addr %s186, 32
          %s188 = smul.addr %s187, 4
          %s189 = scalar_lea.vmem %s3, %s188
        $region32: #{c2f_tripletat.12} parent=19 // pred_fallthru
          _
      $region20: #{c2f_tripletat.12} parent=5 // pred_fallthru
        _
      %p190 = scmp.le.s32.totalorder 1, %s11
      %p191 = scmp.lt.s32.totalorder %s11, 3
      %p192 = pnand %p190, %p191
      %p193 = pneg %p192
      // Predicated region
      $region33: #{c2f_tripletat.12} parent=5 // pred_check
        _
      $region34: #{c2f_tripletat.12} parent=5 // pred_check_branch
        %195 = sbr.rel (%p192) target = $region36
      $region35: #{c2f_tripletat.12} parent=5 // pred_region
        %s196 = ssub.s32 %s11, 1
        // Predicated region
        $region37: #{c2f_tripletat.12} parent=35 // pred_check
          %p197 = pneg %p32
        $region38: #{c2f_tripletat.12} parent=35 // pred_check_branch
          %199 = sbr.rel (%p197) target = $region40
        $region39: #{c2f_tripletat.12} parent=35 // pred_region
          %200 = dma.done [#allocation4], 16
        $region40: #{c2f_tripletat.12} parent=35 // pred_fallthru
          _
        %201 = sfence
        %p202 = pneg %p32
        %p203 = pneg %p29
        %p204 = scmp.lt.s32.totalorder %s16, 1
        %s205 = scalar_select %p204, %s16, 1
        %s206 = smul.addr %s205, 32
        %s207 = smul.addr %s206, 4
        %s208 = scalar_lea.vmem %s1, %s207
        %p209 = pneg %p58
        %p210 = pneg %p55
        %p211 = scmp.lt.s32.totalorder %s16, 1
        %s212 = scalar_select %p211, %s16, 1
        %s213 = smul.addr %s212, 32
        %s214 = smul.addr %s213, 4
        %s215 = scalar_lea.vmem %s2, %s214
        %p216 = pneg %p84
        %p217 = pneg %p81
        %p218 = scmp.lt.s32.totalorder %s16, 1
        %s219 = scalar_select %p218, %s16, 1
        %s220 = smul.addr %s219, 32
        %s221 = smul.addr %s220, 4
        %s222 = scalar_lea.vmem %s3, %s221
        %p223 = pneg %p110
        %p224 = pneg %p107
        %p225 = pneg %p136
        %p226 = pneg %p133
        %p227 = scmp.lt.s32.totalorder %s16, 1
        %s228 = scalar_select %p227, %s16, 1
        %s229 = smul.addr %s228, 32
        %s230 = smul.addr %s229, 4
        %s231 = scalar_lea.vmem %s4, %s230
        %p232 = scmp.lt.s32.totalorder %s16, 1
        %s233 = scalar_select %p232, %s16, 1
        %s234 = smul.addr %s233, 32
        %s235 = smul.addr %s234, 4
        %s236 = scalar_lea.vmem %s1, %s235
        %p237 = scmp.lt.s32.totalorder %s16, 1
        %s238 = scalar_select %p237, %s16, 1
        %s239 = smul.addr %s238, 32
        %s240 = smul.addr %s239, 4
        %s241 = scalar_lea.vmem %s2, %s240
        %p242 = scmp.lt.s32.totalorder %s16, 1
        %s243 = scalar_select %p242, %s16, 1
        %s244 = smul.addr %s243, 32
        %s245 = smul.addr %s244, 4
        %s246 = scalar_lea.vmem %s3, %s245
        %p247 = scmp.lt.s32.totalorder %s16, 1
        %s248 = scalar_select %p247, %s16, 1
        %s249 = smul.addr %s248, 32
        %s250 = smul.addr %s249, 4
        %s251 = scalar_lea.vmem %s4, %s250
        %v252 = vld [vmem:[%s236] sm:$0xf]
        %v253 = vld [vmem:[%s236 + $0x4] sm:$0xf]
        %v254 = vld [vmem:[%s236 + $0x8] sm:$0xf]
        %v255 = vld [vmem:[%s236 + $0xc] sm:$0xf]
        %v256 = vld [vmem:[%s236 + $0x10] sm:$0xf]
        %v257 = vld [vmem:[%s236 + $0x14] sm:$0xf]
        %v258 = vld [vmem:[%s236 + $0x18] sm:$0xf]
        %v259 = vld [vmem:[%s236 + $0x1c] sm:$0xf]
        %v260 = vld [vmem:[%s236 + $0x20] sm:$0xf]
        %v261 = vld [vmem:[%s236 + $0x24] sm:$0xf]
        %v262 = vld [vmem:[%s236 + $0x28] sm:$0xf]
        %v263 = vld [vmem:[%s236 + $0x2c] sm:$0xf]
        %v264 = vld [vmem:[%s236 + $0x30] sm:$0xf]
        %v265 = vld [vmem:[%s236 + $0x34] sm:$0xf]
        %v266 = vld [vmem:[%s236 + $0x38] sm:$0xf]
        %v267 = vld [vmem:[%s236 + $0x3c] sm:$0xf]
        %v268 = vld [vmem:[%s236 + $0x40] sm:$0xf]
        %v269 = vld [vmem:[%s236 + $0x44] sm:$0xf]
        %v270 = vld [vmem:[%s236 + $0x48] sm:$0xf]
        %v271 = vld [vmem:[%s236 + $0x4c] sm:$0xf]
        %v272 = vld [vmem:[%s236 + $0x50] sm:$0xf]
        %v273 = vld [vmem:[%s236 + $0x54] sm:$0xf]
        %v274 = vld [vmem:[%s236 + $0x58] sm:$0xf]
        %v275 = vld [vmem:[%s236 + $0x5c] sm:$0xf]
        %v276 = vld [vmem:[%s236 + $0x60] sm:$0xf]
        %v277 = vld [vmem:[%s236 + $0x64] sm:$0xf]
        %v278 = vld [vmem:[%s236 + $0x68] sm:$0xf]
        %v279 = vld [vmem:[%s236 + $0x6c] sm:$0xf]
        %v280 = vld [vmem:[%s236 + $0x70] sm:$0xf]
        %v281 = vld [vmem:[%s236 + $0x74] sm:$0xf]
        %v282 = vld [vmem:[%s236 + $0x78] sm:$0xf]
        %v283 = vld [vmem:[%s236 + $0x7c] sm:$0xf]
        %v284 = vunpack.c.l.bf16 %v252
        %v285 = vunpack.c.l.bf16 %v253
        %v286 = vunpack.c.l.bf16 %v254
        %v287 = vunpack.c.l.bf16 %v255
        %v288 = vunpack.c.l.bf16 %v256
        %v289 = vunpack.c.l.bf16 %v257
        %v290 = vunpack.c.l.bf16 %v258
        %v291 = vunpack.c.l.bf16 %v259
        %v292 = vunpack.c.l.bf16 %v260
        %v293 = vunpack.c.l.bf16 %v261
        %v294 = vunpack.c.l.bf16 %v262
        %v295 = vunpack.c.l.bf16 %v263
        %v296 = vunpack.c.l.bf16 %v264
        %v297 = vunpack.c.l.bf16 %v265
        %v298 = vunpack.c.l.bf16 %v266
        %v299 = vunpack.c.l.bf16 %v267
        %v300 = vunpack.c.l.bf16 %v268
        %v301 = vunpack.c.l.bf16 %v269
        %v302 = vunpack.c.l.bf16 %v270
        %v303 = vunpack.c.l.bf16 %v271
        %v304 = vunpack.c.l.bf16 %v272
        %v305 = vunpack.c.l.bf16 %v273
        %v306 = vunpack.c.l.bf16 %v274
        %v307 = vunpack.c.l.bf16 %v275
        %v308 = vunpack.c.l.bf16 %v276
        %v309 = vunpack.c.l.bf16 %v277
        %v310 = vunpack.c.l.bf16 %v278
        %v311 = vunpack.c.l.bf16 %v279
        %v312 = vunpack.c.l.bf16 %v280
        %v313 = vunpack.c.l.bf16 %v281
        %v314 = vunpack.c.l.bf16 %v282
        %v315 = vunpack.c.l.bf16 %v283
        %vm316 = vcmask 179200
        %317 = vst.msk [vmem:[#allocation2] sm:$0xff] %vm316, 0.0
        %318 = vst.msk [vmem:[#allocation2 + $0x8] sm:$0xff] %vm316, 0.0
        %vm319 = vcmask 177152
        %320 = vst.msk [vmem:[#allocation2 + $0x10] sm:$0x3f] %vm319, 0.0
        %321 = vst.msk [vmem:[#allocation2 + $0x18] sm:$0xff] %vm316, 0.0
        %322 = vst.msk [vmem:[#allocation2 + $0x20] sm:$0xff] %vm316, 0.0
        %323 = vst.msk [vmem:[#allocation2 + $0x28] sm:$0x3f] %vm319, 0.0
        %vm324 = vcmask 130048
        %v325 = vsel %vm324, %v284, -inf
        %v326 = vsel %vm324, %v286, -inf
        %v327 = vsel %vm324, %v288, -inf
        %v328 = vmax.f32 %v325, %v327
        %v329 = vsel %vm324, %v290, -inf
        %v330 = vmax.f32 %v326, %v329
        %v331 = vsel %vm324, %v292, -inf
        %v332 = vmax.f32 %v328, %v331
        %v333 = vsel %vm324, %v294, -inf
        %v334 = vmax.f32 %v330, %v333
        %v335 = vsel %vm324, %v296, -inf
        %v336 = vmax.f32 %v332, %v335
        %v337 = vsel %vm324, %v298, -inf
        %v338 = vmax.f32 %v334, %v337
        %v339 = vsel %vm324, %v300, -inf
        %v340 = vmax.f32 %v336, %v339
        %v341 = vsel %vm324, %v302, -inf
        %v342 = vmax.f32 %v338, %v341
        %v343 = vsel %vm324, %v304, -inf
        %v344 = vmax.f32 %v340, %v343
        %v345 = vsel %vm324, %v306, -inf
        %v346 = vmax.f32 %v342, %v345
        %v347 = vsel %vm324, %v308, -inf
        %v348 = vmax.f32 %v344, %v347
        %v349 = vsel %vm324, %v310, -inf
        %v350 = vmax.f32 %v346, %v349
        %v351 = vsel %vm324, %v312, -inf
        %v352 = vmax.f32 %v348, %v351
        %v353 = vsel %vm324, %v314, -inf
        %v354 = vmax.f32 %v350, %v353
        %v355 = vmax.f32 %v352, %v354
        %v356 = vsel %vm324, %v285, -inf
        %v357 = vsel %vm324, %v287, -inf
        %v358 = vsel %vm324, %v289, -inf
        %v359 = vmax.f32 %v356, %v358
        %v360 = vsel %vm324, %v291, -inf
        %v361 = vmax.f32 %v357, %v360
        %v362 = vsel %vm324, %v293, -inf
        %v363 = vmax.f32 %v359, %v362
        %v364 = vsel %vm324, %v295, -inf
        %v365 = vmax.f32 %v361, %v364
        %v366 = vsel %vm324, %v297, -inf
        %v367 = vmax.f32 %v363, %v366
        %v368 = vsel %vm324, %v299, -inf
        %v369 = vmax.f32 %v365, %v368
        %v370 = vsel %vm324, %v301, -inf
        %v371 = vmax.f32 %v367, %v370
        %v372 = vsel %vm324, %v303, -inf
        %v373 = vmax.f32 %v369, %v372
        %v374 = vsel %vm324, %v305, -inf
        %v375 = vmax.f32 %v371, %v374
        %v376 = vsel %vm324, %v307, -inf
        %v377 = vmax.f32 %v373, %v376
        %v378 = vsel %vm324, %v309, -inf
        %v379 = vmax.f32 %v375, %v378
        %v380 = vsel %vm324, %v311, -inf
        %v381 = vmax.f32 %v377, %v380
        %v382 = vsel %vm324, %v313, -inf
        %v383 = vmax.f32 %v379, %v382
        %v384 = vsel %vm324, %v315, -inf
        %v385 = vmax.f32 %v381, %v384
        %v386 = vmax.f32 %v383, %v385
        %389 = vrot.lane.b32.xlu0 %v355, 3
        %v390 = vpop.permute.xlu0 %389
        %391 = vrot.lane.b32.xlu0 %v386, 3
        %v392 = vpop.permute.xlu0 %391
        %vm395 = vcmask 154648
        %396 = vst.msk [vmem:[#allocation2 + $0x3] sm:$0xff] %vm395, %v390
        %397 = vst.msk [vmem:[#allocation2 + $0xb] sm:$0xff] %vm395, %v392
        %v398 = vsel %vm324, %v284, 0.0
        %v399 = vsel %vm324, %v286, 0.0
        %v400 = vadd.f32 %v398, %v399
        %v401 = vsel %vm324, %v288, 0.0
        %v402 = vadd.f32 %v400, %v401
        %v403 = vsel %vm324, %v290, 0.0
        %v404 = vadd.f32 %v402, %v403
        %v405 = vsel %vm324, %v292, 0.0
        %v406 = vadd.f32 %v404, %v405
        %v407 = vsel %vm324, %v294, 0.0
        %v408 = vadd.f32 %v406, %v407
        %v409 = vsel %vm324, %v296, 0.0
        %v410 = vadd.f32 %v408, %v409
        %v411 = vsel %vm324, %v298, 0.0
        %v412 = vadd.f32 %v410, %v411
        %v413 = vsel %vm324, %v300, 0.0
        %v414 = vadd.f32 %v412, %v413
        %v415 = vsel %vm324, %v302, 0.0
        %v416 = vadd.f32 %v414, %v415
        %v417 = vsel %vm324, %v304, 0.0
        %v418 = vadd.f32 %v416, %v417
        %v419 = vsel %vm324, %v306, 0.0
        %v420 = vadd.f32 %v418, %v419
        %v421 = vsel %vm324, %v308, 0.0
        %v422 = vadd.f32 %v420, %v421
        %v423 = vsel %vm324, %v310, 0.0
        %v424 = vadd.f32 %v422, %v423
        %v425 = vsel %vm324, %v312, 0.0
        %v426 = vadd.f32 %v424, %v425
        %v427 = vsel %vm324, %v314, 0.0
        %v428 = vadd.f32 %v426, %v427
        %v429 = vsel %vm324, %v285, 0.0
        %v430 = vsel %vm324, %v287, 0.0
        %v431 = vadd.f32 %v429, %v430
        %v432 = vsel %vm324, %v289, 0.0
        %v433 = vadd.f32 %v431, %v432
        %v434 = vsel %vm324, %v291, 0.0
        %v435 = vadd.f32 %v433, %v434
        %v436 = vsel %vm324, %v293, 0.0
        %v437 = vadd.f32 %v435, %v436
        %v438 = vsel %vm324, %v295, 0.0
        %v439 = vadd.f32 %v437, %v438
        %v440 = vsel %vm324, %v297, 0.0
        %v441 = vadd.f32 %v439, %v440
        %v442 = vsel %vm324, %v299, 0.0
        %v443 = vadd.f32 %v441, %v442
        %v444 = vsel %vm324, %v301, 0.0
        %v445 = vadd.f32 %v443, %v444
        %v446 = vsel %vm324, %v303, 0.0
        %v447 = vadd.f32 %v445, %v446
        %v448 = vsel %vm324, %v305, 0.0
        %v449 = vadd.f32 %v447, %v448
        %v450 = vsel %vm324, %v307, 0.0
        %v451 = vadd.f32 %v449, %v450
        %v452 = vsel %vm324, %v309, 0.0
        %v453 = vadd.f32 %v451, %v452
        %v454 = vsel %vm324, %v311, 0.0
        %v455 = vadd.f32 %v453, %v454
        %v456 = vsel %vm324, %v313, 0.0
        %v457 = vadd.f32 %v455, %v456
        %v458 = vsel %vm324, %v315, 0.0
        %v459 = vadd.f32 %v457, %v458
        %v460 = vrcp.pop 16.0
        %v461 = vmul.f32 %v428, %v460
        %v462 = vmul.f32 %v459, %v460
        %465 = vrot.lane.b32.xlu0 %v461, 3
        %v466 = vpop.permute.xlu0 %465
        %467 = vrot.lane.b32.xlu0 %v462, 3
        %v468 = vpop.permute.xlu0 %467
        %s471 = scalar_lea.vmem [#allocation2], 24
        %472 = vst.msk [vmem:[%s471 + $0x3] sm:$0xff] %vm395, %v466
        %473 = vst.msk [vmem:[%s471 + $0xb] sm:$0xff] %vm395, %v468
        %s474 = sld [smem:[#allocation3]]
        %v475 = vld [vmem:[#allocation2] sm:$0xff]
        %v476 = vld [vmem:[#allocation2 + $0x8] sm:$0xff]
        %v477 = vstv %s474
        %v478 = vmul.f32 %v477, %v475
        %v479 = vmul.f32 %v477, %v476
        %v480 = vadd.f32 %v478, 0.0
        %v481 = vadd.f32 %v479, 0.0
        %s482 = sld [smem:[#allocation3 + $0x1]]
        %v483 = vstv %s482
        %v484 = vmul.f32 %v483, %v475
        %v485 = vmul.f32 %v483, %v476
        %488 = vrot.lane.b32.xlu0 %v484, 127
        %v489 = vpop.permute.xlu0 %488
        %490 = vrot.lane.b32.xlu0 %v485, 127
        %v491 = vpop.permute.xlu0 %490
        %v494 = vadd.f32 %v480, %v489
        %v495 = vadd.f32 %v481, %v491
        %s496 = sld [smem:[#allocation3 + $0x2]]
        %v497 = vstv %s496
        %v498 = vmul.f32 %v497, %v475
        %v499 = vmul.f32 %v497, %v476
        %502 = vrot.lane.b32.xlu0 %v498, 126
        %v503 = vpop.permute.xlu0 %502
        %504 = vrot.lane.b32.xlu0 %v499, 126
        %v505 = vpop.permute.xlu0 %504
        %v508 = vadd.f32 %v494, %v503
        %v509 = vadd.f32 %v495, %v505
        %s510 = sld [smem:[#allocation3 + $0x3]]
        %v511 = vstv %s510
        %v512 = vmul.f32 %v511, %v475
        %v513 = vmul.f32 %v511, %v476
        %516 = vrot.lane.b32.xlu0 %v512, 125
        %v517 = vpop.permute.xlu0 %516
        %518 = vrot.lane.b32.xlu0 %v513, 125
        %v519 = vpop.permute.xlu0 %518
        %v522 = vadd.f32 %v508, %v517
        %v523 = vadd.f32 %v509, %v519
        %s524 = sld [smem:[#allocation3 + $0x4]]
        %v525 = vstv %s524
        %v526 = vmul.f32 %v525, %v475
        %v527 = vmul.f32 %v525, %v476
        %530 = vrot.lane.b32.xlu0 %v526, 124
        %v531 = vpop.permute.xlu0 %530
        %532 = vrot.lane.b32.xlu0 %v527, 124
        %v533 = vpop.permute.xlu0 %532
        %v536 = vadd.f32 %v522, %v531
        %v537 = vadd.f32 %v523, %v533
        %s538 = sld [smem:[#allocation3 + $0x5]]
        %v539 = vstv %s538
        %v540 = vmul.f32 %v539, %v475
        %v541 = vmul.f32 %v539, %v476
        %544 = vrot.lane.b32.xlu0 %v540, 123
        %v545 = vpop.permute.xlu0 %544
        %546 = vrot.lane.b32.xlu0 %v541, 123
        %v547 = vpop.permute.xlu0 %546
        %v550 = vadd.f32 %v536, %v545
        %v551 = vadd.f32 %v537, %v547
        %s552 = sld [smem:[#allocation3 + $0x6]]
        %v553 = vstv %s552
        %v554 = vmul.f32 %v553, %v475
        %v555 = vmul.f32 %v553, %v476
        %558 = vrot.lane.b32.xlu0 %v554, 122
        %v559 = vpop.permute.xlu0 %558
        %560 = vrot.lane.b32.xlu0 %v555, 122
        %v561 = vpop.permute.xlu0 %560
        %v564 = vadd.f32 %v550, %v559
        %v565 = vadd.f32 %v551, %v561
        %s566 = sld [smem:[#allocation3 + $0x7]]
        %v567 = vld [vmem:[#allocation2 + $0x1] sm:$0xff]
        %v568 = vld [vmem:[#allocation2 + $0x9] sm:$0xff]
        %v569 = vstv %s566
        %v570 = vmul.f32 %v569, %v567
        %v571 = vmul.f32 %v569, %v568
        %v572 = vadd.f32 %v564, %v570
        %v573 = vadd.f32 %v565, %v571
        %s574 = sld [smem:[#allocation3 + $0x8]]
        %v575 = vstv %s574
        %v576 = vmul.f32 %v575, %v567
        %v577 = vmul.f32 %v575, %v568
        %580 = vrot.lane.b32.xlu0 %v576, 127
        %v581 = vpop.permute.xlu0 %580
        %582 = vrot.lane.b32.xlu0 %v577, 127
        %v583 = vpop.permute.xlu0 %582
        %v586 = vadd.f32 %v572, %v581
        %v587 = vadd.f32 %v573, %v583
        %s588 = sld [smem:[#allocation3 + $0x9]]
        %v589 = vstv %s588
        %v590 = vmul.f32 %v589, %v567
        %v591 = vmul.f32 %v589, %v568
        %594 = vrot.lane.b32.xlu0 %v590, 126
        %v595 = vpop.permute.xlu0 %594
        %596 = vrot.lane.b32.xlu0 %v591, 126
        %v597 = vpop.permute.xlu0 %596
        %v600 = vadd.f32 %v586, %v595
        %v601 = vadd.f32 %v587, %v597
        %s602 = sld [smem:[#allocation3 + $0xa]]
        %v603 = vstv %s602
        %v604 = vmul.f32 %v603, %v567
        %v605 = vmul.f32 %v603, %v568
        %608 = vrot.lane.b32.xlu0 %v604, 125
        %v609 = vpop.permute.xlu0 %608
        %610 = vrot.lane.b32.xlu0 %v605, 125
        %v611 = vpop.permute.xlu0 %610
        %v614 = vadd.f32 %v600, %v609
        %v615 = vadd.f32 %v601, %v611
        %s616 = sld [smem:[#allocation3 + $0xb]]
        %v617 = vstv %s616
        %v618 = vmul.f32 %v617, %v567
        %v619 = vmul.f32 %v617, %v568
        %622 = vrot.lane.b32.xlu0 %v618, 124
        %v623 = vpop.permute.xlu0 %622
        %624 = vrot.lane.b32.xlu0 %v619, 124
        %v625 = vpop.permute.xlu0 %624
        %v628 = vadd.f32 %v614, %v623
        %v629 = vadd.f32 %v615, %v625
        %s630 = sld [smem:[#allocation3 + $0xc]]
        %v631 = vstv %s630
        %v632 = vmul.f32 %v631, %v567
        %v633 = vmul.f32 %v631, %v568
        %636 = vrot.lane.b32.xlu0 %v632, 123
        %v637 = vpop.permute.xlu0 %636
        %638 = vrot.lane.b32.xlu0 %v633, 123
        %v639 = vpop.permute.xlu0 %638
        %v642 = vadd.f32 %v628, %v637
        %v643 = vadd.f32 %v629, %v639
        %s644 = sld [smem:[#allocation3 + $0xd]]
        %v645 = vstv %s644
        %v646 = vmul.f32 %v645, %v567
        %v647 = vmul.f32 %v645, %v568
        %650 = vrot.lane.b32.xlu0 %v646, 122
        %v651 = vpop.permute.xlu0 %650
        %652 = vrot.lane.b32.xlu0 %v647, 122
        %v653 = vpop.permute.xlu0 %652
        %v656 = vadd.f32 %v642, %v651
        %v657 = vadd.f32 %v643, %v653
        %s658 = sld [smem:[#allocation3 + $0xe]]
        %v659 = vld [vmem:[#allocation2 + $0x2] sm:$0xff]
        %v660 = vld [vmem:[#allocation2 + $0xa] sm:$0xff]
        %v661 = vstv %s658
        %v662 = vmul.f32 %v661, %v659
        %v663 = vmul.f32 %v661, %v660
        %v664 = vadd.f32 %v656, %v662
        %v665 = vadd.f32 %v657, %v663
        %s666 = sld [smem:[#allocation3 + $0xf]]
        %v667 = vstv %s666
        %v668 = vmul.f32 %v667, %v659
        %v669 = vmul.f32 %v667, %v660
        %672 = vrot.lane.b32.xlu0 %v668, 127
        %v673 = vpop.permute.xlu0 %672
        %674 = vrot.lane.b32.xlu0 %v669, 127
        %v675 = vpop.permute.xlu0 %674
        %v678 = vadd.f32 %v664, %v673
        %v679 = vadd.f32 %v665, %v675
        %s680 = sld [smem:[#allocation3 + $0x10]]
        %v681 = vstv %s680
        %v682 = vmul.f32 %v681, %v659
        %v683 = vmul.f32 %v681, %v660
        %686 = vrot.lane.b32.xlu0 %v682, 126
        %v687 = vpop.permute.xlu0 %686
        %688 = vrot.lane.b32.xlu0 %v683, 126
        %v689 = vpop.permute.xlu0 %688
        %v692 = vadd.f32 %v678, %v687
        %v693 = vadd.f32 %v679, %v689
        %s694 = sld [smem:[#allocation3 + $0x11]]
        %v695 = vstv %s694
        %v696 = vmul.f32 %v695, %v659
        %v697 = vmul.f32 %v695, %v660
        %700 = vrot.lane.b32.xlu0 %v696, 125
        %v701 = vpop.permute.xlu0 %700
        %702 = vrot.lane.b32.xlu0 %v697, 125
        %v703 = vpop.permute.xlu0 %702
        %v706 = vadd.f32 %v692, %v701
        %v707 = vadd.f32 %v693, %v703
        %s708 = sld [smem:[#allocation3 + $0x12]]
        %v709 = vstv %s708
        %v710 = vmul.f32 %v709, %v659
        %v711 = vmul.f32 %v709, %v660
        %714 = vrot.lane.b32.xlu0 %v710, 124
        %v715 = vpop.permute.xlu0 %714
        %716 = vrot.lane.b32.xlu0 %v711, 124
        %v717 = vpop.permute.xlu0 %716
        %v720 = vadd.f32 %v706, %v715
        %v721 = vadd.f32 %v707, %v717
        %s722 = sld [smem:[#allocation3 + $0x13]]
        %v723 = vstv %s722
        %v724 = vmul.f32 %v723, %v659
        %v725 = vmul.f32 %v723, %v660
        %728 = vrot.lane.b32.xlu0 %v724, 123
        %v729 = vpop.permute.xlu0 %728
        %730 = vrot.lane.b32.xlu0 %v725, 123
        %v731 = vpop.permute.xlu0 %730
        %v734 = vadd.f32 %v720, %v729
        %v735 = vadd.f32 %v721, %v731
        %s736 = sld [smem:[#allocation3 + $0x14]]
        %v737 = vstv %s736
        %v738 = vmul.f32 %v737, %v659
        %v739 = vmul.f32 %v737, %v660
        %742 = vrot.lane.b32.xlu0 %v738, 122
        %v743 = vpop.permute.xlu0 %742
        %744 = vrot.lane.b32.xlu0 %v739, 122
        %v745 = vpop.permute.xlu0 %744
        %v748 = vadd.f32 %v734, %v743
        %v749 = vadd.f32 %v735, %v745
        %s750 = sld [smem:[#allocation3 + $0x15]]
        %v751 = vld [vmem:[#allocation2 + $0x3] sm:$0xff]
        %v752 = vld [vmem:[#allocation2 + $0xb] sm:$0xff]
        %v753 = vstv %s750
        %v754 = vmul.f32 %v753, %v751
        %v755 = vmul.f32 %v753, %v752
        %v756 = vadd.f32 %v748, %v754
        %v757 = vadd.f32 %v749, %v755
        %s758 = sld [smem:[#allocation3 + $0x16]]
        %v759 = vstv %s758
        %v760 = vmul.f32 %v759, %v751
        %v761 = vmul.f32 %v759, %v752
        %764 = vrot.lane.b32.xlu0 %v760, 127
        %v765 = vpop.permute.xlu0 %764
        %766 = vrot.lane.b32.xlu0 %v761, 127
        %v767 = vpop.permute.xlu0 %766
        %v770 = vadd.f32 %v756, %v765
        %v771 = vadd.f32 %v757, %v767
        %s772 = sld [smem:[#allocation3 + $0x17]]
        %v773 = vstv %s772
        %v774 = vmul.f32 %v773, %v751
        %v775 = vmul.f32 %v773, %v752
        %778 = vrot.lane.b32.xlu0 %v774, 126
        %v779 = vpop.permute.xlu0 %778
        %780 = vrot.lane.b32.xlu0 %v775, 126
        %v781 = vpop.permute.xlu0 %780
        %v784 = vadd.f32 %v770, %v779
        %v785 = vadd.f32 %v771, %v781
        %s786 = sld [smem:[#allocation3 + $0x18]]
        %v787 = vstv %s786
        %v788 = vmul.f32 %v787, %v751
        %v789 = vmul.f32 %v787, %v752
        %792 = vrot.lane.b32.xlu0 %v788, 125
        %v793 = vpop.permute.xlu0 %792
        %794 = vrot.lane.b32.xlu0 %v789, 125
        %v795 = vpop.permute.xlu0 %794
        %v798 = vadd.f32 %v784, %v793
        %v799 = vadd.f32 %v785, %v795
        %s800 = sld [smem:[#allocation3 + $0x19]]
        %v801 = vstv %s800
        %v802 = vmul.f32 %v801, %v751
        %v803 = vmul.f32 %v801, %v752
        %806 = vrot.lane.b32.xlu0 %v802, 124
        %v807 = vpop.permute.xlu0 %806
        %808 = vrot.lane.b32.xlu0 %v803, 124
        %v809 = vpop.permute.xlu0 %808
        %v812 = vadd.f32 %v798, %v807
        %v813 = vadd.f32 %v799, %v809
        %s814 = sld [smem:[#allocation3 + $0x1a]]
        %v815 = vstv %s814
        %v816 = vmul.f32 %v815, %v751
        %v817 = vmul.f32 %v815, %v752
        %820 = vrot.lane.b32.xlu0 %v816, 123
        %v821 = vpop.permute.xlu0 %820
        %822 = vrot.lane.b32.xlu0 %v817, 123
        %v823 = vpop.permute.xlu0 %822
        %v826 = vadd.f32 %v812, %v821
        %v827 = vadd.f32 %v813, %v823
        %s828 = sld [smem:[#allocation3 + $0x1b]]
        %v829 = vstv %s828
        %v830 = vmul.f32 %v829, %v751
        %v831 = vmul.f32 %v829, %v752
        %834 = vrot.lane.b32.xlu0 %v830, 122
        %v835 = vpop.permute.xlu0 %834
        %836 = vrot.lane.b32.xlu0 %v831, 122
        %v837 = vpop.permute.xlu0 %836
        %v840 = vadd.f32 %v826, %v835
        %v841 = vadd.f32 %v827, %v837
        %s842 = sld [smem:[#allocation3 + $0x1c]]
        %v843 = vld [vmem:[#allocation2 + $0x4] sm:$0xff]
        %v844 = vld [vmem:[#allocation2 + $0xc] sm:$0xff]
        %v845 = vstv %s842
        %v846 = vmul.f32 %v845, %v843
        %v847 = vmul.f32 %v845, %v844
        %v848 = vadd.f32 %v840, %v846
        %v849 = vadd.f32 %v841, %v847
        %s850 = sld [smem:[#allocation3 + $0x1d]]
        %v851 = vstv %s850
        %v852 = vmul.f32 %v851, %v843
        %v853 = vmul.f32 %v851, %v844
        %856 = vrot.lane.b32.xlu0 %v852, 127
        %v857 = vpop.permute.xlu0 %856
        %858 = vrot.lane.b32.xlu0 %v853, 127
        %v859 = vpop.permute.xlu0 %858
        %v862 = vadd.f32 %v848, %v857
        %v863 = vadd.f32 %v849, %v859
        %s864 = sld [smem:[#allocation3 + $0x1e]]
        %v865 = vstv %s864
        %v866 = vmul.f32 %v865, %v843
        %v867 = vmul.f32 %v865, %v844
        %870 = vrot.lane.b32.xlu0 %v866, 126
        %v871 = vpop.permute.xlu0 %870
        %872 = vrot.lane.b32.xlu0 %v867, 126
        %v873 = vpop.permute.xlu0 %872
        %v876 = vadd.f32 %v862, %v871
        %v877 = vadd.f32 %v863, %v873
        %s878 = sld [smem:[#allocation3 + $0x1f]]
        %v879 = vstv %s878
        %v880 = vmul.f32 %v879, %v843
        %v881 = vmul.f32 %v879, %v844
        %884 = vrot.lane.b32.xlu0 %v880, 125
        %v885 = vpop.permute.xlu0 %884
        %886 = vrot.lane.b32.xlu0 %v881, 125
        %v887 = vpop.permute.xlu0 %886
        %v890 = vadd.f32 %v876, %v885
        %v891 = vadd.f32 %v877, %v887
        %s892 = sld [smem:[#allocation3 + $0x20]]
        %v893 = vstv %s892
        %v894 = vmul.f32 %v893, %v843
        %v895 = vmul.f32 %v893, %v844
        %898 = vrot.lane.b32.xlu0 %v894, 124
        %v899 = vpop.permute.xlu0 %898
        %900 = vrot.lane.b32.xlu0 %v895, 124
        %v901 = vpop.permute.xlu0 %900
        %v904 = vadd.f32 %v890, %v899
        %v905 = vadd.f32 %v891, %v901
        %s906 = sld [smem:[#allocation3 + $0x21]]
        %v907 = vstv %s906
        %v908 = vmul.f32 %v907, %v843
        %v909 = vmul.f32 %v907, %v844
        %912 = vrot.lane.b32.xlu0 %v908, 123
        %v913 = vpop.permute.xlu0 %912
        %914 = vrot.lane.b32.xlu0 %v909, 123
        %v915 = vpop.permute.xlu0 %914
        %v918 = vadd.f32 %v904, %v913
        %v919 = vadd.f32 %v905, %v915
        %s920 = sld [smem:[#allocation3 + $0x22]]
        %v921 = vstv %s920
        %v922 = vmul.f32 %v921, %v843
        %v923 = vmul.f32 %v921, %v844
        %926 = vrot.lane.b32.xlu0 %v922, 122
        %v927 = vpop.permute.xlu0 %926
        %928 = vrot.lane.b32.xlu0 %v923, 122
        %v929 = vpop.permute.xlu0 %928
        %v932 = vadd.f32 %v918, %v927
        %v933 = vadd.f32 %v919, %v929
        %s934 = sld [smem:[#allocation3 + $0x23]]
        %v935 = vld [vmem:[#allocation2 + $0x5] sm:$0xff]
        %v936 = vld [vmem:[#allocation2 + $0xd] sm:$0xff]
        %v937 = vstv %s934
        %v938 = vmul.f32 %v937, %v935
        %v939 = vmul.f32 %v937, %v936
        %v940 = vadd.f32 %v932, %v938
        %v941 = vadd.f32 %v933, %v939
        %s942 = sld [smem:[#allocation3 + $0x24]]
        %v943 = vstv %s942
        %v944 = vmul.f32 %v943, %v935
        %v945 = vmul.f32 %v943, %v936
        %948 = vrot.lane.b32.xlu0 %v944, 127
        %v949 = vpop.permute.xlu0 %948
        %950 = vrot.lane.b32.xlu0 %v945, 127
        %v951 = vpop.permute.xlu0 %950
        %v954 = vadd.f32 %v940, %v949
        %v955 = vadd.f32 %v941, %v951
        %s956 = sld [smem:[#allocation3 + $0x25]]
        %v957 = vstv %s956
        %v958 = vmul.f32 %v957, %v935
        %v959 = vmul.f32 %v957, %v936
        %962 = vrot.lane.b32.xlu0 %v958, 126
        %v963 = vpop.permute.xlu0 %962
        %964 = vrot.lane.b32.xlu0 %v959, 126
        %v965 = vpop.permute.xlu0 %964
        %v968 = vadd.f32 %v954, %v963
        %v969 = vadd.f32 %v955, %v965
        %s970 = sld [smem:[#allocation3 + $0x26]]
        %v971 = vstv %s970
        %v972 = vmul.f32 %v971, %v935
        %v973 = vmul.f32 %v971, %v936
        %976 = vrot.lane.b32.xlu0 %v972, 125
        %v977 = vpop.permute.xlu0 %976
        %978 = vrot.lane.b32.xlu0 %v973, 125
        %v979 = vpop.permute.xlu0 %978
        %v982 = vadd.f32 %v968, %v977
        %v983 = vadd.f32 %v969, %v979
        %s984 = sld [smem:[#allocation3 + $0x27]]
        %v985 = vstv %s984
        %v986 = vmul.f32 %v985, %v935
        %v987 = vmul.f32 %v985, %v936
        %990 = vrot.lane.b32.xlu0 %v986, 124
        %v991 = vpop.permute.xlu0 %990
        %992 = vrot.lane.b32.xlu0 %v987, 124
        %v993 = vpop.permute.xlu0 %992
        %v996 = vadd.f32 %v982, %v991
        %v997 = vadd.f32 %v983, %v993
        %s998 = sld [smem:[#allocation3 + $0x28]]
        %v999 = vstv %s998
        %v1000 = vmul.f32 %v999, %v935
        %v1001 = vmul.f32 %v999, %v936
        %1004 = vrot.lane.b32.xlu0 %v1000, 123
        %v1005 = vpop.permute.xlu0 %1004
        %1006 = vrot.lane.b32.xlu0 %v1001, 123
        %v1007 = vpop.permute.xlu0 %1006
        %v1010 = vadd.f32 %v996, %v1005
        %v1011 = vadd.f32 %v997, %v1007
        %s1012 = sld [smem:[#allocation3 + $0x29]]
        %v1013 = vstv %s1012
        %v1014 = vmul.f32 %v1013, %v935
        %v1015 = vmul.f32 %v1013, %v936
        %1018 = vrot.lane.b32.xlu0 %v1014, 122
        %v1019 = vpop.permute.xlu0 %1018
        %1020 = vrot.lane.b32.xlu0 %v1015, 122
        %v1021 = vpop.permute.xlu0 %1020
        %v1024 = vadd.f32 %v1010, %v1019
        %v1025 = vadd.f32 %v1011, %v1021
        %s1026 = sld [smem:[#allocation3 + $0x2a]]
        %v1027 = vld [vmem:[#allocation2 + $0x6] sm:$0xff]
        %v1028 = vld [vmem:[#allocation2 + $0xe] sm:$0xff]
        %v1029 = vstv %s1026
        %v1030 = vmul.f32 %v1029, %v1027
        %v1031 = vmul.f32 %v1029, %v1028
        %v1032 = vadd.f32 %v1024, %v1030
        %v1033 = vadd.f32 %v1025, %v1031
        %s1034 = sld [smem:[#allocation3 + $0x2b]]
        %v1035 = vstv %s1034
        %v1036 = vmul.f32 %v1035, %v1027
        %v1037 = vmul.f32 %v1035, %v1028
        %1040 = vrot.lane.b32.xlu0 %v1036, 127
        %v1041 = vpop.permute.xlu0 %1040
        %1042 = vrot.lane.b32.xlu0 %v1037, 127
        %v1043 = vpop.permute.xlu0 %1042
        %v1046 = vadd.f32 %v1032, %v1041
        %v1047 = vadd.f32 %v1033, %v1043
        %s1048 = sld [smem:[#allocation3 + $0x2c]]
        %v1049 = vstv %s1048
        %v1050 = vmul.f32 %v1049, %v1027
        %v1051 = vmul.f32 %v1049, %v1028
        %1054 = vrot.lane.b32.xlu0 %v1050, 126
        %v1055 = vpop.permute.xlu0 %1054
        %1056 = vrot.lane.b32.xlu0 %v1051, 126
        %v1057 = vpop.permute.xlu0 %1056
        %v1060 = vadd.f32 %v1046, %v1055
        %v1061 = vadd.f32 %v1047, %v1057
        %s1062 = sld [smem:[#allocation3 + $0x2d]]
        %v1063 = vstv %s1062
        %v1064 = vmul.f32 %v1063, %v1027
        %v1065 = vmul.f32 %v1063, %v1028
        %1068 = vrot.lane.b32.xlu0 %v1064, 125
        %v1069 = vpop.permute.xlu0 %1068
        %1070 = vrot.lane.b32.xlu0 %v1065, 125
        %v1071 = vpop.permute.xlu0 %1070
        %v1074 = vadd.f32 %v1060, %v1069
        %v1075 = vadd.f32 %v1061, %v1071
        %s1076 = sld [smem:[#allocation3 + $0x2e]]
        %v1077 = vstv %s1076
        %v1078 = vmul.f32 %v1077, %v1027
        %v1079 = vmul.f32 %v1077, %v1028
        %1082 = vrot.lane.b32.xlu0 %v1078, 124
        %v1083 = vpop.permute.xlu0 %1082
        %1084 = vrot.lane.b32.xlu0 %v1079, 124
        %v1085 = vpop.permute.xlu0 %1084
        %v1088 = vadd.f32 %v1074, %v1083
        %v1089 = vadd.f32 %v1075, %v1085
        %s1090 = sld [smem:[#allocation3 + $0x2f]]
        %v1091 = vstv %s1090
        %v1092 = vmul.f32 %v1091, %v1027
        %v1093 = vmul.f32 %v1091, %v1028
        %1096 = vrot.lane.b32.xlu0 %v1092, 123
        %v1097 = vpop.permute.xlu0 %1096
        %1098 = vrot.lane.b32.xlu0 %v1093, 123
        %v1099 = vpop.permute.xlu0 %1098
        %v1102 = vadd.f32 %v1088, %v1097
        %v1103 = vadd.f32 %v1089, %v1099
        %s1104 = sld [smem:[#allocation3 + $0x30]]
        %v1105 = vstv %s1104
        %v1106 = vmul.f32 %v1105, %v1027
        %v1107 = vmul.f32 %v1105, %v1028
        %1110 = vrot.lane.b32.xlu0 %v1106, 122
        %v1111 = vpop.permute.xlu0 %1110
        %1112 = vrot.lane.b32.xlu0 %v1107, 122
        %v1113 = vpop.permute.xlu0 %1112
        %v1116 = vadd.f32 %v1102, %v1111
        %v1117 = vadd.f32 %v1103, %v1113
        %s1118 = sld [smem:[#allocation3 + $0x31]]
        %v1119 = vld [vmem:[%s471] sm:$0xff]
        %v1120 = vld [vmem:[%s471 + $0x8] sm:$0xff]
        %v1121 = vstv %s1118
        %v1122 = vmul.f32 %v1121, %v1119
        %v1123 = vmul.f32 %v1121, %v1120
        %v1124 = vadd.f32 %v1116, %v1122
        %v1125 = vadd.f32 %v1117, %v1123
        %s1126 = sld [smem:[#allocation3 + $0x32]]
        %v1127 = vstv %s1126
        %v1128 = vmul.f32 %v1127, %v1119
        %v1129 = vmul.f32 %v1127, %v1120
        %1132 = vrot.lane.b32.xlu0 %v1128, 127
        %v1133 = vpop.permute.xlu0 %1132
        %1134 = vrot.lane.b32.xlu0 %v1129, 127
        %v1135 = vpop.permute.xlu0 %1134
        %v1138 = vadd.f32 %v1124, %v1133
        %v1139 = vadd.f32 %v1125, %v1135
        %s1140 = sld [smem:[#allocation3 + $0x33]]
        %v1141 = vstv %s1140
        %v1142 = vmul.f32 %v1141, %v1119
        %v1143 = vmul.f32 %v1141, %v1120
        %1146 = vrot.lane.b32.xlu0 %v1142, 126
        %v1147 = vpop.permute.xlu0 %1146
        %1148 = vrot.lane.b32.xlu0 %v1143, 126
        %v1149 = vpop.permute.xlu0 %1148
        %v1152 = vadd.f32 %v1138, %v1147
        %v1153 = vadd.f32 %v1139, %v1149
        %s1154 = sld [smem:[#allocation3 + $0x34]]
        %v1155 = vstv %s1154
        %v1156 = vmul.f32 %v1155, %v1119
        %v1157 = vmul.f32 %v1155, %v1120
        %1160 = vrot.lane.b32.xlu0 %v1156, 125
        %v1161 = vpop.permute.xlu0 %1160
        %1162 = vrot.lane.b32.xlu0 %v1157, 125
        %v1163 = vpop.permute.xlu0 %1162
        %v1166 = vadd.f32 %v1152, %v1161
        %v1167 = vadd.f32 %v1153, %v1163
        %s1168 = sld [smem:[#allocation3 + $0x35]]
        %v1169 = vstv %s1168
        %v1170 = vmul.f32 %v1169, %v1119
        %v1171 = vmul.f32 %v1169, %v1120
        %1174 = vrot.lane.b32.xlu0 %v1170, 124
        %v1175 = vpop.permute.xlu0 %1174
        %1176 = vrot.lane.b32.xlu0 %v1171, 124
        %v1177 = vpop.permute.xlu0 %1176
        %v1180 = vadd.f32 %v1166, %v1175
        %v1181 = vadd.f32 %v1167, %v1177
        %s1182 = sld [smem:[#allocation3 + $0x36]]
        %v1183 = vstv %s1182
        %v1184 = vmul.f32 %v1183, %v1119
        %v1185 = vmul.f32 %v1183, %v1120
        %1188 = vrot.lane.b32.xlu0 %v1184, 123
        %v1189 = vpop.permute.xlu0 %1188
        %1190 = vrot.lane.b32.xlu0 %v1185, 123
        %v1191 = vpop.permute.xlu0 %1190
        %v1194 = vadd.f32 %v1180, %v1189
        %v1195 = vadd.f32 %v1181, %v1191
        %s1196 = sld [smem:[#allocation3 + $0x37]]
        %v1197 = vstv %s1196
        %v1198 = vmul.f32 %v1197, %v1119
        %v1199 = vmul.f32 %v1197, %v1120
        %1202 = vrot.lane.b32.xlu0 %v1198, 122
        %v1203 = vpop.permute.xlu0 %1202
        %1204 = vrot.lane.b32.xlu0 %v1199, 122
        %v1205 = vpop.permute.xlu0 %1204
        %v1208 = vadd.f32 %v1194, %v1203
        %v1209 = vadd.f32 %v1195, %v1205
        %s1210 = sld [smem:[#allocation3 + $0x38]]
        %v1211 = vld [vmem:[%s471 + $0x1] sm:$0xff]
        %v1212 = vld [vmem:[%s471 + $0x9] sm:$0xff]
        %v1213 = vstv %s1210
        %v1214 = vmul.f32 %v1213, %v1211
        %v1215 = vmul.f32 %v1213, %v1212
        %v1216 = vadd.f32 %v1208, %v1214
        %v1217 = vadd.f32 %v1209, %v1215
        %s1218 = sld [smem:[#allocation3 + $0x39]]
        %v1219 = vstv %s1218
        %v1220 = vmul.f32 %v1219, %v1211
        %v1221 = vmul.f32 %v1219, %v1212
        %1224 = vrot.lane.b32.xlu0 %v1220, 127
        %v1225 = vpop.permute.xlu0 %1224
        %1226 = vrot.lane.b32.xlu0 %v1221, 127
        %v1227 = vpop.permute.xlu0 %1226
        %v1230 = vadd.f32 %v1216, %v1225
        %v1231 = vadd.f32 %v1217, %v1227
        %s1232 = sld [smem:[#allocation3 + $0x3a]]
        %v1233 = vstv %s1232
        %v1234 = vmul.f32 %v1233, %v1211
        %v1235 = vmul.f32 %v1233, %v1212
        %1238 = vrot.lane.b32.xlu0 %v1234, 126
        %v1239 = vpop.permute.xlu0 %1238
        %1240 = vrot.lane.b32.xlu0 %v1235, 126
        %v1241 = vpop.permute.xlu0 %1240
        %v1244 = vadd.f32 %v1230, %v1239
        %v1245 = vadd.f32 %v1231, %v1241
        %s1246 = sld [smem:[#allocation3 + $0x3b]]
        %v1247 = vstv %s1246
        %v1248 = vmul.f32 %v1247, %v1211
        %v1249 = vmul.f32 %v1247, %v1212
        %1252 = vrot.lane.b32.xlu0 %v1248, 125
        %v1253 = vpop.permute.xlu0 %1252
        %1254 = vrot.lane.b32.xlu0 %v1249, 125
        %v1255 = vpop.permute.xlu0 %1254
        %v1258 = vadd.f32 %v1244, %v1253
        %v1259 = vadd.f32 %v1245, %v1255
        %s1260 = sld [smem:[#allocation3 + $0x3c]]
        %v1261 = vstv %s1260
        %v1262 = vmul.f32 %v1261, %v1211
        %v1263 = vmul.f32 %v1261, %v1212
        %1266 = vrot.lane.b32.xlu0 %v1262, 124
        %v1267 = vpop.permute.xlu0 %1266
        %1268 = vrot.lane.b32.xlu0 %v1263, 124
        %v1269 = vpop.permute.xlu0 %1268
        %v1272 = vadd.f32 %v1258, %v1267
        %v1273 = vadd.f32 %v1259, %v1269
        %s1274 = sld [smem:[#allocation3 + $0x3d]]
        %v1275 = vstv %s1274
        %v1276 = vmul.f32 %v1275, %v1211
        %v1277 = vmul.f32 %v1275, %v1212
        %1280 = vrot.lane.b32.xlu0 %v1276, 123
        %v1281 = vpop.permute.xlu0 %1280
        %1282 = vrot.lane.b32.xlu0 %v1277, 123
        %v1283 = vpop.permute.xlu0 %1282
        %v1286 = vadd.f32 %v1272, %v1281
        %v1287 = vadd.f32 %v1273, %v1283
        %s1288 = sld [smem:[#allocation3 + $0x3e]]
        %v1289 = vstv %s1288
        %v1290 = vmul.f32 %v1289, %v1211
        %v1291 = vmul.f32 %v1289, %v1212
        %1294 = vrot.lane.b32.xlu0 %v1290, 122
        %v1295 = vpop.permute.xlu0 %1294
        %1296 = vrot.lane.b32.xlu0 %v1291, 122
        %v1297 = vpop.permute.xlu0 %1296
        %v1300 = vadd.f32 %v1286, %v1295
        %v1301 = vadd.f32 %v1287, %v1297
        %s1302 = sld [smem:[#allocation3 + $0x3f]]
        %v1303 = vld [vmem:[%s471 + $0x2] sm:$0xff]
        %v1304 = vld [vmem:[%s471 + $0xa] sm:$0xff]
        %v1305 = vstv %s1302
        %v1306 = vmul.f32 %v1305, %v1303
        %v1307 = vmul.f32 %v1305, %v1304
        %v1308 = vadd.f32 %v1300, %v1306
        %v1309 = vadd.f32 %v1301, %v1307
        %s1310 = sld [smem:[#allocation3 + $0x40]]
        %v1311 = vstv %s1310
        %v1312 = vmul.f32 %v1311, %v1303
        %v1313 = vmul.f32 %v1311, %v1304
        %1316 = vrot.lane.b32.xlu0 %v1312, 127
        %v1317 = vpop.permute.xlu0 %1316
        %1318 = vrot.lane.b32.xlu0 %v1313, 127
        %v1319 = vpop.permute.xlu0 %1318
        %v1322 = vadd.f32 %v1308, %v1317
        %v1323 = vadd.f32 %v1309, %v1319
        %s1324 = sld [smem:[#allocation3 + $0x41]]
        %v1325 = vstv %s1324
        %v1326 = vmul.f32 %v1325, %v1303
        %v1327 = vmul.f32 %v1325, %v1304
        %1330 = vrot.lane.b32.xlu0 %v1326, 126
        %v1331 = vpop.permute.xlu0 %1330
        %1332 = vrot.lane.b32.xlu0 %v1327, 126
        %v1333 = vpop.permute.xlu0 %1332
        %v1336 = vadd.f32 %v1322, %v1331
        %v1337 = vadd.f32 %v1323, %v1333
        %s1338 = sld [smem:[#allocation3 + $0x42]]
        %v1339 = vstv %s1338
        %v1340 = vmul.f32 %v1339, %v1303
        %v1341 = vmul.f32 %v1339, %v1304
        %1344 = vrot.lane.b32.xlu0 %v1340, 125
        %v1345 = vpop.permute.xlu0 %1344
        %1346 = vrot.lane.b32.xlu0 %v1341, 125
        %v1347 = vpop.permute.xlu0 %1346
        %v1350 = vadd.f32 %v1336, %v1345
        %v1351 = vadd.f32 %v1337, %v1347
        %s1352 = sld [smem:[#allocation3 + $0x43]]
        %v1353 = vstv %s1352
        %v1354 = vmul.f32 %v1353, %v1303
        %v1355 = vmul.f32 %v1353, %v1304
        %1358 = vrot.lane.b32.xlu0 %v1354, 124
        %v1359 = vpop.permute.xlu0 %1358
        %1360 = vrot.lane.b32.xlu0 %v1355, 124
        %v1361 = vpop.permute.xlu0 %1360
        %v1364 = vadd.f32 %v1350, %v1359
        %v1365 = vadd.f32 %v1351, %v1361
        %s1366 = sld [smem:[#allocation3 + $0x44]]
        %v1367 = vstv %s1366
        %v1368 = vmul.f32 %v1367, %v1303
        %v1369 = vmul.f32 %v1367, %v1304
        %1372 = vrot.lane.b32.xlu0 %v1368, 123
        %v1373 = vpop.permute.xlu0 %1372
        %1374 = vrot.lane.b32.xlu0 %v1369, 123
        %v1375 = vpop.permute.xlu0 %1374
        %v1378 = vadd.f32 %v1364, %v1373
        %v1379 = vadd.f32 %v1365, %v1375
        %s1380 = sld [smem:[#allocation3 + $0x45]]
        %v1381 = vstv %s1380
        %v1382 = vmul.f32 %v1381, %v1303
        %v1383 = vmul.f32 %v1381, %v1304
        %1386 = vrot.lane.b32.xlu0 %v1382, 122
        %v1387 = vpop.permute.xlu0 %1386
        %1388 = vrot.lane.b32.xlu0 %v1383, 122
        %v1389 = vpop.permute.xlu0 %1388
        %v1392 = vadd.f32 %v1378, %v1387
        %v1393 = vadd.f32 %v1379, %v1389
        %s1394 = sld [smem:[#allocation3 + $0x46]]
        %v1395 = vld [vmem:[%s471 + $0x3] sm:$0xff]
        %v1396 = vld [vmem:[%s471 + $0xb] sm:$0xff]
        %v1397 = vstv %s1394
        %v1398 = vmul.f32 %v1397, %v1395
        %v1399 = vmul.f32 %v1397, %v1396
        %v1400 = vadd.f32 %v1392, %v1398
        %v1401 = vadd.f32 %v1393, %v1399
        %s1402 = sld [smem:[#allocation3 + $0x47]]
        %v1403 = vstv %s1402
        %v1404 = vmul.f32 %v1403, %v1395
        %v1405 = vmul.f32 %v1403, %v1396
        %1408 = vrot.lane.b32.xlu0 %v1404, 127
        %v1409 = vpop.permute.xlu0 %1408
        %1410 = vrot.lane.b32.xlu0 %v1405, 127
        %v1411 = vpop.permute.xlu0 %1410
        %v1414 = vadd.f32 %v1400, %v1409
        %v1415 = vadd.f32 %v1401, %v1411
        %s1416 = sld [smem:[#allocation3 + $0x48]]
        %v1417 = vstv %s1416
        %v1418 = vmul.f32 %v1417, %v1395
        %v1419 = vmul.f32 %v1417, %v1396
        %1422 = vrot.lane.b32.xlu0 %v1418, 126
        %v1423 = vpop.permute.xlu0 %1422
        %1424 = vrot.lane.b32.xlu0 %v1419, 126
        %v1425 = vpop.permute.xlu0 %1424
        %v1428 = vadd.f32 %v1414, %v1423
        %v1429 = vadd.f32 %v1415, %v1425
        %s1430 = sld [smem:[#allocation3 + $0x49]]
        %v1431 = vstv %s1430
        %v1432 = vmul.f32 %v1431, %v1395
        %v1433 = vmul.f32 %v1431, %v1396
        %1436 = vrot.lane.b32.xlu0 %v1432, 125
        %v1437 = vpop.permute.xlu0 %1436
        %1438 = vrot.lane.b32.xlu0 %v1433, 125
        %v1439 = vpop.permute.xlu0 %1438
        %v1442 = vadd.f32 %v1428, %v1437
        %v1443 = vadd.f32 %v1429, %v1439
        %s1444 = sld [smem:[#allocation3 + $0x4a]]
        %v1445 = vstv %s1444
        %v1446 = vmul.f32 %v1445, %v1395
        %v1447 = vmul.f32 %v1445, %v1396
        %1450 = vrot.lane.b32.xlu0 %v1446, 124
        %v1451 = vpop.permute.xlu0 %1450
        %1452 = vrot.lane.b32.xlu0 %v1447, 124
        %v1453 = vpop.permute.xlu0 %1452
        %v1456 = vadd.f32 %v1442, %v1451
        %v1457 = vadd.f32 %v1443, %v1453
        %s1458 = sld [smem:[#allocation3 + $0x4b]]
        %v1459 = vstv %s1458
        %v1460 = vmul.f32 %v1459, %v1395
        %v1461 = vmul.f32 %v1459, %v1396
        %1464 = vrot.lane.b32.xlu0 %v1460, 123
        %v1465 = vpop.permute.xlu0 %1464
        %1466 = vrot.lane.b32.xlu0 %v1461, 123
        %v1467 = vpop.permute.xlu0 %1466
        %v1470 = vadd.f32 %v1456, %v1465
        %v1471 = vadd.f32 %v1457, %v1467
        %s1472 = sld [smem:[#allocation3 + $0x4c]]
        %v1473 = vstv %s1472
        %v1474 = vmul.f32 %v1473, %v1395
        %v1475 = vmul.f32 %v1473, %v1396
        %1478 = vrot.lane.b32.xlu0 %v1474, 122
        %v1479 = vpop.permute.xlu0 %1478
        %1480 = vrot.lane.b32.xlu0 %v1475, 122
        %v1481 = vpop.permute.xlu0 %1480
        %v1484 = vadd.f32 %v1470, %v1479
        %v1485 = vadd.f32 %v1471, %v1481
        %s1486 = sld [smem:[#allocation3 + $0x4d]]
        %v1487 = vld [vmem:[%s471 + $0x4] sm:$0xff]
        %v1488 = vld [vmem:[%s471 + $0xc] sm:$0xff]
        %v1489 = vstv %s1486
        %v1490 = vmul.f32 %v1489, %v1487
        %v1491 = vmul.f32 %v1489, %v1488
        %v1492 = vadd.f32 %v1484, %v1490
        %v1493 = vadd.f32 %v1485, %v1491
        %s1494 = sld [smem:[#allocation3 + $0x4e]]
        %v1495 = vstv %s1494
        %v1496 = vmul.f32 %v1495, %v1487
        %v1497 = vmul.f32 %v1495, %v1488
        %1500 = vrot.lane.b32.xlu0 %v1496, 127
        %v1501 = vpop.permute.xlu0 %1500
        %1502 = vrot.lane.b32.xlu0 %v1497, 127
        %v1503 = vpop.permute.xlu0 %1502
        %v1506 = vadd.f32 %v1492, %v1501
        %v1507 = vadd.f32 %v1493, %v1503
        %s1508 = sld [smem:[#allocation3 + $0x4f]]
        %v1509 = vstv %s1508
        %v1510 = vmul.f32 %v1509, %v1487
        %v1511 = vmul.f32 %v1509, %v1488
        %1514 = vrot.lane.b32.xlu0 %v1510, 126
        %v1515 = vpop.permute.xlu0 %1514
        %1516 = vrot.lane.b32.xlu0 %v1511, 126
        %v1517 = vpop.permute.xlu0 %1516
        %v1520 = vadd.f32 %v1506, %v1515
        %v1521 = vadd.f32 %v1507, %v1517
        %s1522 = sld [smem:[#allocation3 + $0x50]]
        %v1523 = vstv %s1522
        %v1524 = vmul.f32 %v1523, %v1487
        %v1525 = vmul.f32 %v1523, %v1488
        %1528 = vrot.lane.b32.xlu0 %v1524, 125
        %v1529 = vpop.permute.xlu0 %1528
        %1530 = vrot.lane.b32.xlu0 %v1525, 125
        %v1531 = vpop.permute.xlu0 %1530
        %v1534 = vadd.f32 %v1520, %v1529
        %v1535 = vadd.f32 %v1521, %v1531
        %s1536 = sld [smem:[#allocation3 + $0x51]]
        %v1537 = vstv %s1536
        %v1538 = vmul.f32 %v1537, %v1487
        %v1539 = vmul.f32 %v1537, %v1488
        %1542 = vrot.lane.b32.xlu0 %v1538, 124
        %v1543 = vpop.permute.xlu0 %1542
        %1544 = vrot.lane.b32.xlu0 %v1539, 124
        %v1545 = vpop.permute.xlu0 %1544
        %v1548 = vadd.f32 %v1534, %v1543
        %v1549 = vadd.f32 %v1535, %v1545
        %s1550 = sld [smem:[#allocation3 + $0x52]]
        %v1551 = vstv %s1550
        %v1552 = vmul.f32 %v1551, %v1487
        %v1553 = vmul.f32 %v1551, %v1488
        %1556 = vrot.lane.b32.xlu0 %v1552, 123
        %v1557 = vpop.permute.xlu0 %1556
        %1558 = vrot.lane.b32.xlu0 %v1553, 123
        %v1559 = vpop.permute.xlu0 %1558
        %v1562 = vadd.f32 %v1548, %v1557
        %v1563 = vadd.f32 %v1549, %v1559
        %s1564 = sld [smem:[#allocation3 + $0x53]]
        %v1565 = vstv %s1564
        %v1566 = vmul.f32 %v1565, %v1487
        %v1567 = vmul.f32 %v1565, %v1488
        %1570 = vrot.lane.b32.xlu0 %v1566, 122
        %v1571 = vpop.permute.xlu0 %1570
        %1572 = vrot.lane.b32.xlu0 %v1567, 122
        %v1573 = vpop.permute.xlu0 %1572
        %v1576 = vadd.f32 %v1562, %v1571
        %v1577 = vadd.f32 %v1563, %v1573
        %s1578 = sld [smem:[#allocation3 + $0x54]]
        %v1579 = vld [vmem:[%s471 + $0x5] sm:$0xff]
        %v1580 = vld [vmem:[%s471 + $0xd] sm:$0xff]
        %v1581 = vstv %s1578
        %v1582 = vmul.f32 %v1581, %v1579
        %v1583 = vmul.f32 %v1581, %v1580
        %v1584 = vadd.f32 %v1576, %v1582
        %v1585 = vadd.f32 %v1577, %v1583
        %s1586 = sld [smem:[#allocation3 + $0x55]]
        %v1587 = vstv %s1586
        %v1588 = vmul.f32 %v1587, %v1579
        %v1589 = vmul.f32 %v1587, %v1580
        %1592 = vrot.lane.b32.xlu0 %v1588, 127
        %v1593 = vpop.permute.xlu0 %1592
        %1594 = vrot.lane.b32.xlu0 %v1589, 127
        %v1595 = vpop.permute.xlu0 %1594
        %v1598 = vadd.f32 %v1584, %v1593
        %v1599 = vadd.f32 %v1585, %v1595
        %s1600 = sld [smem:[#allocation3 + $0x56]]
        %v1601 = vstv %s1600
        %v1602 = vmul.f32 %v1601, %v1579
        %v1603 = vmul.f32 %v1601, %v1580
        %1606 = vrot.lane.b32.xlu0 %v1602, 126
        %v1607 = vpop.permute.xlu0 %1606
        %1608 = vrot.lane.b32.xlu0 %v1603, 126
        %v1609 = vpop.permute.xlu0 %1608
        %v1612 = vadd.f32 %v1598, %v1607
        %v1613 = vadd.f32 %v1599, %v1609
        %s1614 = sld [smem:[#allocation3 + $0x57]]
        %v1615 = vstv %s1614
        %v1616 = vmul.f32 %v1615, %v1579
        %v1617 = vmul.f32 %v1615, %v1580
        %1620 = vrot.lane.b32.xlu0 %v1616, 125
        %v1621 = vpop.permute.xlu0 %1620
        %1622 = vrot.lane.b32.xlu0 %v1617, 125
        %v1623 = vpop.permute.xlu0 %1622
        %v1626 = vadd.f32 %v1612, %v1621
        %v1627 = vadd.f32 %v1613, %v1623
        %s1628 = sld [smem:[#allocation3 + $0x58]]
        %v1629 = vstv %s1628
        %v1630 = vmul.f32 %v1629, %v1579
        %v1631 = vmul.f32 %v1629, %v1580
        %1634 = vrot.lane.b32.xlu0 %v1630, 124
        %v1635 = vpop.permute.xlu0 %1634
        %1636 = vrot.lane.b32.xlu0 %v1631, 124
        %v1637 = vpop.permute.xlu0 %1636
        %v1640 = vadd.f32 %v1626, %v1635
        %v1641 = vadd.f32 %v1627, %v1637
        %s1642 = sld [smem:[#allocation3 + $0x59]]
        %v1643 = vstv %s1642
        %v1644 = vmul.f32 %v1643, %v1579
        %v1645 = vmul.f32 %v1643, %v1580
        %1648 = vrot.lane.b32.xlu0 %v1644, 123
        %v1649 = vpop.permute.xlu0 %1648
        %1650 = vrot.lane.b32.xlu0 %v1645, 123
        %v1651 = vpop.permute.xlu0 %1650
        %v1654 = vadd.f32 %v1640, %v1649
        %v1655 = vadd.f32 %v1641, %v1651
        %s1656 = sld [smem:[#allocation3 + $0x5a]]
        %v1657 = vstv %s1656
        %v1658 = vmul.f32 %v1657, %v1579
        %v1659 = vmul.f32 %v1657, %v1580
        %1662 = vrot.lane.b32.xlu0 %v1658, 122
        %v1663 = vpop.permute.xlu0 %1662
        %1664 = vrot.lane.b32.xlu0 %v1659, 122
        %v1665 = vpop.permute.xlu0 %1664
        %v1668 = vadd.f32 %v1654, %v1663
        %v1669 = vadd.f32 %v1655, %v1665
        %s1670 = sld [smem:[#allocation3 + $0x5b]]
        %v1671 = vld [vmem:[%s471 + $0x6] sm:$0xff]
        %v1672 = vld [vmem:[%s471 + $0xe] sm:$0xff]
        %v1673 = vstv %s1670
        %v1674 = vmul.f32 %v1673, %v1671
        %v1675 = vmul.f32 %v1673, %v1672
        %v1676 = vadd.f32 %v1668, %v1674
        %v1677 = vadd.f32 %v1669, %v1675
        %s1678 = sld [smem:[#allocation3 + $0x5c]]
        %v1679 = vstv %s1678
        %v1680 = vmul.f32 %v1679, %v1671
        %v1681 = vmul.f32 %v1679, %v1672
        %1684 = vrot.lane.b32.xlu0 %v1680, 127
        %v1685 = vpop.permute.xlu0 %1684
        %1686 = vrot.lane.b32.xlu0 %v1681, 127
        %v1687 = vpop.permute.xlu0 %1686
        %v1690 = vadd.f32 %v1676, %v1685
        %v1691 = vadd.f32 %v1677, %v1687
        %s1692 = sld [smem:[#allocation3 + $0x5d]]
        %v1693 = vstv %s1692
        %v1694 = vmul.f32 %v1693, %v1671
        %v1695 = vmul.f32 %v1693, %v1672
        %1698 = vrot.lane.b32.xlu0 %v1694, 126
        %v1699 = vpop.permute.xlu0 %1698
        %1700 = vrot.lane.b32.xlu0 %v1695, 126
        %v1701 = vpop.permute.xlu0 %1700
        %v1704 = vadd.f32 %v1690, %v1699
        %v1705 = vadd.f32 %v1691, %v1701
        %s1706 = sld [smem:[#allocation3 + $0x5e]]
        %v1707 = vstv %s1706
        %v1708 = vmul.f32 %v1707, %v1671
        %v1709 = vmul.f32 %v1707, %v1672
        %1712 = vrot.lane.b32.xlu0 %v1708, 125
        %v1713 = vpop.permute.xlu0 %1712
        %1714 = vrot.lane.b32.xlu0 %v1709, 125
        %v1715 = vpop.permute.xlu0 %1714
        %v1718 = vadd.f32 %v1704, %v1713
        %v1719 = vadd.f32 %v1705, %v1715
        %s1720 = sld [smem:[#allocation3 + $0x5f]]
        %v1721 = vstv %s1720
        %v1722 = vmul.f32 %v1721, %v1671
        %v1723 = vmul.f32 %v1721, %v1672
        %1726 = vrot.lane.b32.xlu0 %v1722, 124
        %v1727 = vpop.permute.xlu0 %1726
        %1728 = vrot.lane.b32.xlu0 %v1723, 124
        %v1729 = vpop.permute.xlu0 %1728
        %v1732 = vadd.f32 %v1718, %v1727
        %v1733 = vadd.f32 %v1719, %v1729
        %s1734 = sld [smem:[#allocation3 + $0x60]]
        %v1735 = vstv %s1734
        %v1736 = vmul.f32 %v1735, %v1671
        %v1737 = vmul.f32 %v1735, %v1672
        %1740 = vrot.lane.b32.xlu0 %v1736, 123
        %v1741 = vpop.permute.xlu0 %1740
        %1742 = vrot.lane.b32.xlu0 %v1737, 123
        %v1743 = vpop.permute.xlu0 %1742
        %v1746 = vadd.f32 %v1732, %v1741
        %v1747 = vadd.f32 %v1733, %v1743
        %s1748 = sld [smem:[#allocation3 + $0x61]]
        %v1749 = vstv %s1748
        %v1750 = vmul.f32 %v1749, %v1671
        %v1751 = vmul.f32 %v1749, %v1672
        %1754 = vrot.lane.b32.xlu0 %v1750, 122
        %v1755 = vpop.permute.xlu0 %1754
        %1756 = vrot.lane.b32.xlu0 %v1751, 122
        %v1757 = vpop.permute.xlu0 %1756
        %v1760 = vadd.f32 %v1746, %v1755
        %v1761 = vadd.f32 %v1747, %v1757
        %s1762 = sld [smem:[#allocation3 + $0x62]]
        %v1763 = vstv %s1762
        %v1764 = vadd.f32 %v1760, %v1763
        %v1765 = vadd.f32 %v1761, %v1763
        %v1766 = vsub.f32 0.0, %v1764
        %v1767 = vsub.f32 0.0, %v1765
        %v1768 = vmul.f32 %v1766, 1.442695
        %v1769 = vpow.pop %v1768
        %v1770 = vmul.f32 %v1767, 1.442695
        %v1771 = vpow.pop %v1770
        %v1772 = vadd.f32 %v1769, 1.0
        %v1773 = vadd.f32 %v1771, 1.0
        %v1774 = vrcp.pop %v1772
        %v1775 = vrcp.pop %v1773
        %v1776 = vmul.f32 %v284, %v1774
        %v1777 = vmul.f32 %v285, %v1775
        %v1778 = vmul.f32 %v286, %v1774
        %v1779 = vmul.f32 %v287, %v1775
        %v1780 = vmul.f32 %v288, %v1774
        %v1781 = vmul.f32 %v289, %v1775
        %v1782 = vmul.f32 %v290, %v1774
        %v1783 = vmul.f32 %v291, %v1775
        %v1784 = vmul.f32 %v292, %v1774
        %v1785 = vmul.f32 %v293, %v1775
        %v1786 = vmul.f32 %v294, %v1774
        %v1787 = vmul.f32 %v295, %v1775
        %v1788 = vmul.f32 %v296, %v1774
        %v1789 = vmul.f32 %v297, %v1775
        %v1790 = vmul.f32 %v298, %v1774
        %v1791 = vmul.f32 %v299, %v1775
        %v1792 = vmul.f32 %v300, %v1774
        %v1793 = vmul.f32 %v301, %v1775
        %v1794 = vmul.f32 %v302, %v1774
        %v1795 = vmul.f32 %v303, %v1775
        %v1796 = vmul.f32 %v304, %v1774
        %v1797 = vmul.f32 %v305, %v1775
        %v1798 = vmul.f32 %v306, %v1774
        %v1799 = vmul.f32 %v307, %v1775
        %v1800 = vmul.f32 %v308, %v1774
        %v1801 = vmul.f32 %v309, %v1775
        %v1802 = vmul.f32 %v310, %v1774
        %v1803 = vmul.f32 %v311, %v1775
        %v1804 = vmul.f32 %v312, %v1774
        %v1805 = vmul.f32 %v313, %v1775
        %v1806 = vmul.f32 %v314, %v1774
        %v1807 = vmul.f32 %v315, %v1775
        %v1808 = vld [vmem:[%s241] sm:$0xf]
        %v1809 = vld [vmem:[%s241 + $0x4] sm:$0xf]
        %v1810 = vld [vmem:[%s241 + $0x8] sm:$0xf]
        %v1811 = vld [vmem:[%s241 + $0xc] sm:$0xf]
        %v1812 = vld [vmem:[%s241 + $0x10] sm:$0xf]
        %v1813 = vld [vmem:[%s241 + $0x14] sm:$0xf]
        %v1814 = vld [vmem:[%s241 + $0x18] sm:$0xf]
        %v1815 = vld [vmem:[%s241 + $0x1c] sm:$0xf]
        %v1816 = vld [vmem:[%s241 + $0x20] sm:$0xf]
        %v1817 = vld [vmem:[%s241 + $0x24] sm:$0xf]
        %v1818 = vld [vmem:[%s241 + $0x28] sm:$0xf]
        %v1819 = vld [vmem:[%s241 + $0x2c] sm:$0xf]
        %v1820 = vld [vmem:[%s241 + $0x30] sm:$0xf]
        %v1821 = vld [vmem:[%s241 + $0x34] sm:$0xf]
        %v1822 = vld [vmem:[%s241 + $0x38] sm:$0xf]
        %v1823 = vld [vmem:[%s241 + $0x3c] sm:$0xf]
        %v1824 = vld [vmem:[%s241 + $0x40] sm:$0xf]
        %v1825 = vld [vmem:[%s241 + $0x44] sm:$0xf]
        %v1826 = vld [vmem:[%s241 + $0x48] sm:$0xf]
        %v1827 = vld [vmem:[%s241 + $0x4c] sm:$0xf]
        %v1828 = vld [vmem:[%s241 + $0x50] sm:$0xf]
        %v1829 = vld [vmem:[%s241 + $0x54] sm:$0xf]
        %v1830 = vld [vmem:[%s241 + $0x58] sm:$0xf]
        %v1831 = vld [vmem:[%s241 + $0x5c] sm:$0xf]
        %v1832 = vld [vmem:[%s241 + $0x60] sm:$0xf]
        %v1833 = vld [vmem:[%s241 + $0x64] sm:$0xf]
        %v1834 = vld [vmem:[%s241 + $0x68] sm:$0xf]
        %v1835 = vld [vmem:[%s241 + $0x6c] sm:$0xf]
        %v1836 = vld [vmem:[%s241 + $0x70] sm:$0xf]
        %v1837 = vld [vmem:[%s241 + $0x74] sm:$0xf]
        %v1838 = vld [vmem:[%s241 + $0x78] sm:$0xf]
        %v1839 = vld [vmem:[%s241 + $0x7c] sm:$0xf]
        %v1840 = vunpack.c.l.bf16 %v1808
        %v1841 = vunpack.c.l.bf16 %v1809
        %v1842 = vunpack.c.l.bf16 %v1810
        %v1843 = vunpack.c.l.bf16 %v1811
        %v1844 = vunpack.c.l.bf16 %v1812
        %v1845 = vunpack.c.l.bf16 %v1813
        %v1846 = vunpack.c.l.bf16 %v1814
        %v1847 = vunpack.c.l.bf16 %v1815
        %v1848 = vunpack.c.l.bf16 %v1816
        %v1849 = vunpack.c.l.bf16 %v1817
        %v1850 = vunpack.c.l.bf16 %v1818
        %v1851 = vunpack.c.l.bf16 %v1819
        %v1852 = vunpack.c.l.bf16 %v1820
        %v1853 = vunpack.c.l.bf16 %v1821
        %v1854 = vunpack.c.l.bf16 %v1822
        %v1855 = vunpack.c.l.bf16 %v1823
        %v1856 = vunpack.c.l.bf16 %v1824
        %v1857 = vunpack.c.l.bf16 %v1825
        %v1858 = vunpack.c.l.bf16 %v1826
        %v1859 = vunpack.c.l.bf16 %v1827
        %v1860 = vunpack.c.l.bf16 %v1828
        %v1861 = vunpack.c.l.bf16 %v1829
        %v1862 = vunpack.c.l.bf16 %v1830
        %v1863 = vunpack.c.l.bf16 %v1831
        %v1864 = vunpack.c.l.bf16 %v1832
        %v1865 = vunpack.c.l.bf16 %v1833
        %v1866 = vunpack.c.l.bf16 %v1834
        %v1867 = vunpack.c.l.bf16 %v1835
        %v1868 = vunpack.c.l.bf16 %v1836
        %v1869 = vunpack.c.l.bf16 %v1837
        %v1870 = vunpack.c.l.bf16 %v1838
        %v1871 = vunpack.c.l.bf16 %v1839
        %v1872 = vadd.f32 %v1776, %v1840
        %v1873 = vadd.f32 %v1777, %v1841
        %v1874 = vadd.f32 %v1778, %v1842
        %v1875 = vadd.f32 %v1779, %v1843
        %v1876 = vadd.f32 %v1780, %v1844
        %v1877 = vadd.f32 %v1781, %v1845
        %v1878 = vadd.f32 %v1782, %v1846
        %v1879 = vadd.f32 %v1783, %v1847
        %v1880 = vadd.f32 %v1784, %v1848
        %v1881 = vadd.f32 %v1785, %v1849
        %v1882 = vadd.f32 %v1786, %v1850
        %v1883 = vadd.f32 %v1787, %v1851
        %v1884 = vadd.f32 %v1788, %v1852
        %v1885 = vadd.f32 %v1789, %v1853
        %v1886 = vadd.f32 %v1790, %v1854
        %v1887 = vadd.f32 %v1791, %v1855
        %v1888 = vadd.f32 %v1792, %v1856
        %v1889 = vadd.f32 %v1793, %v1857
        %v1890 = vadd.f32 %v1794, %v1858
        %v1891 = vadd.f32 %v1795, %v1859
        %v1892 = vadd.f32 %v1796, %v1860
        %v1893 = vadd.f32 %v1797, %v1861
        %v1894 = vadd.f32 %v1798, %v1862
        %v1895 = vadd.f32 %v1799, %v1863
        %v1896 = vadd.f32 %v1800, %v1864
        %v1897 = vadd.f32 %v1801, %v1865
        %v1898 = vadd.f32 %v1802, %v1866
        %v1899 = vadd.f32 %v1803, %v1867
        %v1900 = vadd.f32 %v1804, %v1868
        %v1901 = vadd.f32 %v1805, %v1869
        %v1902 = vadd.f32 %v1806, %v1870
        %v1903 = vadd.f32 %v1807, %v1871
        %v1904 = vld [vmem:[%s246] sm:$0xf]
        %v1905 = vld [vmem:[%s246 + $0x4] sm:$0xf]
        %v1906 = vld [vmem:[%s246 + $0x8] sm:$0xf]
        %v1907 = vld [vmem:[%s246 + $0xc] sm:$0xf]
        %v1908 = vld [vmem:[%s246 + $0x10] sm:$0xf]
        %v1909 = vld [vmem:[%s246 + $0x14] sm:$0xf]
        %v1910 = vld [vmem:[%s246 + $0x18] sm:$0xf]
        %v1911 = vld [vmem:[%s246 + $0x1c] sm:$0xf]
        %v1912 = vld [vmem:[%s246 + $0x20] sm:$0xf]
        %v1913 = vld [vmem:[%s246 + $0x24] sm:$0xf]
        %v1914 = vld [vmem:[%s246 + $0x28] sm:$0xf]
        %v1915 = vld [vmem:[%s246 + $0x2c] sm:$0xf]
        %v1916 = vld [vmem:[%s246 + $0x30] sm:$0xf]
        %v1917 = vld [vmem:[%s246 + $0x34] sm:$0xf]
        %v1918 = vld [vmem:[%s246 + $0x38] sm:$0xf]
        %v1919 = vld [vmem:[%s246 + $0x3c] sm:$0xf]
        %v1920 = vld [vmem:[%s246 + $0x40] sm:$0xf]
        %v1921 = vld [vmem:[%s246 + $0x44] sm:$0xf]
        %v1922 = vld [vmem:[%s246 + $0x48] sm:$0xf]
        %v1923 = vld [vmem:[%s246 + $0x4c] sm:$0xf]
        %v1924 = vld [vmem:[%s246 + $0x50] sm:$0xf]
        %v1925 = vld [vmem:[%s246 + $0x54] sm:$0xf]
        %v1926 = vld [vmem:[%s246 + $0x58] sm:$0xf]
        %v1927 = vld [vmem:[%s246 + $0x5c] sm:$0xf]
        %v1928 = vld [vmem:[%s246 + $0x60] sm:$0xf]
        %v1929 = vld [vmem:[%s246 + $0x64] sm:$0xf]
        %v1930 = vld [vmem:[%s246 + $0x68] sm:$0xf]
        %v1931 = vld [vmem:[%s246 + $0x6c] sm:$0xf]
        %v1932 = vld [vmem:[%s246 + $0x70] sm:$0xf]
        %v1933 = vld [vmem:[%s246 + $0x74] sm:$0xf]
        %v1934 = vld [vmem:[%s246 + $0x78] sm:$0xf]
        %v1935 = vld [vmem:[%s246 + $0x7c] sm:$0xf]
        %v1936 = vunpack.c.l.bf16 %v1904
        %v1937 = vunpack.c.l.bf16 %v1905
        %v1938 = vunpack.c.l.bf16 %v1906
        %v1939 = vunpack.c.l.bf16 %v1907
        %v1940 = vunpack.c.l.bf16 %v1908
        %v1941 = vunpack.c.l.bf16 %v1909
        %v1942 = vunpack.c.l.bf16 %v1910
        %v1943 = vunpack.c.l.bf16 %v1911
        %v1944 = vunpack.c.l.bf16 %v1912
        %v1945 = vunpack.c.l.bf16 %v1913
        %v1946 = vunpack.c.l.bf16 %v1914
        %v1947 = vunpack.c.l.bf16 %v1915
        %v1948 = vunpack.c.l.bf16 %v1916
        %v1949 = vunpack.c.l.bf16 %v1917
        %v1950 = vunpack.c.l.bf16 %v1918
        %v1951 = vunpack.c.l.bf16 %v1919
        %v1952 = vunpack.c.l.bf16 %v1920
        %v1953 = vunpack.c.l.bf16 %v1921
        %v1954 = vunpack.c.l.bf16 %v1922
        %v1955 = vunpack.c.l.bf16 %v1923
        %v1956 = vunpack.c.l.bf16 %v1924
        %v1957 = vunpack.c.l.bf16 %v1925
        %v1958 = vunpack.c.l.bf16 %v1926
        %v1959 = vunpack.c.l.bf16 %v1927
        %v1960 = vunpack.c.l.bf16 %v1928
        %v1961 = vunpack.c.l.bf16 %v1929
        %v1962 = vunpack.c.l.bf16 %v1930
        %v1963 = vunpack.c.l.bf16 %v1931
        %v1964 = vunpack.c.l.bf16 %v1932
        %v1965 = vunpack.c.l.bf16 %v1933
        %v1966 = vunpack.c.l.bf16 %v1934
        %v1967 = vunpack.c.l.bf16 %v1935
        %v1968 = vadd.f32 %v1872, %v1936
        %v1969 = vadd.f32 %v1873, %v1937
        %v1970 = vadd.f32 %v1874, %v1938
        %v1971 = vadd.f32 %v1875, %v1939
        %v1972 = vadd.f32 %v1876, %v1940
        %v1973 = vadd.f32 %v1877, %v1941
        %v1974 = vadd.f32 %v1878, %v1942
        %v1975 = vadd.f32 %v1879, %v1943
        %v1976 = vadd.f32 %v1880, %v1944
        %v1977 = vadd.f32 %v1881, %v1945
        %v1978 = vadd.f32 %v1882, %v1946
        %v1979 = vadd.f32 %v1883, %v1947
        %v1980 = vadd.f32 %v1884, %v1948
        %v1981 = vadd.f32 %v1885, %v1949
        %v1982 = vadd.f32 %v1886, %v1950
        %v1983 = vadd.f32 %v1887, %v1951
        %v1984 = vadd.f32 %v1888, %v1952
        %v1985 = vadd.f32 %v1889, %v1953
        %v1986 = vadd.f32 %v1890, %v1954
        %v1987 = vadd.f32 %v1891, %v1955
        %v1988 = vadd.f32 %v1892, %v1956
        %v1989 = vadd.f32 %v1893, %v1957
        %v1990 = vadd.f32 %v1894, %v1958
        %v1991 = vadd.f32 %v1895, %v1959
        %v1992 = vadd.f32 %v1896, %v1960
        %v1993 = vadd.f32 %v1897, %v1961
        %v1994 = vadd.f32 %v1898, %v1962
        %v1995 = vadd.f32 %v1899, %v1963
        %v1996 = vadd.f32 %v1900, %v1964
        %v1997 = vadd.f32 %v1901, %v1965
        %v1998 = vadd.f32 %v1902, %v1966
        %v1999 = vadd.f32 %v1903, %v1967
        %v2000 = vmul.f32 %v1968, 0.33333334
        %v2001 = vmul.f32 %v1969, 0.33333334
        %v2002 = vmul.f32 %v1970, 0.33333334
        %v2003 = vmul.f32 %v1971, 0.33333334
        %v2004 = vmul.f32 %v1972, 0.33333334
        %v2005 = vmul.f32 %v1973, 0.33333334
        %v2006 = vmul.f32 %v1974, 0.33333334
        %v2007 = vmul.f32 %v1975, 0.33333334
        %v2008 = vmul.f32 %v1976, 0.33333334
        %v2009 = vmul.f32 %v1977, 0.33333334
        %v2010 = vmul.f32 %v1978, 0.33333334
        %v2011 = vmul.f32 %v1979, 0.33333334
        %v2012 = vmul.f32 %v1980, 0.33333334
        %v2013 = vmul.f32 %v1981, 0.33333334
        %v2014 = vmul.f32 %v1982, 0.33333334
        %v2015 = vmul.f32 %v1983, 0.33333334
        %v2016 = vmul.f32 %v1984, 0.33333334
        %v2017 = vmul.f32 %v1985, 0.33333334
        %v2018 = vmul.f32 %v1986, 0.33333334
        %v2019 = vmul.f32 %v1987, 0.33333334
        %v2020 = vmul.f32 %v1988, 0.33333334
        %v2021 = vmul.f32 %v1989, 0.33333334
        %v2022 = vmul.f32 %v1990, 0.33333334
        %v2023 = vmul.f32 %v1991, 0.33333334
        %v2024 = vmul.f32 %v1992, 0.33333334
        %v2025 = vmul.f32 %v1993, 0.33333334
        %v2026 = vmul.f32 %v1994, 0.33333334
        %v2027 = vmul.f32 %v1995, 0.33333334
        %v2028 = vmul.f32 %v1996, 0.33333334
        %v2029 = vmul.f32 %v1997, 0.33333334
        %v2030 = vmul.f32 %v1998, 0.33333334
        %v2031 = vmul.f32 %v1999, 0.33333334
        %v2032 = vpack.c.bf16 %v2001, %v2000
        %v2033 = vpack.c.bf16 %v2003, %v2002
        %v2034 = vpack.c.bf16 %v2005, %v2004
        %v2035 = vpack.c.bf16 %v2007, %v2006
        %v2036 = vpack.c.bf16 %v2009, %v2008
        %v2037 = vpack.c.bf16 %v2011, %v2010
        %v2038 = vpack.c.bf16 %v2013, %v2012
        %v2039 = vpack.c.bf16 %v2015, %v2014
        %v2040 = vpack.c.bf16 %v2017, %v2016
        %v2041 = vpack.c.bf16 %v2019, %v2018
        %v2042 = vpack.c.bf16 %v2021, %v2020
        %v2043 = vpack.c.bf16 %v2023, %v2022
        %v2044 = vpack.c.bf16 %v2025, %v2024
        %v2045 = vpack.c.bf16 %v2027, %v2026
        %v2046 = vpack.c.bf16 %v2029, %v2028
        %v2047 = vpack.c.bf16 %v2031, %v2030
        %v2064 = vunpack.c.l.b16 %v2032
        %v2065 = vunpack.c.h.b16 %v2032
        %v2066 = vunpack.c.l.b16 %v2033
        %v2067 = vunpack.c.h.b16 %v2033
        %v2068 = vunpack.c.l.b16 %v2034
        %v2069 = vunpack.c.h.b16 %v2034
        %v2070 = vunpack.c.l.b16 %v2035
        %v2071 = vunpack.c.h.b16 %v2035
        %v2072 = vunpack.c.l.b16 %v2036
        %v2073 = vunpack.c.h.b16 %v2036
        %v2074 = vunpack.c.l.b16 %v2037
        %v2075 = vunpack.c.h.b16 %v2037
        %v2076 = vunpack.c.l.b16 %v2038
        %v2077 = vunpack.c.h.b16 %v2038
        %v2078 = vunpack.c.l.b16 %v2039
        %v2079 = vunpack.c.h.b16 %v2039
        %v2080 = vunpack.c.l.b16 %v2040
        %v2081 = vunpack.c.h.b16 %v2040
        %v2082 = vunpack.c.l.b16 %v2041
        %v2083 = vunpack.c.h.b16 %v2041
        %v2084 = vunpack.c.l.b16 %v2042
        %v2085 = vunpack.c.h.b16 %v2042
        %v2086 = vunpack.c.l.b16 %v2043
        %v2087 = vunpack.c.h.b16 %v2043
        %v2088 = vunpack.c.l.b16 %v2044
        %v2089 = vunpack.c.h.b16 %v2044
        %v2090 = vunpack.c.l.b16 %v2045
        %v2091 = vunpack.c.h.b16 %v2045
        %v2092 = vunpack.c.l.b16 %v2046
        %v2093 = vunpack.c.h.b16 %v2046
        %v2094 = vunpack.c.l.b16 %v2047
        %v2095 = vunpack.c.h.b16 %v2047
        %v2096 = vpack.c.b16 %v2064, %v2064
        %v2097 = vpack.c.b16 %v2065, %v2065
        %v2098 = vpack.c.b16 %v2066, %v2066
        %v2099 = vpack.c.b16 %v2067, %v2067
        %v2100 = vpack.c.b16 %v2068, %v2068
        %v2101 = vpack.c.b16 %v2069, %v2069
        %v2102 = vpack.c.b16 %v2070, %v2070
        %v2103 = vpack.c.b16 %v2071, %v2071
        %v2104 = vpack.c.b16 %v2072, %v2072
        %v2105 = vpack.c.b16 %v2073, %v2073
        %v2106 = vpack.c.b16 %v2074, %v2074
        %v2107 = vpack.c.b16 %v2075, %v2075
        %v2108 = vpack.c.b16 %v2076, %v2076
        %v2109 = vpack.c.b16 %v2077, %v2077
        %v2110 = vpack.c.b16 %v2078, %v2078
        %v2111 = vpack.c.b16 %v2079, %v2079
        %v2112 = vpack.c.b16 %v2080, %v2080
        %v2113 = vpack.c.b16 %v2081, %v2081
        %v2114 = vpack.c.b16 %v2082, %v2082
        %v2115 = vpack.c.b16 %v2083, %v2083
        %v2116 = vpack.c.b16 %v2084, %v2084
        %v2117 = vpack.c.b16 %v2085, %v2085
        %v2118 = vpack.c.b16 %v2086, %v2086
        %v2119 = vpack.c.b16 %v2087, %v2087
        %v2120 = vpack.c.b16 %v2088, %v2088
        %v2121 = vpack.c.b16 %v2089, %v2089
        %v2122 = vpack.c.b16 %v2090, %v2090
        %v2123 = vpack.c.b16 %v2091, %v2091
        %v2124 = vpack.c.b16 %v2092, %v2092
        %v2125 = vpack.c.b16 %v2093, %v2093
        %v2126 = vpack.c.b16 %v2094, %v2094
        %v2127 = vpack.c.b16 %v2095, %v2095
        %vm2160 = vcmask 125952
        %2161 = vst.msk [vmem:[%s251] sm:$0xf] %vm2160, %v2096
        %2162 = vst.msk [vmem:[%s251 + $0x4] sm:$0xf] %vm2160, %v2097
        %2163 = vst.msk [vmem:[%s251 + $0x8] sm:$0xf] %vm2160, %v2098
        %2164 = vst.msk [vmem:[%s251 + $0xc] sm:$0xf] %vm2160, %v2099
        %2165 = vst.msk [vmem:[%s251 + $0x10] sm:$0xf] %vm2160, %v2100
        %2166 = vst.msk [vmem:[%s251 + $0x14] sm:$0xf] %vm2160, %v2101
        %2167 = vst.msk [vmem:[%s251 + $0x18] sm:$0xf] %vm2160, %v2102
        %2168 = vst.msk [vmem:[%s251 + $0x1c] sm:$0xf] %vm2160, %v2103
        %2169 = vst.msk [vmem:[%s251 + $0x20] sm:$0xf] %vm2160, %v2104
        %2170 = vst.msk [vmem:[%s251 + $0x24] sm:$0xf] %vm2160, %v2105
        %2171 = vst.msk [vmem:[%s251 + $0x28] sm:$0xf] %vm2160, %v2106
        %2172 = vst.msk [vmem:[%s251 + $0x2c] sm:$0xf] %vm2160, %v2107
        %2173 = vst.msk [vmem:[%s251 + $0x30] sm:$0xf] %vm2160, %v2108
        %2174 = vst.msk [vmem:[%s251 + $0x34] sm:$0xf] %vm2160, %v2109
        %2175 = vst.msk [vmem:[%s251 + $0x38] sm:$0xf] %vm2160, %v2110
        %2176 = vst.msk [vmem:[%s251 + $0x3c] sm:$0xf] %vm2160, %v2111
        %2177 = vst.msk [vmem:[%s251 + $0x40] sm:$0xf] %vm2160, %v2112
        %2178 = vst.msk [vmem:[%s251 + $0x44] sm:$0xf] %vm2160, %v2113
        %2179 = vst.msk [vmem:[%s251 + $0x48] sm:$0xf] %vm2160, %v2114
        %2180 = vst.msk [vmem:[%s251 + $0x4c] sm:$0xf] %vm2160, %v2115
        %2181 = vst.msk [vmem:[%s251 + $0x50] sm:$0xf] %vm2160, %v2116
        %2182 = vst.msk [vmem:[%s251 + $0x54] sm:$0xf] %vm2160, %v2117
        %2183 = vst.msk [vmem:[%s251 + $0x58] sm:$0xf] %vm2160, %v2118
        %2184 = vst.msk [vmem:[%s251 + $0x5c] sm:$0xf] %vm2160, %v2119
        %2185 = vst.msk [vmem:[%s251 + $0x60] sm:$0xf] %vm2160, %v2120
        %2186 = vst.msk [vmem:[%s251 + $0x64] sm:$0xf] %vm2160, %v2121
        %2187 = vst.msk [vmem:[%s251 + $0x68] sm:$0xf] %vm2160, %v2122
        %2188 = vst.msk [vmem:[%s251 + $0x6c] sm:$0xf] %vm2160, %v2123
        %2189 = vst.msk [vmem:[%s251 + $0x70] sm:$0xf] %vm2160, %v2124
        %2190 = vst.msk [vmem:[%s251 + $0x74] sm:$0xf] %vm2160, %v2125
        %2191 = vst.msk [vmem:[%s251 + $0x78] sm:$0xf] %vm2160, %v2126
        %2192 = vst.msk [vmem:[%s251 + $0x7c] sm:$0xf] %vm2160, %v2127
        %p2193 = scmp.lt.s32.totalorder %s16, 1
        %s2194 = scalar_select %p2193, %s16, 1
        %s2195 = smul.addr %s2194, 32
        %s2196 = smul.addr %s2195, 4
        %s2197 = scalar_lea.vmem %s4, %s2196
        // Predicated region
        $region41: #{c2f_tripletat.12} parent=35 // pred_check
          %p2198 = pneg %p133
        $region42: #{c2f_tripletat.12} parent=35 // pred_check_branch
          %2200 = sbr.rel (%p2198) target = $region44
        $region43: #{c2f_tripletat.12} parent=35 // pred_region
          _
        $region44: #{c2f_tripletat.12} parent=35 // pred_fallthru
          _
      $region36: #{c2f_tripletat.12} parent=5 // pred_fallthru
        _
      %p2201 = scmp.le.s32.totalorder 2, %s11
      // Predicated region
      $region45: #{c2f_tripletat.12} parent=5 // pred_check
        %p2202 = pneg %p2201
      $region46: #{c2f_tripletat.12} parent=5 // pred_check_branch
        %2204 = sbr.rel (%p2202) target = $region48
      $region47: #{c2f_tripletat.12} parent=5 // pred_region
        %s2205 = ssub.s32 %s11, 2
        // Predicated region
        $region49: #{c2f_tripletat.12} parent=47 // pred_check
          %p2206 = pneg %p139
        $region50: #{c2f_tripletat.12} parent=47 // pred_check_branch
          %2208 = sbr.rel (%p2206) target = $region52
        $region51: #{c2f_tripletat.12} parent=47 // pred_region
          %p2209 = scmp.lt.s32.totalorder %s17, 1
          %s2210 = scalar_select %p2209, %s17, 1
          %s2211 = smul.addr %s2210, 32
          %s2212 = smul.addr %s2211, 4
          %s2213 = scalar_lea.vmem %s4, %s2212
        $region52: #{c2f_tripletat.12} parent=47 // pred_fallthru
          _
      $region48: #{c2f_tripletat.12} parent=5 // pred_fallthru
        _
    $region6: #{c2f_tripletat.12} parent=1 // loop_footer
      %s15 = sadd.s32 1, %s11
    $region7: #{c2f_tripletat.12} parent=1 // loop_footer_branch
      %10 = sbr.rel target = $region3
    $region8: #{c2f_tripletat.12} parent=1 // loop_exit
      _
    %2214 = vsyncpa [#allocation4], 1
    %s2215 = scalar_lea.sflag [#allocation4], 1
    %2216 = vsyncpa %s2215, 1

</llo_original>
